<compile_context>
chip_gen: v6e
topology: v6e:2x2x1
jax: 0.10.0
libtpu: 0.0.40
codegen_flags: <defaults>
</compile_context>

<pallas_src>
import functools

import jax
import jax.numpy as jnp
from jax import lax
from jax.experimental import pallas as pl
from jax.experimental.pallas import tpu as pltpu

LANE = 128


def _round_up(x, m):
    return ((x + m - 1) // m) * m


# ----------------------------------------------------------------------------
# Pallas kernels: fused  (patches @ W_scaled) + shift  [+ identity] [+ ReLU]
# ----------------------------------------------------------------------------
def gemm_bias_kernel(p_ref, w_ref, shift_ref, o_ref, *, relu):
    acc = jnp.dot(p_ref[...], w_ref[...], preferred_element_type=jnp.float32)
    acc = acc + shift_ref[...]
    if relu:
        acc = jnp.maximum(acc, 0.0)
    o_ref[...] = acc.astype(o_ref.dtype)


def gemm_bias_res_kernel(p_ref, w_ref, shift_ref, id_ref, o_ref, *, relu):
    acc = jnp.dot(p_ref[...], w_ref[...], preferred_element_type=jnp.float32)
    acc = acc + shift_ref[...] + id_ref[...].astype(jnp.float32)
    if relu:
        acc = jnp.maximum(acc, 0.0)
    o_ref[...] = acc.astype(o_ref.dtype)


def gemm_bias(patches, w_mat, shift, relu, id_mat=None):
    """patches: [M, K] bf16 (K % 128 == 0), w_mat: [K, Cout] bf16 (Cout % 128 == 0,
    BN scale pre-folded), shift: [1, Cout] f32, optional id_mat: [M, Cout] bf16.
    Returns [M, Cout] bf16."""
    M, K = patches.shape
    Cout = w_mat.shape[1]

    # Bigger M tiles (fewer grid steps); M >= 512 keeps >= 2 steps so both v7x
    # TensorCores get work via the "parallel" grid axis.
    if M % 256 == 0:
        tm = 256
    elif M % 128 == 0:
        tm = 128
    else:
        tm = M  # M is a multiple of 8 at every layer of this model

    in_specs = [
        pl.BlockSpec((tm, K), lambda i: (i, 0)),
        pl.BlockSpec((K, Cout), lambda i: (0, 0)),
        pl.BlockSpec((1, Cout), lambda i: (0, 0)),
    ]
    args = [patches, w_mat, shift]
    if id_mat is not None:
        in_specs.append(pl.BlockSpec((tm, Cout), lambda i: (i, 0)))
        args.append(id_mat)
        kernel = functools.partial(gemm_bias_res_kernel, relu=relu)
    else:
        kernel = functools.partial(gemm_bias_kernel, relu=relu)

    return pl.pallas_call(
        kernel,
        out_shape=jax.ShapeDtypeStruct((M, Cout), jnp.bfloat16),
        grid=(M // tm,),
        in_specs=in_specs,
        out_specs=pl.BlockSpec((tm, Cout), lambda i: (i, 0)),
        compiler_params=pltpu.CompilerParams(
            dimension_semantics=("parallel",),
            vmem_limit_bytes=32 * 1024 * 1024,
        ),
    )(*args)


# ----------------------------------------------------------------------------
# Conv2d = im2col (glue) + Pallas GEMM (hot path)
# ----------------------------------------------------------------------------
def im2col(x, kh, kw, stride, pad):
    """x: [N, H, W, C] -> ([N*Ho*Wo, kh*kw*C], Ho, Wo); patch order (kh, kw, c)."""
    N, H, W, C = x.shape
    xp = jnp.pad(x, ((0, 0), (pad, pad), (pad, pad), (0, 0)))
    Ho = (H + 2 * pad - kh) // stride + 1
    Wo = (W + 2 * pad - kw) // stride + 1
    cols = []
    for i in range(kh):
        for j in range(kw):
            cols.append(xp[:, i:i + Ho * stride:stride, j:j + Wo * stride:stride, :])
    patches = jnp.concatenate(cols, axis=-1)
    return patches.reshape(N * Ho * Wo, kh * kw * C), Ho, Wo


def conv_affine(x, w, scale, shift, stride, pad, relu, identity=None):
    """x: [N,H,W,Cx] bf16 (Cx may be lane-padded >= w's Cin; pad channels are 0);
    w: [KH,KW,Cin,Cout] f32.  Returns [N,Ho,Wo,Cp] bf16 with Cp = roundup(Cout,128)
    and channels >= Cout exactly zero.  BN scale is folded into the weights; the
    kernel epilogue adds `shift` (+ optional residual `identity`), then ReLU."""
    KH, KW, Cin, Cout = w.shape
    N = x.shape[0]
    Cx = x.shape[-1]
    if Cx > Cin:  # activation channels are lane-padded with zeros: pad the weight too
        w = jnp.pad(w, ((0, 0), (0, 0), (0, Cx - Cin), (0, 0)))

    patches, Ho, Wo = im2col(x, KH, KW, stride, pad)

    w_mat = w.reshape(KH * KW * Cx, Cout) * scale[None, :]           # fold BN scale (f32)
    shift2 = shift.reshape(1, Cout).astype(jnp.float32)

    # Lane-dense output: pad Cout up to a multiple of 128 (unmasked stores).
    Cp = _round_up(Cout, LANE)
    if Cp != Cout:
        w_mat = jnp.pad(w_mat, ((0, 0), (0, Cp - Cout)))
        shift2 = jnp.pad(shift2, ((0, 0), (0, Cp - Cout)))

    # Zero-pad K (LHS lane dim) to a multiple of 128 (e.g. stem conv: 147 -> 256).
    K = w_mat.shape[0]
    Kp = _round_up(K, LANE)
    if Kp != K:
        patches = jnp.pad(patches, ((0, 0), (0, Kp - K)))
        w_mat = jnp.pad(w_mat, ((0, Kp - K), (0, 0)))

    # Safety: keep M a multiple of 8 (always true at this model's shapes).
    M = patches.shape[0]
    Mp = _round_up(M, 8)
    if Mp != M:
        patches = jnp.pad(patches, ((0, Mp - M), (0, 0)))

    id_mat = None
    if identity is not None:
        id_mat = identity.reshape(-1, Cp).astype(jnp.bfloat16)       # already lane-padded
        if Mp != M:
            id_mat = jnp.pad(id_mat, ((0, Mp - M), (0, 0)))

    out = gemm_bias(patches.astype(jnp.bfloat16), w_mat.astype(jnp.bfloat16),
                    shift2, relu, id_mat)
    if Mp != M:
        out = out[:M]
    return out.reshape(N, Ho, Wo, Cp)


def fold_bn(bias, gamma, beta, mean, var, eps=1e-5):
    scale = gamma / jnp.sqrt(var + eps)
    shift = beta + scale * (bias - mean)
    return scale, shift


def maxpool3x3s2(x):
    # Lane-padded channels are zero everywhere, so their max stays zero.
    neg_inf = jnp.array(-jnp.inf, dtype=x.dtype)
    return lax.reduce_window(
        x, neg_inf, lax.max,
        window_dimensions=(1, 3, 3, 1),
        window_strides=(1, 2, 2, 1),
        padding=((0, 0), (1, 1), (1, 1), (0, 0)),
    )


def up2(x):  # nn.Upsample(scale_factor=2), mode='nearest', NHWC
    return jnp.repeat(jnp.repeat(x, 2, axis=1), 2, axis=2)


# ----------------------------------------------------------------------------
# Deterministic parameter init (synthetic, matches module shapes)
# ----------------------------------------------------------------------------
class ParamGen:
    def __init__(self, key):
        self.key = key

    def next(self):
        self.key, sub = jax.random.split(self.key)
        return sub


def make_conv(g, kh, kw, cin, cout, scale=0.05):
    return jax.random.normal(g.next(), (kh, kw, cin, cout), jnp.float32) * scale


def make_bn(g, c):
    gamma = 1.0 + 0.1 * jax.random.normal(g.next(), (c,), jnp.float32)
    beta = 0.1 * jax.random.normal(g.next(), (c,), jnp.float32)
    mean = 0.1 * jax.random.normal(g.next(), (c,), jnp.float32)
    var = 1.0 + 0.1 * jnp.abs(jax.random.normal(g.next(), (c,), jnp.float32))
    return (gamma, beta, mean, var)


def make_bias(g, c):
    return 0.1 * jax.random.normal(g.next(), (c,), jnp.float32)


def make_basic_block(g, cin, cout, downsample):
    p = {
        "w1": make_conv(g, 3, 3, cin, cout),
        "bn1": make_bn(g, cout),
        "w2": make_conv(g, 3, 3, cout, cout),
        "bn2": make_bn(g, cout),
    }
    if downsample:
        p["wd"] = make_conv(g, 1, 1, cin, cout)
        p["bnd"] = make_bn(g, cout)
    return p


def make_params(key):
    g = ParamGen(key)
    resnet = {
        "conv1_w": make_conv(g, 7, 7, 3, 64),
        "bn1": make_bn(g, 64),
        "l1b1": make_basic_block(g, 64, 64, False),
        "l1b2": make_basic_block(g, 64, 64, False),
        "l2b1": make_basic_block(g, 64, 128, True),
        "l2b2": make_basic_block(g, 128, 128, False),
    }
    head = {
        "w1": make_conv(g, 3, 3, 128, 128), "b1": make_bias(g, 128), "bn1": make_bn(g, 128),
        "w2": make_conv(g, 3, 3, 128, 64),  "b2": make_bias(g, 64),  "bn2": make_bn(g, 64),
        "w3": make_conv(g, 3, 3, 64, 64),   "b3": make_bias(g, 64),  "bn3": make_bn(g, 64),
        "w4": make_conv(g, 3, 3, 64, 32),   "b4": make_bias(g, 32),  "bn4": make_bn(g, 32),
        "w5": make_conv(g, 3, 3, 32, 2),    "b5": make_bias(g, 2),
    }
    return {"resnet": resnet, "head": head}


# ----------------------------------------------------------------------------
# Forward pass
# ----------------------------------------------------------------------------
def basic_block(x, p, stride):
    out = conv_affine(x, p["w1"], *fold_bn(0.0, *p["bn1"]), stride, 1, True)
    if "wd" in p:
        identity = conv_affine(x, p["wd"], *fold_bn(0.0, *p["bnd"]), stride, 0, False)
    else:
        identity = x
    # Residual add + ReLU fused into the second conv's epilogue.
    out = conv_affine(out, p["w2"], *fold_bn(0.0, *p["bn2"]), 1, 1, True,
                      identity=identity)
    return out


def upsample_head(x, p):
    x = conv_affine(x, p["w1"], *fold_bn(p["b1"], *p["bn1"]), 1, 1, True)
    x = up2(x)
    x = conv_affine(x, p["w2"], *fold_bn(p["b2"], *p["bn2"]), 1, 1, True)
    x = conv_affine(x, p["w3"], *fold_bn(p["b3"], *p["bn3"]), 1, 1, True)
    x = up2(x)
    x = conv_affine(x, p["w4"], *fold_bn(p["b4"], *p["bn4"]), 1, 1, True)
    x = conv_affine(x, p["w5"], jnp.ones((2,), jnp.float32), p["b5"], 1, 1, False)
    x = x[..., :2]          # drop lane padding once, at the very end
    x = up2(x)
    return x


@jax.jit
def colorization_net(x_nchw, params):
    # layout: NCHW f32 at the boundary (PyTorch), NHWC bf16 internally
    # (channel dim lane-padded to 128 between layers; pad channels stay 0).
    x = jnp.transpose(x_nchw, (0, 2, 3, 1)).astype(jnp.bfloat16)
    rp = params["resnet"]
    # resnet18 children [0:6]: conv1, bn1, relu, maxpool, layer1, layer2
    x = conv_affine(x, rp["conv1_w"], *fold_bn(0.0, *rp["bn1"]), 2, 3, True)
    x = maxpool3x3s2(x)
    x = basic_block(x, rp["l1b1"], 1)
    x = basic_block(x, rp["l1b2"], 1)
    x = basic_block(x, rp["l2b1"], 2)
    x = basic_block(x, rp["l2b2"], 1)
    x = upsample_head(x, params["head"])
    return jnp.transpose(x, (0, 3, 1, 2)).astype(jnp.float32)


if __name__ == "__main__":
    key = jax.random.PRNGKey(0)
    k_param, k_img = jax.random.split(key)

    # img_gray -> stacked with two zero channels, as in the reference script.
    B, H, W = 2, 32, 32
    img_gray = jax.random.uniform(k_img, (B, H, W), jnp.float32)
    x = jnp.stack([img_gray, jnp.zeros_like(img_gray), jnp.zeros_like(img_gray)], axis=1)
    # x: [2, 3, 32, 32] (NCHW)

    params = make_params(k_param)
    out = colorization_net(x, params)
    out = jax.block_until_ready(out)

    assert out.shape == (B, 2, H, W), out.shape  # 2 (a,b) chroma channels, full resolution
    assert jnp.all(jnp.isfinite(out))
    print("KERNEL_OK")
</pallas_src>

<mosaic_0001>
module attributes {stable_mosaic.version = 11 : i64} {
  func.func @gemm_bias_kernel(%arg0: i32, %arg1: memref<256x256xbf16, #tpu.memory_space<vmem>>, %arg2: memref<256x128xbf16, #tpu.memory_space<vmem>>, %arg3: memref<1x128xf32, #tpu.memory_space<vmem>>, %arg4: memref<256x128xbf16, #tpu.memory_space<vmem>>) attributes {dimension_semantics = [#tpu.dimension_semantics<parallel>], iteration_bounds = array<i64: 2>, scalar_prefetch = 0 : i64, scratch_operands = 0 : i64, tpu.core_type = #tpu.core_type<tc>, window_params = [{transform_indices = @transform_0, window_bounds = array<i64: 256, 256>}, {pipeline_mode = #tpu.pipeline_mode<synchronous>, transform_indices = @transform_1, window_bounds = array<i64: 256, 128>}, {pipeline_mode = #tpu.pipeline_mode<synchronous>, transform_indices = @transform_2, window_bounds = array<i64: 1, 128>}, {transform_indices = @transform_3, window_bounds = array<i64: 256, 128>}]} {
    %c0 = arith.constant 0 : index
    %c0_0 = arith.constant 0 : index
    %0 = vector.load %arg1[%c0, %c0_0] : memref<256x256xbf16, #tpu.memory_space<vmem>>, vector<256x256xbf16>
    %c0_1 = arith.constant 0 : index
    %c0_2 = arith.constant 0 : index
    %1 = vector.load %arg2[%c0_1, %c0_2] : memref<256x128xbf16, #tpu.memory_space<vmem>>, vector<256x128xbf16>
    %cst = arith.constant dense<0.000000e+00> : vector<256x128xf32>
    %2 = tpu.matmul %0, %1, %cst {dimension_numbers = #tpu.dot_dimension_numbers<[1], [0], [0], [1], [0, 0, 1, 1], [], []>} : vector<256x256xbf16>, vector<256x128xbf16>, vector<256x128xf32> -> vector<256x128xf32>
    %c0_3 = arith.constant 0 : index
    %c0_4 = arith.constant 0 : index
    %3 = vector.load %arg3[%c0_3, %c0_4] : memref<1x128xf32, #tpu.memory_space<vmem>>, vector<1x128xf32>
    %4 = vector.broadcast %3 : vector<1x128xf32> to vector<256x128xf32>
    %5 = arith.addf %2, %4 : vector<256x128xf32>
    %cst_5 = arith.constant 0.000000e+00 : f32
    %6 = vector.broadcast %cst_5 : f32 to vector<256x128xf32>
    %7 = arith.maximumf %5, %6 : vector<256x128xf32>
    %8 = arith.truncf %7 : vector<256x128xf32> to vector<256x128xbf16>
    %c0_6 = arith.constant 0 : index
    %c0_7 = arith.constant 0 : index
    %9 = vector.load %arg4[%c0_6, %c0_7] : memref<256x128xbf16, #tpu.memory_space<vmem>>, vector<256x128xbf16>
    tpu.vector_store %arg4[%c0_6, %c0_7], %8 {strides = array<i32>} : memref<256x128xbf16, #tpu.memory_space<vmem>>, vector<256x128xbf16>,
    return
  }
  func.func @transform_0(%arg0: i32) -> (i32, i32) {
    %c0_i32 = arith.constant 0 : i32
    %c0_i32_0 = arith.constant 0 : i32
    return %arg0, %c0_i32 : i32, i32
  }
  func.func @transform_1(%arg0: i32) -> (i32, i32) {
    %c0_i32 = arith.constant 0 : i32
    %c0_i32_0 = arith.constant 0 : i32
    %c0_i32_1 = arith.constant 0 : i32
    return %c0_i32, %c0_i32_0 : i32, i32
  }
  func.func @transform_2(%arg0: i32) -> (i32, i32) {
    %c0_i32 = arith.constant 0 : i32
    %c0_i32_0 = arith.constant 0 : i32
    %c0_i32_1 = arith.constant 0 : i32
    return %c0_i32, %c0_i32_0 : i32, i32
  }
  func.func @transform_3(%arg0: i32) -> (i32, i32) {
    %c0_i32 = arith.constant 0 : i32
    %c0_i32_0 = arith.constant 0 : i32
    return %arg0, %c0_i32 : i32, i32
  }
}

module attributes {stable_mosaic.version = 11 : i64} {
  func.func @gemm_bias_kernel(%arg0: i32, %arg1: memref<128x1152xbf16, #tpu.memory_space<vmem>>, %arg2: memref<1152x128xbf16, #tpu.memory_space<vmem>>, %arg3: memref<1x128xf32, #tpu.memory_space<vmem>>, %arg4: memref<128x128xbf16, #tpu.memory_space<vmem>>) attributes {dimension_semantics = [#tpu.dimension_semantics<parallel>], iteration_bounds = array<i64: 1>, scalar_prefetch = 0 : i64, scratch_operands = 0 : i64, tpu.core_type = #tpu.core_type<tc>, window_params = [{transform_indices = @transform_0, window_bounds = array<i64: 128, 1152>}, {pipeline_mode = #tpu.pipeline_mode<synchronous>, transform_indices = @transform_1, window_bounds = array<i64: 1152, 128>}, {pipeline_mode = #tpu.pipeline_mode<synchronous>, transform_indices = @transform_2, window_bounds = array<i64: 1, 128>}, {transform_indices = @transform_3, window_bounds = array<i64: 128, 128>}]} {
    %c0 = arith.constant 0 : index
    %c0_0 = arith.constant 0 : index
    %0 = vector.load %arg1[%c0, %c0_0] : memref<128x1152xbf16, #tpu.memory_space<vmem>>, vector<128x1152xbf16>
    %c0_1 = arith.constant 0 : index
    %c0_2 = arith.constant 0 : index
    %1 = vector.load %arg2[%c0_1, %c0_2] : memref<1152x128xbf16, #tpu.memory_space<vmem>>, vector<1152x128xbf16>
    %cst = arith.constant dense<0.000000e+00> : vector<128x128xf32>
    %2 = tpu.matmul %0, %1, %cst {dimension_numbers = #tpu.dot_dimension_numbers<[1], [0], [0], [1], [0, 0, 1, 1], [], []>} : vector<128x1152xbf16>, vector<1152x128xbf16>, vector<128x128xf32> -> vector<128x128xf32>
    %c0_3 = arith.constant 0 : index
    %c0_4 = arith.constant 0 : index
    %3 = vector.load %arg3[%c0_3, %c0_4] : memref<1x128xf32, #tpu.memory_space<vmem>>, vector<1x128xf32>
    %4 = vector.broadcast %3 : vector<1x128xf32> to vector<128x128xf32>
    %5 = arith.addf %2, %4 : vector<128x128xf32>
    %cst_5 = arith.constant 0.000000e+00 : f32
    %6 = vector.broadcast %cst_5 : f32 to vector<128x128xf32>
    %7 = arith.maximumf %5, %6 : vector<128x128xf32>
    %8 = arith.truncf %7 : vector<128x128xf32> to vector<128x128xbf16>
    %c0_6 = arith.constant 0 : index
    %c0_7 = arith.constant 0 : index
    %9 = vector.load %arg4[%c0_6, %c0_7] : memref<128x128xbf16, #tpu.memory_space<vmem>>, vector<128x128xbf16>
    tpu.vector_store %arg4[%c0_6, %c0_7], %8 {strides = array<i32>} : memref<128x128xbf16, #tpu.memory_space<vmem>>, vector<128x128xbf16>,
    return
  }
  func.func @transform_0(%arg0: i32) -> (i32, i32) {
    %c0_i32 = arith.constant 0 : i32
    %c0_i32_0 = arith.constant 0 : i32
    return %arg0, %c0_i32 : i32, i32
  }
  func.func @transform_1(%arg0: i32) -> (i32, i32) {
    %c0_i32 = arith.constant 0 : i32
    %c0_i32_0 = arith.constant 0 : i32
    %c0_i32_1 = arith.constant 0 : i32
    return %c0_i32, %c0_i32_0 : i32, i32
  }
  func.func @transform_2(%arg0: i32) -> (i32, i32) {
    %c0_i32 = arith.constant 0 : i32
    %c0_i32_0 = arith.constant 0 : i32
    %c0_i32_1 = arith.constant 0 : i32
    return %c0_i32, %c0_i32_0 : i32, i32
  }
  func.func @transform_3(%arg0: i32) -> (i32, i32) {
    %c0_i32 = arith.constant 0 : i32
    %c0_i32_0 = arith.constant 0 : i32
    return %arg0, %c0_i32 : i32, i32
  }
}

module attributes {stable_mosaic.version = 11 : i64} {
  func.func @gemm_bias_res_kernel(%arg0: i32, %arg1: memref<128x1152xbf16, #tpu.memory_space<vmem>>, %arg2: memref<1152x128xbf16, #tpu.memory_space<vmem>>, %arg3: memref<1x128xf32, #tpu.memory_space<vmem>>, %arg4: memref<128x128xbf16, #tpu.memory_space<vmem>>, %arg5: memref<128x128xbf16, #tpu.memory_space<vmem>>) attributes {dimension_semantics = [#tpu.dimension_semantics<parallel>], iteration_bounds = array<i64: 1>, scalar_prefetch = 0 : i64, scratch_operands = 0 : i64, tpu.core_type = #tpu.core_type<tc>, window_params = [{transform_indices = @transform_0, window_bounds = array<i64: 128, 1152>}, {pipeline_mode = #tpu.pipeline_mode<synchronous>, transform_indices = @transform_1, window_bounds = array<i64: 1152, 128>}, {pipeline_mode = #tpu.pipeline_mode<synchronous>, transform_indices = @transform_2, window_bounds = array<i64: 1, 128>}, {transform_indices = @transform_3, window_bounds = array<i64: 128, 128>}, {transform_indices = @transform_4, window_bounds = array<i64: 128, 128>}]} {
    %c0 = arith.constant 0 : index
    %c0_0 = arith.constant 0 : index
    %0 = vector.load %arg1[%c0, %c0_0] : memref<128x1152xbf16, #tpu.memory_space<vmem>>, vector<128x1152xbf16>
    %c0_1 = arith.constant 0 : index
    %c0_2 = arith.constant 0 : index
    %1 = vector.load %arg2[%c0_1, %c0_2] : memref<1152x128xbf16, #tpu.memory_space<vmem>>, vector<1152x128xbf16>
    %cst = arith.constant dense<0.000000e+00> : vector<128x128xf32>
    %2 = tpu.matmul %0, %1, %cst {dimension_numbers = #tpu.dot_dimension_numbers<[1], [0], [0], [1], [0, 0, 1, 1], [], []>} : vector<128x1152xbf16>, vector<1152x128xbf16>, vector<128x128xf32> -> vector<128x128xf32>
    %c0_3 = arith.constant 0 : index
    %c0_4 = arith.constant 0 : index
    %3 = vector.load %arg3[%c0_3, %c0_4] : memref<1x128xf32, #tpu.memory_space<vmem>>, vector<1x128xf32>
    %4 = vector.broadcast %3 : vector<1x128xf32> to vector<128x128xf32>
    %5 = arith.addf %2, %4 : vector<128x128xf32>
    %c0_5 = arith.constant 0 : index
    %c0_6 = arith.constant 0 : index
    %6 = vector.load %arg4[%c0_5, %c0_6] : memref<128x128xbf16, #tpu.memory_space<vmem>>, vector<128x128xbf16>
    %7 = arith.extf %6 : vector<128x128xbf16> to vector<128x128xf32>
    %8 = arith.addf %5, %7 : vector<128x128xf32>
    %cst_7 = arith.constant 0.000000e+00 : f32
    %9 = vector.broadcast %cst_7 : f32 to vector<128x128xf32>
    %10 = arith.maximumf %8, %9 : vector<128x128xf32>
    %11 = arith.truncf %10 : vector<128x128xf32> to vector<128x128xbf16>
    %c0_8 = arith.constant 0 : index
    %c0_9 = arith.constant 0 : index
    %12 = vector.load %arg5[%c0_8, %c0_9] : memref<128x128xbf16, #tpu.memory_space<vmem>>, vector<128x128xbf16>
    tpu.vector_store %arg5[%c0_8, %c0_9], %11 {strides = array<i32>} : memref<128x128xbf16, #tpu.memory_space<vmem>>, vector<128x128xbf16>,
    return
  }
  func.func @transform_0(%arg0: i32) -> (i32, i32) {
    %c0_i32 = arith.constant 0 : i32
    %c0_i32_0 = arith.constant 0 : i32
    return %arg0, %c0_i32 : i32, i32
  }
  func.func @transform_1(%arg0: i32) -> (i32, i32) {
    %c0_i32 = arith.constant 0 : i32
    %c0_i32_0 = arith.constant 0 : i32
    %c0_i32_1 = arith.constant 0 : i32
    return %c0_i32, %c0_i32_0 : i32, i32
  }
  func.func @transform_2(%arg0: i32) -> (i32, i32) {
    %c0_i32 = arith.constant 0 : i32
    %c0_i32_0 = arith.constant 0 : i32
    %c0_i32_1 = arith.constant 0 : i32
    return %c0_i32, %c0_i32_0 : i32, i32
  }
  func.func @transform_3(%arg0: i32) -> (i32, i32) {
    %c0_i32 = arith.constant 0 : i32
    %c0_i32_0 = arith.constant 0 : i32
    return %arg0, %c0_i32 : i32, i32
  }
  func.func @transform_4(%arg0: i32) -> (i32, i32) {
    %c0_i32 = arith.constant 0 : i32
    %c0_i32_0 = arith.constant 0 : i32
    return %arg0, %c0_i32 : i32, i32
  }
}

module attributes {stable_mosaic.version = 11 : i64} {
  func.func @gemm_bias_kernel(%arg0: i32, %arg1: memref<32x1152xbf16, #tpu.memory_space<vmem>>, %arg2: memref<1152x128xbf16, #tpu.memory_space<vmem>>, %arg3: memref<1x128xf32, #tpu.memory_space<vmem>>, %arg4: memref<32x128xbf16, #tpu.memory_space<vmem>>) attributes {dimension_semantics = [#tpu.dimension_semantics<parallel>], iteration_bounds = array<i64: 1>, scalar_prefetch = 0 : i64, scratch_operands = 0 : i64, tpu.core_type = #tpu.core_type<tc>, window_params = [{transform_indices = @transform_0, window_bounds = array<i64: 32, 1152>}, {pipeline_mode = #tpu.pipeline_mode<synchronous>, transform_indices = @transform_1, window_bounds = array<i64: 1152, 128>}, {pipeline_mode = #tpu.pipeline_mode<synchronous>, transform_indices = @transform_2, window_bounds = array<i64: 1, 128>}, {transform_indices = @transform_3, window_bounds = array<i64: 32, 128>}]} {
    %c0 = arith.constant 0 : index
    %c0_0 = arith.constant 0 : index
    %0 = vector.load %arg1[%c0, %c0_0] : memref<32x1152xbf16, #tpu.memory_space<vmem>>, vector<32x1152xbf16>
    %c0_1 = arith.constant 0 : index
    %c0_2 = arith.constant 0 : index
    %1 = vector.load %arg2[%c0_1, %c0_2] : memref<1152x128xbf16, #tpu.memory_space<vmem>>, vector<1152x128xbf16>
    %cst = arith.constant dense<0.000000e+00> : vector<32x128xf32>
    %2 = tpu.matmul %0, %1, %cst {dimension_numbers = #tpu.dot_dimension_numbers<[1], [0], [0], [1], [0, 0, 1, 1], [], []>} : vector<32x1152xbf16>, vector<1152x128xbf16>, vector<32x128xf32> -> vector<32x128xf32>
    %c0_3 = arith.constant 0 : index
    %c0_4 = arith.constant 0 : index
    %3 = vector.load %arg3[%c0_3, %c0_4] : memref<1x128xf32, #tpu.memory_space<vmem>>, vector<1x128xf32>
    %4 = vector.broadcast %3 : vector<1x128xf32> to vector<32x128xf32>
    %5 = arith.addf %2, %4 : vector<32x128xf32>
    %cst_5 = arith.constant 0.000000e+00 : f32
    %6 = vector.broadcast %cst_5 : f32 to vector<32x128xf32>
    %7 = arith.maximumf %5, %6 : vector<32x128xf32>
    %8 = arith.truncf %7 : vector<32x128xf32> to vector<32x128xbf16>
    %c0_6 = arith.constant 0 : index
    %c0_7 = arith.constant 0 : index
    %9 = vector.load %arg4[%c0_6, %c0_7] : memref<32x128xbf16, #tpu.memory_space<vmem>>, vector<32x128xbf16>
    tpu.vector_store %arg4[%c0_6, %c0_7], %8 {strides = array<i32>} : memref<32x128xbf16, #tpu.memory_space<vmem>>, vector<32x128xbf16>,
    return
  }
  func.func @transform_0(%arg0: i32) -> (i32, i32) {
    %c0_i32 = arith.constant 0 : i32
    %c0_i32_0 = arith.constant 0 : i32
    return %arg0, %c0_i32 : i32, i32
  }
  func.func @transform_1(%arg0: i32) -> (i32, i32) {
    %c0_i32 = arith.constant 0 : i32
    %c0_i32_0 = arith.constant 0 : i32
    %c0_i32_1 = arith.constant 0 : i32
    return %c0_i32, %c0_i32_0 : i32, i32
  }
  func.func @transform_2(%arg0: i32) -> (i32, i32) {
    %c0_i32 = arith.constant 0 : i32
    %c0_i32_0 = arith.constant 0 : i32
    %c0_i32_1 = arith.constant 0 : i32
    return %c0_i32, %c0_i32_0 : i32, i32
  }
  func.func @transform_3(%arg0: i32) -> (i32, i32) {
    %c0_i32 = arith.constant 0 : i32
    %c0_i32_0 = arith.constant 0 : i32
    return %arg0, %c0_i32 : i32, i32
  }
}

module attributes {stable_mosaic.version = 11 : i64} {
  func.func @gemm_bias_kernel(%arg0: i32, %arg1: memref<32x128xbf16, #tpu.memory_space<vmem>>, %arg2: memref<128x128xbf16, #tpu.memory_space<vmem>>, %arg3: memref<1x128xf32, #tpu.memory_space<vmem>>, %arg4: memref<32x128xbf16, #tpu.memory_space<vmem>>) attributes {dimension_semantics = [#tpu.dimension_semantics<parallel>], iteration_bounds = array<i64: 1>, scalar_prefetch = 0 : i64, scratch_operands = 0 : i64, tpu.core_type = #tpu.core_type<tc>, window_params = [{transform_indices = @transform_0, window_bounds = array<i64: 32, 128>}, {pipeline_mode = #tpu.pipeline_mode<synchronous>, transform_indices = @transform_1, window_bounds = array<i64: 128, 128>}, {pipeline_mode = #tpu.pipeline_mode<synchronous>, transform_indices = @transform_2, window_bounds = array<i64: 1, 128>}, {transform_indices = @transform_3, window_bounds = array<i64: 32, 128>}]} {
    %c0 = arith.constant 0 : index
    %c0_0 = arith.constant 0 : index
    %0 = vector.load %arg1[%c0, %c0_0] : memref<32x128xbf16, #tpu.memory_space<vmem>>, vector<32x128xbf16>
    %c0_1 = arith.constant 0 : index
    %c0_2 = arith.constant 0 : index
    %1 = vector.load %arg2[%c0_1, %c0_2] : memref<128x128xbf16, #tpu.memory_space<vmem>>, vector<128x128xbf16>
    %cst = arith.constant dense<0.000000e+00> : vector<32x128xf32>
    %2 = tpu.matmul %0, %1, %cst {dimension_numbers = #tpu.dot_dimension_numbers<[1], [0], [0], [1], [0, 0, 1, 1], [], []>} : vector<32x128xbf16>, vector<128x128xbf16>, vector<32x128xf32> -> vector<32x128xf32>
    %c0_3 = arith.constant 0 : index
    %c0_4 = arith.constant 0 : index
    %3 = vector.load %arg3[%c0_3, %c0_4] : memref<1x128xf32, #tpu.memory_space<vmem>>, vector<1x128xf32>
    %4 = vector.broadcast %3 : vector<1x128xf32> to vector<32x128xf32>
    %5 = arith.addf %2, %4 : vector<32x128xf32>
    %6 = arith.truncf %5 : vector<32x128xf32> to vector<32x128xbf16>
    %c0_5 = arith.constant 0 : index
    %c0_6 = arith.constant 0 : index
    %7 = vector.load %arg4[%c0_5, %c0_6] : memref<32x128xbf16, #tpu.memory_space<vmem>>, vector<32x128xbf16>
    tpu.vector_store %arg4[%c0_5, %c0_6], %6 {strides = array<i32>} : memref<32x128xbf16, #tpu.memory_space<vmem>>, vector<32x128xbf16>,
    return
  }
  func.func @transform_0(%arg0: i32) -> (i32, i32) {
    %c0_i32 = arith.constant 0 : i32
    %c0_i32_0 = arith.constant 0 : i32
    return %arg0, %c0_i32 : i32, i32
  }
  func.func @transform_1(%arg0: i32) -> (i32, i32) {
    %c0_i32 = arith.constant 0 : i32
    %c0_i32_0 = arith.constant 0 : i32
    %c0_i32_1 = arith.constant 0 : i32
    return %c0_i32, %c0_i32_0 : i32, i32
  }
  func.func @transform_2(%arg0: i32) -> (i32, i32) {
    %c0_i32 = arith.constant 0 : i32
    %c0_i32_0 = arith.constant 0 : i32
    %c0_i32_1 = arith.constant 0 : i32
    return %c0_i32, %c0_i32_0 : i32, i32
  }
  func.func @transform_3(%arg0: i32) -> (i32, i32) {
    %c0_i32 = arith.constant 0 : i32
    %c0_i32_0 = arith.constant 0 : i32
    return %arg0, %c0_i32 : i32, i32
  }
}

module attributes {stable_mosaic.version = 11 : i64} {
  func.func @gemm_bias_res_kernel(%arg0: i32, %arg1: memref<32x1152xbf16, #tpu.memory_space<vmem>>, %arg2: memref<1152x128xbf16, #tpu.memory_space<vmem>>, %arg3: memref<1x128xf32, #tpu.memory_space<vmem>>, %arg4: memref<32x128xbf16, #tpu.memory_space<vmem>>, %arg5: memref<32x128xbf16, #tpu.memory_space<vmem>>) attributes {dimension_semantics = [#tpu.dimension_semantics<parallel>], iteration_bounds = array<i64: 1>, scalar_prefetch = 0 : i64, scratch_operands = 0 : i64, tpu.core_type = #tpu.core_type<tc>, window_params = [{transform_indices = @transform_0, window_bounds = array<i64: 32, 1152>}, {pipeline_mode = #tpu.pipeline_mode<synchronous>, transform_indices = @transform_1, window_bounds = array<i64: 1152, 128>}, {pipeline_mode = #tpu.pipeline_mode<synchronous>, transform_indices = @transform_2, window_bounds = array<i64: 1, 128>}, {transform_indices = @transform_3, window_bounds = array<i64: 32, 128>}, {transform_indices = @transform_4, window_bounds = array<i64: 32, 128>}]} {
    %c0 = arith.constant 0 : index
    %c0_0 = arith.constant 0 : index
    %0 = vector.load %arg1[%c0, %c0_0] : memref<32x1152xbf16, #tpu.memory_space<vmem>>, vector<32x1152xbf16>
    %c0_1 = arith.constant 0 : index
    %c0_2 = arith.constant 0 : index
    %1 = vector.load %arg2[%c0_1, %c0_2] : memref<1152x128xbf16, #tpu.memory_space<vmem>>, vector<1152x128xbf16>
    %cst = arith.constant dense<0.000000e+00> : vector<32x128xf32>
    %2 = tpu.matmul %0, %1, %cst {dimension_numbers = #tpu.dot_dimension_numbers<[1], [0], [0], [1], [0, 0, 1, 1], [], []>} : vector<32x1152xbf16>, vector<1152x128xbf16>, vector<32x128xf32> -> vector<32x128xf32>
    %c0_3 = arith.constant 0 : index
    %c0_4 = arith.constant 0 : index
    %3 = vector.load %arg3[%c0_3, %c0_4] : memref<1x128xf32, #tpu.memory_space<vmem>>, vector<1x128xf32>
    %4 = vector.broadcast %3 : vector<1x128xf32> to vector<32x128xf32>
    %5 = arith.addf %2, %4 : vector<32x128xf32>
    %c0_5 = arith.constant 0 : index
    %c0_6 = arith.constant 0 : index
    %6 = vector.load %arg4[%c0_5, %c0_6] : memref<32x128xbf16, #tpu.memory_space<vmem>>, vector<32x128xbf16>
    %7 = arith.extf %6 : vector<32x128xbf16> to vector<32x128xf32>
    %8 = arith.addf %5, %7 : vector<32x128xf32>
    %cst_7 = arith.constant 0.000000e+00 : f32
    %9 = vector.broadcast %cst_7 : f32 to vector<32x128xf32>
    %10 = arith.maximumf %8, %9 : vector<32x128xf32>
    %11 = arith.truncf %10 : vector<32x128xf32> to vector<32x128xbf16>
    %c0_8 = arith.constant 0 : index
    %c0_9 = arith.constant 0 : index
    %12 = vector.load %arg5[%c0_8, %c0_9] : memref<32x128xbf16, #tpu.memory_space<vmem>>, vector<32x128xbf16>
    tpu.vector_store %arg5[%c0_8, %c0_9], %11 {strides = array<i32>} : memref<32x128xbf16, #tpu.memory_space<vmem>>, vector<32x128xbf16>,
    return
  }
  func.func @transform_0(%arg0: i32) -> (i32, i32) {
    %c0_i32 = arith.constant 0 : i32
    %c0_i32_0 = arith.constant 0 : i32
    return %arg0, %c0_i32 : i32, i32
  }
  func.func @transform_1(%arg0: i32) -> (i32, i32) {
    %c0_i32 = arith.constant 0 : i32
    %c0_i32_0 = arith.constant 0 : i32
    %c0_i32_1 = arith.constant 0 : i32
    return %c0_i32, %c0_i32_0 : i32, i32
  }
  func.func @transform_2(%arg0: i32) -> (i32, i32) {
    %c0_i32 = arith.constant 0 : i32
    %c0_i32_0 = arith.constant 0 : i32
    %c0_i32_1 = arith.constant 0 : i32
    return %c0_i32, %c0_i32_0 : i32, i32
  }
  func.func @transform_3(%arg0: i32) -> (i32, i32) {
    %c0_i32 = arith.constant 0 : i32
    %c0_i32_0 = arith.constant 0 : i32
    return %arg0, %c0_i32 : i32, i32
  }
  func.func @transform_4(%arg0: i32) -> (i32, i32) {
    %c0_i32 = arith.constant 0 : i32
    %c0_i32_0 = arith.constant 0 : i32
    return %arg0, %c0_i32 : i32, i32
  }
}

module attributes {stable_mosaic.version = 11 : i64} {
  func.func @gemm_bias_kernel(%arg0: i32, %arg1: memref<256x1152xbf16, #tpu.memory_space<vmem>>, %arg2: memref<1152x128xbf16, #tpu.memory_space<vmem>>, %arg3: memref<1x128xf32, #tpu.memory_space<vmem>>, %arg4: memref<256x128xbf16, #tpu.memory_space<vmem>>) attributes {dimension_semantics = [#tpu.dimension_semantics<parallel>], iteration_bounds = array<i64: 2>, scalar_prefetch = 0 : i64, scratch_operands = 0 : i64, tpu.core_type = #tpu.core_type<tc>, window_params = [{transform_indices = @transform_0, window_bounds = array<i64: 256, 1152>}, {pipeline_mode = #tpu.pipeline_mode<synchronous>, transform_indices = @transform_1, window_bounds = array<i64: 1152, 128>}, {pipeline_mode = #tpu.pipeline_mode<synchronous>, transform_indices = @transform_2, window_bounds = array<i64: 1, 128>}, {transform_indices = @transform_3, window_bounds = array<i64: 256, 128>}]} {
    %c0 = arith.constant 0 : index
    %c0_0 = arith.constant 0 : index
    %0 = vector.load %arg1[%c0, %c0_0] : memref<256x1152xbf16, #tpu.memory_space<vmem>>, vector<256x1152xbf16>
    %c0_1 = arith.constant 0 : index
    %c0_2 = arith.constant 0 : index
    %1 = vector.load %arg2[%c0_1, %c0_2] : memref<1152x128xbf16, #tpu.memory_space<vmem>>, vector<1152x128xbf16>
    %cst = arith.constant dense<0.000000e+00> : vector<256x128xf32>
    %2 = tpu.matmul %0, %1, %cst {dimension_numbers = #tpu.dot_dimension_numbers<[1], [0], [0], [1], [0, 0, 1, 1], [], []>} : vector<256x1152xbf16>, vector<1152x128xbf16>, vector<256x128xf32> -> vector<256x128xf32>
    %c0_3 = arith.constant 0 : index
    %c0_4 = arith.constant 0 : index
    %3 = vector.load %arg3[%c0_3, %c0_4] : memref<1x128xf32, #tpu.memory_space<vmem>>, vector<1x128xf32>
    %4 = vector.broadcast %3 : vector<1x128xf32> to vector<256x128xf32>
    %5 = arith.addf %2, %4 : vector<256x128xf32>
    %cst_5 = arith.constant 0.000000e+00 : f32
    %6 = vector.broadcast %cst_5 : f32 to vector<256x128xf32>
    %7 = arith.maximumf %5, %6 : vector<256x128xf32>
    %8 = arith.truncf %7 : vector<256x128xf32> to vector<256x128xbf16>
    %c0_6 = arith.constant 0 : index
    %c0_7 = arith.constant 0 : index
    %9 = vector.load %arg4[%c0_6, %c0_7] : memref<256x128xbf16, #tpu.memory_space<vmem>>, vector<256x128xbf16>
    tpu.vector_store %arg4[%c0_6, %c0_7], %8 {strides = array<i32>} : memref<256x128xbf16, #tpu.memory_space<vmem>>, vector<256x128xbf16>,
    return
  }
  func.func @transform_0(%arg0: i32) -> (i32, i32) {
    %c0_i32 = arith.constant 0 : i32
    %c0_i32_0 = arith.constant 0 : i32
    return %arg0, %c0_i32 : i32, i32
  }
  func.func @transform_1(%arg0: i32) -> (i32, i32) {
    %c0_i32 = arith.constant 0 : i32
    %c0_i32_0 = arith.constant 0 : i32
    %c0_i32_1 = arith.constant 0 : i32
    return %c0_i32, %c0_i32_0 : i32, i32
  }
  func.func @transform_2(%arg0: i32) -> (i32, i32) {
    %c0_i32 = arith.constant 0 : i32
    %c0_i32_0 = arith.constant 0 : i32
    %c0_i32_1 = arith.constant 0 : i32
    return %c0_i32, %c0_i32_0 : i32, i32
  }
  func.func @transform_3(%arg0: i32) -> (i32, i32) {
    %c0_i32 = arith.constant 0 : i32
    %c0_i32_0 = arith.constant 0 : i32
    return %arg0, %c0_i32 : i32, i32
  }
}

module attributes {stable_mosaic.version = 11 : i64} {
  func.func @gemm_bias_kernel(%arg0: i32, %arg1: memref<256x1152xbf16, #tpu.memory_space<vmem>>, %arg2: memref<1152x128xbf16, #tpu.memory_space<vmem>>, %arg3: memref<1x128xf32, #tpu.memory_space<vmem>>, %arg4: memref<256x128xbf16, #tpu.memory_space<vmem>>) attributes {dimension_semantics = [#tpu.dimension_semantics<parallel>], iteration_bounds = array<i64: 2>, scalar_prefetch = 0 : i64, scratch_operands = 0 : i64, tpu.core_type = #tpu.core_type<tc>, window_params = [{transform_indices = @transform_0, window_bounds = array<i64: 256, 1152>}, {pipeline_mode = #tpu.pipeline_mode<synchronous>, transform_indices = @transform_1, window_bounds = array<i64: 1152, 128>}, {pipeline_mode = #tpu.pipeline_mode<synchronous>, transform_indices = @transform_2, window_bounds = array<i64: 1, 128>}, {transform_indices = @transform_3, window_bounds = array<i64: 256, 128>}]} {
    %c0 = arith.constant 0 : index
    %c0_0 = arith.constant 0 : index
    %0 = vector.load %arg1[%c0, %c0_0] : memref<256x1152xbf16, #tpu.memory_space<vmem>>, vector<256x1152xbf16>
    %c0_1 = arith.constant 0 : index
    %c0_2 = arith.constant 0 : index
    %1 = vector.load %arg2[%c0_1, %c0_2] : memref<1152x128xbf16, #tpu.memory_space<vmem>>, vector<1152x128xbf16>
    %cst = arith.constant dense<0.000000e+00> : vector<256x128xf32>
    %2 = tpu.matmul %0, %1, %cst {dimension_numbers = #tpu.dot_dimension_numbers<[1], [0], [0], [1], [0, 0, 1, 1], [], []>} : vector<256x1152xbf16>, vector<1152x128xbf16>, vector<256x128xf32> -> vector<256x128xf32>
    %c0_3 = arith.constant 0 : index
    %c0_4 = arith.constant 0 : index
    %3 = vector.load %arg3[%c0_3, %c0_4] : memref<1x128xf32, #tpu.memory_space<vmem>>, vector<1x128xf32>
    %4 = vector.broadcast %3 : vector<1x128xf32> to vector<256x128xf32>
    %5 = arith.addf %2, %4 : vector<256x128xf32>
    %6 = arith.truncf %5 : vector<256x128xf32> to vector<256x128xbf16>
    %c0_5 = arith.constant 0 : index
    %c0_6 = arith.constant 0 : index
    %7 = vector.load %arg4[%c0_5, %c0_6] : memref<256x128xbf16, #tpu.memory_space<vmem>>, vector<256x128xbf16>
    tpu.vector_store %arg4[%c0_5, %c0_6], %6 {strides = array<i32>} : memref<256x128xbf16, #tpu.memory_space<vmem>>, vector<256x128xbf16>,
    return
  }
  func.func @transform_0(%arg0: i32) -> (i32, i32) {
    %c0_i32 = arith.constant 0 : i32
    %c0_i32_0 = arith.constant 0 : i32
    return %arg0, %c0_i32 : i32, i32
  }
  func.func @transform_1(%arg0: i32) -> (i32, i32) {
    %c0_i32 = arith.constant 0 : i32
    %c0_i32_0 = arith.constant 0 : i32
    %c0_i32_1 = arith.constant 0 : i32
    return %c0_i32, %c0_i32_0 : i32, i32
  }
  func.func @transform_2(%arg0: i32) -> (i32, i32) {
    %c0_i32 = arith.constant 0 : i32
    %c0_i32_0 = arith.constant 0 : i32
    %c0_i32_1 = arith.constant 0 : i32
    return %c0_i32, %c0_i32_0 : i32, i32
  }
  func.func @transform_3(%arg0: i32) -> (i32, i32) {
    %c0_i32 = arith.constant 0 : i32
    %c0_i32_0 = arith.constant 0 : i32
    return %arg0, %c0_i32 : i32, i32
  }
}

</mosaic_0001>

<llo_original>
// kernel: colorization_net.15
$region0: #{colorization_net.15}
  #allocation0 [shape = 'u32[]', space=smem, size = 0x4, offset = 0x4, fixed_abs, tag = 'smem constant byte address 0x4 - core index']
  #allocation1 [shape = 'u32[144,128]{1,0:T(1,128)}', space=vmem, size = 0x12000, scoped, tag = 'internal scratch']
  %s0 = inlined_call_operand.vmem [shape: bf16[512,256], index: 0, kind: input, shape index: {}]
  %s1 = inlined_call_operand.vmem [shape: bf16[256,128], index: 1, kind: input, shape index: {}]
  %s2 = inlined_call_operand.vmem [shape: f32[1,128], index: 2, kind: input, shape index: {}]
  %s3 = inlined_call_operand.vmem [shape: bf16[512,128], index: 3, kind: output, shape index: {}]
  %s4 = sld [smem:[#allocation0]]
  $region45: #{colorization_net.15} parent=0
    _
  %s6 = ssub.s32 1, %s4
  %s7 = scalar_select 0, %s6, %s4
  loop: start=0, step=1, limit=4
  $region2: #{colorization_net.15} parent=0 // loop_pre_header
    _
  $region3: #{colorization_net.15} parent=0 // loop_header
    %s9 = sphi 0, %s13
    %p10 = scmp.ge.s32.totalorder %s9, 4
    %s19 = sphi 0, %s21
    %s22 = sphi 0, %s19
    %s23 = sphi 0, %s22
    %s39 = sphi 0, %s23
    %s43 = sphi 0, %s43
    %s45 = sphi 0, %s43
    %s46 = sphi 0, %s45
    %s60 = sphi 0, %s46
    %s64 = sphi 0, %s64
    %s66 = sphi 0, %s64
    %s67 = sphi 0, %s66
    %s81 = sphi 0, %s67
    %s87 = sphi 0, %s89
    %s90 = sphi 0, %s87
    %s91 = sphi 0, %s90
    %s107 = sphi 0, %s91
  $region4: #{colorization_net.15} parent=0 // loop_header_branch
    %12 = sbr.rel (%p10) target = $region8
  $region5: #{colorization_net.15} parent=0 // loop_body
    %s14 = ssub.s32 %s9, 1
    %s15 = ssub.s32 %s9, 2
    %s16 = sadd.s32 %s9, 1
    %s17 = ssub.s32 %s9, %s16
    %p18 = scmp.eq.s32.totalorder %s17, 0
    %s20 = sadd.s32 %s19, 1
    %s21 = scalar_select %p18, %s19, %s20
    %p24 = pneg %p18
    %p25 = scmp.eq.s32.totalorder %s9, 1
    %p26 = por %p24, %p25
    %p27 = scmp.ne.s32.totalorder %s19, %s22
    %p28 = scmp.eq.s32.totalorder %s9, 0
    %p29 = por %p27, %p28
    %p30 = scmp.ne.s32.totalorder %s19, %s22
    %p31 = scmp.eq.s32.totalorder %s14, 1
    %p32 = por %p30, %p31
    %p33 = scmp.ne.s32.totalorder %s22, %s23
    %p34 = scmp.eq.s32.totalorder %s14, 0
    %p35 = por %p33, %p34
    %p36 = scmp.ne.s32.totalorder %s22, %s23
    %p37 = scmp.eq.s32.totalorder %s15, 1
    %p38 = por %p36, %p37
    %p40 = scmp.ne.s32.totalorder %s23, %s39
    %p41 = scmp.eq.s32.totalorder %s15, 0
    %p42 = por %p40, %p41
    %s44 = sadd.s32 %s43, 1
    %p47 = scmp.eq.s32.totalorder %s9, 1
    %p48 = scmp.ne.s32.totalorder %s43, %s45
    %p49 = scmp.eq.s32.totalorder %s9, 0
    %p50 = por %p48, %p49
    %p51 = scmp.ne.s32.totalorder %s43, %s45
    %p52 = scmp.eq.s32.totalorder %s14, 1
    %p53 = por %p51, %p52
    %p54 = scmp.ne.s32.totalorder %s45, %s46
    %p55 = scmp.eq.s32.totalorder %s14, 0
    %p56 = por %p54, %p55
    %p57 = scmp.ne.s32.totalorder %s45, %s46
    %p58 = scmp.eq.s32.totalorder %s15, 1
    %p59 = por %p57, %p58
    %p61 = scmp.ne.s32.totalorder %s46, %s60
    %p62 = scmp.eq.s32.totalorder %s15, 0
    %p63 = por %p61, %p62
    %s65 = sadd.s32 %s64, 1
    %p68 = scmp.eq.s32.totalorder %s9, 1
    %p69 = scmp.ne.s32.totalorder %s64, %s66
    %p70 = scmp.eq.s32.totalorder %s9, 0
    %p71 = por %p69, %p70
    %p72 = scmp.ne.s32.totalorder %s64, %s66
    %p73 = scmp.eq.s32.totalorder %s14, 1
    %p74 = por %p72, %p73
    %p75 = scmp.ne.s32.totalorder %s66, %s67
    %p76 = scmp.eq.s32.totalorder %s14, 0
    %p77 = por %p75, %p76
    %p78 = scmp.ne.s32.totalorder %s66, %s67
    %p79 = scmp.eq.s32.totalorder %s15, 1
    %p80 = por %p78, %p79
    %p82 = scmp.ne.s32.totalorder %s67, %s81
    %p83 = scmp.eq.s32.totalorder %s15, 0
    %p84 = por %p82, %p83
    %s85 = ssub.s32 %s9, %s16
    %p86 = scmp.eq.s32.totalorder %s85, 0
    %s88 = sadd.s32 %s87, 1
    %s89 = scalar_select %p86, %s87, %s88
    %p92 = pneg %p86
    %p93 = scmp.eq.s32.totalorder %s9, 1
    %p94 = por %p92, %p93
    %p95 = scmp.ne.s32.totalorder %s87, %s90
    %p96 = scmp.eq.s32.totalorder %s9, 0
    %p97 = por %p95, %p96
    %p98 = scmp.ne.s32.totalorder %s87, %s90
    %p99 = scmp.eq.s32.totalorder %s14, 1
    %p100 = por %p98, %p99
    %p101 = scmp.ne.s32.totalorder %s90, %s91
    %p102 = scmp.eq.s32.totalorder %s14, 0
    %p103 = por %p101, %p102
    %p104 = scmp.ne.s32.totalorder %s90, %s91
    %p105 = scmp.eq.s32.totalorder %s15, 1
    %p106 = por %p104, %p105
    %p108 = scmp.ne.s32.totalorder %s91, %s107
    %p109 = scmp.eq.s32.totalorder %s15, 0
    %p110 = por %p108, %p109
    %p111 = scmp.le.s32.totalorder 1, %s9
    %p112 = scmp.lt.s32.totalorder %s9, 3
    %p113 = pnand %p111, %p112
    %p114 = pneg %p113
    // Predicated region
    $region9: #{colorization_net.15} parent=5 // pred_check
      _
    $region10: #{colorization_net.15} parent=5 // pred_check_branch
      %116 = sbr.rel (%p113) target = $region12
    $region11: #{colorization_net.15} parent=5 // pred_region
      %s117 = ssub.s32 %s9, 1
      // Predicated region
      $region13: #{colorization_net.15} parent=11 // pred_check
        %p118 = pneg %p56
      $region14: #{colorization_net.15} parent=11 // pred_check_branch
        %120 = sbr.rel (%p118) target = $region16
      $region15: #{colorization_net.15} parent=11 // pred_region
        _
      $region16: #{colorization_net.15} parent=11 // pred_fallthru
        _
      // Predicated region
      $region17: #{colorization_net.15} parent=11 // pred_check
        %p121 = pneg %p77
      $region18: #{colorization_net.15} parent=11 // pred_check_branch
        %123 = sbr.rel (%p121) target = $region20
      $region19: #{colorization_net.15} parent=11 // pred_region
        _
      $region20: #{colorization_net.15} parent=11 // pred_fallthru
        _
    $region12: #{colorization_net.15} parent=5 // pred_fallthru
      _
    %p124 = scmp.lt.s32.totalorder %s9, 2
    // Predicated region
    $region21: #{colorization_net.15} parent=5 // pred_check
      %p125 = pneg %p124
    $region22: #{colorization_net.15} parent=5 // pred_check_branch
      %127 = sbr.rel (%p125) target = $region24
    $region23: #{colorization_net.15} parent=5 // pred_region
      // Predicated region
      $region25: #{colorization_net.15} parent=23 // pred_check
        %p128 = pneg %p29
      $region26: #{colorization_net.15} parent=23 // pred_check_branch
        %130 = sbr.rel (%p128) target = $region28
      $region27: #{colorization_net.15} parent=23 // pred_region
        %s131 = smul.u32 32, %s9
        %p132 = scmp.lt.s32.totalorder %s131, 63
        %s133 = scalar_select %p132, %s131, 63
        %s134 = smul.addr %s133, 2
        %s135 = smul.addr %s134, 4
        %s136 = scalar_lea.vmem %s0, %s135
        %s137 = smul.u32 32, %s9
      $region28: #{colorization_net.15} parent=23 // pred_fallthru
        _
    $region24: #{colorization_net.15} parent=5 // pred_fallthru
      _
    %p138 = scmp.le.s32.totalorder 1, %s9
    %p139 = scmp.lt.s32.totalorder %s9, 3
    %p140 = pnand %p138, %p139
    %p141 = pneg %p140
    // Predicated region
    $region29: #{colorization_net.15} parent=5 // pred_check
      _
    $region30: #{colorization_net.15} parent=5 // pred_check_branch
      %143 = sbr.rel (%p140) target = $region32
    $region31: #{colorization_net.15} parent=5 // pred_region
      %s144 = ssub.s32 %s9, 1
      %s145 = smul.u32 32, %s14
      %p146 = scmp.lt.s32.totalorder %s145, 63
      %s147 = scalar_select %p146, %s145, 63
      %s148 = smul.addr %s147, 2
      %s149 = smul.addr %s148, 4
      %s150 = scalar_lea.vmem %s0, %s149
      %p151 = pneg %p35
      %p152 = pneg %p32
      %p153 = pneg %p56
      %p154 = pneg %p53
      %p155 = pneg %p77
      %p156 = pneg %p74
      %p157 = pneg %p103
      %p158 = pneg %p100
      %s159 = smul.u32 32, %s14
      %p160 = scmp.lt.s32.totalorder %s159, 63
      %s161 = scalar_select %p160, %s159, 63
      %s162 = smul.addr %s161, 4
      %s163 = scalar_lea.vmem %s3, %s162
      %s164 = smul.u32 32, %s14
      %p165 = scmp.lt.s32.totalorder %s164, 63
      %s166 = scalar_select %p165, %s164, 63
      %s167 = smul.addr %s166, 2
      %s168 = smul.addr %s167, 4
      %s169 = scalar_lea.vmem %s0, %s168
      %s170 = smul.u32 32, %s14
      %s171 = smul.u32 32, %s14
      %p172 = scmp.lt.s32.totalorder %s171, 63
      %s173 = scalar_select %p172, %s171, 63
      %s174 = smul.addr %s173, 4
      %s175 = scalar_lea.vmem %s3, %s174
      %s176 = smul.u32 32, %s14
      %v178 = vld [vmem:[%s169] sm:$0xff]
      %v179 = vld [vmem:[%s169 + $0x8] sm:$0xff]
      %v180 = vld [vmem:[%s169 + $0x10] sm:$0xff]
      %v181 = vld [vmem:[%s169 + $0x18] sm:$0xff]
      %v182 = vld [vmem:[%s169 + $0x20] sm:$0xff]
      %v183 = vld [vmem:[%s169 + $0x28] sm:$0xff]
      %v184 = vld [vmem:[%s169 + $0x30] sm:$0xff]
      %v185 = vld [vmem:[%s169 + $0x38] sm:$0xff]
      %v186 = vld [vmem:[%s169 + $0x40] sm:$0xff]
      %v187 = vld [vmem:[%s169 + $0x48] sm:$0xff]
      %v188 = vld [vmem:[%s169 + $0x50] sm:$0xff]
      %v189 = vld [vmem:[%s169 + $0x58] sm:$0xff]
      %v190 = vld [vmem:[%s169 + $0x60] sm:$0xff]
      %v191 = vld [vmem:[%s169 + $0x68] sm:$0xff]
      %v192 = vld [vmem:[%s169 + $0x70] sm:$0xff]
      %v193 = vld [vmem:[%s169 + $0x78] sm:$0xff]
      %v194 = vld [vmem:[%s169 + $0x80] sm:$0xff]
      %v195 = vld [vmem:[%s169 + $0x88] sm:$0xff]
      %v196 = vld [vmem:[%s169 + $0x90] sm:$0xff]
      %v197 = vld [vmem:[%s169 + $0x98] sm:$0xff]
      %v198 = vld [vmem:[%s169 + $0xa0] sm:$0xff]
      %v199 = vld [vmem:[%s169 + $0xa8] sm:$0xff]
      %v200 = vld [vmem:[%s169 + $0xb0] sm:$0xff]
      %v201 = vld [vmem:[%s169 + $0xb8] sm:$0xff]
      %v202 = vld [vmem:[%s169 + $0xc0] sm:$0xff]
      %v203 = vld [vmem:[%s169 + $0xc8] sm:$0xff]
      %v204 = vld [vmem:[%s169 + $0xd0] sm:$0xff]
      %v205 = vld [vmem:[%s169 + $0xd8] sm:$0xff]
      %v206 = vld [vmem:[%s169 + $0xe0] sm:$0xff]
      %v207 = vld [vmem:[%s169 + $0xe8] sm:$0xff]
      %v208 = vld [vmem:[%s169 + $0xf0] sm:$0xff]
      %v209 = vld [vmem:[%s169 + $0xf8] sm:$0xff]
      %v210 = vld [vmem:[%s1] sm:$0xf]
      %v211 = vld [vmem:[%s1 + $0x4] sm:$0xf]
      %v212 = vld [vmem:[%s1 + $0x8] sm:$0xf]
      %v213 = vld [vmem:[%s1 + $0xc] sm:$0xf]
      %v214 = vld [vmem:[%s1 + $0x10] sm:$0xf]
      %v215 = vld [vmem:[%s1 + $0x14] sm:$0xf]
      %v216 = vld [vmem:[%s1 + $0x18] sm:$0xf]
      %v217 = vld [vmem:[%s1 + $0x1c] sm:$0xf]
      %v218 = vld [vmem:[%s1 + $0x20] sm:$0xf]
      %v219 = vld [vmem:[%s1 + $0x24] sm:$0xf]
      %v220 = vld [vmem:[%s1 + $0x28] sm:$0xf]
      %v221 = vld [vmem:[%s1 + $0x2c] sm:$0xf]
      %v222 = vld [vmem:[%s1 + $0x30] sm:$0xf]
      %v223 = vld [vmem:[%s1 + $0x34] sm:$0xf]
      %v224 = vld [vmem:[%s1 + $0x38] sm:$0xf]
      %v225 = vld [vmem:[%s1 + $0x3c] sm:$0xf]
      %v226 = vld [vmem:[%s1 + $0x40] sm:$0xf]
      %v227 = vld [vmem:[%s1 + $0x44] sm:$0xf]
      %v228 = vld [vmem:[%s1 + $0x48] sm:$0xf]
      %v229 = vld [vmem:[%s1 + $0x4c] sm:$0xf]
      %v230 = vld [vmem:[%s1 + $0x50] sm:$0xf]
      %v231 = vld [vmem:[%s1 + $0x54] sm:$0xf]
      %v232 = vld [vmem:[%s1 + $0x58] sm:$0xf]
      %v233 = vld [vmem:[%s1 + $0x5c] sm:$0xf]
      %v234 = vld [vmem:[%s1 + $0x60] sm:$0xf]
      %v235 = vld [vmem:[%s1 + $0x64] sm:$0xf]
      %v236 = vld [vmem:[%s1 + $0x68] sm:$0xf]
      %v237 = vld [vmem:[%s1 + $0x6c] sm:$0xf]
      %v238 = vld [vmem:[%s1 + $0x70] sm:$0xf]
      %v239 = vld [vmem:[%s1 + $0x74] sm:$0xf]
      %v240 = vld [vmem:[%s1 + $0x78] sm:$0xf]
      %v241 = vld [vmem:[%s1 + $0x7c] sm:$0xf]
      %v242 = vld [vmem:[%s2] sm:$0x1]
      %v244 = vlaneseq
      %v245 = vshrl.u32 %v244, 7
      %v246 = vsub.s32 0, %v245
      %v247 = vrot.slane %v242, %v246
      %v281 = vunpack.c.l.b16 %v178
      %v282 = vunpack.c.h.b16 %v178
      %v283 = vunpack.c.l.b16 %v179
      %v284 = vunpack.c.h.b16 %v179
      %v285 = vunpack.c.l.b16 %v180
      %v286 = vunpack.c.h.b16 %v180
      %v287 = vunpack.c.l.b16 %v181
      %v288 = vunpack.c.h.b16 %v181
      %v289 = vunpack.c.l.b16 %v182
      %v290 = vunpack.c.h.b16 %v182
      %v291 = vunpack.c.l.b16 %v183
      %v292 = vunpack.c.h.b16 %v183
      %v293 = vunpack.c.l.b16 %v184
      %v294 = vunpack.c.h.b16 %v184
      %v295 = vunpack.c.l.b16 %v185
      %v296 = vunpack.c.h.b16 %v185
      %v297 = vunpack.c.l.b16 %v186
      %v298 = vunpack.c.h.b16 %v186
      %v299 = vunpack.c.l.b16 %v187
      %v300 = vunpack.c.h.b16 %v187
      %v301 = vunpack.c.l.b16 %v188
      %v302 = vunpack.c.h.b16 %v188
      %v303 = vunpack.c.l.b16 %v189
      %v304 = vunpack.c.h.b16 %v189
      %v305 = vunpack.c.l.b16 %v190
      %v306 = vunpack.c.h.b16 %v190
      %v307 = vunpack.c.l.b16 %v191
      %v308 = vunpack.c.h.b16 %v191
      %v309 = vunpack.c.l.b16 %v192
      %v310 = vunpack.c.h.b16 %v192
      %v311 = vunpack.c.l.b16 %v193
      %v312 = vunpack.c.h.b16 %v193
      %v313 = vunpack.c.l.b16 %v194
      %v314 = vunpack.c.h.b16 %v194
      %v315 = vunpack.c.l.b16 %v195
      %v316 = vunpack.c.h.b16 %v195
      %v317 = vunpack.c.l.b16 %v196
      %v318 = vunpack.c.h.b16 %v196
      %v319 = vunpack.c.l.b16 %v197
      %v320 = vunpack.c.h.b16 %v197
      %v321 = vunpack.c.l.b16 %v198
      %v322 = vunpack.c.h.b16 %v198
      %v323 = vunpack.c.l.b16 %v199
      %v324 = vunpack.c.h.b16 %v199
      %v325 = vunpack.c.l.b16 %v200
      %v326 = vunpack.c.h.b16 %v200
      %v327 = vunpack.c.l.b16 %v201
      %v328 = vunpack.c.h.b16 %v201
      %v329 = vunpack.c.l.b16 %v202
      %v330 = vunpack.c.h.b16 %v202
      %v331 = vunpack.c.l.b16 %v203
      %v332 = vunpack.c.h.b16 %v203
      %v333 = vunpack.c.l.b16 %v204
      %v334 = vunpack.c.h.b16 %v204
      %v335 = vunpack.c.l.b16 %v205
      %v336 = vunpack.c.h.b16 %v205
      %v337 = vunpack.c.l.b16 %v206
      %v338 = vunpack.c.h.b16 %v206
      %v339 = vunpack.c.l.b16 %v207
      %v340 = vunpack.c.h.b16 %v207
      %v341 = vunpack.c.l.b16 %v208
      %v342 = vunpack.c.h.b16 %v208
      %v343 = vunpack.c.l.b16 %v209
      %v344 = vunpack.c.h.b16 %v209
      %v345 = vpack.c.b16 %v283, %v281
      %v346 = vpack.c.b16 %v284, %v282
      %v347 = vpack.c.b16 %v287, %v285
      %v348 = vpack.c.b16 %v288, %v286
      %v349 = vpack.c.b16 %v291, %v289
      %v350 = vpack.c.b16 %v292, %v290
      %v351 = vpack.c.b16 %v295, %v293
      %v352 = vpack.c.b16 %v296, %v294
      %v353 = vpack.c.b16 %v299, %v297
      %v354 = vpack.c.b16 %v300, %v298
      %v355 = vpack.c.b16 %v303, %v301
      %v356 = vpack.c.b16 %v304, %v302
      %v357 = vpack.c.b16 %v307, %v305
      %v358 = vpack.c.b16 %v308, %v306
      %v359 = vpack.c.b16 %v311, %v309
      %v360 = vpack.c.b16 %v312, %v310
      %v361 = vpack.c.b16 %v315, %v313
      %v362 = vpack.c.b16 %v316, %v314
      %v363 = vpack.c.b16 %v319, %v317
      %v364 = vpack.c.b16 %v320, %v318
      %v365 = vpack.c.b16 %v323, %v321
      %v366 = vpack.c.b16 %v324, %v322
      %v367 = vpack.c.b16 %v327, %v325
      %v368 = vpack.c.b16 %v328, %v326
      %v369 = vpack.c.b16 %v331, %v329
      %v370 = vpack.c.b16 %v332, %v330
      %v371 = vpack.c.b16 %v335, %v333
      %v372 = vpack.c.b16 %v336, %v334
      %v373 = vpack.c.b16 %v339, %v337
      %v374 = vpack.c.b16 %v340, %v338
      %v375 = vpack.c.b16 %v343, %v341
      %v376 = vpack.c.b16 %v344, %v342
      %v441 = vunpack.c.l.b16 %v210
      %v442 = vunpack.c.l.b16 %v211
      %v443 = vunpack.c.l.b16 %v212
      %v444 = vunpack.c.l.b16 %v213
      %v445 = vunpack.c.l.b16 %v214
      %v446 = vunpack.c.l.b16 %v215
      %v447 = vunpack.c.l.b16 %v216
      %v448 = vunpack.c.l.b16 %v217
      %v449 = vunpack.c.l.b16 %v218
      %v450 = vunpack.c.l.b16 %v219
      %v451 = vunpack.c.l.b16 %v220
      %v452 = vunpack.c.l.b16 %v221
      %v453 = vunpack.c.l.b16 %v222
      %v454 = vunpack.c.l.b16 %v223
      %v455 = vunpack.c.l.b16 %v224
      %v456 = vunpack.c.l.b16 %v225
      %v457 = vunpack.c.l.b16 %v226
      %v458 = vunpack.c.l.b16 %v227
      %v459 = vunpack.c.l.b16 %v228
      %v460 = vunpack.c.l.b16 %v229
      %v461 = vunpack.c.l.b16 %v230
      %v462 = vunpack.c.l.b16 %v231
      %v463 = vunpack.c.l.b16 %v232
      %v464 = vunpack.c.l.b16 %v233
      %v465 = vunpack.c.l.b16 %v234
      %v466 = vunpack.c.l.b16 %v235
      %v467 = vunpack.c.l.b16 %v236
      %v468 = vunpack.c.l.b16 %v237
      %v469 = vunpack.c.l.b16 %v238
      %v470 = vunpack.c.l.b16 %v239
      %v471 = vunpack.c.l.b16 %v240
      %v472 = vunpack.c.l.b16 %v241
      %v473 = vpack.c.b16 %v442, %v441
      %v474 = vpack.c.b16 %v444, %v443
      %v475 = vpack.c.b16 %v446, %v445
      %v476 = vpack.c.b16 %v448, %v447
      %v477 = vpack.c.b16 %v450, %v449
      %v478 = vpack.c.b16 %v452, %v451
      %v479 = vpack.c.b16 %v454, %v453
      %v480 = vpack.c.b16 %v456, %v455
      %v481 = vpack.c.b16 %v458, %v457
      %v482 = vpack.c.b16 %v460, %v459
      %v483 = vpack.c.b16 %v462, %v461
      %v484 = vpack.c.b16 %v464, %v463
      %v485 = vpack.c.b16 %v466, %v465
      %v486 = vpack.c.b16 %v468, %v467
      %v487 = vpack.c.b16 %v470, %v469
      %v488 = vpack.c.b16 %v472, %v471
      %505 = vmatprep.subr.bf16.mxu0 0
      %506 = vmatpush1.bf16.msra.mxu0 %v480
      %507 = vmatprep.subr.bf16.mxu0 0
      %508 = vmatpush1.bf16.msra.mxu0 %v479
      %509 = vmatprep.subr.bf16.mxu0 0
      %510 = vmatpush1.bf16.msra.mxu0 %v478
      %511 = vmatprep.subr.bf16.mxu0 0
      %512 = vmatpush1.bf16.msra.mxu0 %v477
      %513 = vmatprep.subr.bf16.mxu0 0
      %514 = vmatpush1.bf16.msra.mxu0 %v476
      %515 = vmatprep.subr.bf16.mxu0 0
      %516 = vmatpush1.bf16.msra.mxu0 %v475
      %517 = vmatprep.subr.bf16.mxu0 0
      %518 = vmatpush1.bf16.msra.mxu0 %v474
      %519 = vmatprep.subr.bf16.mxu0 0
      %520 = vmatpush1.bf16.msra.mxu0 %v473
      %521 = vmatprep.subr.bf16.mxu0 0
      %522 = vmatpush2.bf16.msra.mxu0 %v488
      %523 = vmatprep.subr.bf16.mxu0 0
      %524 = vmatpush2.bf16.msra.mxu0 %v487
      %525 = vmatprep.subr.bf16.mxu0 0
      %526 = vmatpush2.bf16.msra.mxu0 %v486
      %527 = vmatprep.subr.bf16.mxu0 0
      %528 = vmatpush2.bf16.msra.mxu0 %v485
      %529 = vmatprep.subr.bf16.mxu0 0
      %530 = vmatpush2.bf16.msra.mxu0 %v484
      %531 = vmatprep.subr.bf16.mxu0 0
      %532 = vmatpush2.bf16.msra.mxu0 %v483
      %533 = vmatprep.subr.bf16.mxu0 0
      %534 = vmatpush2.bf16.msra.mxu0 %v482
      %535 = vmatprep.subr.bf16.mxu0 0
      %536 = vmatpush2.bf16.msra.mxu0 %v481
      %537 = vmatprep.mubr.bf16.mxu0 %v346
      %538 = vmatmul.mubr.bf16.gmra.mxu0 %v345
      %v539 = vpop.f32.mrf.mxu0
      %v540 = vadd.f32 %v247, %v539
      %v541 = vpop.f32.mrf.mxu0
      %v542 = vpop.f32.mrf.mxu0
      %v543 = vadd.f32 %v247, %v542
      %v544 = vpop.f32.mrf.mxu0
      %545 = vmatprep.mubr.bf16.mxu0 %v348
      %546 = vmatmul.mubr.bf16.gmra.mxu0 %v347
      %v547 = vpop.f32.mrf.mxu0
      %v548 = vadd.f32 %v247, %v547
      %v549 = vpop.f32.mrf.mxu0
      %v550 = vpop.f32.mrf.mxu0
      %v551 = vadd.f32 %v247, %v550
      %v552 = vpop.f32.mrf.mxu0
      %553 = vmatprep.mubr.bf16.mxu0 %v350
      %554 = vmatmul.mubr.bf16.gmra.mxu0 %v349
      %v555 = vpop.f32.mrf.mxu0
      %v556 = vadd.f32 %v247, %v555
      %v557 = vpop.f32.mrf.mxu0
      %v558 = vpop.f32.mrf.mxu0
      %v559 = vadd.f32 %v247, %v558
      %v560 = vpop.f32.mrf.mxu0
      %561 = vmatprep.mubr.bf16.mxu0 %v352
      %562 = vmatmul.mubr.bf16.gmra.mxu0 %v351
      %v563 = vpop.f32.mrf.mxu0
      %v564 = vadd.f32 %v247, %v563
      %v565 = vpop.f32.mrf.mxu0
      %v566 = vpop.f32.mrf.mxu0
      %v567 = vadd.f32 %v247, %v566
      %v568 = vpop.f32.mrf.mxu0
      %569 = vmatprep.mubr.bf16.mxu0 %v354
      %570 = vmatmul.mubr.bf16.gmra.mxu0 %v353
      %v571 = vpop.f32.mrf.mxu0
      %v572 = vadd.f32 %v247, %v571
      %v573 = vpop.f32.mrf.mxu0
      %v574 = vpop.f32.mrf.mxu0
      %v575 = vadd.f32 %v247, %v574
      %v576 = vpop.f32.mrf.mxu0
      %577 = vmatprep.mubr.bf16.mxu0 %v356
      %578 = vmatmul.mubr.bf16.gmra.mxu0 %v355
      %v579 = vpop.f32.mrf.mxu0
      %v580 = vadd.f32 %v247, %v579
      %v581 = vpop.f32.mrf.mxu0
      %v582 = vpop.f32.mrf.mxu0
      %v583 = vadd.f32 %v247, %v582
      %v584 = vpop.f32.mrf.mxu0
      %585 = vmatprep.mubr.bf16.mxu0 %v358
      %586 = vmatmul.mubr.bf16.gmra.mxu0 %v357
      %v587 = vpop.f32.mrf.mxu0
      %v588 = vadd.f32 %v247, %v587
      %v589 = vpop.f32.mrf.mxu0
      %v590 = vpop.f32.mrf.mxu0
      %v591 = vadd.f32 %v247, %v590
      %v592 = vpop.f32.mrf.mxu0
      %593 = vmatprep.mubr.bf16.mxu0 %v360
      %594 = vmatmul.mubr.bf16.gmra.mxu0 %v359
      %v595 = vpop.f32.mrf.mxu0
      %v596 = vadd.f32 %v247, %v595
      %v597 = vpop.f32.mrf.mxu0
      %v598 = vpop.f32.mrf.mxu0
      %v599 = vadd.f32 %v247, %v598
      %v600 = vpop.f32.mrf.mxu0
      %601 = vmatprep.mubr.bf16.mxu0 %v362
      %602 = vmatmul.mubr.bf16.gmra.mxu0 %v361
      %v603 = vpop.f32.mrf.mxu0
      %v604 = vadd.f32 %v247, %v603
      %v605 = vpop.f32.mrf.mxu0
      %v606 = vpop.f32.mrf.mxu0
      %v607 = vadd.f32 %v247, %v606
      %v608 = vpop.f32.mrf.mxu0
      %609 = vmatprep.mubr.bf16.mxu0 %v364
      %610 = vmatmul.mubr.bf16.gmra.mxu0 %v363
      %v611 = vpop.f32.mrf.mxu0
      %v612 = vadd.f32 %v247, %v611
      %v613 = vpop.f32.mrf.mxu0
      %v614 = vpop.f32.mrf.mxu0
      %v615 = vadd.f32 %v247, %v614
      %v616 = vpop.f32.mrf.mxu0
      %617 = vmatprep.mubr.bf16.mxu0 %v366
      %618 = vmatmul.mubr.bf16.gmra.mxu0 %v365
      %v619 = vpop.f32.mrf.mxu0
      %v620 = vadd.f32 %v247, %v619
      %v621 = vpop.f32.mrf.mxu0
      %v622 = vpop.f32.mrf.mxu0
      %v623 = vadd.f32 %v247, %v622
      %v624 = vpop.f32.mrf.mxu0
      %625 = vmatprep.mubr.bf16.mxu0 %v368
      %626 = vmatmul.mubr.bf16.gmra.mxu0 %v367
      %v627 = vpop.f32.mrf.mxu0
      %v628 = vadd.f32 %v247, %v627
      %v629 = vpop.f32.mrf.mxu0
      %v630 = vpop.f32.mrf.mxu0
      %v631 = vadd.f32 %v247, %v630
      %v632 = vpop.f32.mrf.mxu0
      %633 = vmatprep.mubr.bf16.mxu0 %v370
      %634 = vmatmul.mubr.bf16.gmra.mxu0 %v369
      %v635 = vpop.f32.mrf.mxu0
      %v636 = vadd.f32 %v247, %v635
      %v637 = vpop.f32.mrf.mxu0
      %v638 = vpop.f32.mrf.mxu0
      %v639 = vadd.f32 %v247, %v638
      %v640 = vpop.f32.mrf.mxu0
      %641 = vmatprep.mubr.bf16.mxu0 %v372
      %642 = vmatmul.mubr.bf16.gmra.mxu0 %v371
      %v643 = vpop.f32.mrf.mxu0
      %v644 = vadd.f32 %v247, %v643
      %v645 = vpop.f32.mrf.mxu0
      %v646 = vpop.f32.mrf.mxu0
      %v647 = vadd.f32 %v247, %v646
      %v648 = vpop.f32.mrf.mxu0
      %649 = vmatprep.mubr.bf16.mxu0 %v374
      %650 = vmatmul.mubr.bf16.gmra.mxu0 %v373
      %v651 = vpop.f32.mrf.mxu0
      %v652 = vadd.f32 %v247, %v651
      %v653 = vpop.f32.mrf.mxu0
      %v654 = vpop.f32.mrf.mxu0
      %v655 = vadd.f32 %v247, %v654
      %v656 = vpop.f32.mrf.mxu0
      %657 = vmatprep.mubr.bf16.mxu0 %v376
      %658 = vmatmul.mubr.bf16.gmra.mxu0 %v375
      %v659 = vpop.f32.mrf.mxu0
      %v660 = vadd.f32 %v247, %v659
      %v661 = vpop.f32.mrf.mxu0
      %v662 = vpop.f32.mrf.mxu0
      %v663 = vadd.f32 %v247, %v662
      %v664 = vpop.f32.mrf.mxu0
      %665 = vdwg.mxu0
      %v666 = vmax.f32 %v540, 0.0
      %v667 = vmax.f32 %v543, 0.0
      %v668 = vmax.f32 %v548, 0.0
      %v669 = vmax.f32 %v551, 0.0
      %v670 = vmax.f32 %v556, 0.0
      %v671 = vmax.f32 %v559, 0.0
      %v672 = vmax.f32 %v564, 0.0
      %v673 = vmax.f32 %v567, 0.0
      %v674 = vmax.f32 %v572, 0.0
      %v675 = vmax.f32 %v575, 0.0
      %v676 = vmax.f32 %v580, 0.0
      %v677 = vmax.f32 %v583, 0.0
      %v678 = vmax.f32 %v588, 0.0
      %v679 = vmax.f32 %v591, 0.0
      %v680 = vmax.f32 %v596, 0.0
      %v681 = vmax.f32 %v599, 0.0
      %v682 = vmax.f32 %v604, 0.0
      %v683 = vmax.f32 %v607, 0.0
      %v684 = vmax.f32 %v612, 0.0
      %v685 = vmax.f32 %v615, 0.0
      %v686 = vmax.f32 %v620, 0.0
      %v687 = vmax.f32 %v623, 0.0
      %v688 = vmax.f32 %v628, 0.0
      %v689 = vmax.f32 %v631, 0.0
      %v690 = vmax.f32 %v636, 0.0
      %v691 = vmax.f32 %v639, 0.0
      %v692 = vmax.f32 %v644, 0.0
      %v693 = vmax.f32 %v647, 0.0
      %v694 = vmax.f32 %v652, 0.0
      %v695 = vmax.f32 %v655, 0.0
      %v696 = vmax.f32 %v660, 0.0
      %v697 = vmax.f32 %v663, 0.0
      %v698 = vpack.c.bf16 %v667, %v666
      %v699 = vpack.c.bf16 %v669, %v668
      %v700 = vpack.c.bf16 %v671, %v670
      %v701 = vpack.c.bf16 %v673, %v672
      %v702 = vpack.c.bf16 %v675, %v674
      %v703 = vpack.c.bf16 %v677, %v676
      %v704 = vpack.c.bf16 %v679, %v678
      %v705 = vpack.c.bf16 %v681, %v680
      %v706 = vpack.c.bf16 %v683, %v682
      %v707 = vpack.c.bf16 %v685, %v684
      %v708 = vpack.c.bf16 %v687, %v686
      %v709 = vpack.c.bf16 %v689, %v688
      %v710 = vpack.c.bf16 %v691, %v690
      %v711 = vpack.c.bf16 %v693, %v692
      %v712 = vpack.c.bf16 %v695, %v694
      %v713 = vpack.c.bf16 %v697, %v696
      %v730 = vunpack.c.l.b16 %v698
      %v731 = vunpack.c.h.b16 %v698
      %v732 = vunpack.c.l.b16 %v699
      %v733 = vunpack.c.h.b16 %v699
      %v734 = vunpack.c.l.b16 %v700
      %v735 = vunpack.c.h.b16 %v700
      %v736 = vunpack.c.l.b16 %v701
      %v737 = vunpack.c.h.b16 %v701
      %v738 = vunpack.c.l.b16 %v702
      %v739 = vunpack.c.h.b16 %v702
      %v740 = vunpack.c.l.b16 %v703
      %v741 = vunpack.c.h.b16 %v703
      %v742 = vunpack.c.l.b16 %v704
      %v743 = vunpack.c.h.b16 %v704
      %v744 = vunpack.c.l.b16 %v705
      %v745 = vunpack.c.h.b16 %v705
      %v746 = vunpack.c.l.b16 %v706
      %v747 = vunpack.c.h.b16 %v706
      %v748 = vunpack.c.l.b16 %v707
      %v749 = vunpack.c.h.b16 %v707
      %v750 = vunpack.c.l.b16 %v708
      %v751 = vunpack.c.h.b16 %v708
      %v752 = vunpack.c.l.b16 %v709
      %v753 = vunpack.c.h.b16 %v709
      %v754 = vunpack.c.l.b16 %v710
      %v755 = vunpack.c.h.b16 %v710
      %v756 = vunpack.c.l.b16 %v711
      %v757 = vunpack.c.h.b16 %v711
      %v758 = vunpack.c.l.b16 %v712
      %v759 = vunpack.c.h.b16 %v712
      %v760 = vunpack.c.l.b16 %v713
      %v761 = vunpack.c.h.b16 %v713
      %v762 = vpack.c.b16 %v730, %v730
      %v763 = vpack.c.b16 %v731, %v731
      %v764 = vpack.c.b16 %v732, %v732
      %v765 = vpack.c.b16 %v733, %v733
      %v766 = vpack.c.b16 %v734, %v734
      %v767 = vpack.c.b16 %v735, %v735
      %v768 = vpack.c.b16 %v736, %v736
      %v769 = vpack.c.b16 %v737, %v737
      %v770 = vpack.c.b16 %v738, %v738
      %v771 = vpack.c.b16 %v739, %v739
      %v772 = vpack.c.b16 %v740, %v740
      %v773 = vpack.c.b16 %v741, %v741
      %v774 = vpack.c.b16 %v742, %v742
      %v775 = vpack.c.b16 %v743, %v743
      %v776 = vpack.c.b16 %v744, %v744
      %v777 = vpack.c.b16 %v745, %v745
      %v778 = vpack.c.b16 %v746, %v746
      %v779 = vpack.c.b16 %v747, %v747
      %v780 = vpack.c.b16 %v748, %v748
      %v781 = vpack.c.b16 %v749, %v749
      %v782 = vpack.c.b16 %v750, %v750
      %v783 = vpack.c.b16 %v751, %v751
      %v784 = vpack.c.b16 %v752, %v752
      %v785 = vpack.c.b16 %v753, %v753
      %v786 = vpack.c.b16 %v754, %v754
      %v787 = vpack.c.b16 %v755, %v755
      %v788 = vpack.c.b16 %v756, %v756
      %v789 = vpack.c.b16 %v757, %v757
      %v790 = vpack.c.b16 %v758, %v758
      %v791 = vpack.c.b16 %v759, %v759
      %v792 = vpack.c.b16 %v760, %v760
      %v793 = vpack.c.b16 %v761, %v761
      %826 = vst [vmem:[%s175] sm:$0xf] %v762
      %827 = vst [vmem:[%s175 + $0x4] sm:$0xf] %v763
      %828 = vst [vmem:[%s175 + $0x8] sm:$0xf] %v764
      %829 = vst [vmem:[%s175 + $0xc] sm:$0xf] %v765
      %830 = vst [vmem:[%s175 + $0x10] sm:$0xf] %v766
      %831 = vst [vmem:[%s175 + $0x14] sm:$0xf] %v767
      %832 = vst [vmem:[%s175 + $0x18] sm:$0xf] %v768
      %833 = vst [vmem:[%s175 + $0x1c] sm:$0xf] %v769
      %834 = vst [vmem:[%s175 + $0x20] sm:$0xf] %v770
      %835 = vst [vmem:[%s175 + $0x24] sm:$0xf] %v771
      %836 = vst [vmem:[%s175 + $0x28] sm:$0xf] %v772
      %837 = vst [vmem:[%s175 + $0x2c] sm:$0xf] %v773
      %838 = vst [vmem:[%s175 + $0x30] sm:$0xf] %v774
      %839 = vst [vmem:[%s175 + $0x34] sm:$0xf] %v775
      %840 = vst [vmem:[%s175 + $0x38] sm:$0xf] %v776
      %841 = vst [vmem:[%s175 + $0x3c] sm:$0xf] %v777
      %842 = vst [vmem:[%s175 + $0x40] sm:$0xf] %v778
      %843 = vst [vmem:[%s175 + $0x44] sm:$0xf] %v779
      %844 = vst [vmem:[%s175 + $0x48] sm:$0xf] %v780
      %845 = vst [vmem:[%s175 + $0x4c] sm:$0xf] %v781
      %846 = vst [vmem:[%s175 + $0x50] sm:$0xf] %v782
      %847 = vst [vmem:[%s175 + $0x54] sm:$0xf] %v783
      %848 = vst [vmem:[%s175 + $0x58] sm:$0xf] %v784
      %849 = vst [vmem:[%s175 + $0x5c] sm:$0xf] %v785
      %850 = vst [vmem:[%s175 + $0x60] sm:$0xf] %v786
      %851 = vst [vmem:[%s175 + $0x64] sm:$0xf] %v787
      %852 = vst [vmem:[%s175 + $0x68] sm:$0xf] %v788
      %853 = vst [vmem:[%s175 + $0x6c] sm:$0xf] %v789
      %854 = vst [vmem:[%s175 + $0x70] sm:$0xf] %v790
      %855 = vst [vmem:[%s175 + $0x74] sm:$0xf] %v791
      %856 = vst [vmem:[%s175 + $0x78] sm:$0xf] %v792
      %857 = vst [vmem:[%s175 + $0x7c] sm:$0xf] %v793
      %s858 = smul.u32 32, %s14
      %p859 = scmp.lt.s32.totalorder %s858, 63
      %s860 = scalar_select %p859, %s858, 63
      %s861 = smul.addr %s860, 4
      %s862 = scalar_lea.vmem %s3, %s861
      // Predicated region
      $region33: #{colorization_net.15} parent=31 // pred_check
        %p863 = pneg %p100
      $region34: #{colorization_net.15} parent=31 // pred_check_branch
        %865 = sbr.rel (%p863) target = $region36
      $region35: #{colorization_net.15} parent=31 // pred_region
        %s866 = smul.u32 32, %s14
      $region36: #{colorization_net.15} parent=31 // pred_fallthru
        _
    $region32: #{colorization_net.15} parent=5 // pred_fallthru
      _
    %p867 = scmp.le.s32.totalorder 2, %s9
    // Predicated region
    $region37: #{colorization_net.15} parent=5 // pred_check
      %p868 = pneg %p867
    $region38: #{colorization_net.15} parent=5 // pred_check_branch
      %870 = sbr.rel (%p868) target = $region40
    $region39: #{colorization_net.15} parent=5 // pred_region
      %s871 = ssub.s32 %s9, 2
      // Predicated region
      $region41: #{colorization_net.15} parent=39 // pred_check
        %p872 = pneg %p106
      $region42: #{colorization_net.15} parent=39 // pred_check_branch
        %874 = sbr.rel (%p872) target = $region44
      $region43: #{colorization_net.15} parent=39 // pred_region
        %s875 = smul.u32 32, %s15
        %p876 = scmp.lt.s32.totalorder %s875, 63
        %s877 = scalar_select %p876, %s875, 63
        %s878 = smul.addr %s877, 4
        %s879 = scalar_lea.vmem %s3, %s878
      $region44: #{colorization_net.15} parent=39 // pred_fallthru
        _
    $region40: #{colorization_net.15} parent=5 // pred_fallthru
      _
  $region6: #{colorization_net.15} parent=0 // loop_footer
    %s13 = sadd.s32 1, %s9
  $region7: #{colorization_net.15} parent=0 // loop_footer_branch
    %8 = sbr.rel target = $region3
  $region8: #{colorization_net.15} parent=0 // loop_exit
    _

// kernel: colorization_net.16
$region0: #{colorization_net.16}
  #allocation0 [shape = 'u32[]', space=smem, size = 0x4, offset = 0x4, fixed_abs, tag = 'smem constant byte address 0x4 - core index']
  #allocation1 [shape = 'u32[144,128]{1,0:T(1,128)}', space=vmem, size = 0x12000, scoped, tag = 'internal scratch']
  %s0 = inlined_call_operand.vmem [shape: bf16[128,1152], index: 0, kind: input, shape index: {}]
  %s1 = inlined_call_operand.vmem [shape: bf16[1152,128], index: 1, kind: input, shape index: {}]
  %s2 = inlined_call_operand.vmem [shape: f32[1,128], index: 2, kind: input, shape index: {}]
  %s3 = inlined_call_operand.vmem [shape: bf16[128,128], index: 3, kind: output, shape index: {}]
  %s4 = sld [smem:[#allocation0]]
  $region22: #{colorization_net.16} parent=0
    _
  %s6 = ssub.s32 1, %s4
  %s7 = scalar_select 0, %s6, %s4
  // Predicated region
  $region2: #{colorization_net.16} parent=0 // pred_check
    _
  $region3: #{colorization_net.16} parent=0 // pred_check_branch
    %9 = sbr.rel (0) target = $region5
  $region4: #{colorization_net.16} parent=0 // pred_region
    _
  $region5: #{colorization_net.16} parent=0 // pred_fallthru
    _
  // Predicated region
  $region6: #{colorization_net.16} parent=0 // pred_check
    _
  $region7: #{colorization_net.16} parent=0 // pred_check_branch
    %11 = sbr.rel (0) target = $region9
  $region8: #{colorization_net.16} parent=0 // pred_region
    _
  $region9: #{colorization_net.16} parent=0 // pred_fallthru
    _
  // Predicated region
  $region10: #{colorization_net.16} parent=0 // pred_check
    _
  $region11: #{colorization_net.16} parent=0 // pred_check_branch
    %13 = sbr.rel (0) target = $region13
  $region12: #{colorization_net.16} parent=0 // pred_region
    _
  $region13: #{colorization_net.16} parent=0 // pred_fallthru
    _
  %v15 = vld [vmem:[%s0] sm:$0xff]
  %v16 = vld [vmem:[%s0 + $0x8] sm:$0xff]
  %v17 = vld [vmem:[%s0 + $0x10] sm:$0xff]
  %v18 = vld [vmem:[%s0 + $0x18] sm:$0xff]
  %v19 = vld [vmem:[%s0 + $0x20] sm:$0xf]
  %v20 = vld [vmem:[%s0 + $0x24] sm:$0xff]
  %v21 = vld [vmem:[%s0 + $0x2c] sm:$0xff]
  %v22 = vld [vmem:[%s0 + $0x34] sm:$0xff]
  %v23 = vld [vmem:[%s0 + $0x3c] sm:$0xff]
  %v24 = vld [vmem:[%s0 + $0x44] sm:$0xf]
  %v25 = vld [vmem:[%s0 + $0x48] sm:$0xff]
  %v26 = vld [vmem:[%s0 + $0x50] sm:$0xff]
  %v27 = vld [vmem:[%s0 + $0x58] sm:$0xff]
  %v28 = vld [vmem:[%s0 + $0x60] sm:$0xff]
  %v29 = vld [vmem:[%s0 + $0x68] sm:$0xf]
  %v30 = vld [vmem:[%s0 + $0x6c] sm:$0xff]
  %v31 = vld [vmem:[%s0 + $0x74] sm:$0xff]
  %v32 = vld [vmem:[%s0 + $0x7c] sm:$0xff]
  %v33 = vld [vmem:[%s0 + $0x84] sm:$0xff]
  %v34 = vld [vmem:[%s0 + $0x8c] sm:$0xf]
  %v35 = vld [vmem:[%s0 + $0x90] sm:$0xff]
  %v36 = vld [vmem:[%s0 + $0x98] sm:$0xff]
  %v37 = vld [vmem:[%s0 + $0xa0] sm:$0xff]
  %v38 = vld [vmem:[%s0 + $0xa8] sm:$0xff]
  %v39 = vld [vmem:[%s0 + $0xb0] sm:$0xf]
  %v40 = vld [vmem:[%s0 + $0xb4] sm:$0xff]
  %v41 = vld [vmem:[%s0 + $0xbc] sm:$0xff]
  %v42 = vld [vmem:[%s0 + $0xc4] sm:$0xff]
  %v43 = vld [vmem:[%s0 + $0xcc] sm:$0xff]
  %v44 = vld [vmem:[%s0 + $0xd4] sm:$0xf]
  %v45 = vld [vmem:[%s0 + $0xd8] sm:$0xff]
  %v46 = vld [vmem:[%s0 + $0xe0] sm:$0xff]
  %v47 = vld [vmem:[%s0 + $0xe8] sm:$0xff]
  %v48 = vld [vmem:[%s0 + $0xf0] sm:$0xff]
  %v49 = vld [vmem:[%s0 + $0xf8] sm:$0xf]
  %v50 = vld [vmem:[%s0 + $0xfc] sm:$0xff]
  %v51 = vld [vmem:[%s0 + $0x104] sm:$0xff]
  %v52 = vld [vmem:[%s0 + $0x10c] sm:$0xff]
  %v53 = vld [vmem:[%s0 + $0x114] sm:$0xff]
  %v54 = vld [vmem:[%s0 + $0x11c] sm:$0xf]
  %v55 = vld [vmem:[%s0 + $0x120] sm:$0xff]
  %v56 = vld [vmem:[%s0 + $0x128] sm:$0xff]
  %v57 = vld [vmem:[%s0 + $0x130] sm:$0xff]
  %v58 = vld [vmem:[%s0 + $0x138] sm:$0xff]
  %v59 = vld [vmem:[%s0 + $0x140] sm:$0xf]
  %v60 = vld [vmem:[%s0 + $0x144] sm:$0xff]
  %v61 = vld [vmem:[%s0 + $0x14c] sm:$0xff]
  %v62 = vld [vmem:[%s0 + $0x154] sm:$0xff]
  %v63 = vld [vmem:[%s0 + $0x15c] sm:$0xff]
  %v64 = vld [vmem:[%s0 + $0x164] sm:$0xf]
  %v65 = vld [vmem:[%s0 + $0x168] sm:$0xff]
  %v66 = vld [vmem:[%s0 + $0x170] sm:$0xff]
  %v67 = vld [vmem:[%s0 + $0x178] sm:$0xff]
  %v68 = vld [vmem:[%s0 + $0x180] sm:$0xff]
  %v69 = vld [vmem:[%s0 + $0x188] sm:$0xf]
  %v70 = vld [vmem:[%s0 + $0x18c] sm:$0xff]
  %v71 = vld [vmem:[%s0 + $0x194] sm:$0xff]
  %v72 = vld [vmem:[%s0 + $0x19c] sm:$0xff]
  %v73 = vld [vmem:[%s0 + $0x1a4] sm:$0xff]
  %v74 = vld [vmem:[%s0 + $0x1ac] sm:$0xf]
  %v75 = vld [vmem:[%s0 + $0x1b0] sm:$0xff]
  %v76 = vld [vmem:[%s0 + $0x1b8] sm:$0xff]
  %v77 = vld [vmem:[%s0 + $0x1c0] sm:$0xff]
  %v78 = vld [vmem:[%s0 + $0x1c8] sm:$0xff]
  %v79 = vld [vmem:[%s0 + $0x1d0] sm:$0xf]
  %v80 = vld [vmem:[%s0 + $0x1d4] sm:$0xff]
  %v81 = vld [vmem:[%s0 + $0x1dc] sm:$0xff]
  %v82 = vld [vmem:[%s0 + $0x1e4] sm:$0xff]
  %v83 = vld [vmem:[%s0 + $0x1ec] sm:$0xff]
  %v84 = vld [vmem:[%s0 + $0x1f4] sm:$0xf]
  %v85 = vld [vmem:[%s0 + $0x1f8] sm:$0xff]
  %v86 = vld [vmem:[%s0 + $0x200] sm:$0xff]
  %v87 = vld [vmem:[%s0 + $0x208] sm:$0xff]
  %v88 = vld [vmem:[%s0 + $0x210] sm:$0xff]
  %v89 = vld [vmem:[%s0 + $0x218] sm:$0xf]
  %v90 = vld [vmem:[%s0 + $0x21c] sm:$0xff]
  %v91 = vld [vmem:[%s0 + $0x224] sm:$0xff]
  %v92 = vld [vmem:[%s0 + $0x22c] sm:$0xff]
  %v93 = vld [vmem:[%s0 + $0x234] sm:$0xff]
  %v94 = vld [vmem:[%s0 + $0x23c] sm:$0xf]
  %v95 = vld [vmem:[%s1] sm:$0xf]
  %v96 = vld [vmem:[%s1 + $0x4] sm:$0xf]
  %v97 = vld [vmem:[%s1 + $0x8] sm:$0xf]
  %v98 = vld [vmem:[%s1 + $0xc] sm:$0xf]
  %v99 = vld [vmem:[%s1 + $0x10] sm:$0xf]
  %v100 = vld [vmem:[%s1 + $0x14] sm:$0xf]
  %v101 = vld [vmem:[%s1 + $0x18] sm:$0xf]
  %v102 = vld [vmem:[%s1 + $0x1c] sm:$0xf]
  %v103 = vld [vmem:[%s1 + $0x20] sm:$0xf]
  %v104 = vld [vmem:[%s1 + $0x24] sm:$0xf]
  %v105 = vld [vmem:[%s1 + $0x28] sm:$0xf]
  %v106 = vld [vmem:[%s1 + $0x2c] sm:$0xf]
  %v107 = vld [vmem:[%s1 + $0x30] sm:$0xf]
  %v108 = vld [vmem:[%s1 + $0x34] sm:$0xf]
  %v109 = vld [vmem:[%s1 + $0x38] sm:$0xf]
  %v110 = vld [vmem:[%s1 + $0x3c] sm:$0xf]
  %v111 = vld [vmem:[%s1 + $0x40] sm:$0xf]
  %v112 = vld [vmem:[%s1 + $0x44] sm:$0xf]
  %v113 = vld [vmem:[%s1 + $0x48] sm:$0xf]
  %v114 = vld [vmem:[%s1 + $0x4c] sm:$0xf]
  %v115 = vld [vmem:[%s1 + $0x50] sm:$0xf]
  %v116 = vld [vmem:[%s1 + $0x54] sm:$0xf]
  %v117 = vld [vmem:[%s1 + $0x58] sm:$0xf]
  %v118 = vld [vmem:[%s1 + $0x5c] sm:$0xf]
  %v119 = vld [vmem:[%s1 + $0x60] sm:$0xf]
  %v120 = vld [vmem:[%s1 + $0x64] sm:$0xf]
  %v121 = vld [vmem:[%s1 + $0x68] sm:$0xf]
  %v122 = vld [vmem:[%s1 + $0x6c] sm:$0xf]
  %v123 = vld [vmem:[%s1 + $0x70] sm:$0xf]
  %v124 = vld [vmem:[%s1 + $0x74] sm:$0xf]
  %v125 = vld [vmem:[%s1 + $0x78] sm:$0xf]
  %v126 = vld [vmem:[%s1 + $0x7c] sm:$0xf]
  %v127 = vld [vmem:[%s1 + $0x80] sm:$0xf]
  %v128 = vld [vmem:[%s1 + $0x84] sm:$0xf]
  %v129 = vld [vmem:[%s1 + $0x88] sm:$0xf]
  %v130 = vld [vmem:[%s1 + $0x8c] sm:$0xf]
  %v131 = vld [vmem:[%s1 + $0x90] sm:$0xf]
  %v132 = vld [vmem:[%s1 + $0x94] sm:$0xf]
  %v133 = vld [vmem:[%s1 + $0x98] sm:$0xf]
  %v134 = vld [vmem:[%s1 + $0x9c] sm:$0xf]
  %v135 = vld [vmem:[%s1 + $0xa0] sm:$0xf]
  %v136 = vld [vmem:[%s1 + $0xa4] sm:$0xf]
  %v137 = vld [vmem:[%s1 + $0xa8] sm:$0xf]
  %v138 = vld [vmem:[%s1 + $0xac] sm:$0xf]
  %v139 = vld [vmem:[%s1 + $0xb0] sm:$0xf]
  %v140 = vld [vmem:[%s1 + $0xb4] sm:$0xf]
  %v141 = vld [vmem:[%s1 + $0xb8] sm:$0xf]
  %v142 = vld [vmem:[%s1 + $0xbc] sm:$0xf]
  %v143 = vld [vmem:[%s1 + $0xc0] sm:$0xf]
  %v144 = vld [vmem:[%s1 + $0xc4] sm:$0xf]
  %v145 = vld [vmem:[%s1 + $0xc8] sm:$0xf]
  %v146 = vld [vmem:[%s1 + $0xcc] sm:$0xf]
  %v147 = vld [vmem:[%s1 + $0xd0] sm:$0xf]
  %v148 = vld [vmem:[%s1 + $0xd4] sm:$0xf]
  %v149 = vld [vmem:[%s1 + $0xd8] sm:$0xf]
  %v150 = vld [vmem:[%s1 + $0xdc] sm:$0xf]
  %v151 = vld [vmem:[%s1 + $0xe0] sm:$0xf]
  %v152 = vld [vmem:[%s1 + $0xe4] sm:$0xf]
  %v153 = vld [vmem:[%s1 + $0xe8] sm:$0xf]
  %v154 = vld [vmem:[%s1 + $0xec] sm:$0xf]
  %v155 = vld [vmem:[%s1 + $0xf0] sm:$0xf]
  %v156 = vld [vmem:[%s1 + $0xf4] sm:$0xf]
  %v157 = vld [vmem:[%s1 + $0xf8] sm:$0xf]
  %v158 = vld [vmem:[%s1 + $0xfc] sm:$0xf]
  %v159 = vld [vmem:[%s1 + $0x100] sm:$0xf]
  %v160 = vld [vmem:[%s1 + $0x104] sm:$0xf]
  %v161 = vld [vmem:[%s1 + $0x108] sm:$0xf]
  %v162 = vld [vmem:[%s1 + $0x10c] sm:$0xf]
  %v163 = vld [vmem:[%s1 + $0x110] sm:$0xf]
  %v164 = vld [vmem:[%s1 + $0x114] sm:$0xf]
  %v165 = vld [vmem:[%s1 + $0x118] sm:$0xf]
  %v166 = vld [vmem:[%s1 + $0x11c] sm:$0xf]
  %v167 = vld [vmem:[%s1 + $0x120] sm:$0xf]
  %v168 = vld [vmem:[%s1 + $0x124] sm:$0xf]
  %v169 = vld [vmem:[%s1 + $0x128] sm:$0xf]
  %v170 = vld [vmem:[%s1 + $0x12c] sm:$0xf]
  %v171 = vld [vmem:[%s1 + $0x130] sm:$0xf]
  %v172 = vld [vmem:[%s1 + $0x134] sm:$0xf]
  %v173 = vld [vmem:[%s1 + $0x138] sm:$0xf]
  %v174 = vld [vmem:[%s1 + $0x13c] sm:$0xf]
  %v175 = vld [vmem:[%s1 + $0x140] sm:$0xf]
  %v176 = vld [vmem:[%s1 + $0x144] sm:$0xf]
  %v177 = vld [vmem:[%s1 + $0x148] sm:$0xf]
  %v178 = vld [vmem:[%s1 + $0x14c] sm:$0xf]
  %v179 = vld [vmem:[%s1 + $0x150] sm:$0xf]
  %v180 = vld [vmem:[%s1 + $0x154] sm:$0xf]
  %v181 = vld [vmem:[%s1 + $0x158] sm:$0xf]
  %v182 = vld [vmem:[%s1 + $0x15c] sm:$0xf]
  %v183 = vld [vmem:[%s1 + $0x160] sm:$0xf]
  %v184 = vld [vmem:[%s1 + $0x164] sm:$0xf]
  %v185 = vld [vmem:[%s1 + $0x168] sm:$0xf]
  %v186 = vld [vmem:[%s1 + $0x16c] sm:$0xf]
  %v187 = vld [vmem:[%s1 + $0x170] sm:$0xf]
  %v188 = vld [vmem:[%s1 + $0x174] sm:$0xf]
  %v189 = vld [vmem:[%s1 + $0x178] sm:$0xf]
  %v190 = vld [vmem:[%s1 + $0x17c] sm:$0xf]
  %v191 = vld [vmem:[%s1 + $0x180] sm:$0xf]
  %v192 = vld [vmem:[%s1 + $0x184] sm:$0xf]
  %v193 = vld [vmem:[%s1 + $0x188] sm:$0xf]
  %v194 = vld [vmem:[%s1 + $0x18c] sm:$0xf]
  %v195 = vld [vmem:[%s1 + $0x190] sm:$0xf]
  %v196 = vld [vmem:[%s1 + $0x194] sm:$0xf]
  %v197 = vld [vmem:[%s1 + $0x198] sm:$0xf]
  %v198 = vld [vmem:[%s1 + $0x19c] sm:$0xf]
  %v199 = vld [vmem:[%s1 + $0x1a0] sm:$0xf]
  %v200 = vld [vmem:[%s1 + $0x1a4] sm:$0xf]
  %v201 = vld [vmem:[%s1 + $0x1a8] sm:$0xf]
  %v202 = vld [vmem:[%s1 + $0x1ac] sm:$0xf]
  %v203 = vld [vmem:[%s1 + $0x1b0] sm:$0xf]
  %v204 = vld [vmem:[%s1 + $0x1b4] sm:$0xf]
  %v205 = vld [vmem:[%s1 + $0x1b8] sm:$0xf]
  %v206 = vld [vmem:[%s1 + $0x1bc] sm:$0xf]
  %v207 = vld [vmem:[%s1 + $0x1c0] sm:$0xf]
  %v208 = vld [vmem:[%s1 + $0x1c4] sm:$0xf]
  %v209 = vld [vmem:[%s1 + $0x1c8] sm:$0xf]
  %v210 = vld [vmem:[%s1 + $0x1cc] sm:$0xf]
  %v211 = vld [vmem:[%s1 + $0x1d0] sm:$0xf]
  %v212 = vld [vmem:[%s1 + $0x1d4] sm:$0xf]
  %v213 = vld [vmem:[%s1 + $0x1d8] sm:$0xf]
  %v214 = vld [vmem:[%s1 + $0x1dc] sm:$0xf]
  %v215 = vld [vmem:[%s1 + $0x1e0] sm:$0xf]
  %v216 = vld [vmem:[%s1 + $0x1e4] sm:$0xf]
  %v217 = vld [vmem:[%s1 + $0x1e8] sm:$0xf]
  %v218 = vld [vmem:[%s1 + $0x1ec] sm:$0xf]
  %v219 = vld [vmem:[%s1 + $0x1f0] sm:$0xf]
  %v220 = vld [vmem:[%s1 + $0x1f4] sm:$0xf]
  %v221 = vld [vmem:[%s1 + $0x1f8] sm:$0xf]
  %v222 = vld [vmem:[%s1 + $0x1fc] sm:$0xf]
  %v223 = vld [vmem:[%s1 + $0x200] sm:$0xf]
  %v224 = vld [vmem:[%s1 + $0x204] sm:$0xf]
  %v225 = vld [vmem:[%s1 + $0x208] sm:$0xf]
  %v226 = vld [vmem:[%s1 + $0x20c] sm:$0xf]
  %v227 = vld [vmem:[%s1 + $0x210] sm:$0xf]
  %v228 = vld [vmem:[%s1 + $0x214] sm:$0xf]
  %v229 = vld [vmem:[%s1 + $0x218] sm:$0xf]
  %v230 = vld [vmem:[%s1 + $0x21c] sm:$0xf]
  %v231 = vld [vmem:[%s1 + $0x220] sm:$0xf]
  %v232 = vld [vmem:[%s1 + $0x224] sm:$0xf]
  %v233 = vld [vmem:[%s1 + $0x228] sm:$0xf]
  %v234 = vld [vmem:[%s1 + $0x22c] sm:$0xf]
  %v235 = vld [vmem:[%s1 + $0x230] sm:$0xf]
  %v236 = vld [vmem:[%s1 + $0x234] sm:$0xf]
  %v237 = vld [vmem:[%s1 + $0x238] sm:$0xf]
  %v238 = vld [vmem:[%s1 + $0x23c] sm:$0xf]
  %v239 = vld [vmem:[%s2] sm:$0x1]
  %v241 = vlaneseq
  %v242 = vshrl.u32 %v241, 7
  %v243 = vsub.s32 0, %v242
  %v244 = vrot.slane %v239, %v243
  %v326 = vunpack.c.l.b16 %v15
  %v327 = vunpack.c.h.b16 %v15
  %v328 = vunpack.c.l.b16 %v16
  %v329 = vunpack.c.h.b16 %v16
  %v330 = vunpack.c.l.b16 %v17
  %v331 = vunpack.c.h.b16 %v17
  %v332 = vunpack.c.l.b16 %v18
  %v333 = vunpack.c.h.b16 %v18
  %v334 = vunpack.c.l.b16 %v19
  %v335 = vunpack.c.l.b16 %v20
  %v336 = vunpack.c.h.b16 %v20
  %v337 = vunpack.c.l.b16 %v21
  %v338 = vunpack.c.h.b16 %v21
  %v339 = vunpack.c.l.b16 %v22
  %v340 = vunpack.c.h.b16 %v22
  %v341 = vunpack.c.l.b16 %v23
  %v342 = vunpack.c.h.b16 %v23
  %v343 = vunpack.c.l.b16 %v24
  %v344 = vunpack.c.l.b16 %v25
  %v345 = vunpack.c.h.b16 %v25
  %v346 = vunpack.c.l.b16 %v26
  %v347 = vunpack.c.h.b16 %v26
  %v348 = vunpack.c.l.b16 %v27
  %v349 = vunpack.c.h.b16 %v27
  %v350 = vunpack.c.l.b16 %v28
  %v351 = vunpack.c.h.b16 %v28
  %v352 = vunpack.c.l.b16 %v29
  %v353 = vunpack.c.l.b16 %v30
  %v354 = vunpack.c.h.b16 %v30
  %v355 = vunpack.c.l.b16 %v31
  %v356 = vunpack.c.h.b16 %v31
  %v357 = vunpack.c.l.b16 %v32
  %v358 = vunpack.c.h.b16 %v32
  %v359 = vunpack.c.l.b16 %v33
  %v360 = vunpack.c.h.b16 %v33
  %v361 = vunpack.c.l.b16 %v34
  %v362 = vunpack.c.l.b16 %v35
  %v363 = vunpack.c.h.b16 %v35
  %v364 = vunpack.c.l.b16 %v36
  %v365 = vunpack.c.h.b16 %v36
  %v366 = vunpack.c.l.b16 %v37
  %v367 = vunpack.c.h.b16 %v37
  %v368 = vunpack.c.l.b16 %v38
  %v369 = vunpack.c.h.b16 %v38
  %v370 = vunpack.c.l.b16 %v39
  %v371 = vunpack.c.l.b16 %v40
  %v372 = vunpack.c.h.b16 %v40
  %v373 = vunpack.c.l.b16 %v41
  %v374 = vunpack.c.h.b16 %v41
  %v375 = vunpack.c.l.b16 %v42
  %v376 = vunpack.c.h.b16 %v42
  %v377 = vunpack.c.l.b16 %v43
  %v378 = vunpack.c.h.b16 %v43
  %v379 = vunpack.c.l.b16 %v44
  %v380 = vunpack.c.l.b16 %v45
  %v381 = vunpack.c.h.b16 %v45
  %v382 = vunpack.c.l.b16 %v46
  %v383 = vunpack.c.h.b16 %v46
  %v384 = vunpack.c.l.b16 %v47
  %v385 = vunpack.c.h.b16 %v47
  %v386 = vunpack.c.l.b16 %v48
  %v387 = vunpack.c.h.b16 %v48
  %v388 = vunpack.c.l.b16 %v49
  %v389 = vunpack.c.l.b16 %v50
  %v390 = vunpack.c.h.b16 %v50
  %v391 = vunpack.c.l.b16 %v51
  %v392 = vunpack.c.h.b16 %v51
  %v393 = vunpack.c.l.b16 %v52
  %v394 = vunpack.c.h.b16 %v52
  %v395 = vunpack.c.l.b16 %v53
  %v396 = vunpack.c.h.b16 %v53
  %v397 = vunpack.c.l.b16 %v54
  %v398 = vunpack.c.l.b16 %v55
  %v399 = vunpack.c.h.b16 %v55
  %v400 = vunpack.c.l.b16 %v56
  %v401 = vunpack.c.h.b16 %v56
  %v402 = vunpack.c.l.b16 %v57
  %v403 = vunpack.c.h.b16 %v57
  %v404 = vunpack.c.l.b16 %v58
  %v405 = vunpack.c.h.b16 %v58
  %v406 = vunpack.c.l.b16 %v59
  %v407 = vunpack.c.l.b16 %v60
  %v408 = vunpack.c.h.b16 %v60
  %v409 = vunpack.c.l.b16 %v61
  %v410 = vunpack.c.h.b16 %v61
  %v411 = vunpack.c.l.b16 %v62
  %v412 = vunpack.c.h.b16 %v62
  %v413 = vunpack.c.l.b16 %v63
  %v414 = vunpack.c.h.b16 %v63
  %v415 = vunpack.c.l.b16 %v64
  %v416 = vunpack.c.l.b16 %v65
  %v417 = vunpack.c.h.b16 %v65
  %v418 = vunpack.c.l.b16 %v66
  %v419 = vunpack.c.h.b16 %v66
  %v420 = vunpack.c.l.b16 %v67
  %v421 = vunpack.c.h.b16 %v67
  %v422 = vunpack.c.l.b16 %v68
  %v423 = vunpack.c.h.b16 %v68
  %v424 = vunpack.c.l.b16 %v69
  %v425 = vunpack.c.l.b16 %v70
  %v426 = vunpack.c.h.b16 %v70
  %v427 = vunpack.c.l.b16 %v71
  %v428 = vunpack.c.h.b16 %v71
  %v429 = vunpack.c.l.b16 %v72
  %v430 = vunpack.c.h.b16 %v72
  %v431 = vunpack.c.l.b16 %v73
  %v432 = vunpack.c.h.b16 %v73
  %v433 = vunpack.c.l.b16 %v74
  %v434 = vunpack.c.l.b16 %v75
  %v435 = vunpack.c.h.b16 %v75
  %v436 = vunpack.c.l.b16 %v76
  %v437 = vunpack.c.h.b16 %v76
  %v438 = vunpack.c.l.b16 %v77
  %v439 = vunpack.c.h.b16 %v77
  %v440 = vunpack.c.l.b16 %v78
  %v441 = vunpack.c.h.b16 %v78
  %v442 = vunpack.c.l.b16 %v79
  %v443 = vunpack.c.l.b16 %v80
  %v444 = vunpack.c.h.b16 %v80
  %v445 = vunpack.c.l.b16 %v81
  %v446 = vunpack.c.h.b16 %v81
  %v447 = vunpack.c.l.b16 %v82
  %v448 = vunpack.c.h.b16 %v82
  %v449 = vunpack.c.l.b16 %v83
  %v450 = vunpack.c.h.b16 %v83
  %v451 = vunpack.c.l.b16 %v84
  %v452 = vunpack.c.l.b16 %v85
  %v453 = vunpack.c.h.b16 %v85
  %v454 = vunpack.c.l.b16 %v86
  %v455 = vunpack.c.h.b16 %v86
  %v456 = vunpack.c.l.b16 %v87
  %v457 = vunpack.c.h.b16 %v87
  %v458 = vunpack.c.l.b16 %v88
  %v459 = vunpack.c.h.b16 %v88
  %v460 = vunpack.c.l.b16 %v89
  %v461 = vunpack.c.l.b16 %v90
  %v462 = vunpack.c.h.b16 %v90
  %v463 = vunpack.c.l.b16 %v91
  %v464 = vunpack.c.h.b16 %v91
  %v465 = vunpack.c.l.b16 %v92
  %v466 = vunpack.c.h.b16 %v92
  %v467 = vunpack.c.l.b16 %v93
  %v468 = vunpack.c.h.b16 %v93
  %v469 = vunpack.c.l.b16 %v94
  %v470 = vpack.c.b16 %v335, %v326
  %v471 = vpack.c.b16 %v336, %v327
  %v472 = vpack.c.b16 %v337, %v328
  %v473 = vpack.c.b16 %v338, %v329
  %v474 = vpack.c.b16 %v339, %v330
  %v475 = vpack.c.b16 %v340, %v331
  %v476 = vpack.c.b16 %v341, %v332
  %v477 = vpack.c.b16 %v342, %v333
  %v478 = vpack.c.b16 %v343, %v334
  %v479 = vpack.c.b16 %v353, %v344
  %v480 = vpack.c.b16 %v354, %v345
  %v481 = vpack.c.b16 %v355, %v346
  %v482 = vpack.c.b16 %v356, %v347
  %v483 = vpack.c.b16 %v357, %v348
  %v484 = vpack.c.b16 %v358, %v349
  %v485 = vpack.c.b16 %v359, %v350
  %v486 = vpack.c.b16 %v360, %v351
  %v487 = vpack.c.b16 %v361, %v352
  %v488 = vpack.c.b16 %v371, %v362
  %v489 = vpack.c.b16 %v372, %v363
  %v490 = vpack.c.b16 %v373, %v364
  %v491 = vpack.c.b16 %v374, %v365
  %v492 = vpack.c.b16 %v375, %v366
  %v493 = vpack.c.b16 %v376, %v367
  %v494 = vpack.c.b16 %v377, %v368
  %v495 = vpack.c.b16 %v378, %v369
  %v496 = vpack.c.b16 %v379, %v370
  %v497 = vpack.c.b16 %v389, %v380
  %v498 = vpack.c.b16 %v390, %v381
  %v499 = vpack.c.b16 %v391, %v382
  %v500 = vpack.c.b16 %v392, %v383
  %v501 = vpack.c.b16 %v393, %v384
  %v502 = vpack.c.b16 %v394, %v385
  %v503 = vpack.c.b16 %v395, %v386
  %v504 = vpack.c.b16 %v396, %v387
  %v505 = vpack.c.b16 %v397, %v388
  %v506 = vpack.c.b16 %v407, %v398
  %v507 = vpack.c.b16 %v408, %v399
  %v508 = vpack.c.b16 %v409, %v400
  %v509 = vpack.c.b16 %v410, %v401
  %v510 = vpack.c.b16 %v411, %v402
  %v511 = vpack.c.b16 %v412, %v403
  %v512 = vpack.c.b16 %v413, %v404
  %v513 = vpack.c.b16 %v414, %v405
  %v514 = vpack.c.b16 %v415, %v406
  %v515 = vpack.c.b16 %v425, %v416
  %v516 = vpack.c.b16 %v426, %v417
  %v517 = vpack.c.b16 %v427, %v418
  %v518 = vpack.c.b16 %v428, %v419
  %v519 = vpack.c.b16 %v429, %v420
  %v520 = vpack.c.b16 %v430, %v421
  %v521 = vpack.c.b16 %v431, %v422
  %v522 = vpack.c.b16 %v432, %v423
  %v523 = vpack.c.b16 %v433, %v424
  %v524 = vpack.c.b16 %v443, %v434
  %v525 = vpack.c.b16 %v444, %v435
  %v526 = vpack.c.b16 %v445, %v436
  %v527 = vpack.c.b16 %v446, %v437
  %v528 = vpack.c.b16 %v447, %v438
  %v529 = vpack.c.b16 %v448, %v439
  %v530 = vpack.c.b16 %v449, %v440
  %v531 = vpack.c.b16 %v450, %v441
  %v532 = vpack.c.b16 %v451, %v442
  %v533 = vpack.c.b16 %v461, %v452
  %v534 = vpack.c.b16 %v462, %v453
  %v535 = vpack.c.b16 %v463, %v454
  %v536 = vpack.c.b16 %v464, %v455
  %v537 = vpack.c.b16 %v465, %v456
  %v538 = vpack.c.b16 %v466, %v457
  %v539 = vpack.c.b16 %v467, %v458
  %v540 = vpack.c.b16 %v468, %v459
  %v541 = vpack.c.b16 %v469, %v460
  %v758 = vunpack.c.l.b16 %v95
  %v759 = vunpack.c.l.b16 %v96
  %v760 = vunpack.c.l.b16 %v97
  %v761 = vunpack.c.l.b16 %v98
  %v762 = vunpack.c.l.b16 %v99
  %v763 = vunpack.c.l.b16 %v100
  %v764 = vunpack.c.l.b16 %v101
  %v765 = vunpack.c.l.b16 %v102
  %v766 = vunpack.c.l.b16 %v103
  %v767 = vunpack.c.l.b16 %v104
  %v768 = vunpack.c.l.b16 %v105
  %v769 = vunpack.c.l.b16 %v106
  %v770 = vunpack.c.l.b16 %v107
  %v771 = vunpack.c.l.b16 %v108
  %v772 = vunpack.c.l.b16 %v109
  %v773 = vunpack.c.l.b16 %v110
  %v774 = vunpack.c.l.b16 %v111
  %v775 = vunpack.c.l.b16 %v112
  %v776 = vunpack.c.l.b16 %v113
  %v777 = vunpack.c.l.b16 %v114
  %v778 = vunpack.c.l.b16 %v115
  %v779 = vunpack.c.l.b16 %v116
  %v780 = vunpack.c.l.b16 %v117
  %v781 = vunpack.c.l.b16 %v118
  %v782 = vunpack.c.l.b16 %v119
  %v783 = vunpack.c.l.b16 %v120
  %v784 = vunpack.c.l.b16 %v121
  %v785 = vunpack.c.l.b16 %v122
  %v786 = vunpack.c.l.b16 %v123
  %v787 = vunpack.c.l.b16 %v124
  %v788 = vunpack.c.l.b16 %v125
  %v789 = vunpack.c.l.b16 %v126
  %v790 = vunpack.c.l.b16 %v127
  %v791 = vunpack.c.l.b16 %v128
  %v792 = vunpack.c.l.b16 %v129
  %v793 = vunpack.c.l.b16 %v130
  %v794 = vunpack.c.l.b16 %v131
  %v795 = vunpack.c.l.b16 %v132
  %v796 = vunpack.c.l.b16 %v133
  %v797 = vunpack.c.l.b16 %v134
  %v798 = vunpack.c.l.b16 %v135
  %v799 = vunpack.c.l.b16 %v136
  %v800 = vunpack.c.l.b16 %v137
  %v801 = vunpack.c.l.b16 %v138
  %v802 = vunpack.c.l.b16 %v139
  %v803 = vunpack.c.l.b16 %v140
  %v804 = vunpack.c.l.b16 %v141
  %v805 = vunpack.c.l.b16 %v142
  %v806 = vunpack.c.l.b16 %v143
  %v807 = vunpack.c.l.b16 %v144
  %v808 = vunpack.c.l.b16 %v145
  %v809 = vunpack.c.l.b16 %v146
  %v810 = vunpack.c.l.b16 %v147
  %v811 = vunpack.c.l.b16 %v148
  %v812 = vunpack.c.l.b16 %v149
  %v813 = vunpack.c.l.b16 %v150
  %v814 = vunpack.c.l.b16 %v151
  %v815 = vunpack.c.l.b16 %v152
  %v816 = vunpack.c.l.b16 %v153
  %v817 = vunpack.c.l.b16 %v154
  %v818 = vunpack.c.l.b16 %v155
  %v819 = vunpack.c.l.b16 %v156
  %v820 = vunpack.c.l.b16 %v157
  %v821 = vunpack.c.l.b16 %v158
  %v822 = vunpack.c.l.b16 %v159
  %v823 = vunpack.c.l.b16 %v160
  %v824 = vunpack.c.l.b16 %v161
  %v825 = vunpack.c.l.b16 %v162
  %v826 = vunpack.c.l.b16 %v163
  %v827 = vunpack.c.l.b16 %v164
  %v828 = vunpack.c.l.b16 %v165
  %v829 = vunpack.c.l.b16 %v166
  %v830 = vunpack.c.l.b16 %v167
  %v831 = vunpack.c.l.b16 %v168
  %v832 = vunpack.c.l.b16 %v169
  %v833 = vunpack.c.l.b16 %v170
  %v834 = vunpack.c.l.b16 %v171
  %v835 = vunpack.c.l.b16 %v172
  %v836 = vunpack.c.l.b16 %v173
  %v837 = vunpack.c.l.b16 %v174
  %v838 = vunpack.c.l.b16 %v175
  %v839 = vunpack.c.l.b16 %v176
  %v840 = vunpack.c.l.b16 %v177
  %v841 = vunpack.c.l.b16 %v178
  %v842 = vunpack.c.l.b16 %v179
  %v843 = vunpack.c.l.b16 %v180
  %v844 = vunpack.c.l.b16 %v181
  %v845 = vunpack.c.l.b16 %v182
  %v846 = vunpack.c.l.b16 %v183
  %v847 = vunpack.c.l.b16 %v184
  %v848 = vunpack.c.l.b16 %v185
  %v849 = vunpack.c.l.b16 %v186
  %v850 = vunpack.c.l.b16 %v187
  %v851 = vunpack.c.l.b16 %v188
  %v852 = vunpack.c.l.b16 %v189
  %v853 = vunpack.c.l.b16 %v190
  %v854 = vunpack.c.l.b16 %v191
  %v855 = vunpack.c.l.b16 %v192
  %v856 = vunpack.c.l.b16 %v193
  %v857 = vunpack.c.l.b16 %v194
  %v858 = vunpack.c.l.b16 %v195
  %v859 = vunpack.c.l.b16 %v196
  %v860 = vunpack.c.l.b16 %v197
  %v861 = vunpack.c.l.b16 %v198
  %v862 = vunpack.c.l.b16 %v199
  %v863 = vunpack.c.l.b16 %v200
  %v864 = vunpack.c.l.b16 %v201
  %v865 = vunpack.c.l.b16 %v202
  %v866 = vunpack.c.l.b16 %v203
  %v867 = vunpack.c.l.b16 %v204
  %v868 = vunpack.c.l.b16 %v205
  %v869 = vunpack.c.l.b16 %v206
  %v870 = vunpack.c.l.b16 %v207
  %v871 = vunpack.c.l.b16 %v208
  %v872 = vunpack.c.l.b16 %v209
  %v873 = vunpack.c.l.b16 %v210
  %v874 = vunpack.c.l.b16 %v211
  %v875 = vunpack.c.l.b16 %v212
  %v876 = vunpack.c.l.b16 %v213
  %v877 = vunpack.c.l.b16 %v214
  %v878 = vunpack.c.l.b16 %v215
  %v879 = vunpack.c.l.b16 %v216
  %v880 = vunpack.c.l.b16 %v217
  %v881 = vunpack.c.l.b16 %v218
  %v882 = vunpack.c.l.b16 %v219
  %v883 = vunpack.c.l.b16 %v220
  %v884 = vunpack.c.l.b16 %v221
  %v885 = vunpack.c.l.b16 %v222
  %v886 = vunpack.c.l.b16 %v223
  %v887 = vunpack.c.l.b16 %v224
  %v888 = vunpack.c.l.b16 %v225
  %v889 = vunpack.c.l.b16 %v226
  %v890 = vunpack.c.l.b16 %v227
  %v891 = vunpack.c.l.b16 %v228
  %v892 = vunpack.c.l.b16 %v229
  %v893 = vunpack.c.l.b16 %v230
  %v894 = vunpack.c.l.b16 %v231
  %v895 = vunpack.c.l.b16 %v232
  %v896 = vunpack.c.l.b16 %v233
  %v897 = vunpack.c.l.b16 %v234
  %v898 = vunpack.c.l.b16 %v235
  %v899 = vunpack.c.l.b16 %v236
  %v900 = vunpack.c.l.b16 %v237
  %v901 = vunpack.c.l.b16 %v238
  %v902 = vpack.c.b16 %v759, %v758
  %v903 = vpack.c.b16 %v761, %v760
  %v904 = vpack.c.b16 %v763, %v762
  %v905 = vpack.c.b16 %v765, %v764
  %v906 = vpack.c.b16 %v767, %v766
  %v907 = vpack.c.b16 %v769, %v768
  %v908 = vpack.c.b16 %v771, %v770
  %v909 = vpack.c.b16 %v773, %v772
  %v910 = vpack.c.b16 %v775, %v774
  %v911 = vpack.c.b16 %v777, %v776
  %v912 = vpack.c.b16 %v779, %v778
  %v913 = vpack.c.b16 %v781, %v780
  %v914 = vpack.c.b16 %v783, %v782
  %v915 = vpack.c.b16 %v785, %v784
  %v916 = vpack.c.b16 %v787, %v786
  %v917 = vpack.c.b16 %v789, %v788
  %v918 = vpack.c.b16 %v791, %v790
  %v919 = vpack.c.b16 %v793, %v792
  %v920 = vpack.c.b16 %v795, %v794
  %v921 = vpack.c.b16 %v797, %v796
  %v922 = vpack.c.b16 %v799, %v798
  %v923 = vpack.c.b16 %v801, %v800
  %v924 = vpack.c.b16 %v803, %v802
  %v925 = vpack.c.b16 %v805, %v804
  %v926 = vpack.c.b16 %v807, %v806
  %v927 = vpack.c.b16 %v809, %v808
  %v928 = vpack.c.b16 %v811, %v810
  %v929 = vpack.c.b16 %v813, %v812
  %v930 = vpack.c.b16 %v815, %v814
  %v931 = vpack.c.b16 %v817, %v816
  %v932 = vpack.c.b16 %v819, %v818
  %v933 = vpack.c.b16 %v821, %v820
  %v934 = vpack.c.b16 %v823, %v822
  %v935 = vpack.c.b16 %v825, %v824
  %v936 = vpack.c.b16 %v827, %v826
  %v937 = vpack.c.b16 %v829, %v828
  %v938 = vpack.c.b16 %v831, %v830
  %v939 = vpack.c.b16 %v833, %v832
  %v940 = vpack.c.b16 %v835, %v834
  %v941 = vpack.c.b16 %v837, %v836
  %v942 = vpack.c.b16 %v839, %v838
  %v943 = vpack.c.b16 %v841, %v840
  %v944 = vpack.c.b16 %v843, %v842
  %v945 = vpack.c.b16 %v845, %v844
  %v946 = vpack.c.b16 %v847, %v846
  %v947 = vpack.c.b16 %v849, %v848
  %v948 = vpack.c.b16 %v851, %v850
  %v949 = vpack.c.b16 %v853, %v852
  %v950 = vpack.c.b16 %v855, %v854
  %v951 = vpack.c.b16 %v857, %v856
  %v952 = vpack.c.b16 %v859, %v858
  %v953 = vpack.c.b16 %v861, %v860
  %v954 = vpack.c.b16 %v863, %v862
  %v955 = vpack.c.b16 %v865, %v864
  %v956 = vpack.c.b16 %v867, %v866
  %v957 = vpack.c.b16 %v869, %v868
  %v958 = vpack.c.b16 %v871, %v870
  %v959 = vpack.c.b16 %v873, %v872
  %v960 = vpack.c.b16 %v875, %v874
  %v961 = vpack.c.b16 %v877, %v876
  %v962 = vpack.c.b16 %v879, %v878
  %v963 = vpack.c.b16 %v881, %v880
  %v964 = vpack.c.b16 %v883, %v882
  %v965 = vpack.c.b16 %v885, %v884
  %v966 = vpack.c.b16 %v887, %v886
  %v967 = vpack.c.b16 %v889, %v888
  %v968 = vpack.c.b16 %v891, %v890
  %v969 = vpack.c.b16 %v893, %v892
  %v970 = vpack.c.b16 %v895, %v894
  %v971 = vpack.c.b16 %v897, %v896
  %v972 = vpack.c.b16 %v899, %v898
  %v973 = vpack.c.b16 %v901, %v900
  %1046 = vmatprep.subr.bf16.mxu0 0
  %1047 = vmatpush1.bf16.msra.mxu0 %v909
  %1048 = vmatprep.subr.bf16.mxu0 0
  %1049 = vmatpush1.bf16.msra.mxu0 %v908
  %1050 = vmatprep.subr.bf16.mxu0 0
  %1051 = vmatpush1.bf16.msra.mxu0 %v907
  %1052 = vmatprep.subr.bf16.mxu0 0
  %1053 = vmatpush1.bf16.msra.mxu0 %v906
  %1054 = vmatprep.subr.bf16.mxu0 0
  %1055 = vmatpush1.bf16.msra.mxu0 %v905
  %1056 = vmatprep.subr.bf16.mxu0 0
  %1057 = vmatpush1.bf16.msra.mxu0 %v904
  %1058 = vmatprep.subr.bf16.mxu0 0
  %1059 = vmatpush1.bf16.msra.mxu0 %v903
  %1060 = vmatprep.subr.bf16.mxu0 0
  %1061 = vmatpush1.bf16.msra.mxu0 %v902
  %1062 = vmatprep.subr.bf16.mxu0 0
  %1063 = vmatpush2.bf16.msra.mxu0 %v917
  %1064 = vmatprep.subr.bf16.mxu0 0
  %1065 = vmatpush2.bf16.msra.mxu0 %v916
  %1066 = vmatprep.subr.bf16.mxu0 0
  %1067 = vmatpush2.bf16.msra.mxu0 %v915
  %1068 = vmatprep.subr.bf16.mxu0 0
  %1069 = vmatpush2.bf16.msra.mxu0 %v914
  %1070 = vmatprep.subr.bf16.mxu0 0
  %1071 = vmatpush2.bf16.msra.mxu0 %v913
  %1072 = vmatprep.subr.bf16.mxu0 0
  %1073 = vmatpush2.bf16.msra.mxu0 %v912
  %1074 = vmatprep.subr.bf16.mxu0 0
  %1075 = vmatpush2.bf16.msra.mxu0 %v911
  %1076 = vmatprep.subr.bf16.mxu0 0
  %1077 = vmatpush2.bf16.msra.mxu0 %v910
  %1078 = vmatprep.mubr.bf16.mxu0 %v471
  %1079 = vmatmul.mubr.bf16.gmra.mxu0 %v470
  %v1080 = vpop.f32.mrf.mxu0
  %v1081 = vadd.f32 %v244, %v1080
  %v1082 = vpop.f32.mrf.mxu0
  %v1083 = vpop.f32.mrf.mxu0
  %v1084 = vadd.f32 %v244, %v1083
  %v1085 = vpop.f32.mrf.mxu0
  %1086 = vmatprep.mubr.bf16.mxu0 %v480
  %1087 = vmatmul.mubr.bf16.gmra.mxu0 %v479
  %v1088 = vpop.f32.mrf.mxu0
  %v1089 = vadd.f32 %v244, %v1088
  %v1090 = vpop.f32.mrf.mxu0
  %v1091 = vpop.f32.mrf.mxu0
  %v1092 = vadd.f32 %v244, %v1091
  %v1093 = vpop.f32.mrf.mxu0
  %1094 = vmatprep.mubr.bf16.mxu0 %v489
  %1095 = vmatmul.mubr.bf16.gmra.mxu0 %v488
  %v1096 = vpop.f32.mrf.mxu0
  %v1097 = vadd.f32 %v244, %v1096
  %v1098 = vpop.f32.mrf.mxu0
  %v1099 = vpop.f32.mrf.mxu0
  %v1100 = vadd.f32 %v244, %v1099
  %v1101 = vpop.f32.mrf.mxu0
  %1102 = vmatprep.mubr.bf16.mxu0 %v498
  %1103 = vmatmul.mubr.bf16.gmra.mxu0 %v497
  %v1104 = vpop.f32.mrf.mxu0
  %v1105 = vadd.f32 %v244, %v1104
  %v1106 = vpop.f32.mrf.mxu0
  %v1107 = vpop.f32.mrf.mxu0
  %v1108 = vadd.f32 %v244, %v1107
  %v1109 = vpop.f32.mrf.mxu0
  %1110 = vmatprep.mubr.bf16.mxu0 %v507
  %1111 = vmatmul.mubr.bf16.gmra.mxu0 %v506
  %v1112 = vpop.f32.mrf.mxu0
  %v1113 = vadd.f32 %v244, %v1112
  %v1114 = vpop.f32.mrf.mxu0
  %v1115 = vpop.f32.mrf.mxu0
  %v1116 = vadd.f32 %v244, %v1115
  %v1117 = vpop.f32.mrf.mxu0
  %1118 = vmatprep.mubr.bf16.mxu0 %v516
  %1119 = vmatmul.mubr.bf16.gmra.mxu0 %v515
  %v1120 = vpop.f32.mrf.mxu0
  %v1121 = vadd.f32 %v244, %v1120
  %v1122 = vpop.f32.mrf.mxu0
  %v1123 = vpop.f32.mrf.mxu0
  %v1124 = vadd.f32 %v244, %v1123
  %v1125 = vpop.f32.mrf.mxu0
  %1126 = vmatprep.mubr.bf16.mxu0 %v525
  %1127 = vmatmul.mubr.bf16.gmra.mxu0 %v524
  %v1128 = vpop.f32.mrf.mxu0
  %v1129 = vadd.f32 %v244, %v1128
  %v1130 = vpop.f32.mrf.mxu0
  %v1131 = vpop.f32.mrf.mxu0
  %v1132 = vadd.f32 %v244, %v1131
  %v1133 = vpop.f32.mrf.mxu0
  %1134 = vmatprep.mubr.bf16.mxu0 %v534
  %1135 = vmatmul.mubr.bf16.gmra.mxu0 %v533
  %v1136 = vpop.f32.mrf.mxu0
  %v1137 = vadd.f32 %v244, %v1136
  %v1138 = vpop.f32.mrf.mxu0
  %v1139 = vpop.f32.mrf.mxu0
  %v1140 = vadd.f32 %v244, %v1139
  %v1141 = vpop.f32.mrf.mxu0
  %1142 = vdwg.mxu0
  %1143 = vmatprep.subr.bf16.mxu0 0
  %1144 = vmatpush1.bf16.msra.mxu0 %v925
  %1145 = vmatprep.subr.bf16.mxu0 0
  %1146 = vmatpush1.bf16.msra.mxu0 %v924
  %1147 = vmatprep.subr.bf16.mxu0 0
  %1148 = vmatpush1.bf16.msra.mxu0 %v923
  %1149 = vmatprep.subr.bf16.mxu0 0
  %1150 = vmatpush1.bf16.msra.mxu0 %v922
  %1151 = vmatprep.subr.bf16.mxu0 0
  %1152 = vmatpush1.bf16.msra.mxu0 %v921
  %1153 = vmatprep.subr.bf16.mxu0 0
  %1154 = vmatpush1.bf16.msra.mxu0 %v920
  %1155 = vmatprep.subr.bf16.mxu0 0
  %1156 = vmatpush1.bf16.msra.mxu0 %v919
  %1157 = vmatprep.subr.bf16.mxu0 0
  %1158 = vmatpush1.bf16.msra.mxu0 %v918
  %1159 = vmatprep.subr.bf16.mxu0 0
  %1160 = vmatpush2.bf16.msra.mxu0 %v933
  %1161 = vmatprep.subr.bf16.mxu0 0
  %1162 = vmatpush2.bf16.msra.mxu0 %v932
  %1163 = vmatprep.subr.bf16.mxu0 0
  %1164 = vmatpush2.bf16.msra.mxu0 %v931
  %1165 = vmatprep.subr.bf16.mxu0 0
  %1166 = vmatpush2.bf16.msra.mxu0 %v930
  %1167 = vmatprep.subr.bf16.mxu0 0
  %1168 = vmatpush2.bf16.msra.mxu0 %v929
  %1169 = vmatprep.subr.bf16.mxu0 0
  %1170 = vmatpush2.bf16.msra.mxu0 %v928
  %1171 = vmatprep.subr.bf16.mxu0 0
  %1172 = vmatpush2.bf16.msra.mxu0 %v927
  %1173 = vmatprep.subr.bf16.mxu0 0
  %1174 = vmatpush2.bf16.msra.mxu0 %v926
  %1175 = vmatprep.mubr.bf16.mxu0 %v473
  %1176 = vmatmul.mubr.bf16.gmra.mxu0 %v472
  %v1177 = vpop.f32.mrf.mxu0
  %v1178 = vadd.f32 %v1081, %v1177
  %v1179 = vpop.f32.mrf.mxu0
  %v1180 = vpop.f32.mrf.mxu0
  %v1181 = vadd.f32 %v1084, %v1180
  %v1182 = vpop.f32.mrf.mxu0
  %1183 = vmatprep.mubr.bf16.mxu0 %v482
  %1184 = vmatmul.mubr.bf16.gmra.mxu0 %v481
  %v1185 = vpop.f32.mrf.mxu0
  %v1186 = vadd.f32 %v1089, %v1185
  %v1187 = vpop.f32.mrf.mxu0
  %v1188 = vpop.f32.mrf.mxu0
  %v1189 = vadd.f32 %v1092, %v1188
  %v1190 = vpop.f32.mrf.mxu0
  %1191 = vmatprep.mubr.bf16.mxu0 %v491
  %1192 = vmatmul.mubr.bf16.gmra.mxu0 %v490
  %v1193 = vpop.f32.mrf.mxu0
  %v1194 = vadd.f32 %v1097, %v1193
  %v1195 = vpop.f32.mrf.mxu0
  %v1196 = vpop.f32.mrf.mxu0
  %v1197 = vadd.f32 %v1100, %v1196
  %v1198 = vpop.f32.mrf.mxu0
  %1199 = vmatprep.mubr.bf16.mxu0 %v500
  %1200 = vmatmul.mubr.bf16.gmra.mxu0 %v499
  %v1201 = vpop.f32.mrf.mxu0
  %v1202 = vadd.f32 %v1105, %v1201
  %v1203 = vpop.f32.mrf.mxu0
  %v1204 = vpop.f32.mrf.mxu0
  %v1205 = vadd.f32 %v1108, %v1204
  %v1206 = vpop.f32.mrf.mxu0
  %1207 = vmatprep.mubr.bf16.mxu0 %v509
  %1208 = vmatmul.mubr.bf16.gmra.mxu0 %v508
  %v1209 = vpop.f32.mrf.mxu0
  %v1210 = vadd.f32 %v1113, %v1209
  %v1211 = vpop.f32.mrf.mxu0
  %v1212 = vpop.f32.mrf.mxu0
  %v1213 = vadd.f32 %v1116, %v1212
  %v1214 = vpop.f32.mrf.mxu0
  %1215 = vmatprep.mubr.bf16.mxu0 %v518
  %1216 = vmatmul.mubr.bf16.gmra.mxu0 %v517
  %v1217 = vpop.f32.mrf.mxu0
  %v1218 = vadd.f32 %v1121, %v1217
  %v1219 = vpop.f32.mrf.mxu0
  %v1220 = vpop.f32.mrf.mxu0
  %v1221 = vadd.f32 %v1124, %v1220
  %v1222 = vpop.f32.mrf.mxu0
  %1223 = vmatprep.mubr.bf16.mxu0 %v527
  %1224 = vmatmul.mubr.bf16.gmra.mxu0 %v526
  %v1225 = vpop.f32.mrf.mxu0
  %v1226 = vadd.f32 %v1129, %v1225
  %v1227 = vpop.f32.mrf.mxu0
  %v1228 = vpop.f32.mrf.mxu0
  %v1229 = vadd.f32 %v1132, %v1228
  %v1230 = vpop.f32.mrf.mxu0
  %1231 = vmatprep.mubr.bf16.mxu0 %v536
  %1232 = vmatmul.mubr.bf16.gmra.mxu0 %v535
  %v1233 = vpop.f32.mrf.mxu0
  %v1234 = vadd.f32 %v1137, %v1233
  %v1235 = vpop.f32.mrf.mxu0
  %v1236 = vpop.f32.mrf.mxu0
  %v1237 = vadd.f32 %v1140, %v1236
  %v1238 = vpop.f32.mrf.mxu0
  %1239 = vdwg.mxu0
  %1240 = vmatprep.subr.bf16.mxu0 0
  %1241 = vmatpush1.bf16.msra.mxu0 %v941
  %1242 = vmatprep.subr.bf16.mxu0 0
  %1243 = vmatpush1.bf16.msra.mxu0 %v940
  %1244 = vmatprep.subr.bf16.mxu0 0
  %1245 = vmatpush1.bf16.msra.mxu0 %v939
  %1246 = vmatprep.subr.bf16.mxu0 0
  %1247 = vmatpush1.bf16.msra.mxu0 %v938
  %1248 = vmatprep.subr.bf16.mxu0 0
  %1249 = vmatpush1.bf16.msra.mxu0 %v937
  %1250 = vmatprep.subr.bf16.mxu0 0
  %1251 = vmatpush1.bf16.msra.mxu0 %v936
  %1252 = vmatprep.subr.bf16.mxu0 0
  %1253 = vmatpush1.bf16.msra.mxu0 %v935
  %1254 = vmatprep.subr.bf16.mxu0 0
  %1255 = vmatpush1.bf16.msra.mxu0 %v934
  %1256 = vmatprep.subr.bf16.mxu0 0
  %1257 = vmatpush2.bf16.msra.mxu0 %v949
  %1258 = vmatprep.subr.bf16.mxu0 0
  %1259 = vmatpush2.bf16.msra.mxu0 %v948
  %1260 = vmatprep.subr.bf16.mxu0 0
  %1261 = vmatpush2.bf16.msra.mxu0 %v947
  %1262 = vmatprep.subr.bf16.mxu0 0
  %1263 = vmatpush2.bf16.msra.mxu0 %v946
  %1264 = vmatprep.subr.bf16.mxu0 0
  %1265 = vmatpush2.bf16.msra.mxu0 %v945
  %1266 = vmatprep.subr.bf16.mxu0 0
  %1267 = vmatpush2.bf16.msra.mxu0 %v944
  %1268 = vmatprep.subr.bf16.mxu0 0
  %1269 = vmatpush2.bf16.msra.mxu0 %v943
  %1270 = vmatprep.subr.bf16.mxu0 0
  %1271 = vmatpush2.bf16.msra.mxu0 %v942
  %1272 = vmatprep.mubr.bf16.mxu0 %v475
  %1273 = vmatmul.mubr.bf16.gmra.mxu0 %v474
  %v1274 = vpop.f32.mrf.mxu0
  %v1275 = vadd.f32 %v1178, %v1274
  %v1276 = vpop.f32.mrf.mxu0
  %v1277 = vpop.f32.mrf.mxu0
  %v1278 = vadd.f32 %v1181, %v1277
  %v1279 = vpop.f32.mrf.mxu0
  %1280 = vmatprep.mubr.bf16.mxu0 %v484
  %1281 = vmatmul.mubr.bf16.gmra.mxu0 %v483
  %v1282 = vpop.f32.mrf.mxu0
  %v1283 = vadd.f32 %v1186, %v1282
  %v1284 = vpop.f32.mrf.mxu0
  %v1285 = vpop.f32.mrf.mxu0
  %v1286 = vadd.f32 %v1189, %v1285
  %v1287 = vpop.f32.mrf.mxu0
  %1288 = vmatprep.mubr.bf16.mxu0 %v493
  %1289 = vmatmul.mubr.bf16.gmra.mxu0 %v492
  %v1290 = vpop.f32.mrf.mxu0
  %v1291 = vadd.f32 %v1194, %v1290
  %v1292 = vpop.f32.mrf.mxu0
  %v1293 = vpop.f32.mrf.mxu0
  %v1294 = vadd.f32 %v1197, %v1293
  %v1295 = vpop.f32.mrf.mxu0
  %1296 = vmatprep.mubr.bf16.mxu0 %v502
  %1297 = vmatmul.mubr.bf16.gmra.mxu0 %v501
  %v1298 = vpop.f32.mrf.mxu0
  %v1299 = vadd.f32 %v1202, %v1298
  %v1300 = vpop.f32.mrf.mxu0
  %v1301 = vpop.f32.mrf.mxu0
  %v1302 = vadd.f32 %v1205, %v1301
  %v1303 = vpop.f32.mrf.mxu0
  %1304 = vmatprep.mubr.bf16.mxu0 %v511
  %1305 = vmatmul.mubr.bf16.gmra.mxu0 %v510
  %v1306 = vpop.f32.mrf.mxu0
  %v1307 = vadd.f32 %v1210, %v1306
  %v1308 = vpop.f32.mrf.mxu0
  %v1309 = vpop.f32.mrf.mxu0
  %v1310 = vadd.f32 %v1213, %v1309
  %v1311 = vpop.f32.mrf.mxu0
  %1312 = vmatprep.mubr.bf16.mxu0 %v520
  %1313 = vmatmul.mubr.bf16.gmra.mxu0 %v519
  %v1314 = vpop.f32.mrf.mxu0
  %v1315 = vadd.f32 %v1218, %v1314
  %v1316 = vpop.f32.mrf.mxu0
  %v1317 = vpop.f32.mrf.mxu0
  %v1318 = vadd.f32 %v1221, %v1317
  %v1319 = vpop.f32.mrf.mxu0
  %1320 = vmatprep.mubr.bf16.mxu0 %v529
  %1321 = vmatmul.mubr.bf16.gmra.mxu0 %v528
  %v1322 = vpop.f32.mrf.mxu0
  %v1323 = vadd.f32 %v1226, %v1322
  %v1324 = vpop.f32.mrf.mxu0
  %v1325 = vpop.f32.mrf.mxu0
  %v1326 = vadd.f32 %v1229, %v1325
  %v1327 = vpop.f32.mrf.mxu0
  %1328 = vmatprep.mubr.bf16.mxu0 %v538
  %1329 = vmatmul.mubr.bf16.gmra.mxu0 %v537
  %v1330 = vpop.f32.mrf.mxu0
  %v1331 = vadd.f32 %v1234, %v1330
  %v1332 = vpop.f32.mrf.mxu0
  %v1333 = vpop.f32.mrf.mxu0
  %v1334 = vadd.f32 %v1237, %v1333
  %v1335 = vpop.f32.mrf.mxu0
  %1336 = vdwg.mxu0
  %1337 = vmatprep.subr.bf16.mxu0 0
  %1338 = vmatpush1.bf16.msra.mxu0 %v957
  %1339 = vmatprep.subr.bf16.mxu0 0
  %1340 = vmatpush1.bf16.msra.mxu0 %v956
  %1341 = vmatprep.subr.bf16.mxu0 0
  %1342 = vmatpush1.bf16.msra.mxu0 %v955
  %1343 = vmatprep.subr.bf16.mxu0 0
  %1344 = vmatpush1.bf16.msra.mxu0 %v954
  %1345 = vmatprep.subr.bf16.mxu0 0
  %1346 = vmatpush1.bf16.msra.mxu0 %v953
  %1347 = vmatprep.subr.bf16.mxu0 0
  %1348 = vmatpush1.bf16.msra.mxu0 %v952
  %1349 = vmatprep.subr.bf16.mxu0 0
  %1350 = vmatpush1.bf16.msra.mxu0 %v951
  %1351 = vmatprep.subr.bf16.mxu0 0
  %1352 = vmatpush1.bf16.msra.mxu0 %v950
  %1353 = vmatprep.subr.bf16.mxu0 0
  %1354 = vmatpush2.bf16.msra.mxu0 %v965
  %1355 = vmatprep.subr.bf16.mxu0 0
  %1356 = vmatpush2.bf16.msra.mxu0 %v964
  %1357 = vmatprep.subr.bf16.mxu0 0
  %1358 = vmatpush2.bf16.msra.mxu0 %v963
  %1359 = vmatprep.subr.bf16.mxu0 0
  %1360 = vmatpush2.bf16.msra.mxu0 %v962
  %1361 = vmatprep.subr.bf16.mxu0 0
  %1362 = vmatpush2.bf16.msra.mxu0 %v961
  %1363 = vmatprep.subr.bf16.mxu0 0
  %1364 = vmatpush2.bf16.msra.mxu0 %v960
  %1365 = vmatprep.subr.bf16.mxu0 0
  %1366 = vmatpush2.bf16.msra.mxu0 %v959
  %1367 = vmatprep.subr.bf16.mxu0 0
  %1368 = vmatpush2.bf16.msra.mxu0 %v958
  %1369 = vmatprep.mubr.bf16.mxu0 %v477
  %1370 = vmatmul.mubr.bf16.gmra.mxu0 %v476
  %v1371 = vpop.f32.mrf.mxu0
  %v1372 = vadd.f32 %v1275, %v1371
  %v1373 = vpop.f32.mrf.mxu0
  %v1374 = vpop.f32.mrf.mxu0
  %v1375 = vadd.f32 %v1278, %v1374
  %v1376 = vpop.f32.mrf.mxu0
  %1377 = vmatprep.mubr.bf16.mxu0 %v486
  %1378 = vmatmul.mubr.bf16.gmra.mxu0 %v485
  %v1379 = vpop.f32.mrf.mxu0
  %v1380 = vadd.f32 %v1283, %v1379
  %v1381 = vpop.f32.mrf.mxu0
  %v1382 = vpop.f32.mrf.mxu0
  %v1383 = vadd.f32 %v1286, %v1382
  %v1384 = vpop.f32.mrf.mxu0
  %1385 = vmatprep.mubr.bf16.mxu0 %v495
  %1386 = vmatmul.mubr.bf16.gmra.mxu0 %v494
  %v1387 = vpop.f32.mrf.mxu0
  %v1388 = vadd.f32 %v1291, %v1387
  %v1389 = vpop.f32.mrf.mxu0
  %v1390 = vpop.f32.mrf.mxu0
  %v1391 = vadd.f32 %v1294, %v1390
  %v1392 = vpop.f32.mrf.mxu0
  %1393 = vmatprep.mubr.bf16.mxu0 %v504
  %1394 = vmatmul.mubr.bf16.gmra.mxu0 %v503
  %v1395 = vpop.f32.mrf.mxu0
  %v1396 = vadd.f32 %v1299, %v1395
  %v1397 = vpop.f32.mrf.mxu0
  %v1398 = vpop.f32.mrf.mxu0
  %v1399 = vadd.f32 %v1302, %v1398
  %v1400 = vpop.f32.mrf.mxu0
  %1401 = vmatprep.mubr.bf16.mxu0 %v513
  %1402 = vmatmul.mubr.bf16.gmra.mxu0 %v512
  %v1403 = vpop.f32.mrf.mxu0
  %v1404 = vadd.f32 %v1307, %v1403
  %v1405 = vpop.f32.mrf.mxu0
  %v1406 = vpop.f32.mrf.mxu0
  %v1407 = vadd.f32 %v1310, %v1406
  %v1408 = vpop.f32.mrf.mxu0
  %1409 = vmatprep.mubr.bf16.mxu0 %v522
  %1410 = vmatmul.mubr.bf16.gmra.mxu0 %v521
  %v1411 = vpop.f32.mrf.mxu0
  %v1412 = vadd.f32 %v1315, %v1411
  %v1413 = vpop.f32.mrf.mxu0
  %v1414 = vpop.f32.mrf.mxu0
  %v1415 = vadd.f32 %v1318, %v1414
  %v1416 = vpop.f32.mrf.mxu0
  %1417 = vmatprep.mubr.bf16.mxu0 %v531
  %1418 = vmatmul.mubr.bf16.gmra.mxu0 %v530
  %v1419 = vpop.f32.mrf.mxu0
  %v1420 = vadd.f32 %v1323, %v1419
  %v1421 = vpop.f32.mrf.mxu0
  %v1422 = vpop.f32.mrf.mxu0
  %v1423 = vadd.f32 %v1326, %v1422
  %v1424 = vpop.f32.mrf.mxu0
  %1425 = vmatprep.mubr.bf16.mxu0 %v540
  %1426 = vmatmul.mubr.bf16.gmra.mxu0 %v539
  %v1427 = vpop.f32.mrf.mxu0
  %v1428 = vadd.f32 %v1331, %v1427
  %v1429 = vpop.f32.mrf.mxu0
  %v1430 = vpop.f32.mrf.mxu0
  %v1431 = vadd.f32 %v1334, %v1430
  %v1432 = vpop.f32.mrf.mxu0
  %1433 = vdwg.mxu0
  %1434 = vmatprep.subr.bf16.mxu0 0
  %1435 = vmatpush1.bf16.msra.mxu0 %v973
  %1436 = vmatprep.subr.bf16.mxu0 0
  %1437 = vmatpush1.bf16.msra.mxu0 %v972
  %1438 = vmatprep.subr.bf16.mxu0 0
  %1439 = vmatpush1.bf16.msra.mxu0 %v971
  %1440 = vmatprep.subr.bf16.mxu0 0
  %1441 = vmatpush1.bf16.msra.mxu0 %v970
  %1442 = vmatprep.subr.bf16.mxu0 0
  %1443 = vmatpush1.bf16.msra.mxu0 %v969
  %1444 = vmatprep.subr.bf16.mxu0 0
  %1445 = vmatpush1.bf16.msra.mxu0 %v968
  %1446 = vmatprep.subr.bf16.mxu0 0
  %1447 = vmatpush1.bf16.msra.mxu0 %v967
  %1448 = vmatprep.subr.bf16.mxu0 0
  %1449 = vmatpush1.bf16.msra.mxu0 %v966
  %1450 = vmatprep.subr.bf16.mxu0 0
  %1451 = vmatpush2.bf16.msra.mxu0 0
  %1452 = vmatprep.subr.bf16.mxu0 0
  %1453 = vmatpush2.bf16.msra.mxu0 0
  %1454 = vmatprep.subr.bf16.mxu0 0
  %1455 = vmatpush2.bf16.msra.mxu0 0
  %1456 = vmatprep.subr.bf16.mxu0 0
  %1457 = vmatpush2.bf16.msra.mxu0 0
  %1458 = vmatprep.subr.bf16.mxu0 0
  %1459 = vmatpush2.bf16.msra.mxu0 0
  %1460 = vmatprep.subr.bf16.mxu0 0
  %1461 = vmatpush2.bf16.msra.mxu0 0
  %1462 = vmatprep.subr.bf16.mxu0 0
  %1463 = vmatpush2.bf16.msra.mxu0 0
  %1464 = vmatprep.subr.bf16.mxu0 0
  %1465 = vmatpush2.bf16.msra.mxu0 0
  %1466 = vmatprep.mubr.bf16.mxu0 0
  %1467 = vmatmul.mubr.bf16.gmra.mxu0 %v478
  %v1468 = vpop.f32.mrf.mxu0
  %v1469 = vadd.f32 %v1372, %v1468
  %v1470 = vpop.f32.mrf.mxu0
  %v1471 = vpop.f32.mrf.mxu0
  %v1472 = vadd.f32 %v1375, %v1471
  %v1473 = vpop.f32.mrf.mxu0
  %1474 = vmatprep.mubr.bf16.mxu0 0
  %1475 = vmatmul.mubr.bf16.gmra.mxu0 %v487
  %v1476 = vpop.f32.mrf.mxu0
  %v1477 = vadd.f32 %v1380, %v1476
  %v1478 = vpop.f32.mrf.mxu0
  %v1479 = vpop.f32.mrf.mxu0
  %v1480 = vadd.f32 %v1383, %v1479
  %v1481 = vpop.f32.mrf.mxu0
  %1482 = vmatprep.mubr.bf16.mxu0 0
  %1483 = vmatmul.mubr.bf16.gmra.mxu0 %v496
  %v1484 = vpop.f32.mrf.mxu0
  %v1485 = vadd.f32 %v1388, %v1484
  %v1486 = vpop.f32.mrf.mxu0
  %v1487 = vpop.f32.mrf.mxu0
  %v1488 = vadd.f32 %v1391, %v1487
  %v1489 = vpop.f32.mrf.mxu0
  %1490 = vmatprep.mubr.bf16.mxu0 0
  %1491 = vmatmul.mubr.bf16.gmra.mxu0 %v505
  %v1492 = vpop.f32.mrf.mxu0
  %v1493 = vadd.f32 %v1396, %v1492
  %v1494 = vpop.f32.mrf.mxu0
  %v1495 = vpop.f32.mrf.mxu0
  %v1496 = vadd.f32 %v1399, %v1495
  %v1497 = vpop.f32.mrf.mxu0
  %1498 = vmatprep.mubr.bf16.mxu0 0
  %1499 = vmatmul.mubr.bf16.gmra.mxu0 %v514
  %v1500 = vpop.f32.mrf.mxu0
  %v1501 = vadd.f32 %v1404, %v1500
  %v1502 = vpop.f32.mrf.mxu0
  %v1503 = vpop.f32.mrf.mxu0
  %v1504 = vadd.f32 %v1407, %v1503
  %v1505 = vpop.f32.mrf.mxu0
  %1506 = vmatprep.mubr.bf16.mxu0 0
  %1507 = vmatmul.mubr.bf16.gmra.mxu0 %v523
  %v1508 = vpop.f32.mrf.mxu0
  %v1509 = vadd.f32 %v1412, %v1508
  %v1510 = vpop.f32.mrf.mxu0
  %v1511 = vpop.f32.mrf.mxu0
  %v1512 = vadd.f32 %v1415, %v1511
  %v1513 = vpop.f32.mrf.mxu0
  %1514 = vmatprep.mubr.bf16.mxu0 0
  %1515 = vmatmul.mubr.bf16.gmra.mxu0 %v532
  %v1516 = vpop.f32.mrf.mxu0
  %v1517 = vadd.f32 %v1420, %v1516
  %v1518 = vpop.f32.mrf.mxu0
  %v1519 = vpop.f32.mrf.mxu0
  %v1520 = vadd.f32 %v1423, %v1519
  %v1521 = vpop.f32.mrf.mxu0
  %1522 = vmatprep.mubr.bf16.mxu0 0
  %1523 = vmatmul.mubr.bf16.gmra.mxu0 %v541
  %v1524 = vpop.f32.mrf.mxu0
  %v1525 = vadd.f32 %v1428, %v1524
  %v1526 = vpop.f32.mrf.mxu0
  %v1527 = vpop.f32.mrf.mxu0
  %v1528 = vadd.f32 %v1431, %v1527
  %v1529 = vpop.f32.mrf.mxu0
  %1530 = vdwg.mxu0
  %v1531 = vmax.f32 %v1469, 0.0
  %v1532 = vmax.f32 %v1472, 0.0
  %v1533 = vmax.f32 %v1477, 0.0
  %v1534 = vmax.f32 %v1480, 0.0
  %v1535 = vmax.f32 %v1485, 0.0
  %v1536 = vmax.f32 %v1488, 0.0
  %v1537 = vmax.f32 %v1493, 0.0
  %v1538 = vmax.f32 %v1496, 0.0
  %v1539 = vmax.f32 %v1501, 0.0
  %v1540 = vmax.f32 %v1504, 0.0
  %v1541 = vmax.f32 %v1509, 0.0
  %v1542 = vmax.f32 %v1512, 0.0
  %v1543 = vmax.f32 %v1517, 0.0
  %v1544 = vmax.f32 %v1520, 0.0
  %v1545 = vmax.f32 %v1525, 0.0
  %v1546 = vmax.f32 %v1528, 0.0
  %v1547 = vpack.c.bf16 %v1532, %v1531
  %v1548 = vpack.c.bf16 %v1534, %v1533
  %v1549 = vpack.c.bf16 %v1536, %v1535
  %v1550 = vpack.c.bf16 %v1538, %v1537
  %v1551 = vpack.c.bf16 %v1540, %v1539
  %v1552 = vpack.c.bf16 %v1542, %v1541
  %v1553 = vpack.c.bf16 %v1544, %v1543
  %v1554 = vpack.c.bf16 %v1546, %v1545
  %v1563 = vunpack.c.l.b16 %v1547
  %v1564 = vunpack.c.h.b16 %v1547
  %v1565 = vunpack.c.l.b16 %v1548
  %v1566 = vunpack.c.h.b16 %v1548
  %v1567 = vunpack.c.l.b16 %v1549
  %v1568 = vunpack.c.h.b16 %v1549
  %v1569 = vunpack.c.l.b16 %v1550
  %v1570 = vunpack.c.h.b16 %v1550
  %v1571 = vunpack.c.l.b16 %v1551
  %v1572 = vunpack.c.h.b16 %v1551
  %v1573 = vunpack.c.l.b16 %v1552
  %v1574 = vunpack.c.h.b16 %v1552
  %v1575 = vunpack.c.l.b16 %v1553
  %v1576 = vunpack.c.h.b16 %v1553
  %v1577 = vunpack.c.l.b16 %v1554
  %v1578 = vunpack.c.h.b16 %v1554
  %v1579 = vpack.c.b16 %v1563, %v1563
  %v1580 = vpack.c.b16 %v1564, %v1564
  %v1581 = vpack.c.b16 %v1565, %v1565
  %v1582 = vpack.c.b16 %v1566, %v1566
  %v1583 = vpack.c.b16 %v1567, %v1567
  %v1584 = vpack.c.b16 %v1568, %v1568
  %v1585 = vpack.c.b16 %v1569, %v1569
  %v1586 = vpack.c.b16 %v1570, %v1570
  %v1587 = vpack.c.b16 %v1571, %v1571
  %v1588 = vpack.c.b16 %v1572, %v1572
  %v1589 = vpack.c.b16 %v1573, %v1573
  %v1590 = vpack.c.b16 %v1574, %v1574
  %v1591 = vpack.c.b16 %v1575, %v1575
  %v1592 = vpack.c.b16 %v1576, %v1576
  %v1593 = vpack.c.b16 %v1577, %v1577
  %v1594 = vpack.c.b16 %v1578, %v1578
  %1611 = vst [vmem:[%s3] sm:$0xf] %v1579
  %1612 = vst [vmem:[%s3 + $0x4] sm:$0xf] %v1580
  %1613 = vst [vmem:[%s3 + $0x8] sm:$0xf] %v1581
  %1614 = vst [vmem:[%s3 + $0xc] sm:$0xf] %v1582
  %1615 = vst [vmem:[%s3 + $0x10] sm:$0xf] %v1583
  %1616 = vst [vmem:[%s3 + $0x14] sm:$0xf] %v1584
  %1617 = vst [vmem:[%s3 + $0x18] sm:$0xf] %v1585
  %1618 = vst [vmem:[%s3 + $0x1c] sm:$0xf] %v1586
  %1619 = vst [vmem:[%s3 + $0x20] sm:$0xf] %v1587
  %1620 = vst [vmem:[%s3 + $0x24] sm:$0xf] %v1588
  %1621 = vst [vmem:[%s3 + $0x28] sm:$0xf] %v1589
  %1622 = vst [vmem:[%s3 + $0x2c] sm:$0xf] %v1590
  %1623 = vst [vmem:[%s3 + $0x30] sm:$0xf] %v1591
  %1624 = vst [vmem:[%s3 + $0x34] sm:$0xf] %v1592
  %1625 = vst [vmem:[%s3 + $0x38] sm:$0xf] %v1593
  %1626 = vst [vmem:[%s3 + $0x3c] sm:$0xf] %v1594
  // Predicated region
  $region14: #{colorization_net.16} parent=0 // pred_check
    _
  $region15: #{colorization_net.16} parent=0 // pred_check_branch
    %1628 = sbr.rel (0) target = $region17
  $region16: #{colorization_net.16} parent=0 // pred_region
    _
  $region17: #{colorization_net.16} parent=0 // pred_fallthru
    _
  // Predicated region
  $region18: #{colorization_net.16} parent=0 // pred_check
    _
  $region19: #{colorization_net.16} parent=0 // pred_check_branch
    %1630 = sbr.rel (0) target = $region21
  $region20: #{colorization_net.16} parent=0 // pred_region
    _
  $region21: #{colorization_net.16} parent=0 // pred_fallthru
    _

// kernel: colorization_net.17
$region0: #{colorization_net.17}
  #allocation0 [shape = 'u32[]', space=smem, size = 0x4, offset = 0x4, fixed_abs, tag = 'smem constant byte address 0x4 - core index']
  #allocation1 [shape = 'u32[144,128]{1,0:T(1,128)}', space=vmem, size = 0x12000, scoped, tag = 'internal scratch']
  %s0 = inlined_call_operand.vmem [shape: bf16[128,1152], index: 0, kind: input, shape index: {}]
  %s1 = inlined_call_operand.vmem [shape: bf16[1152,128], index: 1, kind: input, shape index: {}]
  %s2 = inlined_call_operand.vmem [shape: f32[1,128], index: 2, kind: input, shape index: {}]
  %s3 = inlined_call_operand.vmem [shape: bf16[128,128], index: 3, kind: input, shape index: {}]
  %s4 = inlined_call_operand.vmem [shape: bf16[128,128], index: 4, kind: output, shape index: {}]
  %s5 = sld [smem:[#allocation0]]
  $region26: #{colorization_net.17} parent=0
    _
  %s7 = ssub.s32 1, %s5
  %s8 = scalar_select 0, %s7, %s5
  // Predicated region
  $region2: #{colorization_net.17} parent=0 // pred_check
    _
  $region3: #{colorization_net.17} parent=0 // pred_check_branch
    %10 = sbr.rel (0) target = $region5
  $region4: #{colorization_net.17} parent=0 // pred_region
    _
  $region5: #{colorization_net.17} parent=0 // pred_fallthru
    _
  // Predicated region
  $region6: #{colorization_net.17} parent=0 // pred_check
    _
  $region7: #{colorization_net.17} parent=0 // pred_check_branch
    %12 = sbr.rel (0) target = $region9
  $region8: #{colorization_net.17} parent=0 // pred_region
    _
  $region9: #{colorization_net.17} parent=0 // pred_fallthru
    _
  // Predicated region
  $region10: #{colorization_net.17} parent=0 // pred_check
    _
  $region11: #{colorization_net.17} parent=0 // pred_check_branch
    %14 = sbr.rel (0) target = $region13
  $region12: #{colorization_net.17} parent=0 // pred_region
    _
  $region13: #{colorization_net.17} parent=0 // pred_fallthru
    _
  // Predicated region
  $region14: #{colorization_net.17} parent=0 // pred_check
    _
  $region15: #{colorization_net.17} parent=0 // pred_check_branch
    %16 = sbr.rel (0) target = $region17
  $region16: #{colorization_net.17} parent=0 // pred_region
    _
  $region17: #{colorization_net.17} parent=0 // pred_fallthru
    _
  %v18 = vld [vmem:[%s0] sm:$0xff]
  %v19 = vld [vmem:[%s0 + $0x8] sm:$0xff]
  %v20 = vld [vmem:[%s0 + $0x10] sm:$0xff]
  %v21 = vld [vmem:[%s0 + $0x18] sm:$0xff]
  %v22 = vld [vmem:[%s0 + $0x20] sm:$0xf]
  %v23 = vld [vmem:[%s0 + $0x24] sm:$0xff]
  %v24 = vld [vmem:[%s0 + $0x2c] sm:$0xff]
  %v25 = vld [vmem:[%s0 + $0x34] sm:$0xff]
  %v26 = vld [vmem:[%s0 + $0x3c] sm:$0xff]
  %v27 = vld [vmem:[%s0 + $0x44] sm:$0xf]
  %v28 = vld [vmem:[%s0 + $0x48] sm:$0xff]
  %v29 = vld [vmem:[%s0 + $0x50] sm:$0xff]
  %v30 = vld [vmem:[%s0 + $0x58] sm:$0xff]
  %v31 = vld [vmem:[%s0 + $0x60] sm:$0xff]
  %v32 = vld [vmem:[%s0 + $0x68] sm:$0xf]
  %v33 = vld [vmem:[%s0 + $0x6c] sm:$0xff]
  %v34 = vld [vmem:[%s0 + $0x74] sm:$0xff]
  %v35 = vld [vmem:[%s0 + $0x7c] sm:$0xff]
  %v36 = vld [vmem:[%s0 + $0x84] sm:$0xff]
  %v37 = vld [vmem:[%s0 + $0x8c] sm:$0xf]
  %v38 = vld [vmem:[%s0 + $0x90] sm:$0xff]
  %v39 = vld [vmem:[%s0 + $0x98] sm:$0xff]
  %v40 = vld [vmem:[%s0 + $0xa0] sm:$0xff]
  %v41 = vld [vmem:[%s0 + $0xa8] sm:$0xff]
  %v42 = vld [vmem:[%s0 + $0xb0] sm:$0xf]
  %v43 = vld [vmem:[%s0 + $0xb4] sm:$0xff]
  %v44 = vld [vmem:[%s0 + $0xbc] sm:$0xff]
  %v45 = vld [vmem:[%s0 + $0xc4] sm:$0xff]
  %v46 = vld [vmem:[%s0 + $0xcc] sm:$0xff]
  %v47 = vld [vmem:[%s0 + $0xd4] sm:$0xf]
  %v48 = vld [vmem:[%s0 + $0xd8] sm:$0xff]
  %v49 = vld [vmem:[%s0 + $0xe0] sm:$0xff]
  %v50 = vld [vmem:[%s0 + $0xe8] sm:$0xff]
  %v51 = vld [vmem:[%s0 + $0xf0] sm:$0xff]
  %v52 = vld [vmem:[%s0 + $0xf8] sm:$0xf]
  %v53 = vld [vmem:[%s0 + $0xfc] sm:$0xff]
  %v54 = vld [vmem:[%s0 + $0x104] sm:$0xff]
  %v55 = vld [vmem:[%s0 + $0x10c] sm:$0xff]
  %v56 = vld [vmem:[%s0 + $0x114] sm:$0xff]
  %v57 = vld [vmem:[%s0 + $0x11c] sm:$0xf]
  %v58 = vld [vmem:[%s0 + $0x120] sm:$0xff]
  %v59 = vld [vmem:[%s0 + $0x128] sm:$0xff]
  %v60 = vld [vmem:[%s0 + $0x130] sm:$0xff]
  %v61 = vld [vmem:[%s0 + $0x138] sm:$0xff]
  %v62 = vld [vmem:[%s0 + $0x140] sm:$0xf]
  %v63 = vld [vmem:[%s0 + $0x144] sm:$0xff]
  %v64 = vld [vmem:[%s0 + $0x14c] sm:$0xff]
  %v65 = vld [vmem:[%s0 + $0x154] sm:$0xff]
  %v66 = vld [vmem:[%s0 + $0x15c] sm:$0xff]
  %v67 = vld [vmem:[%s0 + $0x164] sm:$0xf]
  %v68 = vld [vmem:[%s0 + $0x168] sm:$0xff]
  %v69 = vld [vmem:[%s0 + $0x170] sm:$0xff]
  %v70 = vld [vmem:[%s0 + $0x178] sm:$0xff]
  %v71 = vld [vmem:[%s0 + $0x180] sm:$0xff]
  %v72 = vld [vmem:[%s0 + $0x188] sm:$0xf]
  %v73 = vld [vmem:[%s0 + $0x18c] sm:$0xff]
  %v74 = vld [vmem:[%s0 + $0x194] sm:$0xff]
  %v75 = vld [vmem:[%s0 + $0x19c] sm:$0xff]
  %v76 = vld [vmem:[%s0 + $0x1a4] sm:$0xff]
  %v77 = vld [vmem:[%s0 + $0x1ac] sm:$0xf]
  %v78 = vld [vmem:[%s0 + $0x1b0] sm:$0xff]
  %v79 = vld [vmem:[%s0 + $0x1b8] sm:$0xff]
  %v80 = vld [vmem:[%s0 + $0x1c0] sm:$0xff]
  %v81 = vld [vmem:[%s0 + $0x1c8] sm:$0xff]
  %v82 = vld [vmem:[%s0 + $0x1d0] sm:$0xf]
  %v83 = vld [vmem:[%s0 + $0x1d4] sm:$0xff]
  %v84 = vld [vmem:[%s0 + $0x1dc] sm:$0xff]
  %v85 = vld [vmem:[%s0 + $0x1e4] sm:$0xff]
  %v86 = vld [vmem:[%s0 + $0x1ec] sm:$0xff]
  %v87 = vld [vmem:[%s0 + $0x1f4] sm:$0xf]
  %v88 = vld [vmem:[%s0 + $0x1f8] sm:$0xff]
  %v89 = vld [vmem:[%s0 + $0x200] sm:$0xff]
  %v90 = vld [vmem:[%s0 + $0x208] sm:$0xff]
  %v91 = vld [vmem:[%s0 + $0x210] sm:$0xff]
  %v92 = vld [vmem:[%s0 + $0x218] sm:$0xf]
  %v93 = vld [vmem:[%s0 + $0x21c] sm:$0xff]
  %v94 = vld [vmem:[%s0 + $0x224] sm:$0xff]
  %v95 = vld [vmem:[%s0 + $0x22c] sm:$0xff]
  %v96 = vld [vmem:[%s0 + $0x234] sm:$0xff]
  %v97 = vld [vmem:[%s0 + $0x23c] sm:$0xf]
  %v98 = vld [vmem:[%s1] sm:$0xf]
  %v99 = vld [vmem:[%s1 + $0x4] sm:$0xf]
  %v100 = vld [vmem:[%s1 + $0x8] sm:$0xf]
  %v101 = vld [vmem:[%s1 + $0xc] sm:$0xf]
  %v102 = vld [vmem:[%s1 + $0x10] sm:$0xf]
  %v103 = vld [vmem:[%s1 + $0x14] sm:$0xf]
  %v104 = vld [vmem:[%s1 + $0x18] sm:$0xf]
  %v105 = vld [vmem:[%s1 + $0x1c] sm:$0xf]
  %v106 = vld [vmem:[%s1 + $0x20] sm:$0xf]
  %v107 = vld [vmem:[%s1 + $0x24] sm:$0xf]
  %v108 = vld [vmem:[%s1 + $0x28] sm:$0xf]
  %v109 = vld [vmem:[%s1 + $0x2c] sm:$0xf]
  %v110 = vld [vmem:[%s1 + $0x30] sm:$0xf]
  %v111 = vld [vmem:[%s1 + $0x34] sm:$0xf]
  %v112 = vld [vmem:[%s1 + $0x38] sm:$0xf]
  %v113 = vld [vmem:[%s1 + $0x3c] sm:$0xf]
  %v114 = vld [vmem:[%s1 + $0x40] sm:$0xf]
  %v115 = vld [vmem:[%s1 + $0x44] sm:$0xf]
  %v116 = vld [vmem:[%s1 + $0x48] sm:$0xf]
  %v117 = vld [vmem:[%s1 + $0x4c] sm:$0xf]
  %v118 = vld [vmem:[%s1 + $0x50] sm:$0xf]
  %v119 = vld [vmem:[%s1 + $0x54] sm:$0xf]
  %v120 = vld [vmem:[%s1 + $0x58] sm:$0xf]
  %v121 = vld [vmem:[%s1 + $0x5c] sm:$0xf]
  %v122 = vld [vmem:[%s1 + $0x60] sm:$0xf]
  %v123 = vld [vmem:[%s1 + $0x64] sm:$0xf]
  %v124 = vld [vmem:[%s1 + $0x68] sm:$0xf]
  %v125 = vld [vmem:[%s1 + $0x6c] sm:$0xf]
  %v126 = vld [vmem:[%s1 + $0x70] sm:$0xf]
  %v127 = vld [vmem:[%s1 + $0x74] sm:$0xf]
  %v128 = vld [vmem:[%s1 + $0x78] sm:$0xf]
  %v129 = vld [vmem:[%s1 + $0x7c] sm:$0xf]
  %v130 = vld [vmem:[%s1 + $0x80] sm:$0xf]
  %v131 = vld [vmem:[%s1 + $0x84] sm:$0xf]
  %v132 = vld [vmem:[%s1 + $0x88] sm:$0xf]
  %v133 = vld [vmem:[%s1 + $0x8c] sm:$0xf]
  %v134 = vld [vmem:[%s1 + $0x90] sm:$0xf]
  %v135 = vld [vmem:[%s1 + $0x94] sm:$0xf]
  %v136 = vld [vmem:[%s1 + $0x98] sm:$0xf]
  %v137 = vld [vmem:[%s1 + $0x9c] sm:$0xf]
  %v138 = vld [vmem:[%s1 + $0xa0] sm:$0xf]
  %v139 = vld [vmem:[%s1 + $0xa4] sm:$0xf]
  %v140 = vld [vmem:[%s1 + $0xa8] sm:$0xf]
  %v141 = vld [vmem:[%s1 + $0xac] sm:$0xf]
  %v142 = vld [vmem:[%s1 + $0xb0] sm:$0xf]
  %v143 = vld [vmem:[%s1 + $0xb4] sm:$0xf]
  %v144 = vld [vmem:[%s1 + $0xb8] sm:$0xf]
  %v145 = vld [vmem:[%s1 + $0xbc] sm:$0xf]
  %v146 = vld [vmem:[%s1 + $0xc0] sm:$0xf]
  %v147 = vld [vmem:[%s1 + $0xc4] sm:$0xf]
  %v148 = vld [vmem:[%s1 + $0xc8] sm:$0xf]
  %v149 = vld [vmem:[%s1 + $0xcc] sm:$0xf]
  %v150 = vld [vmem:[%s1 + $0xd0] sm:$0xf]
  %v151 = vld [vmem:[%s1 + $0xd4] sm:$0xf]
  %v152 = vld [vmem:[%s1 + $0xd8] sm:$0xf]
  %v153 = vld [vmem:[%s1 + $0xdc] sm:$0xf]
  %v154 = vld [vmem:[%s1 + $0xe0] sm:$0xf]
  %v155 = vld [vmem:[%s1 + $0xe4] sm:$0xf]
  %v156 = vld [vmem:[%s1 + $0xe8] sm:$0xf]
  %v157 = vld [vmem:[%s1 + $0xec] sm:$0xf]
  %v158 = vld [vmem:[%s1 + $0xf0] sm:$0xf]
  %v159 = vld [vmem:[%s1 + $0xf4] sm:$0xf]
  %v160 = vld [vmem:[%s1 + $0xf8] sm:$0xf]
  %v161 = vld [vmem:[%s1 + $0xfc] sm:$0xf]
  %v162 = vld [vmem:[%s1 + $0x100] sm:$0xf]
  %v163 = vld [vmem:[%s1 + $0x104] sm:$0xf]
  %v164 = vld [vmem:[%s1 + $0x108] sm:$0xf]
  %v165 = vld [vmem:[%s1 + $0x10c] sm:$0xf]
  %v166 = vld [vmem:[%s1 + $0x110] sm:$0xf]
  %v167 = vld [vmem:[%s1 + $0x114] sm:$0xf]
  %v168 = vld [vmem:[%s1 + $0x118] sm:$0xf]
  %v169 = vld [vmem:[%s1 + $0x11c] sm:$0xf]
  %v170 = vld [vmem:[%s1 + $0x120] sm:$0xf]
  %v171 = vld [vmem:[%s1 + $0x124] sm:$0xf]
  %v172 = vld [vmem:[%s1 + $0x128] sm:$0xf]
  %v173 = vld [vmem:[%s1 + $0x12c] sm:$0xf]
  %v174 = vld [vmem:[%s1 + $0x130] sm:$0xf]
  %v175 = vld [vmem:[%s1 + $0x134] sm:$0xf]
  %v176 = vld [vmem:[%s1 + $0x138] sm:$0xf]
  %v177 = vld [vmem:[%s1 + $0x13c] sm:$0xf]
  %v178 = vld [vmem:[%s1 + $0x140] sm:$0xf]
  %v179 = vld [vmem:[%s1 + $0x144] sm:$0xf]
  %v180 = vld [vmem:[%s1 + $0x148] sm:$0xf]
  %v181 = vld [vmem:[%s1 + $0x14c] sm:$0xf]
  %v182 = vld [vmem:[%s1 + $0x150] sm:$0xf]
  %v183 = vld [vmem:[%s1 + $0x154] sm:$0xf]
  %v184 = vld [vmem:[%s1 + $0x158] sm:$0xf]
  %v185 = vld [vmem:[%s1 + $0x15c] sm:$0xf]
  %v186 = vld [vmem:[%s1 + $0x160] sm:$0xf]
  %v187 = vld [vmem:[%s1 + $0x164] sm:$0xf]
  %v188 = vld [vmem:[%s1 + $0x168] sm:$0xf]
  %v189 = vld [vmem:[%s1 + $0x16c] sm:$0xf]
  %v190 = vld [vmem:[%s1 + $0x170] sm:$0xf]
  %v191 = vld [vmem:[%s1 + $0x174] sm:$0xf]
  %v192 = vld [vmem:[%s1 + $0x178] sm:$0xf]
  %v193 = vld [vmem:[%s1 + $0x17c] sm:$0xf]
  %v194 = vld [vmem:[%s1 + $0x180] sm:$0xf]
  %v195 = vld [vmem:[%s1 + $0x184] sm:$0xf]
  %v196 = vld [vmem:[%s1 + $0x188] sm:$0xf]
  %v197 = vld [vmem:[%s1 + $0x18c] sm:$0xf]
  %v198 = vld [vmem:[%s1 + $0x190] sm:$0xf]
  %v199 = vld [vmem:[%s1 + $0x194] sm:$0xf]
  %v200 = vld [vmem:[%s1 + $0x198] sm:$0xf]
  %v201 = vld [vmem:[%s1 + $0x19c] sm:$0xf]
  %v202 = vld [vmem:[%s1 + $0x1a0] sm:$0xf]
  %v203 = vld [vmem:[%s1 + $0x1a4] sm:$0xf]
  %v204 = vld [vmem:[%s1 + $0x1a8] sm:$0xf]
  %v205 = vld [vmem:[%s1 + $0x1ac] sm:$0xf]
  %v206 = vld [vmem:[%s1 + $0x1b0] sm:$0xf]
  %v207 = vld [vmem:[%s1 + $0x1b4] sm:$0xf]
  %v208 = vld [vmem:[%s1 + $0x1b8] sm:$0xf]
  %v209 = vld [vmem:[%s1 + $0x1bc] sm:$0xf]
  %v210 = vld [vmem:[%s1 + $0x1c0] sm:$0xf]
  %v211 = vld [vmem:[%s1 + $0x1c4] sm:$0xf]
  %v212 = vld [vmem:[%s1 + $0x1c8] sm:$0xf]
  %v213 = vld [vmem:[%s1 + $0x1cc] sm:$0xf]
  %v214 = vld [vmem:[%s1 + $0x1d0] sm:$0xf]
  %v215 = vld [vmem:[%s1 + $0x1d4] sm:$0xf]
  %v216 = vld [vmem:[%s1 + $0x1d8] sm:$0xf]
  %v217 = vld [vmem:[%s1 + $0x1dc] sm:$0xf]
  %v218 = vld [vmem:[%s1 + $0x1e0] sm:$0xf]
  %v219 = vld [vmem:[%s1 + $0x1e4] sm:$0xf]
  %v220 = vld [vmem:[%s1 + $0x1e8] sm:$0xf]
  %v221 = vld [vmem:[%s1 + $0x1ec] sm:$0xf]
  %v222 = vld [vmem:[%s1 + $0x1f0] sm:$0xf]
  %v223 = vld [vmem:[%s1 + $0x1f4] sm:$0xf]
  %v224 = vld [vmem:[%s1 + $0x1f8] sm:$0xf]
  %v225 = vld [vmem:[%s1 + $0x1fc] sm:$0xf]
  %v226 = vld [vmem:[%s1 + $0x200] sm:$0xf]
  %v227 = vld [vmem:[%s1 + $0x204] sm:$0xf]
  %v228 = vld [vmem:[%s1 + $0x208] sm:$0xf]
  %v229 = vld [vmem:[%s1 + $0x20c] sm:$0xf]
  %v230 = vld [vmem:[%s1 + $0x210] sm:$0xf]
  %v231 = vld [vmem:[%s1 + $0x214] sm:$0xf]
  %v232 = vld [vmem:[%s1 + $0x218] sm:$0xf]
  %v233 = vld [vmem:[%s1 + $0x21c] sm:$0xf]
  %v234 = vld [vmem:[%s1 + $0x220] sm:$0xf]
  %v235 = vld [vmem:[%s1 + $0x224] sm:$0xf]
  %v236 = vld [vmem:[%s1 + $0x228] sm:$0xf]
  %v237 = vld [vmem:[%s1 + $0x22c] sm:$0xf]
  %v238 = vld [vmem:[%s1 + $0x230] sm:$0xf]
  %v239 = vld [vmem:[%s1 + $0x234] sm:$0xf]
  %v240 = vld [vmem:[%s1 + $0x238] sm:$0xf]
  %v241 = vld [vmem:[%s1 + $0x23c] sm:$0xf]
  %v242 = vld [vmem:[%s2] sm:$0x1]
  %v244 = vlaneseq
  %v245 = vshrl.u32 %v244, 7
  %v246 = vsub.s32 0, %v245
  %v247 = vrot.slane %v242, %v246
  %v329 = vunpack.c.l.b16 %v18
  %v330 = vunpack.c.h.b16 %v18
  %v331 = vunpack.c.l.b16 %v19
  %v332 = vunpack.c.h.b16 %v19
  %v333 = vunpack.c.l.b16 %v20
  %v334 = vunpack.c.h.b16 %v20
  %v335 = vunpack.c.l.b16 %v21
  %v336 = vunpack.c.h.b16 %v21
  %v337 = vunpack.c.l.b16 %v22
  %v338 = vunpack.c.l.b16 %v23
  %v339 = vunpack.c.h.b16 %v23
  %v340 = vunpack.c.l.b16 %v24
  %v341 = vunpack.c.h.b16 %v24
  %v342 = vunpack.c.l.b16 %v25
  %v343 = vunpack.c.h.b16 %v25
  %v344 = vunpack.c.l.b16 %v26
  %v345 = vunpack.c.h.b16 %v26
  %v346 = vunpack.c.l.b16 %v27
  %v347 = vunpack.c.l.b16 %v28
  %v348 = vunpack.c.h.b16 %v28
  %v349 = vunpack.c.l.b16 %v29
  %v350 = vunpack.c.h.b16 %v29
  %v351 = vunpack.c.l.b16 %v30
  %v352 = vunpack.c.h.b16 %v30
  %v353 = vunpack.c.l.b16 %v31
  %v354 = vunpack.c.h.b16 %v31
  %v355 = vunpack.c.l.b16 %v32
  %v356 = vunpack.c.l.b16 %v33
  %v357 = vunpack.c.h.b16 %v33
  %v358 = vunpack.c.l.b16 %v34
  %v359 = vunpack.c.h.b16 %v34
  %v360 = vunpack.c.l.b16 %v35
  %v361 = vunpack.c.h.b16 %v35
  %v362 = vunpack.c.l.b16 %v36
  %v363 = vunpack.c.h.b16 %v36
  %v364 = vunpack.c.l.b16 %v37
  %v365 = vunpack.c.l.b16 %v38
  %v366 = vunpack.c.h.b16 %v38
  %v367 = vunpack.c.l.b16 %v39
  %v368 = vunpack.c.h.b16 %v39
  %v369 = vunpack.c.l.b16 %v40
  %v370 = vunpack.c.h.b16 %v40
  %v371 = vunpack.c.l.b16 %v41
  %v372 = vunpack.c.h.b16 %v41
  %v373 = vunpack.c.l.b16 %v42
  %v374 = vunpack.c.l.b16 %v43
  %v375 = vunpack.c.h.b16 %v43
  %v376 = vunpack.c.l.b16 %v44
  %v377 = vunpack.c.h.b16 %v44
  %v378 = vunpack.c.l.b16 %v45
  %v379 = vunpack.c.h.b16 %v45
  %v380 = vunpack.c.l.b16 %v46
  %v381 = vunpack.c.h.b16 %v46
  %v382 = vunpack.c.l.b16 %v47
  %v383 = vunpack.c.l.b16 %v48
  %v384 = vunpack.c.h.b16 %v48
  %v385 = vunpack.c.l.b16 %v49
  %v386 = vunpack.c.h.b16 %v49
  %v387 = vunpack.c.l.b16 %v50
  %v388 = vunpack.c.h.b16 %v50
  %v389 = vunpack.c.l.b16 %v51
  %v390 = vunpack.c.h.b16 %v51
  %v391 = vunpack.c.l.b16 %v52
  %v392 = vunpack.c.l.b16 %v53
  %v393 = vunpack.c.h.b16 %v53
  %v394 = vunpack.c.l.b16 %v54
  %v395 = vunpack.c.h.b16 %v54
  %v396 = vunpack.c.l.b16 %v55
  %v397 = vunpack.c.h.b16 %v55
  %v398 = vunpack.c.l.b16 %v56
  %v399 = vunpack.c.h.b16 %v56
  %v400 = vunpack.c.l.b16 %v57
  %v401 = vunpack.c.l.b16 %v58
  %v402 = vunpack.c.h.b16 %v58
  %v403 = vunpack.c.l.b16 %v59
  %v404 = vunpack.c.h.b16 %v59
  %v405 = vunpack.c.l.b16 %v60
  %v406 = vunpack.c.h.b16 %v60
  %v407 = vunpack.c.l.b16 %v61
  %v408 = vunpack.c.h.b16 %v61
  %v409 = vunpack.c.l.b16 %v62
  %v410 = vunpack.c.l.b16 %v63
  %v411 = vunpack.c.h.b16 %v63
  %v412 = vunpack.c.l.b16 %v64
  %v413 = vunpack.c.h.b16 %v64
  %v414 = vunpack.c.l.b16 %v65
  %v415 = vunpack.c.h.b16 %v65
  %v416 = vunpack.c.l.b16 %v66
  %v417 = vunpack.c.h.b16 %v66
  %v418 = vunpack.c.l.b16 %v67
  %v419 = vunpack.c.l.b16 %v68
  %v420 = vunpack.c.h.b16 %v68
  %v421 = vunpack.c.l.b16 %v69
  %v422 = vunpack.c.h.b16 %v69
  %v423 = vunpack.c.l.b16 %v70
  %v424 = vunpack.c.h.b16 %v70
  %v425 = vunpack.c.l.b16 %v71
  %v426 = vunpack.c.h.b16 %v71
  %v427 = vunpack.c.l.b16 %v72
  %v428 = vunpack.c.l.b16 %v73
  %v429 = vunpack.c.h.b16 %v73
  %v430 = vunpack.c.l.b16 %v74
  %v431 = vunpack.c.h.b16 %v74
  %v432 = vunpack.c.l.b16 %v75
  %v433 = vunpack.c.h.b16 %v75
  %v434 = vunpack.c.l.b16 %v76
  %v435 = vunpack.c.h.b16 %v76
  %v436 = vunpack.c.l.b16 %v77
  %v437 = vunpack.c.l.b16 %v78
  %v438 = vunpack.c.h.b16 %v78
  %v439 = vunpack.c.l.b16 %v79
  %v440 = vunpack.c.h.b16 %v79
  %v441 = vunpack.c.l.b16 %v80
  %v442 = vunpack.c.h.b16 %v80
  %v443 = vunpack.c.l.b16 %v81
  %v444 = vunpack.c.h.b16 %v81
  %v445 = vunpack.c.l.b16 %v82
  %v446 = vunpack.c.l.b16 %v83
  %v447 = vunpack.c.h.b16 %v83
  %v448 = vunpack.c.l.b16 %v84
  %v449 = vunpack.c.h.b16 %v84
  %v450 = vunpack.c.l.b16 %v85
  %v451 = vunpack.c.h.b16 %v85
  %v452 = vunpack.c.l.b16 %v86
  %v453 = vunpack.c.h.b16 %v86
  %v454 = vunpack.c.l.b16 %v87
  %v455 = vunpack.c.l.b16 %v88
  %v456 = vunpack.c.h.b16 %v88
  %v457 = vunpack.c.l.b16 %v89
  %v458 = vunpack.c.h.b16 %v89
  %v459 = vunpack.c.l.b16 %v90
  %v460 = vunpack.c.h.b16 %v90
  %v461 = vunpack.c.l.b16 %v91
  %v462 = vunpack.c.h.b16 %v91
  %v463 = vunpack.c.l.b16 %v92
  %v464 = vunpack.c.l.b16 %v93
  %v465 = vunpack.c.h.b16 %v93
  %v466 = vunpack.c.l.b16 %v94
  %v467 = vunpack.c.h.b16 %v94
  %v468 = vunpack.c.l.b16 %v95
  %v469 = vunpack.c.h.b16 %v95
  %v470 = vunpack.c.l.b16 %v96
  %v471 = vunpack.c.h.b16 %v96
  %v472 = vunpack.c.l.b16 %v97
  %v473 = vpack.c.b16 %v338, %v329
  %v474 = vpack.c.b16 %v339, %v330
  %v475 = vpack.c.b16 %v340, %v331
  %v476 = vpack.c.b16 %v341, %v332
  %v477 = vpack.c.b16 %v342, %v333
  %v478 = vpack.c.b16 %v343, %v334
  %v479 = vpack.c.b16 %v344, %v335
  %v480 = vpack.c.b16 %v345, %v336
  %v481 = vpack.c.b16 %v346, %v337
  %v482 = vpack.c.b16 %v356, %v347
  %v483 = vpack.c.b16 %v357, %v348
  %v484 = vpack.c.b16 %v358, %v349
  %v485 = vpack.c.b16 %v359, %v350
  %v486 = vpack.c.b16 %v360, %v351
  %v487 = vpack.c.b16 %v361, %v352
  %v488 = vpack.c.b16 %v362, %v353
  %v489 = vpack.c.b16 %v363, %v354
  %v490 = vpack.c.b16 %v364, %v355
  %v491 = vpack.c.b16 %v374, %v365
  %v492 = vpack.c.b16 %v375, %v366
  %v493 = vpack.c.b16 %v376, %v367
  %v494 = vpack.c.b16 %v377, %v368
  %v495 = vpack.c.b16 %v378, %v369
  %v496 = vpack.c.b16 %v379, %v370
  %v497 = vpack.c.b16 %v380, %v371
  %v498 = vpack.c.b16 %v381, %v372
  %v499 = vpack.c.b16 %v382, %v373
  %v500 = vpack.c.b16 %v392, %v383
  %v501 = vpack.c.b16 %v393, %v384
  %v502 = vpack.c.b16 %v394, %v385
  %v503 = vpack.c.b16 %v395, %v386
  %v504 = vpack.c.b16 %v396, %v387
  %v505 = vpack.c.b16 %v397, %v388
  %v506 = vpack.c.b16 %v398, %v389
  %v507 = vpack.c.b16 %v399, %v390
  %v508 = vpack.c.b16 %v400, %v391
  %v509 = vpack.c.b16 %v410, %v401
  %v510 = vpack.c.b16 %v411, %v402
  %v511 = vpack.c.b16 %v412, %v403
  %v512 = vpack.c.b16 %v413, %v404
  %v513 = vpack.c.b16 %v414, %v405
  %v514 = vpack.c.b16 %v415, %v406
  %v515 = vpack.c.b16 %v416, %v407
  %v516 = vpack.c.b16 %v417, %v408
  %v517 = vpack.c.b16 %v418, %v409
  %v518 = vpack.c.b16 %v428, %v419
  %v519 = vpack.c.b16 %v429, %v420
  %v520 = vpack.c.b16 %v430, %v421
  %v521 = vpack.c.b16 %v431, %v422
  %v522 = vpack.c.b16 %v432, %v423
  %v523 = vpack.c.b16 %v433, %v424
  %v524 = vpack.c.b16 %v434, %v425
  %v525 = vpack.c.b16 %v435, %v426
  %v526 = vpack.c.b16 %v436, %v427
  %v527 = vpack.c.b16 %v446, %v437
  %v528 = vpack.c.b16 %v447, %v438
  %v529 = vpack.c.b16 %v448, %v439
  %v530 = vpack.c.b16 %v449, %v440
  %v531 = vpack.c.b16 %v450, %v441
  %v532 = vpack.c.b16 %v451, %v442
  %v533 = vpack.c.b16 %v452, %v443
  %v534 = vpack.c.b16 %v453, %v444
  %v535 = vpack.c.b16 %v454, %v445
  %v536 = vpack.c.b16 %v464, %v455
  %v537 = vpack.c.b16 %v465, %v456
  %v538 = vpack.c.b16 %v466, %v457
  %v539 = vpack.c.b16 %v467, %v458
  %v540 = vpack.c.b16 %v468, %v459
  %v541 = vpack.c.b16 %v469, %v460
  %v542 = vpack.c.b16 %v470, %v461
  %v543 = vpack.c.b16 %v471, %v462
  %v544 = vpack.c.b16 %v472, %v463
  %v761 = vunpack.c.l.b16 %v98
  %v762 = vunpack.c.l.b16 %v99
  %v763 = vunpack.c.l.b16 %v100
  %v764 = vunpack.c.l.b16 %v101
  %v765 = vunpack.c.l.b16 %v102
  %v766 = vunpack.c.l.b16 %v103
  %v767 = vunpack.c.l.b16 %v104
  %v768 = vunpack.c.l.b16 %v105
  %v769 = vunpack.c.l.b16 %v106
  %v770 = vunpack.c.l.b16 %v107
  %v771 = vunpack.c.l.b16 %v108
  %v772 = vunpack.c.l.b16 %v109
  %v773 = vunpack.c.l.b16 %v110
  %v774 = vunpack.c.l.b16 %v111
  %v775 = vunpack.c.l.b16 %v112
  %v776 = vunpack.c.l.b16 %v113
  %v777 = vunpack.c.l.b16 %v114
  %v778 = vunpack.c.l.b16 %v115
  %v779 = vunpack.c.l.b16 %v116
  %v780 = vunpack.c.l.b16 %v117
  %v781 = vunpack.c.l.b16 %v118
  %v782 = vunpack.c.l.b16 %v119
  %v783 = vunpack.c.l.b16 %v120
  %v784 = vunpack.c.l.b16 %v121
  %v785 = vunpack.c.l.b16 %v122
  %v786 = vunpack.c.l.b16 %v123
  %v787 = vunpack.c.l.b16 %v124
  %v788 = vunpack.c.l.b16 %v125
  %v789 = vunpack.c.l.b16 %v126
  %v790 = vunpack.c.l.b16 %v127
  %v791 = vunpack.c.l.b16 %v128
  %v792 = vunpack.c.l.b16 %v129
  %v793 = vunpack.c.l.b16 %v130
  %v794 = vunpack.c.l.b16 %v131
  %v795 = vunpack.c.l.b16 %v132
  %v796 = vunpack.c.l.b16 %v133
  %v797 = vunpack.c.l.b16 %v134
  %v798 = vunpack.c.l.b16 %v135
  %v799 = vunpack.c.l.b16 %v136
  %v800 = vunpack.c.l.b16 %v137
  %v801 = vunpack.c.l.b16 %v138
  %v802 = vunpack.c.l.b16 %v139
  %v803 = vunpack.c.l.b16 %v140
  %v804 = vunpack.c.l.b16 %v141
  %v805 = vunpack.c.l.b16 %v142
  %v806 = vunpack.c.l.b16 %v143
  %v807 = vunpack.c.l.b16 %v144
  %v808 = vunpack.c.l.b16 %v145
  %v809 = vunpack.c.l.b16 %v146
  %v810 = vunpack.c.l.b16 %v147
  %v811 = vunpack.c.l.b16 %v148
  %v812 = vunpack.c.l.b16 %v149
  %v813 = vunpack.c.l.b16 %v150
  %v814 = vunpack.c.l.b16 %v151
  %v815 = vunpack.c.l.b16 %v152
  %v816 = vunpack.c.l.b16 %v153
  %v817 = vunpack.c.l.b16 %v154
  %v818 = vunpack.c.l.b16 %v155
  %v819 = vunpack.c.l.b16 %v156
  %v820 = vunpack.c.l.b16 %v157
  %v821 = vunpack.c.l.b16 %v158
  %v822 = vunpack.c.l.b16 %v159
  %v823 = vunpack.c.l.b16 %v160
  %v824 = vunpack.c.l.b16 %v161
  %v825 = vunpack.c.l.b16 %v162
  %v826 = vunpack.c.l.b16 %v163
  %v827 = vunpack.c.l.b16 %v164
  %v828 = vunpack.c.l.b16 %v165
  %v829 = vunpack.c.l.b16 %v166
  %v830 = vunpack.c.l.b16 %v167
  %v831 = vunpack.c.l.b16 %v168
  %v832 = vunpack.c.l.b16 %v169
  %v833 = vunpack.c.l.b16 %v170
  %v834 = vunpack.c.l.b16 %v171
  %v835 = vunpack.c.l.b16 %v172
  %v836 = vunpack.c.l.b16 %v173
  %v837 = vunpack.c.l.b16 %v174
  %v838 = vunpack.c.l.b16 %v175
  %v839 = vunpack.c.l.b16 %v176
  %v840 = vunpack.c.l.b16 %v177
  %v841 = vunpack.c.l.b16 %v178
  %v842 = vunpack.c.l.b16 %v179
  %v843 = vunpack.c.l.b16 %v180
  %v844 = vunpack.c.l.b16 %v181
  %v845 = vunpack.c.l.b16 %v182
  %v846 = vunpack.c.l.b16 %v183
  %v847 = vunpack.c.l.b16 %v184
  %v848 = vunpack.c.l.b16 %v185
  %v849 = vunpack.c.l.b16 %v186
  %v850 = vunpack.c.l.b16 %v187
  %v851 = vunpack.c.l.b16 %v188
  %v852 = vunpack.c.l.b16 %v189
  %v853 = vunpack.c.l.b16 %v190
  %v854 = vunpack.c.l.b16 %v191
  %v855 = vunpack.c.l.b16 %v192
  %v856 = vunpack.c.l.b16 %v193
  %v857 = vunpack.c.l.b16 %v194
  %v858 = vunpack.c.l.b16 %v195
  %v859 = vunpack.c.l.b16 %v196
  %v860 = vunpack.c.l.b16 %v197
  %v861 = vunpack.c.l.b16 %v198
  %v862 = vunpack.c.l.b16 %v199
  %v863 = vunpack.c.l.b16 %v200
  %v864 = vunpack.c.l.b16 %v201
  %v865 = vunpack.c.l.b16 %v202
  %v866 = vunpack.c.l.b16 %v203
  %v867 = vunpack.c.l.b16 %v204
  %v868 = vunpack.c.l.b16 %v205
  %v869 = vunpack.c.l.b16 %v206
  %v870 = vunpack.c.l.b16 %v207
  %v871 = vunpack.c.l.b16 %v208
  %v872 = vunpack.c.l.b16 %v209
  %v873 = vunpack.c.l.b16 %v210
  %v874 = vunpack.c.l.b16 %v211
  %v875 = vunpack.c.l.b16 %v212
  %v876 = vunpack.c.l.b16 %v213
  %v877 = vunpack.c.l.b16 %v214
  %v878 = vunpack.c.l.b16 %v215
  %v879 = vunpack.c.l.b16 %v216
  %v880 = vunpack.c.l.b16 %v217
  %v881 = vunpack.c.l.b16 %v218
  %v882 = vunpack.c.l.b16 %v219
  %v883 = vunpack.c.l.b16 %v220
  %v884 = vunpack.c.l.b16 %v221
  %v885 = vunpack.c.l.b16 %v222
  %v886 = vunpack.c.l.b16 %v223
  %v887 = vunpack.c.l.b16 %v224
  %v888 = vunpack.c.l.b16 %v225
  %v889 = vunpack.c.l.b16 %v226
  %v890 = vunpack.c.l.b16 %v227
  %v891 = vunpack.c.l.b16 %v228
  %v892 = vunpack.c.l.b16 %v229
  %v893 = vunpack.c.l.b16 %v230
  %v894 = vunpack.c.l.b16 %v231
  %v895 = vunpack.c.l.b16 %v232
  %v896 = vunpack.c.l.b16 %v233
  %v897 = vunpack.c.l.b16 %v234
  %v898 = vunpack.c.l.b16 %v235
  %v899 = vunpack.c.l.b16 %v236
  %v900 = vunpack.c.l.b16 %v237
  %v901 = vunpack.c.l.b16 %v238
  %v902 = vunpack.c.l.b16 %v239
  %v903 = vunpack.c.l.b16 %v240
  %v904 = vunpack.c.l.b16 %v241
  %v905 = vpack.c.b16 %v762, %v761
  %v906 = vpack.c.b16 %v764, %v763
  %v907 = vpack.c.b16 %v766, %v765
  %v908 = vpack.c.b16 %v768, %v767
  %v909 = vpack.c.b16 %v770, %v769
  %v910 = vpack.c.b16 %v772, %v771
  %v911 = vpack.c.b16 %v774, %v773
  %v912 = vpack.c.b16 %v776, %v775
  %v913 = vpack.c.b16 %v778, %v777
  %v914 = vpack.c.b16 %v780, %v779
  %v915 = vpack.c.b16 %v782, %v781
  %v916 = vpack.c.b16 %v784, %v783
  %v917 = vpack.c.b16 %v786, %v785
  %v918 = vpack.c.b16 %v788, %v787
  %v919 = vpack.c.b16 %v790, %v789
  %v920 = vpack.c.b16 %v792, %v791
  %v921 = vpack.c.b16 %v794, %v793
  %v922 = vpack.c.b16 %v796, %v795
  %v923 = vpack.c.b16 %v798, %v797
  %v924 = vpack.c.b16 %v800, %v799
  %v925 = vpack.c.b16 %v802, %v801
  %v926 = vpack.c.b16 %v804, %v803
  %v927 = vpack.c.b16 %v806, %v805
  %v928 = vpack.c.b16 %v808, %v807
  %v929 = vpack.c.b16 %v810, %v809
  %v930 = vpack.c.b16 %v812, %v811
  %v931 = vpack.c.b16 %v814, %v813
  %v932 = vpack.c.b16 %v816, %v815
  %v933 = vpack.c.b16 %v818, %v817
  %v934 = vpack.c.b16 %v820, %v819
  %v935 = vpack.c.b16 %v822, %v821
  %v936 = vpack.c.b16 %v824, %v823
  %v937 = vpack.c.b16 %v826, %v825
  %v938 = vpack.c.b16 %v828, %v827
  %v939 = vpack.c.b16 %v830, %v829
  %v940 = vpack.c.b16 %v832, %v831
  %v941 = vpack.c.b16 %v834, %v833
  %v942 = vpack.c.b16 %v836, %v835
  %v943 = vpack.c.b16 %v838, %v837
  %v944 = vpack.c.b16 %v840, %v839
  %v945 = vpack.c.b16 %v842, %v841
  %v946 = vpack.c.b16 %v844, %v843
  %v947 = vpack.c.b16 %v846, %v845
  %v948 = vpack.c.b16 %v848, %v847
  %v949 = vpack.c.b16 %v850, %v849
  %v950 = vpack.c.b16 %v852, %v851
  %v951 = vpack.c.b16 %v854, %v853
  %v952 = vpack.c.b16 %v856, %v855
  %v953 = vpack.c.b16 %v858, %v857
  %v954 = vpack.c.b16 %v860, %v859
  %v955 = vpack.c.b16 %v862, %v861
  %v956 = vpack.c.b16 %v864, %v863
  %v957 = vpack.c.b16 %v866, %v865
  %v958 = vpack.c.b16 %v868, %v867
  %v959 = vpack.c.b16 %v870, %v869
  %v960 = vpack.c.b16 %v872, %v871
  %v961 = vpack.c.b16 %v874, %v873
  %v962 = vpack.c.b16 %v876, %v875
  %v963 = vpack.c.b16 %v878, %v877
  %v964 = vpack.c.b16 %v880, %v879
  %v965 = vpack.c.b16 %v882, %v881
  %v966 = vpack.c.b16 %v884, %v883
  %v967 = vpack.c.b16 %v886, %v885
  %v968 = vpack.c.b16 %v888, %v887
  %v969 = vpack.c.b16 %v890, %v889
  %v970 = vpack.c.b16 %v892, %v891
  %v971 = vpack.c.b16 %v894, %v893
  %v972 = vpack.c.b16 %v896, %v895
  %v973 = vpack.c.b16 %v898, %v897
  %v974 = vpack.c.b16 %v900, %v899
  %v975 = vpack.c.b16 %v902, %v901
  %v976 = vpack.c.b16 %v904, %v903
  %1049 = vmatprep.subr.bf16.mxu0 0
  %1050 = vmatpush1.bf16.msra.mxu0 %v912
  %1051 = vmatprep.subr.bf16.mxu0 0
  %1052 = vmatpush1.bf16.msra.mxu0 %v911
  %1053 = vmatprep.subr.bf16.mxu0 0
  %1054 = vmatpush1.bf16.msra.mxu0 %v910
  %1055 = vmatprep.subr.bf16.mxu0 0
  %1056 = vmatpush1.bf16.msra.mxu0 %v909
  %1057 = vmatprep.subr.bf16.mxu0 0
  %1058 = vmatpush1.bf16.msra.mxu0 %v908
  %1059 = vmatprep.subr.bf16.mxu0 0
  %1060 = vmatpush1.bf16.msra.mxu0 %v907
  %1061 = vmatprep.subr.bf16.mxu0 0
  %1062 = vmatpush1.bf16.msra.mxu0 %v906
  %1063 = vmatprep.subr.bf16.mxu0 0
  %1064 = vmatpush1.bf16.msra.mxu0 %v905
  %1065 = vmatprep.subr.bf16.mxu0 0
  %1066 = vmatpush2.bf16.msra.mxu0 %v920
  %1067 = vmatprep.subr.bf16.mxu0 0
  %1068 = vmatpush2.bf16.msra.mxu0 %v919
  %1069 = vmatprep.subr.bf16.mxu0 0
  %1070 = vmatpush2.bf16.msra.mxu0 %v918
  %1071 = vmatprep.subr.bf16.mxu0 0
  %1072 = vmatpush2.bf16.msra.mxu0 %v917
  %1073 = vmatprep.subr.bf16.mxu0 0
  %1074 = vmatpush2.bf16.msra.mxu0 %v916
  %1075 = vmatprep.subr.bf16.mxu0 0
  %1076 = vmatpush2.bf16.msra.mxu0 %v915
  %1077 = vmatprep.subr.bf16.mxu0 0
  %1078 = vmatpush2.bf16.msra.mxu0 %v914
  %1079 = vmatprep.subr.bf16.mxu0 0
  %1080 = vmatpush2.bf16.msra.mxu0 %v913
  %1081 = vmatprep.mubr.bf16.mxu0 %v474
  %1082 = vmatmul.mubr.bf16.gmra.mxu0 %v473
  %v1083 = vpop.f32.mrf.mxu0
  %v1084 = vadd.f32 %v247, %v1083
  %v1085 = vpop.f32.mrf.mxu0
  %v1086 = vpop.f32.mrf.mxu0
  %v1087 = vadd.f32 %v247, %v1086
  %v1088 = vpop.f32.mrf.mxu0
  %1089 = vmatprep.mubr.bf16.mxu0 %v483
  %1090 = vmatmul.mubr.bf16.gmra.mxu0 %v482
  %v1091 = vpop.f32.mrf.mxu0
  %v1092 = vadd.f32 %v247, %v1091
  %v1093 = vpop.f32.mrf.mxu0
  %v1094 = vpop.f32.mrf.mxu0
  %v1095 = vadd.f32 %v247, %v1094
  %v1096 = vpop.f32.mrf.mxu0
  %1097 = vmatprep.mubr.bf16.mxu0 %v492
  %1098 = vmatmul.mubr.bf16.gmra.mxu0 %v491
  %v1099 = vpop.f32.mrf.mxu0
  %v1100 = vadd.f32 %v247, %v1099
  %v1101 = vpop.f32.mrf.mxu0
  %v1102 = vpop.f32.mrf.mxu0
  %v1103 = vadd.f32 %v247, %v1102
  %v1104 = vpop.f32.mrf.mxu0
  %1105 = vmatprep.mubr.bf16.mxu0 %v501
  %1106 = vmatmul.mubr.bf16.gmra.mxu0 %v500
  %v1107 = vpop.f32.mrf.mxu0
  %v1108 = vadd.f32 %v247, %v1107
  %v1109 = vpop.f32.mrf.mxu0
  %v1110 = vpop.f32.mrf.mxu0
  %v1111 = vadd.f32 %v247, %v1110
  %v1112 = vpop.f32.mrf.mxu0
  %1113 = vmatprep.mubr.bf16.mxu0 %v510
  %1114 = vmatmul.mubr.bf16.gmra.mxu0 %v509
  %v1115 = vpop.f32.mrf.mxu0
  %v1116 = vadd.f32 %v247, %v1115
  %v1117 = vpop.f32.mrf.mxu0
  %v1118 = vpop.f32.mrf.mxu0
  %v1119 = vadd.f32 %v247, %v1118
  %v1120 = vpop.f32.mrf.mxu0
  %1121 = vmatprep.mubr.bf16.mxu0 %v519
  %1122 = vmatmul.mubr.bf16.gmra.mxu0 %v518
  %v1123 = vpop.f32.mrf.mxu0
  %v1124 = vadd.f32 %v247, %v1123
  %v1125 = vpop.f32.mrf.mxu0
  %v1126 = vpop.f32.mrf.mxu0
  %v1127 = vadd.f32 %v247, %v1126
  %v1128 = vpop.f32.mrf.mxu0
  %1129 = vmatprep.mubr.bf16.mxu0 %v528
  %1130 = vmatmul.mubr.bf16.gmra.mxu0 %v527
  %v1131 = vpop.f32.mrf.mxu0
  %v1132 = vadd.f32 %v247, %v1131
  %v1133 = vpop.f32.mrf.mxu0
  %v1134 = vpop.f32.mrf.mxu0
  %v1135 = vadd.f32 %v247, %v1134
  %v1136 = vpop.f32.mrf.mxu0
  %1137 = vmatprep.mubr.bf16.mxu0 %v537
  %1138 = vmatmul.mubr.bf16.gmra.mxu0 %v536
  %v1139 = vpop.f32.mrf.mxu0
  %v1140 = vadd.f32 %v247, %v1139
  %v1141 = vpop.f32.mrf.mxu0
  %v1142 = vpop.f32.mrf.mxu0
  %v1143 = vadd.f32 %v247, %v1142
  %v1144 = vpop.f32.mrf.mxu0
  %1145 = vdwg.mxu0
  %1146 = vmatprep.subr.bf16.mxu0 0
  %1147 = vmatpush1.bf16.msra.mxu0 %v928
  %1148 = vmatprep.subr.bf16.mxu0 0
  %1149 = vmatpush1.bf16.msra.mxu0 %v927
  %1150 = vmatprep.subr.bf16.mxu0 0
  %1151 = vmatpush1.bf16.msra.mxu0 %v926
  %1152 = vmatprep.subr.bf16.mxu0 0
  %1153 = vmatpush1.bf16.msra.mxu0 %v925
  %1154 = vmatprep.subr.bf16.mxu0 0
  %1155 = vmatpush1.bf16.msra.mxu0 %v924
  %1156 = vmatprep.subr.bf16.mxu0 0
  %1157 = vmatpush1.bf16.msra.mxu0 %v923
  %1158 = vmatprep.subr.bf16.mxu0 0
  %1159 = vmatpush1.bf16.msra.mxu0 %v922
  %1160 = vmatprep.subr.bf16.mxu0 0
  %1161 = vmatpush1.bf16.msra.mxu0 %v921
  %1162 = vmatprep.subr.bf16.mxu0 0
  %1163 = vmatpush2.bf16.msra.mxu0 %v936
  %1164 = vmatprep.subr.bf16.mxu0 0
  %1165 = vmatpush2.bf16.msra.mxu0 %v935
  %1166 = vmatprep.subr.bf16.mxu0 0
  %1167 = vmatpush2.bf16.msra.mxu0 %v934
  %1168 = vmatprep.subr.bf16.mxu0 0
  %1169 = vmatpush2.bf16.msra.mxu0 %v933
  %1170 = vmatprep.subr.bf16.mxu0 0
  %1171 = vmatpush2.bf16.msra.mxu0 %v932
  %1172 = vmatprep.subr.bf16.mxu0 0
  %1173 = vmatpush2.bf16.msra.mxu0 %v931
  %1174 = vmatprep.subr.bf16.mxu0 0
  %1175 = vmatpush2.bf16.msra.mxu0 %v930
  %1176 = vmatprep.subr.bf16.mxu0 0
  %1177 = vmatpush2.bf16.msra.mxu0 %v929
  %1178 = vmatprep.mubr.bf16.mxu0 %v476
  %1179 = vmatmul.mubr.bf16.gmra.mxu0 %v475
  %v1180 = vpop.f32.mrf.mxu0
  %v1181 = vadd.f32 %v1084, %v1180
  %v1182 = vpop.f32.mrf.mxu0
  %v1183 = vpop.f32.mrf.mxu0
  %v1184 = vadd.f32 %v1087, %v1183
  %v1185 = vpop.f32.mrf.mxu0
  %1186 = vmatprep.mubr.bf16.mxu0 %v485
  %1187 = vmatmul.mubr.bf16.gmra.mxu0 %v484
  %v1188 = vpop.f32.mrf.mxu0
  %v1189 = vadd.f32 %v1092, %v1188
  %v1190 = vpop.f32.mrf.mxu0
  %v1191 = vpop.f32.mrf.mxu0
  %v1192 = vadd.f32 %v1095, %v1191
  %v1193 = vpop.f32.mrf.mxu0
  %1194 = vmatprep.mubr.bf16.mxu0 %v494
  %1195 = vmatmul.mubr.bf16.gmra.mxu0 %v493
  %v1196 = vpop.f32.mrf.mxu0
  %v1197 = vadd.f32 %v1100, %v1196
  %v1198 = vpop.f32.mrf.mxu0
  %v1199 = vpop.f32.mrf.mxu0
  %v1200 = vadd.f32 %v1103, %v1199
  %v1201 = vpop.f32.mrf.mxu0
  %1202 = vmatprep.mubr.bf16.mxu0 %v503
  %1203 = vmatmul.mubr.bf16.gmra.mxu0 %v502
  %v1204 = vpop.f32.mrf.mxu0
  %v1205 = vadd.f32 %v1108, %v1204
  %v1206 = vpop.f32.mrf.mxu0
  %v1207 = vpop.f32.mrf.mxu0
  %v1208 = vadd.f32 %v1111, %v1207
  %v1209 = vpop.f32.mrf.mxu0
  %1210 = vmatprep.mubr.bf16.mxu0 %v512
  %1211 = vmatmul.mubr.bf16.gmra.mxu0 %v511
  %v1212 = vpop.f32.mrf.mxu0
  %v1213 = vadd.f32 %v1116, %v1212
  %v1214 = vpop.f32.mrf.mxu0
  %v1215 = vpop.f32.mrf.mxu0
  %v1216 = vadd.f32 %v1119, %v1215
  %v1217 = vpop.f32.mrf.mxu0
  %1218 = vmatprep.mubr.bf16.mxu0 %v521
  %1219 = vmatmul.mubr.bf16.gmra.mxu0 %v520
  %v1220 = vpop.f32.mrf.mxu0
  %v1221 = vadd.f32 %v1124, %v1220
  %v1222 = vpop.f32.mrf.mxu0
  %v1223 = vpop.f32.mrf.mxu0
  %v1224 = vadd.f32 %v1127, %v1223
  %v1225 = vpop.f32.mrf.mxu0
  %1226 = vmatprep.mubr.bf16.mxu0 %v530
  %1227 = vmatmul.mubr.bf16.gmra.mxu0 %v529
  %v1228 = vpop.f32.mrf.mxu0
  %v1229 = vadd.f32 %v1132, %v1228
  %v1230 = vpop.f32.mrf.mxu0
  %v1231 = vpop.f32.mrf.mxu0
  %v1232 = vadd.f32 %v1135, %v1231
  %v1233 = vpop.f32.mrf.mxu0
  %1234 = vmatprep.mubr.bf16.mxu0 %v539
  %1235 = vmatmul.mubr.bf16.gmra.mxu0 %v538
  %v1236 = vpop.f32.mrf.mxu0
  %v1237 = vadd.f32 %v1140, %v1236
  %v1238 = vpop.f32.mrf.mxu0
  %v1239 = vpop.f32.mrf.mxu0
  %v1240 = vadd.f32 %v1143, %v1239
  %v1241 = vpop.f32.mrf.mxu0
  %1242 = vdwg.mxu0
  %1243 = vmatprep.subr.bf16.mxu0 0
  %1244 = vmatpush1.bf16.msra.mxu0 %v944
  %1245 = vmatprep.subr.bf16.mxu0 0
  %1246 = vmatpush1.bf16.msra.mxu0 %v943
  %1247 = vmatprep.subr.bf16.mxu0 0
  %1248 = vmatpush1.bf16.msra.mxu0 %v942
  %1249 = vmatprep.subr.bf16.mxu0 0
  %1250 = vmatpush1.bf16.msra.mxu0 %v941
  %1251 = vmatprep.subr.bf16.mxu0 0
  %1252 = vmatpush1.bf16.msra.mxu0 %v940
  %1253 = vmatprep.subr.bf16.mxu0 0
  %1254 = vmatpush1.bf16.msra.mxu0 %v939
  %1255 = vmatprep.subr.bf16.mxu0 0
  %1256 = vmatpush1.bf16.msra.mxu0 %v938
  %1257 = vmatprep.subr.bf16.mxu0 0
  %1258 = vmatpush1.bf16.msra.mxu0 %v937
  %1259 = vmatprep.subr.bf16.mxu0 0
  %1260 = vmatpush2.bf16.msra.mxu0 %v952
  %1261 = vmatprep.subr.bf16.mxu0 0
  %1262 = vmatpush2.bf16.msra.mxu0 %v951
  %1263 = vmatprep.subr.bf16.mxu0 0
  %1264 = vmatpush2.bf16.msra.mxu0 %v950
  %1265 = vmatprep.subr.bf16.mxu0 0
  %1266 = vmatpush2.bf16.msra.mxu0 %v949
  %1267 = vmatprep.subr.bf16.mxu0 0
  %1268 = vmatpush2.bf16.msra.mxu0 %v948
  %1269 = vmatprep.subr.bf16.mxu0 0
  %1270 = vmatpush2.bf16.msra.mxu0 %v947
  %1271 = vmatprep.subr.bf16.mxu0 0
  %1272 = vmatpush2.bf16.msra.mxu0 %v946
  %1273 = vmatprep.subr.bf16.mxu0 0
  %1274 = vmatpush2.bf16.msra.mxu0 %v945
  %1275 = vmatprep.mubr.bf16.mxu0 %v478
  %1276 = vmatmul.mubr.bf16.gmra.mxu0 %v477
  %v1277 = vpop.f32.mrf.mxu0
  %v1278 = vadd.f32 %v1181, %v1277
  %v1279 = vpop.f32.mrf.mxu0
  %v1280 = vpop.f32.mrf.mxu0
  %v1281 = vadd.f32 %v1184, %v1280
  %v1282 = vpop.f32.mrf.mxu0
  %1283 = vmatprep.mubr.bf16.mxu0 %v487
  %1284 = vmatmul.mubr.bf16.gmra.mxu0 %v486
  %v1285 = vpop.f32.mrf.mxu0
  %v1286 = vadd.f32 %v1189, %v1285
  %v1287 = vpop.f32.mrf.mxu0
  %v1288 = vpop.f32.mrf.mxu0
  %v1289 = vadd.f32 %v1192, %v1288
  %v1290 = vpop.f32.mrf.mxu0
  %1291 = vmatprep.mubr.bf16.mxu0 %v496
  %1292 = vmatmul.mubr.bf16.gmra.mxu0 %v495
  %v1293 = vpop.f32.mrf.mxu0
  %v1294 = vadd.f32 %v1197, %v1293
  %v1295 = vpop.f32.mrf.mxu0
  %v1296 = vpop.f32.mrf.mxu0
  %v1297 = vadd.f32 %v1200, %v1296
  %v1298 = vpop.f32.mrf.mxu0
  %1299 = vmatprep.mubr.bf16.mxu0 %v505
  %1300 = vmatmul.mubr.bf16.gmra.mxu0 %v504
  %v1301 = vpop.f32.mrf.mxu0
  %v1302 = vadd.f32 %v1205, %v1301
  %v1303 = vpop.f32.mrf.mxu0
  %v1304 = vpop.f32.mrf.mxu0
  %v1305 = vadd.f32 %v1208, %v1304
  %v1306 = vpop.f32.mrf.mxu0
  %1307 = vmatprep.mubr.bf16.mxu0 %v514
  %1308 = vmatmul.mubr.bf16.gmra.mxu0 %v513
  %v1309 = vpop.f32.mrf.mxu0
  %v1310 = vadd.f32 %v1213, %v1309
  %v1311 = vpop.f32.mrf.mxu0
  %v1312 = vpop.f32.mrf.mxu0
  %v1313 = vadd.f32 %v1216, %v1312
  %v1314 = vpop.f32.mrf.mxu0
  %1315 = vmatprep.mubr.bf16.mxu0 %v523
  %1316 = vmatmul.mubr.bf16.gmra.mxu0 %v522
  %v1317 = vpop.f32.mrf.mxu0
  %v1318 = vadd.f32 %v1221, %v1317
  %v1319 = vpop.f32.mrf.mxu0
  %v1320 = vpop.f32.mrf.mxu0
  %v1321 = vadd.f32 %v1224, %v1320
  %v1322 = vpop.f32.mrf.mxu0
  %1323 = vmatprep.mubr.bf16.mxu0 %v532
  %1324 = vmatmul.mubr.bf16.gmra.mxu0 %v531
  %v1325 = vpop.f32.mrf.mxu0
  %v1326 = vadd.f32 %v1229, %v1325
  %v1327 = vpop.f32.mrf.mxu0
  %v1328 = vpop.f32.mrf.mxu0
  %v1329 = vadd.f32 %v1232, %v1328
  %v1330 = vpop.f32.mrf.mxu0
  %1331 = vmatprep.mubr.bf16.mxu0 %v541
  %1332 = vmatmul.mubr.bf16.gmra.mxu0 %v540
  %v1333 = vpop.f32.mrf.mxu0
  %v1334 = vadd.f32 %v1237, %v1333
  %v1335 = vpop.f32.mrf.mxu0
  %v1336 = vpop.f32.mrf.mxu0
  %v1337 = vadd.f32 %v1240, %v1336
  %v1338 = vpop.f32.mrf.mxu0
  %1339 = vdwg.mxu0
  %1340 = vmatprep.subr.bf16.mxu0 0
  %1341 = vmatpush1.bf16.msra.mxu0 %v960
  %1342 = vmatprep.subr.bf16.mxu0 0
  %1343 = vmatpush1.bf16.msra.mxu0 %v959
  %1344 = vmatprep.subr.bf16.mxu0 0
  %1345 = vmatpush1.bf16.msra.mxu0 %v958
  %1346 = vmatprep.subr.bf16.mxu0 0
  %1347 = vmatpush1.bf16.msra.mxu0 %v957
  %1348 = vmatprep.subr.bf16.mxu0 0
  %1349 = vmatpush1.bf16.msra.mxu0 %v956
  %1350 = vmatprep.subr.bf16.mxu0 0
  %1351 = vmatpush1.bf16.msra.mxu0 %v955
  %1352 = vmatprep.subr.bf16.mxu0 0
  %1353 = vmatpush1.bf16.msra.mxu0 %v954
  %1354 = vmatprep.subr.bf16.mxu0 0
  %1355 = vmatpush1.bf16.msra.mxu0 %v953
  %1356 = vmatprep.subr.bf16.mxu0 0
  %1357 = vmatpush2.bf16.msra.mxu0 %v968
  %1358 = vmatprep.subr.bf16.mxu0 0
  %1359 = vmatpush2.bf16.msra.mxu0 %v967
  %1360 = vmatprep.subr.bf16.mxu0 0
  %1361 = vmatpush2.bf16.msra.mxu0 %v966
  %1362 = vmatprep.subr.bf16.mxu0 0
  %1363 = vmatpush2.bf16.msra.mxu0 %v965
  %1364 = vmatprep.subr.bf16.mxu0 0
  %1365 = vmatpush2.bf16.msra.mxu0 %v964
  %1366 = vmatprep.subr.bf16.mxu0 0
  %1367 = vmatpush2.bf16.msra.mxu0 %v963
  %1368 = vmatprep.subr.bf16.mxu0 0
  %1369 = vmatpush2.bf16.msra.mxu0 %v962
  %1370 = vmatprep.subr.bf16.mxu0 0
  %1371 = vmatpush2.bf16.msra.mxu0 %v961
  %1372 = vmatprep.mubr.bf16.mxu0 %v480
  %1373 = vmatmul.mubr.bf16.gmra.mxu0 %v479
  %v1374 = vpop.f32.mrf.mxu0
  %v1375 = vadd.f32 %v1278, %v1374
  %v1376 = vpop.f32.mrf.mxu0
  %v1377 = vpop.f32.mrf.mxu0
  %v1378 = vadd.f32 %v1281, %v1377
  %v1379 = vpop.f32.mrf.mxu0
  %1380 = vmatprep.mubr.bf16.mxu0 %v489
  %1381 = vmatmul.mubr.bf16.gmra.mxu0 %v488
  %v1382 = vpop.f32.mrf.mxu0
  %v1383 = vadd.f32 %v1286, %v1382
  %v1384 = vpop.f32.mrf.mxu0
  %v1385 = vpop.f32.mrf.mxu0
  %v1386 = vadd.f32 %v1289, %v1385
  %v1387 = vpop.f32.mrf.mxu0
  %1388 = vmatprep.mubr.bf16.mxu0 %v498
  %1389 = vmatmul.mubr.bf16.gmra.mxu0 %v497
  %v1390 = vpop.f32.mrf.mxu0
  %v1391 = vadd.f32 %v1294, %v1390
  %v1392 = vpop.f32.mrf.mxu0
  %v1393 = vpop.f32.mrf.mxu0
  %v1394 = vadd.f32 %v1297, %v1393
  %v1395 = vpop.f32.mrf.mxu0
  %1396 = vmatprep.mubr.bf16.mxu0 %v507
  %1397 = vmatmul.mubr.bf16.gmra.mxu0 %v506
  %v1398 = vpop.f32.mrf.mxu0
  %v1399 = vadd.f32 %v1302, %v1398
  %v1400 = vpop.f32.mrf.mxu0
  %v1401 = vpop.f32.mrf.mxu0
  %v1402 = vadd.f32 %v1305, %v1401
  %v1403 = vpop.f32.mrf.mxu0
  %1404 = vmatprep.mubr.bf16.mxu0 %v516
  %1405 = vmatmul.mubr.bf16.gmra.mxu0 %v515
  %v1406 = vpop.f32.mrf.mxu0
  %v1407 = vadd.f32 %v1310, %v1406
  %v1408 = vpop.f32.mrf.mxu0
  %v1409 = vpop.f32.mrf.mxu0
  %v1410 = vadd.f32 %v1313, %v1409
  %v1411 = vpop.f32.mrf.mxu0
  %1412 = vmatprep.mubr.bf16.mxu0 %v525
  %1413 = vmatmul.mubr.bf16.gmra.mxu0 %v524
  %v1414 = vpop.f32.mrf.mxu0
  %v1415 = vadd.f32 %v1318, %v1414
  %v1416 = vpop.f32.mrf.mxu0
  %v1417 = vpop.f32.mrf.mxu0
  %v1418 = vadd.f32 %v1321, %v1417
  %v1419 = vpop.f32.mrf.mxu0
  %1420 = vmatprep.mubr.bf16.mxu0 %v534
  %1421 = vmatmul.mubr.bf16.gmra.mxu0 %v533
  %v1422 = vpop.f32.mrf.mxu0
  %v1423 = vadd.f32 %v1326, %v1422
  %v1424 = vpop.f32.mrf.mxu0
  %v1425 = vpop.f32.mrf.mxu0
  %v1426 = vadd.f32 %v1329, %v1425
  %v1427 = vpop.f32.mrf.mxu0
  %1428 = vmatprep.mubr.bf16.mxu0 %v543
  %1429 = vmatmul.mubr.bf16.gmra.mxu0 %v542
  %v1430 = vpop.f32.mrf.mxu0
  %v1431 = vadd.f32 %v1334, %v1430
  %v1432 = vpop.f32.mrf.mxu0
  %v1433 = vpop.f32.mrf.mxu0
  %v1434 = vadd.f32 %v1337, %v1433
  %v1435 = vpop.f32.mrf.mxu0
  %1436 = vdwg.mxu0
  %1437 = vmatprep.subr.bf16.mxu0 0
  %1438 = vmatpush1.bf16.msra.mxu0 %v976
  %1439 = vmatprep.subr.bf16.mxu0 0
  %1440 = vmatpush1.bf16.msra.mxu0 %v975
  %1441 = vmatprep.subr.bf16.mxu0 0
  %1442 = vmatpush1.bf16.msra.mxu0 %v974
  %1443 = vmatprep.subr.bf16.mxu0 0
  %1444 = vmatpush1.bf16.msra.mxu0 %v973
  %1445 = vmatprep.subr.bf16.mxu0 0
  %1446 = vmatpush1.bf16.msra.mxu0 %v972
  %1447 = vmatprep.subr.bf16.mxu0 0
  %1448 = vmatpush1.bf16.msra.mxu0 %v971
  %1449 = vmatprep.subr.bf16.mxu0 0
  %1450 = vmatpush1.bf16.msra.mxu0 %v970
  %1451 = vmatprep.subr.bf16.mxu0 0
  %1452 = vmatpush1.bf16.msra.mxu0 %v969
  %1453 = vmatprep.subr.bf16.mxu0 0
  %1454 = vmatpush2.bf16.msra.mxu0 0
  %1455 = vmatprep.subr.bf16.mxu0 0
  %1456 = vmatpush2.bf16.msra.mxu0 0
  %1457 = vmatprep.subr.bf16.mxu0 0
  %1458 = vmatpush2.bf16.msra.mxu0 0
  %1459 = vmatprep.subr.bf16.mxu0 0
  %1460 = vmatpush2.bf16.msra.mxu0 0
  %1461 = vmatprep.subr.bf16.mxu0 0
  %1462 = vmatpush2.bf16.msra.mxu0 0
  %1463 = vmatprep.subr.bf16.mxu0 0
  %1464 = vmatpush2.bf16.msra.mxu0 0
  %1465 = vmatprep.subr.bf16.mxu0 0
  %1466 = vmatpush2.bf16.msra.mxu0 0
  %1467 = vmatprep.subr.bf16.mxu0 0
  %1468 = vmatpush2.bf16.msra.mxu0 0
  %1469 = vmatprep.mubr.bf16.mxu0 0
  %1470 = vmatmul.mubr.bf16.gmra.mxu0 %v481
  %v1471 = vpop.f32.mrf.mxu0
  %v1472 = vadd.f32 %v1375, %v1471
  %v1473 = vpop.f32.mrf.mxu0
  %v1474 = vpop.f32.mrf.mxu0
  %v1475 = vadd.f32 %v1378, %v1474
  %v1476 = vpop.f32.mrf.mxu0
  %1477 = vmatprep.mubr.bf16.mxu0 0
  %1478 = vmatmul.mubr.bf16.gmra.mxu0 %v490
  %v1479 = vpop.f32.mrf.mxu0
  %v1480 = vadd.f32 %v1383, %v1479
  %v1481 = vpop.f32.mrf.mxu0
  %v1482 = vpop.f32.mrf.mxu0
  %v1483 = vadd.f32 %v1386, %v1482
  %v1484 = vpop.f32.mrf.mxu0
  %1485 = vmatprep.mubr.bf16.mxu0 0
  %1486 = vmatmul.mubr.bf16.gmra.mxu0 %v499
  %v1487 = vpop.f32.mrf.mxu0
  %v1488 = vadd.f32 %v1391, %v1487
  %v1489 = vpop.f32.mrf.mxu0
  %v1490 = vpop.f32.mrf.mxu0
  %v1491 = vadd.f32 %v1394, %v1490
  %v1492 = vpop.f32.mrf.mxu0
  %1493 = vmatprep.mubr.bf16.mxu0 0
  %1494 = vmatmul.mubr.bf16.gmra.mxu0 %v508
  %v1495 = vpop.f32.mrf.mxu0
  %v1496 = vadd.f32 %v1399, %v1495
  %v1497 = vpop.f32.mrf.mxu0
  %v1498 = vpop.f32.mrf.mxu0
  %v1499 = vadd.f32 %v1402, %v1498
  %v1500 = vpop.f32.mrf.mxu0
  %1501 = vmatprep.mubr.bf16.mxu0 0
  %1502 = vmatmul.mubr.bf16.gmra.mxu0 %v517
  %v1503 = vpop.f32.mrf.mxu0
  %v1504 = vadd.f32 %v1407, %v1503
  %v1505 = vpop.f32.mrf.mxu0
  %v1506 = vpop.f32.mrf.mxu0
  %v1507 = vadd.f32 %v1410, %v1506
  %v1508 = vpop.f32.mrf.mxu0
  %1509 = vmatprep.mubr.bf16.mxu0 0
  %1510 = vmatmul.mubr.bf16.gmra.mxu0 %v526
  %v1511 = vpop.f32.mrf.mxu0
  %v1512 = vadd.f32 %v1415, %v1511
  %v1513 = vpop.f32.mrf.mxu0
  %v1514 = vpop.f32.mrf.mxu0
  %v1515 = vadd.f32 %v1418, %v1514
  %v1516 = vpop.f32.mrf.mxu0
  %1517 = vmatprep.mubr.bf16.mxu0 0
  %1518 = vmatmul.mubr.bf16.gmra.mxu0 %v535
  %v1519 = vpop.f32.mrf.mxu0
  %v1520 = vadd.f32 %v1423, %v1519
  %v1521 = vpop.f32.mrf.mxu0
  %v1522 = vpop.f32.mrf.mxu0
  %v1523 = vadd.f32 %v1426, %v1522
  %v1524 = vpop.f32.mrf.mxu0
  %1525 = vmatprep.mubr.bf16.mxu0 0
  %1526 = vmatmul.mubr.bf16.gmra.mxu0 %v544
  %v1527 = vpop.f32.mrf.mxu0
  %v1528 = vadd.f32 %v1431, %v1527
  %v1529 = vpop.f32.mrf.mxu0
  %v1530 = vpop.f32.mrf.mxu0
  %v1531 = vadd.f32 %v1434, %v1530
  %v1532 = vpop.f32.mrf.mxu0
  %1533 = vdwg.mxu0
  %v1534 = vld [vmem:[%s3] sm:$0xf]
  %v1535 = vld [vmem:[%s3 + $0x4] sm:$0xf]
  %v1536 = vld [vmem:[%s3 + $0x8] sm:$0xf]
  %v1537 = vld [vmem:[%s3 + $0xc] sm:$0xf]
  %v1538 = vld [vmem:[%s3 + $0x10] sm:$0xf]
  %v1539 = vld [vmem:[%s3 + $0x14] sm:$0xf]
  %v1540 = vld [vmem:[%s3 + $0x18] sm:$0xf]
  %v1541 = vld [vmem:[%s3 + $0x1c] sm:$0xf]
  %v1542 = vld [vmem:[%s3 + $0x20] sm:$0xf]
  %v1543 = vld [vmem:[%s3 + $0x24] sm:$0xf]
  %v1544 = vld [vmem:[%s3 + $0x28] sm:$0xf]
  %v1545 = vld [vmem:[%s3 + $0x2c] sm:$0xf]
  %v1546 = vld [vmem:[%s3 + $0x30] sm:$0xf]
  %v1547 = vld [vmem:[%s3 + $0x34] sm:$0xf]
  %v1548 = vld [vmem:[%s3 + $0x38] sm:$0xf]
  %v1549 = vld [vmem:[%s3 + $0x3c] sm:$0xf]
  %v1550 = vunpack.c.l.bf16 %v1534
  %v1551 = vunpack.c.l.bf16 %v1535
  %v1552 = vunpack.c.l.bf16 %v1536
  %v1553 = vunpack.c.l.bf16 %v1537
  %v1554 = vunpack.c.l.bf16 %v1538
  %v1555 = vunpack.c.l.bf16 %v1539
  %v1556 = vunpack.c.l.bf16 %v1540
  %v1557 = vunpack.c.l.bf16 %v1541
  %v1558 = vunpack.c.l.bf16 %v1542
  %v1559 = vunpack.c.l.bf16 %v1543
  %v1560 = vunpack.c.l.bf16 %v1544
  %v1561 = vunpack.c.l.bf16 %v1545
  %v1562 = vunpack.c.l.bf16 %v1546
  %v1563 = vunpack.c.l.bf16 %v1547
  %v1564 = vunpack.c.l.bf16 %v1548
  %v1565 = vunpack.c.l.bf16 %v1549
  %v1566 = vadd.f32 %v1472, %v1550
  %v1567 = vadd.f32 %v1475, %v1551
  %v1568 = vadd.f32 %v1480, %v1552
  %v1569 = vadd.f32 %v1483, %v1553
  %v1570 = vadd.f32 %v1488, %v1554
  %v1571 = vadd.f32 %v1491, %v1555
  %v1572 = vadd.f32 %v1496, %v1556
  %v1573 = vadd.f32 %v1499, %v1557
  %v1574 = vadd.f32 %v1504, %v1558
  %v1575 = vadd.f32 %v1507, %v1559
  %v1576 = vadd.f32 %v1512, %v1560
  %v1577 = vadd.f32 %v1515, %v1561
  %v1578 = vadd.f32 %v1520, %v1562
  %v1579 = vadd.f32 %v1523, %v1563
  %v1580 = vadd.f32 %v1528, %v1564
  %v1581 = vadd.f32 %v1531, %v1565
  %v1582 = vmax.f32 %v1566, 0.0
  %v1583 = vmax.f32 %v1567, 0.0
  %v1584 = vmax.f32 %v1568, 0.0
  %v1585 = vmax.f32 %v1569, 0.0
  %v1586 = vmax.f32 %v1570, 0.0
  %v1587 = vmax.f32 %v1571, 0.0
  %v1588 = vmax.f32 %v1572, 0.0
  %v1589 = vmax.f32 %v1573, 0.0
  %v1590 = vmax.f32 %v1574, 0.0
  %v1591 = vmax.f32 %v1575, 0.0
  %v1592 = vmax.f32 %v1576, 0.0
  %v1593 = vmax.f32 %v1577, 0.0
  %v1594 = vmax.f32 %v1578, 0.0
  %v1595 = vmax.f32 %v1579, 0.0
  %v1596 = vmax.f32 %v1580, 0.0
  %v1597 = vmax.f32 %v1581, 0.0
  %v1598 = vpack.c.bf16 %v1583, %v1582
  %v1599 = vpack.c.bf16 %v1585, %v1584
  %v1600 = vpack.c.bf16 %v1587, %v1586
  %v1601 = vpack.c.bf16 %v1589, %v1588
  %v1602 = vpack.c.bf16 %v1591, %v1590
  %v1603 = vpack.c.bf16 %v1593, %v1592
  %v1604 = vpack.c.bf16 %v1595, %v1594
  %v1605 = vpack.c.bf16 %v1597, %v1596
  %v1614 = vunpack.c.l.b16 %v1598
  %v1615 = vunpack.c.h.b16 %v1598
  %v1616 = vunpack.c.l.b16 %v1599
  %v1617 = vunpack.c.h.b16 %v1599
  %v1618 = vunpack.c.l.b16 %v1600
  %v1619 = vunpack.c.h.b16 %v1600
  %v1620 = vunpack.c.l.b16 %v1601
  %v1621 = vunpack.c.h.b16 %v1601
  %v1622 = vunpack.c.l.b16 %v1602
  %v1623 = vunpack.c.h.b16 %v1602
  %v1624 = vunpack.c.l.b16 %v1603
  %v1625 = vunpack.c.h.b16 %v1603
  %v1626 = vunpack.c.l.b16 %v1604
  %v1627 = vunpack.c.h.b16 %v1604
  %v1628 = vunpack.c.l.b16 %v1605
  %v1629 = vunpack.c.h.b16 %v1605
  %v1630 = vpack.c.b16 %v1614, %v1614
  %v1631 = vpack.c.b16 %v1615, %v1615
  %v1632 = vpack.c.b16 %v1616, %v1616
  %v1633 = vpack.c.b16 %v1617, %v1617
  %v1634 = vpack.c.b16 %v1618, %v1618
  %v1635 = vpack.c.b16 %v1619, %v1619
  %v1636 = vpack.c.b16 %v1620, %v1620
  %v1637 = vpack.c.b16 %v1621, %v1621
  %v1638 = vpack.c.b16 %v1622, %v1622
  %v1639 = vpack.c.b16 %v1623, %v1623
  %v1640 = vpack.c.b16 %v1624, %v1624
  %v1641 = vpack.c.b16 %v1625, %v1625
  %v1642 = vpack.c.b16 %v1626, %v1626
  %v1643 = vpack.c.b16 %v1627, %v1627
  %v1644 = vpack.c.b16 %v1628, %v1628
  %v1645 = vpack.c.b16 %v1629, %v1629
  %1662 = vst [vmem:[%s4] sm:$0xf] %v1630
  %1663 = vst [vmem:[%s4 + $0x4] sm:$0xf] %v1631
  %1664 = vst [vmem:[%s4 + $0x8] sm:$0xf] %v1632
  %1665 = vst [vmem:[%s4 + $0xc] sm:$0xf] %v1633
  %1666 = vst [vmem:[%s4 + $0x10] sm:$0xf] %v1634
  %1667 = vst [vmem:[%s4 + $0x14] sm:$0xf] %v1635
  %1668 = vst [vmem:[%s4 + $0x18] sm:$0xf] %v1636
  %1669 = vst [vmem:[%s4 + $0x1c] sm:$0xf] %v1637
  %1670 = vst [vmem:[%s4 + $0x20] sm:$0xf] %v1638
  %1671 = vst [vmem:[%s4 + $0x24] sm:$0xf] %v1639
  %1672 = vst [vmem:[%s4 + $0x28] sm:$0xf] %v1640
  %1673 = vst [vmem:[%s4 + $0x2c] sm:$0xf] %v1641
  %1674 = vst [vmem:[%s4 + $0x30] sm:$0xf] %v1642
  %1675 = vst [vmem:[%s4 + $0x34] sm:$0xf] %v1643
  %1676 = vst [vmem:[%s4 + $0x38] sm:$0xf] %v1644
  %1677 = vst [vmem:[%s4 + $0x3c] sm:$0xf] %v1645
  // Predicated region
  $region18: #{colorization_net.17} parent=0 // pred_check
    _
  $region19: #{colorization_net.17} parent=0 // pred_check_branch
    %1679 = sbr.rel (0) target = $region21
  $region20: #{colorization_net.17} parent=0 // pred_region
    _
  $region21: #{colorization_net.17} parent=0 // pred_fallthru
    _
  // Predicated region
  $region22: #{colorization_net.17} parent=0 // pred_check
    _
  $region23: #{colorization_net.17} parent=0 // pred_check_branch
    %1681 = sbr.rel (0) target = $region25
  $region24: #{colorization_net.17} parent=0 // pred_region
    _
  $region25: #{colorization_net.17} parent=0 // pred_fallthru
    _

// kernel: colorization_net.20
$region0: #{colorization_net.20}
  #allocation0 [shape = 'u32[]', space=smem, size = 0x4, offset = 0x4, fixed_abs, tag = 'smem constant byte address 0x4 - core index']
  #allocation1 [shape = 'u32[144,128]{1,0:T(1,128)}', space=vmem, size = 0x12000, scoped, tag = 'internal scratch']
  %s0 = inlined_call_operand.vmem [shape: bf16[32,1152], index: 0, kind: input, shape index: {}]
  %s1 = inlined_call_operand.vmem [shape: bf16[1152,128], index: 1, kind: input, shape index: {}]
  %s2 = inlined_call_operand.vmem [shape: f32[1,128], index: 2, kind: input, shape index: {}]
  %s3 = inlined_call_operand.vmem [shape: bf16[32,128], index: 3, kind: output, shape index: {}]
  %s4 = sld [smem:[#allocation0]]
  $region22: #{colorization_net.20} parent=0
    _
  %s6 = ssub.s32 1, %s4
  %s7 = scalar_select 0, %s6, %s4
  // Predicated region
  $region2: #{colorization_net.20} parent=0 // pred_check
    _
  $region3: #{colorization_net.20} parent=0 // pred_check_branch
    %9 = sbr.rel (0) target = $region5
  $region4: #{colorization_net.20} parent=0 // pred_region
    _
  $region5: #{colorization_net.20} parent=0 // pred_fallthru
    _
  // Predicated region
  $region6: #{colorization_net.20} parent=0 // pred_check
    _
  $region7: #{colorization_net.20} parent=0 // pred_check_branch
    %11 = sbr.rel (0) target = $region9
  $region8: #{colorization_net.20} parent=0 // pred_region
    _
  $region9: #{colorization_net.20} parent=0 // pred_fallthru
    _
  // Predicated region
  $region10: #{colorization_net.20} parent=0 // pred_check
    _
  $region11: #{colorization_net.20} parent=0 // pred_check_branch
    %13 = sbr.rel (0) target = $region13
  $region12: #{colorization_net.20} parent=0 // pred_region
    _
  $region13: #{colorization_net.20} parent=0 // pred_fallthru
    _
  %v15 = vld [vmem:[%s0] sm:$0xff]
  %v16 = vld [vmem:[%s0 + $0x8] sm:$0xff]
  %v17 = vld [vmem:[%s0 + $0x10] sm:$0xff]
  %v18 = vld [vmem:[%s0 + $0x18] sm:$0xff]
  %v19 = vld [vmem:[%s0 + $0x20] sm:$0xf]
  %v20 = vld [vmem:[%s0 + $0x24] sm:$0xff]
  %v21 = vld [vmem:[%s0 + $0x2c] sm:$0xff]
  %v22 = vld [vmem:[%s0 + $0x34] sm:$0xff]
  %v23 = vld [vmem:[%s0 + $0x3c] sm:$0xff]
  %v24 = vld [vmem:[%s0 + $0x44] sm:$0xf]
  %v25 = vld [vmem:[%s0 + $0x48] sm:$0xff]
  %v26 = vld [vmem:[%s0 + $0x50] sm:$0xff]
  %v27 = vld [vmem:[%s0 + $0x58] sm:$0xff]
  %v28 = vld [vmem:[%s0 + $0x60] sm:$0xff]
  %v29 = vld [vmem:[%s0 + $0x68] sm:$0xf]
  %v30 = vld [vmem:[%s0 + $0x6c] sm:$0xff]
  %v31 = vld [vmem:[%s0 + $0x74] sm:$0xff]
  %v32 = vld [vmem:[%s0 + $0x7c] sm:$0xff]
  %v33 = vld [vmem:[%s0 + $0x84] sm:$0xff]
  %v34 = vld [vmem:[%s0 + $0x8c] sm:$0xf]
  %v35 = vld [vmem:[%s1] sm:$0xf]
  %v36 = vld [vmem:[%s1 + $0x4] sm:$0xf]
  %v37 = vld [vmem:[%s1 + $0x8] sm:$0xf]
  %v38 = vld [vmem:[%s1 + $0xc] sm:$0xf]
  %v39 = vld [vmem:[%s1 + $0x10] sm:$0xf]
  %v40 = vld [vmem:[%s1 + $0x14] sm:$0xf]
  %v41 = vld [vmem:[%s1 + $0x18] sm:$0xf]
  %v42 = vld [vmem:[%s1 + $0x1c] sm:$0xf]
  %v43 = vld [vmem:[%s1 + $0x20] sm:$0xf]
  %v44 = vld [vmem:[%s1 + $0x24] sm:$0xf]
  %v45 = vld [vmem:[%s1 + $0x28] sm:$0xf]
  %v46 = vld [vmem:[%s1 + $0x2c] sm:$0xf]
  %v47 = vld [vmem:[%s1 + $0x30] sm:$0xf]
  %v48 = vld [vmem:[%s1 + $0x34] sm:$0xf]
  %v49 = vld [vmem:[%s1 + $0x38] sm:$0xf]
  %v50 = vld [vmem:[%s1 + $0x3c] sm:$0xf]
  %v51 = vld [vmem:[%s1 + $0x40] sm:$0xf]
  %v52 = vld [vmem:[%s1 + $0x44] sm:$0xf]
  %v53 = vld [vmem:[%s1 + $0x48] sm:$0xf]
  %v54 = vld [vmem:[%s1 + $0x4c] sm:$0xf]
  %v55 = vld [vmem:[%s1 + $0x50] sm:$0xf]
  %v56 = vld [vmem:[%s1 + $0x54] sm:$0xf]
  %v57 = vld [vmem:[%s1 + $0x58] sm:$0xf]
  %v58 = vld [vmem:[%s1 + $0x5c] sm:$0xf]
  %v59 = vld [vmem:[%s1 + $0x60] sm:$0xf]
  %v60 = vld [vmem:[%s1 + $0x64] sm:$0xf]
  %v61 = vld [vmem:[%s1 + $0x68] sm:$0xf]
  %v62 = vld [vmem:[%s1 + $0x6c] sm:$0xf]
  %v63 = vld [vmem:[%s1 + $0x70] sm:$0xf]
  %v64 = vld [vmem:[%s1 + $0x74] sm:$0xf]
  %v65 = vld [vmem:[%s1 + $0x78] sm:$0xf]
  %v66 = vld [vmem:[%s1 + $0x7c] sm:$0xf]
  %v67 = vld [vmem:[%s1 + $0x80] sm:$0xf]
  %v68 = vld [vmem:[%s1 + $0x84] sm:$0xf]
  %v69 = vld [vmem:[%s1 + $0x88] sm:$0xf]
  %v70 = vld [vmem:[%s1 + $0x8c] sm:$0xf]
  %v71 = vld [vmem:[%s1 + $0x90] sm:$0xf]
  %v72 = vld [vmem:[%s1 + $0x94] sm:$0xf]
  %v73 = vld [vmem:[%s1 + $0x98] sm:$0xf]
  %v74 = vld [vmem:[%s1 + $0x9c] sm:$0xf]
  %v75 = vld [vmem:[%s1 + $0xa0] sm:$0xf]
  %v76 = vld [vmem:[%s1 + $0xa4] sm:$0xf]
  %v77 = vld [vmem:[%s1 + $0xa8] sm:$0xf]
  %v78 = vld [vmem:[%s1 + $0xac] sm:$0xf]
  %v79 = vld [vmem:[%s1 + $0xb0] sm:$0xf]
  %v80 = vld [vmem:[%s1 + $0xb4] sm:$0xf]
  %v81 = vld [vmem:[%s1 + $0xb8] sm:$0xf]
  %v82 = vld [vmem:[%s1 + $0xbc] sm:$0xf]
  %v83 = vld [vmem:[%s1 + $0xc0] sm:$0xf]
  %v84 = vld [vmem:[%s1 + $0xc4] sm:$0xf]
  %v85 = vld [vmem:[%s1 + $0xc8] sm:$0xf]
  %v86 = vld [vmem:[%s1 + $0xcc] sm:$0xf]
  %v87 = vld [vmem:[%s1 + $0xd0] sm:$0xf]
  %v88 = vld [vmem:[%s1 + $0xd4] sm:$0xf]
  %v89 = vld [vmem:[%s1 + $0xd8] sm:$0xf]
  %v90 = vld [vmem:[%s1 + $0xdc] sm:$0xf]
  %v91 = vld [vmem:[%s1 + $0xe0] sm:$0xf]
  %v92 = vld [vmem:[%s1 + $0xe4] sm:$0xf]
  %v93 = vld [vmem:[%s1 + $0xe8] sm:$0xf]
  %v94 = vld [vmem:[%s1 + $0xec] sm:$0xf]
  %v95 = vld [vmem:[%s1 + $0xf0] sm:$0xf]
  %v96 = vld [vmem:[%s1 + $0xf4] sm:$0xf]
  %v97 = vld [vmem:[%s1 + $0xf8] sm:$0xf]
  %v98 = vld [vmem:[%s1 + $0xfc] sm:$0xf]
  %v99 = vld [vmem:[%s1 + $0x100] sm:$0xf]
  %v100 = vld [vmem:[%s1 + $0x104] sm:$0xf]
  %v101 = vld [vmem:[%s1 + $0x108] sm:$0xf]
  %v102 = vld [vmem:[%s1 + $0x10c] sm:$0xf]
  %v103 = vld [vmem:[%s1 + $0x110] sm:$0xf]
  %v104 = vld [vmem:[%s1 + $0x114] sm:$0xf]
  %v105 = vld [vmem:[%s1 + $0x118] sm:$0xf]
  %v106 = vld [vmem:[%s1 + $0x11c] sm:$0xf]
  %v107 = vld [vmem:[%s1 + $0x120] sm:$0xf]
  %v108 = vld [vmem:[%s1 + $0x124] sm:$0xf]
  %v109 = vld [vmem:[%s1 + $0x128] sm:$0xf]
  %v110 = vld [vmem:[%s1 + $0x12c] sm:$0xf]
  %v111 = vld [vmem:[%s1 + $0x130] sm:$0xf]
  %v112 = vld [vmem:[%s1 + $0x134] sm:$0xf]
  %v113 = vld [vmem:[%s1 + $0x138] sm:$0xf]
  %v114 = vld [vmem:[%s1 + $0x13c] sm:$0xf]
  %v115 = vld [vmem:[%s1 + $0x140] sm:$0xf]
  %v116 = vld [vmem:[%s1 + $0x144] sm:$0xf]
  %v117 = vld [vmem:[%s1 + $0x148] sm:$0xf]
  %v118 = vld [vmem:[%s1 + $0x14c] sm:$0xf]
  %v119 = vld [vmem:[%s1 + $0x150] sm:$0xf]
  %v120 = vld [vmem:[%s1 + $0x154] sm:$0xf]
  %v121 = vld [vmem:[%s1 + $0x158] sm:$0xf]
  %v122 = vld [vmem:[%s1 + $0x15c] sm:$0xf]
  %v123 = vld [vmem:[%s1 + $0x160] sm:$0xf]
  %v124 = vld [vmem:[%s1 + $0x164] sm:$0xf]
  %v125 = vld [vmem:[%s1 + $0x168] sm:$0xf]
  %v126 = vld [vmem:[%s1 + $0x16c] sm:$0xf]
  %v127 = vld [vmem:[%s1 + $0x170] sm:$0xf]
  %v128 = vld [vmem:[%s1 + $0x174] sm:$0xf]
  %v129 = vld [vmem:[%s1 + $0x178] sm:$0xf]
  %v130 = vld [vmem:[%s1 + $0x17c] sm:$0xf]
  %v131 = vld [vmem:[%s1 + $0x180] sm:$0xf]
  %v132 = vld [vmem:[%s1 + $0x184] sm:$0xf]
  %v133 = vld [vmem:[%s1 + $0x188] sm:$0xf]
  %v134 = vld [vmem:[%s1 + $0x18c] sm:$0xf]
  %v135 = vld [vmem:[%s1 + $0x190] sm:$0xf]
  %v136 = vld [vmem:[%s1 + $0x194] sm:$0xf]
  %v137 = vld [vmem:[%s1 + $0x198] sm:$0xf]
  %v138 = vld [vmem:[%s1 + $0x19c] sm:$0xf]
  %v139 = vld [vmem:[%s1 + $0x1a0] sm:$0xf]
  %v140 = vld [vmem:[%s1 + $0x1a4] sm:$0xf]
  %v141 = vld [vmem:[%s1 + $0x1a8] sm:$0xf]
  %v142 = vld [vmem:[%s1 + $0x1ac] sm:$0xf]
  %v143 = vld [vmem:[%s1 + $0x1b0] sm:$0xf]
  %v144 = vld [vmem:[%s1 + $0x1b4] sm:$0xf]
  %v145 = vld [vmem:[%s1 + $0x1b8] sm:$0xf]
  %v146 = vld [vmem:[%s1 + $0x1bc] sm:$0xf]
  %v147 = vld [vmem:[%s1 + $0x1c0] sm:$0xf]
  %v148 = vld [vmem:[%s1 + $0x1c4] sm:$0xf]
  %v149 = vld [vmem:[%s1 + $0x1c8] sm:$0xf]
  %v150 = vld [vmem:[%s1 + $0x1cc] sm:$0xf]
  %v151 = vld [vmem:[%s1 + $0x1d0] sm:$0xf]
  %v152 = vld [vmem:[%s1 + $0x1d4] sm:$0xf]
  %v153 = vld [vmem:[%s1 + $0x1d8] sm:$0xf]
  %v154 = vld [vmem:[%s1 + $0x1dc] sm:$0xf]
  %v155 = vld [vmem:[%s1 + $0x1e0] sm:$0xf]
  %v156 = vld [vmem:[%s1 + $0x1e4] sm:$0xf]
  %v157 = vld [vmem:[%s1 + $0x1e8] sm:$0xf]
  %v158 = vld [vmem:[%s1 + $0x1ec] sm:$0xf]
  %v159 = vld [vmem:[%s1 + $0x1f0] sm:$0xf]
  %v160 = vld [vmem:[%s1 + $0x1f4] sm:$0xf]
  %v161 = vld [vmem:[%s1 + $0x1f8] sm:$0xf]
  %v162 = vld [vmem:[%s1 + $0x1fc] sm:$0xf]
  %v163 = vld [vmem:[%s1 + $0x200] sm:$0xf]
  %v164 = vld [vmem:[%s1 + $0x204] sm:$0xf]
  %v165 = vld [vmem:[%s1 + $0x208] sm:$0xf]
  %v166 = vld [vmem:[%s1 + $0x20c] sm:$0xf]
  %v167 = vld [vmem:[%s1 + $0x210] sm:$0xf]
  %v168 = vld [vmem:[%s1 + $0x214] sm:$0xf]
  %v169 = vld [vmem:[%s1 + $0x218] sm:$0xf]
  %v170 = vld [vmem:[%s1 + $0x21c] sm:$0xf]
  %v171 = vld [vmem:[%s1 + $0x220] sm:$0xf]
  %v172 = vld [vmem:[%s1 + $0x224] sm:$0xf]
  %v173 = vld [vmem:[%s1 + $0x228] sm:$0xf]
  %v174 = vld [vmem:[%s1 + $0x22c] sm:$0xf]
  %v175 = vld [vmem:[%s1 + $0x230] sm:$0xf]
  %v176 = vld [vmem:[%s1 + $0x234] sm:$0xf]
  %v177 = vld [vmem:[%s1 + $0x238] sm:$0xf]
  %v178 = vld [vmem:[%s1 + $0x23c] sm:$0xf]
  %v179 = vld [vmem:[%s2] sm:$0x1]
  %v181 = vlaneseq
  %v182 = vshrl.u32 %v181, 7
  %v183 = vsub.s32 0, %v182
  %v184 = vrot.slane %v179, %v183
  %v206 = vunpack.c.l.b16 %v15
  %v207 = vunpack.c.h.b16 %v15
  %v208 = vunpack.c.l.b16 %v16
  %v209 = vunpack.c.h.b16 %v16
  %v210 = vunpack.c.l.b16 %v17
  %v211 = vunpack.c.h.b16 %v17
  %v212 = vunpack.c.l.b16 %v18
  %v213 = vunpack.c.h.b16 %v18
  %v214 = vunpack.c.l.b16 %v19
  %v215 = vunpack.c.l.b16 %v20
  %v216 = vunpack.c.h.b16 %v20
  %v217 = vunpack.c.l.b16 %v21
  %v218 = vunpack.c.h.b16 %v21
  %v219 = vunpack.c.l.b16 %v22
  %v220 = vunpack.c.h.b16 %v22
  %v221 = vunpack.c.l.b16 %v23
  %v222 = vunpack.c.h.b16 %v23
  %v223 = vunpack.c.l.b16 %v24
  %v224 = vunpack.c.l.b16 %v25
  %v225 = vunpack.c.h.b16 %v25
  %v226 = vunpack.c.l.b16 %v26
  %v227 = vunpack.c.h.b16 %v26
  %v228 = vunpack.c.l.b16 %v27
  %v229 = vunpack.c.h.b16 %v27
  %v230 = vunpack.c.l.b16 %v28
  %v231 = vunpack.c.h.b16 %v28
  %v232 = vunpack.c.l.b16 %v29
  %v233 = vunpack.c.l.b16 %v30
  %v234 = vunpack.c.h.b16 %v30
  %v235 = vunpack.c.l.b16 %v31
  %v236 = vunpack.c.h.b16 %v31
  %v237 = vunpack.c.l.b16 %v32
  %v238 = vunpack.c.h.b16 %v32
  %v239 = vunpack.c.l.b16 %v33
  %v240 = vunpack.c.h.b16 %v33
  %v241 = vunpack.c.l.b16 %v34
  %v242 = vpack.c.b16 %v215, %v206
  %v243 = vpack.c.b16 %v216, %v207
  %v244 = vpack.c.b16 %v217, %v208
  %v245 = vpack.c.b16 %v218, %v209
  %v246 = vpack.c.b16 %v219, %v210
  %v247 = vpack.c.b16 %v220, %v211
  %v248 = vpack.c.b16 %v221, %v212
  %v249 = vpack.c.b16 %v222, %v213
  %v250 = vpack.c.b16 %v223, %v214
  %v251 = vpack.c.b16 %v233, %v224
  %v252 = vpack.c.b16 %v234, %v225
  %v253 = vpack.c.b16 %v235, %v226
  %v254 = vpack.c.b16 %v236, %v227
  %v255 = vpack.c.b16 %v237, %v228
  %v256 = vpack.c.b16 %v238, %v229
  %v257 = vpack.c.b16 %v239, %v230
  %v258 = vpack.c.b16 %v240, %v231
  %v259 = vpack.c.b16 %v241, %v232
  %v422 = vunpack.c.l.b16 %v35
  %v423 = vunpack.c.l.b16 %v36
  %v424 = vunpack.c.l.b16 %v37
  %v425 = vunpack.c.l.b16 %v38
  %v426 = vunpack.c.l.b16 %v39
  %v427 = vunpack.c.l.b16 %v40
  %v428 = vunpack.c.l.b16 %v41
  %v429 = vunpack.c.l.b16 %v42
  %v430 = vunpack.c.l.b16 %v43
  %v431 = vunpack.c.l.b16 %v44
  %v432 = vunpack.c.l.b16 %v45
  %v433 = vunpack.c.l.b16 %v46
  %v434 = vunpack.c.l.b16 %v47
  %v435 = vunpack.c.l.b16 %v48
  %v436 = vunpack.c.l.b16 %v49
  %v437 = vunpack.c.l.b16 %v50
  %v438 = vunpack.c.l.b16 %v51
  %v439 = vunpack.c.l.b16 %v52
  %v440 = vunpack.c.l.b16 %v53
  %v441 = vunpack.c.l.b16 %v54
  %v442 = vunpack.c.l.b16 %v55
  %v443 = vunpack.c.l.b16 %v56
  %v444 = vunpack.c.l.b16 %v57
  %v445 = vunpack.c.l.b16 %v58
  %v446 = vunpack.c.l.b16 %v59
  %v447 = vunpack.c.l.b16 %v60
  %v448 = vunpack.c.l.b16 %v61
  %v449 = vunpack.c.l.b16 %v62
  %v450 = vunpack.c.l.b16 %v63
  %v451 = vunpack.c.l.b16 %v64
  %v452 = vunpack.c.l.b16 %v65
  %v453 = vunpack.c.l.b16 %v66
  %v454 = vunpack.c.l.b16 %v67
  %v455 = vunpack.c.l.b16 %v68
  %v456 = vunpack.c.l.b16 %v69
  %v457 = vunpack.c.l.b16 %v70
  %v458 = vunpack.c.l.b16 %v71
  %v459 = vunpack.c.l.b16 %v72
  %v460 = vunpack.c.l.b16 %v73
  %v461 = vunpack.c.l.b16 %v74
  %v462 = vunpack.c.l.b16 %v75
  %v463 = vunpack.c.l.b16 %v76
  %v464 = vunpack.c.l.b16 %v77
  %v465 = vunpack.c.l.b16 %v78
  %v466 = vunpack.c.l.b16 %v79
  %v467 = vunpack.c.l.b16 %v80
  %v468 = vunpack.c.l.b16 %v81
  %v469 = vunpack.c.l.b16 %v82
  %v470 = vunpack.c.l.b16 %v83
  %v471 = vunpack.c.l.b16 %v84
  %v472 = vunpack.c.l.b16 %v85
  %v473 = vunpack.c.l.b16 %v86
  %v474 = vunpack.c.l.b16 %v87
  %v475 = vunpack.c.l.b16 %v88
  %v476 = vunpack.c.l.b16 %v89
  %v477 = vunpack.c.l.b16 %v90
  %v478 = vunpack.c.l.b16 %v91
  %v479 = vunpack.c.l.b16 %v92
  %v480 = vunpack.c.l.b16 %v93
  %v481 = vunpack.c.l.b16 %v94
  %v482 = vunpack.c.l.b16 %v95
  %v483 = vunpack.c.l.b16 %v96
  %v484 = vunpack.c.l.b16 %v97
  %v485 = vunpack.c.l.b16 %v98
  %v486 = vunpack.c.l.b16 %v99
  %v487 = vunpack.c.l.b16 %v100
  %v488 = vunpack.c.l.b16 %v101
  %v489 = vunpack.c.l.b16 %v102
  %v490 = vunpack.c.l.b16 %v103
  %v491 = vunpack.c.l.b16 %v104
  %v492 = vunpack.c.l.b16 %v105
  %v493 = vunpack.c.l.b16 %v106
  %v494 = vunpack.c.l.b16 %v107
  %v495 = vunpack.c.l.b16 %v108
  %v496 = vunpack.c.l.b16 %v109
  %v497 = vunpack.c.l.b16 %v110
  %v498 = vunpack.c.l.b16 %v111
  %v499 = vunpack.c.l.b16 %v112
  %v500 = vunpack.c.l.b16 %v113
  %v501 = vunpack.c.l.b16 %v114
  %v502 = vunpack.c.l.b16 %v115
  %v503 = vunpack.c.l.b16 %v116
  %v504 = vunpack.c.l.b16 %v117
  %v505 = vunpack.c.l.b16 %v118
  %v506 = vunpack.c.l.b16 %v119
  %v507 = vunpack.c.l.b16 %v120
  %v508 = vunpack.c.l.b16 %v121
  %v509 = vunpack.c.l.b16 %v122
  %v510 = vunpack.c.l.b16 %v123
  %v511 = vunpack.c.l.b16 %v124
  %v512 = vunpack.c.l.b16 %v125
  %v513 = vunpack.c.l.b16 %v126
  %v514 = vunpack.c.l.b16 %v127
  %v515 = vunpack.c.l.b16 %v128
  %v516 = vunpack.c.l.b16 %v129
  %v517 = vunpack.c.l.b16 %v130
  %v518 = vunpack.c.l.b16 %v131
  %v519 = vunpack.c.l.b16 %v132
  %v520 = vunpack.c.l.b16 %v133
  %v521 = vunpack.c.l.b16 %v134
  %v522 = vunpack.c.l.b16 %v135
  %v523 = vunpack.c.l.b16 %v136
  %v524 = vunpack.c.l.b16 %v137
  %v525 = vunpack.c.l.b16 %v138
  %v526 = vunpack.c.l.b16 %v139
  %v527 = vunpack.c.l.b16 %v140
  %v528 = vunpack.c.l.b16 %v141
  %v529 = vunpack.c.l.b16 %v142
  %v530 = vunpack.c.l.b16 %v143
  %v531 = vunpack.c.l.b16 %v144
  %v532 = vunpack.c.l.b16 %v145
  %v533 = vunpack.c.l.b16 %v146
  %v534 = vunpack.c.l.b16 %v147
  %v535 = vunpack.c.l.b16 %v148
  %v536 = vunpack.c.l.b16 %v149
  %v537 = vunpack.c.l.b16 %v150
  %v538 = vunpack.c.l.b16 %v151
  %v539 = vunpack.c.l.b16 %v152
  %v540 = vunpack.c.l.b16 %v153
  %v541 = vunpack.c.l.b16 %v154
  %v542 = vunpack.c.l.b16 %v155
  %v543 = vunpack.c.l.b16 %v156
  %v544 = vunpack.c.l.b16 %v157
  %v545 = vunpack.c.l.b16 %v158
  %v546 = vunpack.c.l.b16 %v159
  %v547 = vunpack.c.l.b16 %v160
  %v548 = vunpack.c.l.b16 %v161
  %v549 = vunpack.c.l.b16 %v162
  %v550 = vunpack.c.l.b16 %v163
  %v551 = vunpack.c.l.b16 %v164
  %v552 = vunpack.c.l.b16 %v165
  %v553 = vunpack.c.l.b16 %v166
  %v554 = vunpack.c.l.b16 %v167
  %v555 = vunpack.c.l.b16 %v168
  %v556 = vunpack.c.l.b16 %v169
  %v557 = vunpack.c.l.b16 %v170
  %v558 = vunpack.c.l.b16 %v171
  %v559 = vunpack.c.l.b16 %v172
  %v560 = vunpack.c.l.b16 %v173
  %v561 = vunpack.c.l.b16 %v174
  %v562 = vunpack.c.l.b16 %v175
  %v563 = vunpack.c.l.b16 %v176
  %v564 = vunpack.c.l.b16 %v177
  %v565 = vunpack.c.l.b16 %v178
  %v566 = vpack.c.b16 %v423, %v422
  %v567 = vpack.c.b16 %v425, %v424
  %v568 = vpack.c.b16 %v427, %v426
  %v569 = vpack.c.b16 %v429, %v428
  %v570 = vpack.c.b16 %v431, %v430
  %v571 = vpack.c.b16 %v433, %v432
  %v572 = vpack.c.b16 %v435, %v434
  %v573 = vpack.c.b16 %v437, %v436
  %v574 = vpack.c.b16 %v439, %v438
  %v575 = vpack.c.b16 %v441, %v440
  %v576 = vpack.c.b16 %v443, %v442
  %v577 = vpack.c.b16 %v445, %v444
  %v578 = vpack.c.b16 %v447, %v446
  %v579 = vpack.c.b16 %v449, %v448
  %v580 = vpack.c.b16 %v451, %v450
  %v581 = vpack.c.b16 %v453, %v452
  %v582 = vpack.c.b16 %v455, %v454
  %v583 = vpack.c.b16 %v457, %v456
  %v584 = vpack.c.b16 %v459, %v458
  %v585 = vpack.c.b16 %v461, %v460
  %v586 = vpack.c.b16 %v463, %v462
  %v587 = vpack.c.b16 %v465, %v464
  %v588 = vpack.c.b16 %v467, %v466
  %v589 = vpack.c.b16 %v469, %v468
  %v590 = vpack.c.b16 %v471, %v470
  %v591 = vpack.c.b16 %v473, %v472
  %v592 = vpack.c.b16 %v475, %v474
  %v593 = vpack.c.b16 %v477, %v476
  %v594 = vpack.c.b16 %v479, %v478
  %v595 = vpack.c.b16 %v481, %v480
  %v596 = vpack.c.b16 %v483, %v482
  %v597 = vpack.c.b16 %v485, %v484
  %v598 = vpack.c.b16 %v487, %v486
  %v599 = vpack.c.b16 %v489, %v488
  %v600 = vpack.c.b16 %v491, %v490
  %v601 = vpack.c.b16 %v493, %v492
  %v602 = vpack.c.b16 %v495, %v494
  %v603 = vpack.c.b16 %v497, %v496
  %v604 = vpack.c.b16 %v499, %v498
  %v605 = vpack.c.b16 %v501, %v500
  %v606 = vpack.c.b16 %v503, %v502
  %v607 = vpack.c.b16 %v505, %v504
  %v608 = vpack.c.b16 %v507, %v506
  %v609 = vpack.c.b16 %v509, %v508
  %v610 = vpack.c.b16 %v511, %v510
  %v611 = vpack.c.b16 %v513, %v512
  %v612 = vpack.c.b16 %v515, %v514
  %v613 = vpack.c.b16 %v517, %v516
  %v614 = vpack.c.b16 %v519, %v518
  %v615 = vpack.c.b16 %v521, %v520
  %v616 = vpack.c.b16 %v523, %v522
  %v617 = vpack.c.b16 %v525, %v524
  %v618 = vpack.c.b16 %v527, %v526
  %v619 = vpack.c.b16 %v529, %v528
  %v620 = vpack.c.b16 %v531, %v530
  %v621 = vpack.c.b16 %v533, %v532
  %v622 = vpack.c.b16 %v535, %v534
  %v623 = vpack.c.b16 %v537, %v536
  %v624 = vpack.c.b16 %v539, %v538
  %v625 = vpack.c.b16 %v541, %v540
  %v626 = vpack.c.b16 %v543, %v542
  %v627 = vpack.c.b16 %v545, %v544
  %v628 = vpack.c.b16 %v547, %v546
  %v629 = vpack.c.b16 %v549, %v548
  %v630 = vpack.c.b16 %v551, %v550
  %v631 = vpack.c.b16 %v553, %v552
  %v632 = vpack.c.b16 %v555, %v554
  %v633 = vpack.c.b16 %v557, %v556
  %v634 = vpack.c.b16 %v559, %v558
  %v635 = vpack.c.b16 %v561, %v560
  %v636 = vpack.c.b16 %v563, %v562
  %v637 = vpack.c.b16 %v565, %v564
  %710 = vmatprep.subr.bf16.mxu0 0
  %711 = vmatpush1.bf16.msra.mxu0 %v573
  %712 = vmatprep.subr.bf16.mxu0 0
  %713 = vmatpush1.bf16.msra.mxu0 %v572
  %714 = vmatprep.subr.bf16.mxu0 0
  %715 = vmatpush1.bf16.msra.mxu0 %v571
  %716 = vmatprep.subr.bf16.mxu0 0
  %717 = vmatpush1.bf16.msra.mxu0 %v570
  %718 = vmatprep.subr.bf16.mxu0 0
  %719 = vmatpush1.bf16.msra.mxu0 %v569
  %720 = vmatprep.subr.bf16.mxu0 0
  %721 = vmatpush1.bf16.msra.mxu0 %v568
  %722 = vmatprep.subr.bf16.mxu0 0
  %723 = vmatpush1.bf16.msra.mxu0 %v567
  %724 = vmatprep.subr.bf16.mxu0 0
  %725 = vmatpush1.bf16.msra.mxu0 %v566
  %726 = vmatprep.subr.bf16.mxu0 0
  %727 = vmatpush2.bf16.msra.mxu0 %v581
  %728 = vmatprep.subr.bf16.mxu0 0
  %729 = vmatpush2.bf16.msra.mxu0 %v580
  %730 = vmatprep.subr.bf16.mxu0 0
  %731 = vmatpush2.bf16.msra.mxu0 %v579
  %732 = vmatprep.subr.bf16.mxu0 0
  %733 = vmatpush2.bf16.msra.mxu0 %v578
  %734 = vmatprep.subr.bf16.mxu0 0
  %735 = vmatpush2.bf16.msra.mxu0 %v577
  %736 = vmatprep.subr.bf16.mxu0 0
  %737 = vmatpush2.bf16.msra.mxu0 %v576
  %738 = vmatprep.subr.bf16.mxu0 0
  %739 = vmatpush2.bf16.msra.mxu0 %v575
  %740 = vmatprep.subr.bf16.mxu0 0
  %741 = vmatpush2.bf16.msra.mxu0 %v574
  %742 = vmatprep.mubr.bf16.mxu0 %v243
  %743 = vmatmul.mubr.bf16.gmra.mxu0 %v242
  %v744 = vpop.f32.mrf.mxu0
  %v745 = vadd.f32 %v184, %v744
  %v746 = vpop.f32.mrf.mxu0
  %v747 = vpop.f32.mrf.mxu0
  %v748 = vadd.f32 %v184, %v747
  %v749 = vpop.f32.mrf.mxu0
  %750 = vmatprep.mubr.bf16.mxu0 %v252
  %751 = vmatmul.mubr.bf16.gmra.mxu0 %v251
  %v752 = vpop.f32.mrf.mxu0
  %v753 = vadd.f32 %v184, %v752
  %v754 = vpop.f32.mrf.mxu0
  %v755 = vpop.f32.mrf.mxu0
  %v756 = vadd.f32 %v184, %v755
  %v757 = vpop.f32.mrf.mxu0
  %758 = vdwg.mxu0
  %759 = vmatprep.subr.bf16.mxu0 0
  %760 = vmatpush1.bf16.msra.mxu0 %v589
  %761 = vmatprep.subr.bf16.mxu0 0
  %762 = vmatpush1.bf16.msra.mxu0 %v588
  %763 = vmatprep.subr.bf16.mxu0 0
  %764 = vmatpush1.bf16.msra.mxu0 %v587
  %765 = vmatprep.subr.bf16.mxu0 0
  %766 = vmatpush1.bf16.msra.mxu0 %v586
  %767 = vmatprep.subr.bf16.mxu0 0
  %768 = vmatpush1.bf16.msra.mxu0 %v585
  %769 = vmatprep.subr.bf16.mxu0 0
  %770 = vmatpush1.bf16.msra.mxu0 %v584
  %771 = vmatprep.subr.bf16.mxu0 0
  %772 = vmatpush1.bf16.msra.mxu0 %v583
  %773 = vmatprep.subr.bf16.mxu0 0
  %774 = vmatpush1.bf16.msra.mxu0 %v582
  %775 = vmatprep.subr.bf16.mxu0 0
  %776 = vmatpush2.bf16.msra.mxu0 %v597
  %777 = vmatprep.subr.bf16.mxu0 0
  %778 = vmatpush2.bf16.msra.mxu0 %v596
  %779 = vmatprep.subr.bf16.mxu0 0
  %780 = vmatpush2.bf16.msra.mxu0 %v595
  %781 = vmatprep.subr.bf16.mxu0 0
  %782 = vmatpush2.bf16.msra.mxu0 %v594
  %783 = vmatprep.subr.bf16.mxu0 0
  %784 = vmatpush2.bf16.msra.mxu0 %v593
  %785 = vmatprep.subr.bf16.mxu0 0
  %786 = vmatpush2.bf16.msra.mxu0 %v592
  %787 = vmatprep.subr.bf16.mxu0 0
  %788 = vmatpush2.bf16.msra.mxu0 %v591
  %789 = vmatprep.subr.bf16.mxu0 0
  %790 = vmatpush2.bf16.msra.mxu0 %v590
  %791 = vmatprep.mubr.bf16.mxu0 %v245
  %792 = vmatmul.mubr.bf16.gmra.mxu0 %v244
  %v793 = vpop.f32.mrf.mxu0
  %v794 = vadd.f32 %v745, %v793
  %v795 = vpop.f32.mrf.mxu0
  %v796 = vpop.f32.mrf.mxu0
  %v797 = vadd.f32 %v748, %v796
  %v798 = vpop.f32.mrf.mxu0
  %799 = vmatprep.mubr.bf16.mxu0 %v254
  %800 = vmatmul.mubr.bf16.gmra.mxu0 %v253
  %v801 = vpop.f32.mrf.mxu0
  %v802 = vadd.f32 %v753, %v801
  %v803 = vpop.f32.mrf.mxu0
  %v804 = vpop.f32.mrf.mxu0
  %v805 = vadd.f32 %v756, %v804
  %v806 = vpop.f32.mrf.mxu0
  %807 = vdwg.mxu0
  %808 = vmatprep.subr.bf16.mxu0 0
  %809 = vmatpush1.bf16.msra.mxu0 %v605
  %810 = vmatprep.subr.bf16.mxu0 0
  %811 = vmatpush1.bf16.msra.mxu0 %v604
  %812 = vmatprep.subr.bf16.mxu0 0
  %813 = vmatpush1.bf16.msra.mxu0 %v603
  %814 = vmatprep.subr.bf16.mxu0 0
  %815 = vmatpush1.bf16.msra.mxu0 %v602
  %816 = vmatprep.subr.bf16.mxu0 0
  %817 = vmatpush1.bf16.msra.mxu0 %v601
  %818 = vmatprep.subr.bf16.mxu0 0
  %819 = vmatpush1.bf16.msra.mxu0 %v600
  %820 = vmatprep.subr.bf16.mxu0 0
  %821 = vmatpush1.bf16.msra.mxu0 %v599
  %822 = vmatprep.subr.bf16.mxu0 0
  %823 = vmatpush1.bf16.msra.mxu0 %v598
  %824 = vmatprep.subr.bf16.mxu0 0
  %825 = vmatpush2.bf16.msra.mxu0 %v613
  %826 = vmatprep.subr.bf16.mxu0 0
  %827 = vmatpush2.bf16.msra.mxu0 %v612
  %828 = vmatprep.subr.bf16.mxu0 0
  %829 = vmatpush2.bf16.msra.mxu0 %v611
  %830 = vmatprep.subr.bf16.mxu0 0
  %831 = vmatpush2.bf16.msra.mxu0 %v610
  %832 = vmatprep.subr.bf16.mxu0 0
  %833 = vmatpush2.bf16.msra.mxu0 %v609
  %834 = vmatprep.subr.bf16.mxu0 0
  %835 = vmatpush2.bf16.msra.mxu0 %v608
  %836 = vmatprep.subr.bf16.mxu0 0
  %837 = vmatpush2.bf16.msra.mxu0 %v607
  %838 = vmatprep.subr.bf16.mxu0 0
  %839 = vmatpush2.bf16.msra.mxu0 %v606
  %840 = vmatprep.mubr.bf16.mxu0 %v247
  %841 = vmatmul.mubr.bf16.gmra.mxu0 %v246
  %v842 = vpop.f32.mrf.mxu0
  %v843 = vadd.f32 %v794, %v842
  %v844 = vpop.f32.mrf.mxu0
  %v845 = vpop.f32.mrf.mxu0
  %v846 = vadd.f32 %v797, %v845
  %v847 = vpop.f32.mrf.mxu0
  %848 = vmatprep.mubr.bf16.mxu0 %v256
  %849 = vmatmul.mubr.bf16.gmra.mxu0 %v255
  %v850 = vpop.f32.mrf.mxu0
  %v851 = vadd.f32 %v802, %v850
  %v852 = vpop.f32.mrf.mxu0
  %v853 = vpop.f32.mrf.mxu0
  %v854 = vadd.f32 %v805, %v853
  %v855 = vpop.f32.mrf.mxu0
  %856 = vdwg.mxu0
  %857 = vmatprep.subr.bf16.mxu0 0
  %858 = vmatpush1.bf16.msra.mxu0 %v621
  %859 = vmatprep.subr.bf16.mxu0 0
  %860 = vmatpush1.bf16.msra.mxu0 %v620
  %861 = vmatprep.subr.bf16.mxu0 0
  %862 = vmatpush1.bf16.msra.mxu0 %v619
  %863 = vmatprep.subr.bf16.mxu0 0
  %864 = vmatpush1.bf16.msra.mxu0 %v618
  %865 = vmatprep.subr.bf16.mxu0 0
  %866 = vmatpush1.bf16.msra.mxu0 %v617
  %867 = vmatprep.subr.bf16.mxu0 0
  %868 = vmatpush1.bf16.msra.mxu0 %v616
  %869 = vmatprep.subr.bf16.mxu0 0
  %870 = vmatpush1.bf16.msra.mxu0 %v615
  %871 = vmatprep.subr.bf16.mxu0 0
  %872 = vmatpush1.bf16.msra.mxu0 %v614
  %873 = vmatprep.subr.bf16.mxu0 0
  %874 = vmatpush2.bf16.msra.mxu0 %v629
  %875 = vmatprep.subr.bf16.mxu0 0
  %876 = vmatpush2.bf16.msra.mxu0 %v628
  %877 = vmatprep.subr.bf16.mxu0 0
  %878 = vmatpush2.bf16.msra.mxu0 %v627
  %879 = vmatprep.subr.bf16.mxu0 0
  %880 = vmatpush2.bf16.msra.mxu0 %v626
  %881 = vmatprep.subr.bf16.mxu0 0
  %882 = vmatpush2.bf16.msra.mxu0 %v625
  %883 = vmatprep.subr.bf16.mxu0 0
  %884 = vmatpush2.bf16.msra.mxu0 %v624
  %885 = vmatprep.subr.bf16.mxu0 0
  %886 = vmatpush2.bf16.msra.mxu0 %v623
  %887 = vmatprep.subr.bf16.mxu0 0
  %888 = vmatpush2.bf16.msra.mxu0 %v622
  %889 = vmatprep.mubr.bf16.mxu0 %v249
  %890 = vmatmul.mubr.bf16.gmra.mxu0 %v248
  %v891 = vpop.f32.mrf.mxu0
  %v892 = vadd.f32 %v843, %v891
  %v893 = vpop.f32.mrf.mxu0
  %v894 = vpop.f32.mrf.mxu0
  %v895 = vadd.f32 %v846, %v894
  %v896 = vpop.f32.mrf.mxu0
  %897 = vmatprep.mubr.bf16.mxu0 %v258
  %898 = vmatmul.mubr.bf16.gmra.mxu0 %v257
  %v899 = vpop.f32.mrf.mxu0
  %v900 = vadd.f32 %v851, %v899
  %v901 = vpop.f32.mrf.mxu0
  %v902 = vpop.f32.mrf.mxu0
  %v903 = vadd.f32 %v854, %v902
  %v904 = vpop.f32.mrf.mxu0
  %905 = vdwg.mxu0
  %906 = vmatprep.subr.bf16.mxu0 0
  %907 = vmatpush1.bf16.msra.mxu0 %v637
  %908 = vmatprep.subr.bf16.mxu0 0
  %909 = vmatpush1.bf16.msra.mxu0 %v636
  %910 = vmatprep.subr.bf16.mxu0 0
  %911 = vmatpush1.bf16.msra.mxu0 %v635
  %912 = vmatprep.subr.bf16.mxu0 0
  %913 = vmatpush1.bf16.msra.mxu0 %v634
  %914 = vmatprep.subr.bf16.mxu0 0
  %915 = vmatpush1.bf16.msra.mxu0 %v633
  %916 = vmatprep.subr.bf16.mxu0 0
  %917 = vmatpush1.bf16.msra.mxu0 %v632
  %918 = vmatprep.subr.bf16.mxu0 0
  %919 = vmatpush1.bf16.msra.mxu0 %v631
  %920 = vmatprep.subr.bf16.mxu0 0
  %921 = vmatpush1.bf16.msra.mxu0 %v630
  %922 = vmatprep.subr.bf16.mxu0 0
  %923 = vmatpush2.bf16.msra.mxu0 0
  %924 = vmatprep.subr.bf16.mxu0 0
  %925 = vmatpush2.bf16.msra.mxu0 0
  %926 = vmatprep.subr.bf16.mxu0 0
  %927 = vmatpush2.bf16.msra.mxu0 0
  %928 = vmatprep.subr.bf16.mxu0 0
  %929 = vmatpush2.bf16.msra.mxu0 0
  %930 = vmatprep.subr.bf16.mxu0 0
  %931 = vmatpush2.bf16.msra.mxu0 0
  %932 = vmatprep.subr.bf16.mxu0 0
  %933 = vmatpush2.bf16.msra.mxu0 0
  %934 = vmatprep.subr.bf16.mxu0 0
  %935 = vmatpush2.bf16.msra.mxu0 0
  %936 = vmatprep.subr.bf16.mxu0 0
  %937 = vmatpush2.bf16.msra.mxu0 0
  %938 = vmatprep.mubr.bf16.mxu0 0
  %939 = vmatmul.mubr.bf16.gmra.mxu0 %v250
  %v940 = vpop.f32.mrf.mxu0
  %v941 = vadd.f32 %v892, %v940
  %v942 = vpop.f32.mrf.mxu0
  %v943 = vpop.f32.mrf.mxu0
  %v944 = vadd.f32 %v895, %v943
  %v945 = vpop.f32.mrf.mxu0
  %946 = vmatprep.mubr.bf16.mxu0 0
  %947 = vmatmul.mubr.bf16.gmra.mxu0 %v259
  %v948 = vpop.f32.mrf.mxu0
  %v949 = vadd.f32 %v900, %v948
  %v950 = vpop.f32.mrf.mxu0
  %v951 = vpop.f32.mrf.mxu0
  %v952 = vadd.f32 %v903, %v951
  %v953 = vpop.f32.mrf.mxu0
  %954 = vdwg.mxu0
  %v955 = vmax.f32 %v941, 0.0
  %v956 = vmax.f32 %v944, 0.0
  %v957 = vmax.f32 %v949, 0.0
  %v958 = vmax.f32 %v952, 0.0
  %v959 = vpack.c.bf16 %v956, %v955
  %v960 = vpack.c.bf16 %v958, %v957
  %v963 = vunpack.c.l.b16 %v959
  %v964 = vunpack.c.h.b16 %v959
  %v965 = vunpack.c.l.b16 %v960
  %v966 = vunpack.c.h.b16 %v960
  %v967 = vpack.c.b16 %v963, %v963
  %v968 = vpack.c.b16 %v964, %v964
  %v969 = vpack.c.b16 %v965, %v965
  %v970 = vpack.c.b16 %v966, %v966
  %975 = vst [vmem:[%s3] sm:$0xf] %v967
  %976 = vst [vmem:[%s3 + $0x4] sm:$0xf] %v968
  %977 = vst [vmem:[%s3 + $0x8] sm:$0xf] %v969
  %978 = vst [vmem:[%s3 + $0xc] sm:$0xf] %v970
  // Predicated region
  $region14: #{colorization_net.20} parent=0 // pred_check
    _
  $region15: #{colorization_net.20} parent=0 // pred_check_branch
    %980 = sbr.rel (0) target = $region17
  $region16: #{colorization_net.20} parent=0 // pred_region
    _
  $region17: #{colorization_net.20} parent=0 // pred_fallthru
    _
  // Predicated region
  $region18: #{colorization_net.20} parent=0 // pred_check
    _
  $region19: #{colorization_net.20} parent=0 // pred_check_branch
    %982 = sbr.rel (0) target = $region21
  $region20: #{colorization_net.20} parent=0 // pred_region
    _
  $region21: #{colorization_net.20} parent=0 // pred_fallthru
    _

// kernel: colorization_net.21
$region0: #{colorization_net.21}
  #allocation0 [shape = 'u32[]', space=smem, size = 0x4, offset = 0x4, fixed_abs, tag = 'smem constant byte address 0x4 - core index']
  #allocation1 [shape = 'u32[144,128]{1,0:T(1,128)}', space=vmem, size = 0x12000, scoped, tag = 'internal scratch']
  %s0 = inlined_call_operand.vmem [shape: bf16[32,128], index: 0, kind: input, shape index: {}]
  %s1 = inlined_call_operand.vmem [shape: bf16[128,128], index: 1, kind: input, shape index: {}]
  %s2 = inlined_call_operand.vmem [shape: f32[1,128], index: 2, kind: input, shape index: {}]
  %s3 = inlined_call_operand.vmem [shape: bf16[32,128], index: 3, kind: output, shape index: {}]
  %s4 = sld [smem:[#allocation0]]
  $region22: #{colorization_net.21} parent=0
    _
  %s6 = ssub.s32 1, %s4
  %s7 = scalar_select 0, %s6, %s4
  // Predicated region
  $region2: #{colorization_net.21} parent=0 // pred_check
    _
  $region3: #{colorization_net.21} parent=0 // pred_check_branch
    %9 = sbr.rel (0) target = $region5
  $region4: #{colorization_net.21} parent=0 // pred_region
    _
  $region5: #{colorization_net.21} parent=0 // pred_fallthru
    _
  // Predicated region
  $region6: #{colorization_net.21} parent=0 // pred_check
    _
  $region7: #{colorization_net.21} parent=0 // pred_check_branch
    %11 = sbr.rel (0) target = $region9
  $region8: #{colorization_net.21} parent=0 // pred_region
    _
  $region9: #{colorization_net.21} parent=0 // pred_fallthru
    _
  // Predicated region
  $region10: #{colorization_net.21} parent=0 // pred_check
    _
  $region11: #{colorization_net.21} parent=0 // pred_check_branch
    %13 = sbr.rel (0) target = $region13
  $region12: #{colorization_net.21} parent=0 // pred_region
    _
  $region13: #{colorization_net.21} parent=0 // pred_fallthru
    _
  %v15 = vld [vmem:[%s0] sm:$0xf]
  %v16 = vld [vmem:[%s0 + $0x4] sm:$0xf]
  %v17 = vld [vmem:[%s0 + $0x8] sm:$0xf]
  %v18 = vld [vmem:[%s0 + $0xc] sm:$0xf]
  %v19 = vld [vmem:[%s1] sm:$0xf]
  %v20 = vld [vmem:[%s1 + $0x4] sm:$0xf]
  %v21 = vld [vmem:[%s1 + $0x8] sm:$0xf]
  %v22 = vld [vmem:[%s1 + $0xc] sm:$0xf]
  %v23 = vld [vmem:[%s1 + $0x10] sm:$0xf]
  %v24 = vld [vmem:[%s1 + $0x14] sm:$0xf]
  %v25 = vld [vmem:[%s1 + $0x18] sm:$0xf]
  %v26 = vld [vmem:[%s1 + $0x1c] sm:$0xf]
  %v27 = vld [vmem:[%s1 + $0x20] sm:$0xf]
  %v28 = vld [vmem:[%s1 + $0x24] sm:$0xf]
  %v29 = vld [vmem:[%s1 + $0x28] sm:$0xf]
  %v30 = vld [vmem:[%s1 + $0x2c] sm:$0xf]
  %v31 = vld [vmem:[%s1 + $0x30] sm:$0xf]
  %v32 = vld [vmem:[%s1 + $0x34] sm:$0xf]
  %v33 = vld [vmem:[%s1 + $0x38] sm:$0xf]
  %v34 = vld [vmem:[%s1 + $0x3c] sm:$0xf]
  %v35 = vld [vmem:[%s2] sm:$0x1]
  %v37 = vlaneseq
  %v38 = vshrl.u32 %v37, 7
  %v39 = vsub.s32 0, %v38
  %v40 = vrot.slane %v35, %v39
  %v46 = vunpack.c.l.b16 %v15
  %v47 = vunpack.c.l.b16 %v16
  %v48 = vunpack.c.l.b16 %v17
  %v49 = vunpack.c.l.b16 %v18
  %v50 = vpack.c.b16 %v47, %v46
  %v51 = vpack.c.b16 %v49, %v48
  %v70 = vunpack.c.l.b16 %v19
  %v71 = vunpack.c.l.b16 %v20
  %v72 = vunpack.c.l.b16 %v21
  %v73 = vunpack.c.l.b16 %v22
  %v74 = vunpack.c.l.b16 %v23
  %v75 = vunpack.c.l.b16 %v24
  %v76 = vunpack.c.l.b16 %v25
  %v77 = vunpack.c.l.b16 %v26
  %v78 = vunpack.c.l.b16 %v27
  %v79 = vunpack.c.l.b16 %v28
  %v80 = vunpack.c.l.b16 %v29
  %v81 = vunpack.c.l.b16 %v30
  %v82 = vunpack.c.l.b16 %v31
  %v83 = vunpack.c.l.b16 %v32
  %v84 = vunpack.c.l.b16 %v33
  %v85 = vunpack.c.l.b16 %v34
  %v86 = vpack.c.b16 %v71, %v70
  %v87 = vpack.c.b16 %v73, %v72
  %v88 = vpack.c.b16 %v75, %v74
  %v89 = vpack.c.b16 %v77, %v76
  %v90 = vpack.c.b16 %v79, %v78
  %v91 = vpack.c.b16 %v81, %v80
  %v92 = vpack.c.b16 %v83, %v82
  %v93 = vpack.c.b16 %v85, %v84
  %102 = vmatprep.subr.bf16.mxu0 0
  %103 = vmatpush1.bf16.msra.mxu0 %v93
  %104 = vmatprep.subr.bf16.mxu0 0
  %105 = vmatpush1.bf16.msra.mxu0 %v92
  %106 = vmatprep.subr.bf16.mxu0 0
  %107 = vmatpush1.bf16.msra.mxu0 %v91
  %108 = vmatprep.subr.bf16.mxu0 0
  %109 = vmatpush1.bf16.msra.mxu0 %v90
  %110 = vmatprep.subr.bf16.mxu0 0
  %111 = vmatpush1.bf16.msra.mxu0 %v89
  %112 = vmatprep.subr.bf16.mxu0 0
  %113 = vmatpush1.bf16.msra.mxu0 %v88
  %114 = vmatprep.subr.bf16.mxu0 0
  %115 = vmatpush1.bf16.msra.mxu0 %v87
  %116 = vmatprep.subr.bf16.mxu0 0
  %117 = vmatpush1.bf16.msra.mxu0 %v86
  %118 = vmatprep.subr.bf16.mxu0 0
  %119 = vmatpush2.bf16.msra.mxu0 0
  %120 = vmatprep.subr.bf16.mxu0 0
  %121 = vmatpush2.bf16.msra.mxu0 0
  %122 = vmatprep.subr.bf16.mxu0 0
  %123 = vmatpush2.bf16.msra.mxu0 0
  %124 = vmatprep.subr.bf16.mxu0 0
  %125 = vmatpush2.bf16.msra.mxu0 0
  %126 = vmatprep.subr.bf16.mxu0 0
  %127 = vmatpush2.bf16.msra.mxu0 0
  %128 = vmatprep.subr.bf16.mxu0 0
  %129 = vmatpush2.bf16.msra.mxu0 0
  %130 = vmatprep.subr.bf16.mxu0 0
  %131 = vmatpush2.bf16.msra.mxu0 0
  %132 = vmatprep.subr.bf16.mxu0 0
  %133 = vmatpush2.bf16.msra.mxu0 0
  %134 = vmatprep.mubr.bf16.mxu0 0
  %135 = vmatmul.mubr.bf16.gmra.mxu0 %v50
  %v136 = vpop.f32.mrf.mxu0
  %v137 = vadd.f32 %v40, %v136
  %v138 = vpop.f32.mrf.mxu0
  %v139 = vpop.f32.mrf.mxu0
  %v140 = vadd.f32 %v40, %v139
  %v141 = vpop.f32.mrf.mxu0
  %142 = vmatprep.mubr.bf16.mxu0 0
  %143 = vmatmul.mubr.bf16.gmra.mxu0 %v51
  %v144 = vpop.f32.mrf.mxu0
  %v145 = vadd.f32 %v40, %v144
  %v146 = vpop.f32.mrf.mxu0
  %v147 = vpop.f32.mrf.mxu0
  %v148 = vadd.f32 %v40, %v147
  %v149 = vpop.f32.mrf.mxu0
  %150 = vdwg.mxu0
  %v151 = vpack.c.bf16 %v140, %v137
  %v152 = vpack.c.bf16 %v148, %v145
  %v155 = vunpack.c.l.b16 %v151
  %v156 = vunpack.c.h.b16 %v151
  %v157 = vunpack.c.l.b16 %v152
  %v158 = vunpack.c.h.b16 %v152
  %v159 = vpack.c.b16 %v155, %v155
  %v160 = vpack.c.b16 %v156, %v156
  %v161 = vpack.c.b16 %v157, %v157
  %v162 = vpack.c.b16 %v158, %v158
  %167 = vst [vmem:[%s3] sm:$0xf] %v159
  %168 = vst [vmem:[%s3 + $0x4] sm:$0xf] %v160
  %169 = vst [vmem:[%s3 + $0x8] sm:$0xf] %v161
  %170 = vst [vmem:[%s3 + $0xc] sm:$0xf] %v162
  // Predicated region
  $region14: #{colorization_net.21} parent=0 // pred_check
    _
  $region15: #{colorization_net.21} parent=0 // pred_check_branch
    %172 = sbr.rel (0) target = $region17
  $region16: #{colorization_net.21} parent=0 // pred_region
    _
  $region17: #{colorization_net.21} parent=0 // pred_fallthru
    _
  // Predicated region
  $region18: #{colorization_net.21} parent=0 // pred_check
    _
  $region19: #{colorization_net.21} parent=0 // pred_check_branch
    %174 = sbr.rel (0) target = $region21
  $region20: #{colorization_net.21} parent=0 // pred_region
    _
  $region21: #{colorization_net.21} parent=0 // pred_fallthru
    _

// kernel: colorization_net.22
$region0: #{colorization_net.22}
  #allocation0 [shape = 'u32[]', space=smem, size = 0x4, offset = 0x4, fixed_abs, tag = 'smem constant byte address 0x4 - core index']
  #allocation1 [shape = 'u32[144,128]{1,0:T(1,128)}', space=vmem, size = 0x12000, scoped, tag = 'internal scratch']
  %s0 = inlined_call_operand.vmem [shape: bf16[32,1152], index: 0, kind: input, shape index: {}]
  %s1 = inlined_call_operand.vmem [shape: bf16[1152,128], index: 1, kind: input, shape index: {}]
  %s2 = inlined_call_operand.vmem [shape: f32[1,128], index: 2, kind: input, shape index: {}]
  %s3 = inlined_call_operand.vmem [shape: bf16[32,128], index: 3, kind: input, shape index: {}]
  %s4 = inlined_call_operand.vmem [shape: bf16[32,128], index: 4, kind: output, shape index: {}]
  %s5 = sld [smem:[#allocation0]]
  $region26: #{colorization_net.22} parent=0
    _
  %s7 = ssub.s32 1, %s5
  %s8 = scalar_select 0, %s7, %s5
  // Predicated region
  $region2: #{colorization_net.22} parent=0 // pred_check
    _
  $region3: #{colorization_net.22} parent=0 // pred_check_branch
    %10 = sbr.rel (0) target = $region5
  $region4: #{colorization_net.22} parent=0 // pred_region
    _
  $region5: #{colorization_net.22} parent=0 // pred_fallthru
    _
  // Predicated region
  $region6: #{colorization_net.22} parent=0 // pred_check
    _
  $region7: #{colorization_net.22} parent=0 // pred_check_branch
    %12 = sbr.rel (0) target = $region9
  $region8: #{colorization_net.22} parent=0 // pred_region
    _
  $region9: #{colorization_net.22} parent=0 // pred_fallthru
    _
  // Predicated region
  $region10: #{colorization_net.22} parent=0 // pred_check
    _
  $region11: #{colorization_net.22} parent=0 // pred_check_branch
    %14 = sbr.rel (0) target = $region13
  $region12: #{colorization_net.22} parent=0 // pred_region
    _
  $region13: #{colorization_net.22} parent=0 // pred_fallthru
    _
  // Predicated region
  $region14: #{colorization_net.22} parent=0 // pred_check
    _
  $region15: #{colorization_net.22} parent=0 // pred_check_branch
    %16 = sbr.rel (0) target = $region17
  $region16: #{colorization_net.22} parent=0 // pred_region
    _
  $region17: #{colorization_net.22} parent=0 // pred_fallthru
    _
  %v18 = vld [vmem:[%s0] sm:$0xff]
  %v19 = vld [vmem:[%s0 + $0x8] sm:$0xff]
  %v20 = vld [vmem:[%s0 + $0x10] sm:$0xff]
  %v21 = vld [vmem:[%s0 + $0x18] sm:$0xff]
  %v22 = vld [vmem:[%s0 + $0x20] sm:$0xf]
  %v23 = vld [vmem:[%s0 + $0x24] sm:$0xff]
  %v24 = vld [vmem:[%s0 + $0x2c] sm:$0xff]
  %v25 = vld [vmem:[%s0 + $0x34] sm:$0xff]
  %v26 = vld [vmem:[%s0 + $0x3c] sm:$0xff]
  %v27 = vld [vmem:[%s0 + $0x44] sm:$0xf]
  %v28 = vld [vmem:[%s0 + $0x48] sm:$0xff]
  %v29 = vld [vmem:[%s0 + $0x50] sm:$0xff]
  %v30 = vld [vmem:[%s0 + $0x58] sm:$0xff]
  %v31 = vld [vmem:[%s0 + $0x60] sm:$0xff]
  %v32 = vld [vmem:[%s0 + $0x68] sm:$0xf]
  %v33 = vld [vmem:[%s0 + $0x6c] sm:$0xff]
  %v34 = vld [vmem:[%s0 + $0x74] sm:$0xff]
  %v35 = vld [vmem:[%s0 + $0x7c] sm:$0xff]
  %v36 = vld [vmem:[%s0 + $0x84] sm:$0xff]
  %v37 = vld [vmem:[%s0 + $0x8c] sm:$0xf]
  %v38 = vld [vmem:[%s1] sm:$0xf]
  %v39 = vld [vmem:[%s1 + $0x4] sm:$0xf]
  %v40 = vld [vmem:[%s1 + $0x8] sm:$0xf]
  %v41 = vld [vmem:[%s1 + $0xc] sm:$0xf]
  %v42 = vld [vmem:[%s1 + $0x10] sm:$0xf]
  %v43 = vld [vmem:[%s1 + $0x14] sm:$0xf]
  %v44 = vld [vmem:[%s1 + $0x18] sm:$0xf]
  %v45 = vld [vmem:[%s1 + $0x1c] sm:$0xf]
  %v46 = vld [vmem:[%s1 + $0x20] sm:$0xf]
  %v47 = vld [vmem:[%s1 + $0x24] sm:$0xf]
  %v48 = vld [vmem:[%s1 + $0x28] sm:$0xf]
  %v49 = vld [vmem:[%s1 + $0x2c] sm:$0xf]
  %v50 = vld [vmem:[%s1 + $0x30] sm:$0xf]
  %v51 = vld [vmem:[%s1 + $0x34] sm:$0xf]
  %v52 = vld [vmem:[%s1 + $0x38] sm:$0xf]
  %v53 = vld [vmem:[%s1 + $0x3c] sm:$0xf]
  %v54 = vld [vmem:[%s1 + $0x40] sm:$0xf]
  %v55 = vld [vmem:[%s1 + $0x44] sm:$0xf]
  %v56 = vld [vmem:[%s1 + $0x48] sm:$0xf]
  %v57 = vld [vmem:[%s1 + $0x4c] sm:$0xf]
  %v58 = vld [vmem:[%s1 + $0x50] sm:$0xf]
  %v59 = vld [vmem:[%s1 + $0x54] sm:$0xf]
  %v60 = vld [vmem:[%s1 + $0x58] sm:$0xf]
  %v61 = vld [vmem:[%s1 + $0x5c] sm:$0xf]
  %v62 = vld [vmem:[%s1 + $0x60] sm:$0xf]
  %v63 = vld [vmem:[%s1 + $0x64] sm:$0xf]
  %v64 = vld [vmem:[%s1 + $0x68] sm:$0xf]
  %v65 = vld [vmem:[%s1 + $0x6c] sm:$0xf]
  %v66 = vld [vmem:[%s1 + $0x70] sm:$0xf]
  %v67 = vld [vmem:[%s1 + $0x74] sm:$0xf]
  %v68 = vld [vmem:[%s1 + $0x78] sm:$0xf]
  %v69 = vld [vmem:[%s1 + $0x7c] sm:$0xf]
  %v70 = vld [vmem:[%s1 + $0x80] sm:$0xf]
  %v71 = vld [vmem:[%s1 + $0x84] sm:$0xf]
  %v72 = vld [vmem:[%s1 + $0x88] sm:$0xf]
  %v73 = vld [vmem:[%s1 + $0x8c] sm:$0xf]
  %v74 = vld [vmem:[%s1 + $0x90] sm:$0xf]
  %v75 = vld [vmem:[%s1 + $0x94] sm:$0xf]
  %v76 = vld [vmem:[%s1 + $0x98] sm:$0xf]
  %v77 = vld [vmem:[%s1 + $0x9c] sm:$0xf]
  %v78 = vld [vmem:[%s1 + $0xa0] sm:$0xf]
  %v79 = vld [vmem:[%s1 + $0xa4] sm:$0xf]
  %v80 = vld [vmem:[%s1 + $0xa8] sm:$0xf]
  %v81 = vld [vmem:[%s1 + $0xac] sm:$0xf]
  %v82 = vld [vmem:[%s1 + $0xb0] sm:$0xf]
  %v83 = vld [vmem:[%s1 + $0xb4] sm:$0xf]
  %v84 = vld [vmem:[%s1 + $0xb8] sm:$0xf]
  %v85 = vld [vmem:[%s1 + $0xbc] sm:$0xf]
  %v86 = vld [vmem:[%s1 + $0xc0] sm:$0xf]
  %v87 = vld [vmem:[%s1 + $0xc4] sm:$0xf]
  %v88 = vld [vmem:[%s1 + $0xc8] sm:$0xf]
  %v89 = vld [vmem:[%s1 + $0xcc] sm:$0xf]
  %v90 = vld [vmem:[%s1 + $0xd0] sm:$0xf]
  %v91 = vld [vmem:[%s1 + $0xd4] sm:$0xf]
  %v92 = vld [vmem:[%s1 + $0xd8] sm:$0xf]
  %v93 = vld [vmem:[%s1 + $0xdc] sm:$0xf]
  %v94 = vld [vmem:[%s1 + $0xe0] sm:$0xf]
  %v95 = vld [vmem:[%s1 + $0xe4] sm:$0xf]
  %v96 = vld [vmem:[%s1 + $0xe8] sm:$0xf]
  %v97 = vld [vmem:[%s1 + $0xec] sm:$0xf]
  %v98 = vld [vmem:[%s1 + $0xf0] sm:$0xf]
  %v99 = vld [vmem:[%s1 + $0xf4] sm:$0xf]
  %v100 = vld [vmem:[%s1 + $0xf8] sm:$0xf]
  %v101 = vld [vmem:[%s1 + $0xfc] sm:$0xf]
  %v102 = vld [vmem:[%s1 + $0x100] sm:$0xf]
  %v103 = vld [vmem:[%s1 + $0x104] sm:$0xf]
  %v104 = vld [vmem:[%s1 + $0x108] sm:$0xf]
  %v105 = vld [vmem:[%s1 + $0x10c] sm:$0xf]
  %v106 = vld [vmem:[%s1 + $0x110] sm:$0xf]
  %v107 = vld [vmem:[%s1 + $0x114] sm:$0xf]
  %v108 = vld [vmem:[%s1 + $0x118] sm:$0xf]
  %v109 = vld [vmem:[%s1 + $0x11c] sm:$0xf]
  %v110 = vld [vmem:[%s1 + $0x120] sm:$0xf]
  %v111 = vld [vmem:[%s1 + $0x124] sm:$0xf]
  %v112 = vld [vmem:[%s1 + $0x128] sm:$0xf]
  %v113 = vld [vmem:[%s1 + $0x12c] sm:$0xf]
  %v114 = vld [vmem:[%s1 + $0x130] sm:$0xf]
  %v115 = vld [vmem:[%s1 + $0x134] sm:$0xf]
  %v116 = vld [vmem:[%s1 + $0x138] sm:$0xf]
  %v117 = vld [vmem:[%s1 + $0x13c] sm:$0xf]
  %v118 = vld [vmem:[%s1 + $0x140] sm:$0xf]
  %v119 = vld [vmem:[%s1 + $0x144] sm:$0xf]
  %v120 = vld [vmem:[%s1 + $0x148] sm:$0xf]
  %v121 = vld [vmem:[%s1 + $0x14c] sm:$0xf]
  %v122 = vld [vmem:[%s1 + $0x150] sm:$0xf]
  %v123 = vld [vmem:[%s1 + $0x154] sm:$0xf]
  %v124 = vld [vmem:[%s1 + $0x158] sm:$0xf]
  %v125 = vld [vmem:[%s1 + $0x15c] sm:$0xf]
  %v126 = vld [vmem:[%s1 + $0x160] sm:$0xf]
  %v127 = vld [vmem:[%s1 + $0x164] sm:$0xf]
  %v128 = vld [vmem:[%s1 + $0x168] sm:$0xf]
  %v129 = vld [vmem:[%s1 + $0x16c] sm:$0xf]
  %v130 = vld [vmem:[%s1 + $0x170] sm:$0xf]
  %v131 = vld [vmem:[%s1 + $0x174] sm:$0xf]
  %v132 = vld [vmem:[%s1 + $0x178] sm:$0xf]
  %v133 = vld [vmem:[%s1 + $0x17c] sm:$0xf]
  %v134 = vld [vmem:[%s1 + $0x180] sm:$0xf]
  %v135 = vld [vmem:[%s1 + $0x184] sm:$0xf]
  %v136 = vld [vmem:[%s1 + $0x188] sm:$0xf]
  %v137 = vld [vmem:[%s1 + $0x18c] sm:$0xf]
  %v138 = vld [vmem:[%s1 + $0x190] sm:$0xf]
  %v139 = vld [vmem:[%s1 + $0x194] sm:$0xf]
  %v140 = vld [vmem:[%s1 + $0x198] sm:$0xf]
  %v141 = vld [vmem:[%s1 + $0x19c] sm:$0xf]
  %v142 = vld [vmem:[%s1 + $0x1a0] sm:$0xf]
  %v143 = vld [vmem:[%s1 + $0x1a4] sm:$0xf]
  %v144 = vld [vmem:[%s1 + $0x1a8] sm:$0xf]
  %v145 = vld [vmem:[%s1 + $0x1ac] sm:$0xf]
  %v146 = vld [vmem:[%s1 + $0x1b0] sm:$0xf]
  %v147 = vld [vmem:[%s1 + $0x1b4] sm:$0xf]
  %v148 = vld [vmem:[%s1 + $0x1b8] sm:$0xf]
  %v149 = vld [vmem:[%s1 + $0x1bc] sm:$0xf]
  %v150 = vld [vmem:[%s1 + $0x1c0] sm:$0xf]
  %v151 = vld [vmem:[%s1 + $0x1c4] sm:$0xf]
  %v152 = vld [vmem:[%s1 + $0x1c8] sm:$0xf]
  %v153 = vld [vmem:[%s1 + $0x1cc] sm:$0xf]
  %v154 = vld [vmem:[%s1 + $0x1d0] sm:$0xf]
  %v155 = vld [vmem:[%s1 + $0x1d4] sm:$0xf]
  %v156 = vld [vmem:[%s1 + $0x1d8] sm:$0xf]
  %v157 = vld [vmem:[%s1 + $0x1dc] sm:$0xf]
  %v158 = vld [vmem:[%s1 + $0x1e0] sm:$0xf]
  %v159 = vld [vmem:[%s1 + $0x1e4] sm:$0xf]
  %v160 = vld [vmem:[%s1 + $0x1e8] sm:$0xf]
  %v161 = vld [vmem:[%s1 + $0x1ec] sm:$0xf]
  %v162 = vld [vmem:[%s1 + $0x1f0] sm:$0xf]
  %v163 = vld [vmem:[%s1 + $0x1f4] sm:$0xf]
  %v164 = vld [vmem:[%s1 + $0x1f8] sm:$0xf]
  %v165 = vld [vmem:[%s1 + $0x1fc] sm:$0xf]
  %v166 = vld [vmem:[%s1 + $0x200] sm:$0xf]
  %v167 = vld [vmem:[%s1 + $0x204] sm:$0xf]
  %v168 = vld [vmem:[%s1 + $0x208] sm:$0xf]
  %v169 = vld [vmem:[%s1 + $0x20c] sm:$0xf]
  %v170 = vld [vmem:[%s1 + $0x210] sm:$0xf]
  %v171 = vld [vmem:[%s1 + $0x214] sm:$0xf]
  %v172 = vld [vmem:[%s1 + $0x218] sm:$0xf]
  %v173 = vld [vmem:[%s1 + $0x21c] sm:$0xf]
  %v174 = vld [vmem:[%s1 + $0x220] sm:$0xf]
  %v175 = vld [vmem:[%s1 + $0x224] sm:$0xf]
  %v176 = vld [vmem:[%s1 + $0x228] sm:$0xf]
  %v177 = vld [vmem:[%s1 + $0x22c] sm:$0xf]
  %v178 = vld [vmem:[%s1 + $0x230] sm:$0xf]
  %v179 = vld [vmem:[%s1 + $0x234] sm:$0xf]
  %v180 = vld [vmem:[%s1 + $0x238] sm:$0xf]
  %v181 = vld [vmem:[%s1 + $0x23c] sm:$0xf]
  %v182 = vld [vmem:[%s2] sm:$0x1]
  %v184 = vlaneseq
  %v185 = vshrl.u32 %v184, 7
  %v186 = vsub.s32 0, %v185
  %v187 = vrot.slane %v182, %v186
  %v209 = vunpack.c.l.b16 %v18
  %v210 = vunpack.c.h.b16 %v18
  %v211 = vunpack.c.l.b16 %v19
  %v212 = vunpack.c.h.b16 %v19
  %v213 = vunpack.c.l.b16 %v20
  %v214 = vunpack.c.h.b16 %v20
  %v215 = vunpack.c.l.b16 %v21
  %v216 = vunpack.c.h.b16 %v21
  %v217 = vunpack.c.l.b16 %v22
  %v218 = vunpack.c.l.b16 %v23
  %v219 = vunpack.c.h.b16 %v23
  %v220 = vunpack.c.l.b16 %v24
  %v221 = vunpack.c.h.b16 %v24
  %v222 = vunpack.c.l.b16 %v25
  %v223 = vunpack.c.h.b16 %v25
  %v224 = vunpack.c.l.b16 %v26
  %v225 = vunpack.c.h.b16 %v26
  %v226 = vunpack.c.l.b16 %v27
  %v227 = vunpack.c.l.b16 %v28
  %v228 = vunpack.c.h.b16 %v28
  %v229 = vunpack.c.l.b16 %v29
  %v230 = vunpack.c.h.b16 %v29
  %v231 = vunpack.c.l.b16 %v30
  %v232 = vunpack.c.h.b16 %v30
  %v233 = vunpack.c.l.b16 %v31
  %v234 = vunpack.c.h.b16 %v31
  %v235 = vunpack.c.l.b16 %v32
  %v236 = vunpack.c.l.b16 %v33
  %v237 = vunpack.c.h.b16 %v33
  %v238 = vunpack.c.l.b16 %v34
  %v239 = vunpack.c.h.b16 %v34
  %v240 = vunpack.c.l.b16 %v35
  %v241 = vunpack.c.h.b16 %v35
  %v242 = vunpack.c.l.b16 %v36
  %v243 = vunpack.c.h.b16 %v36
  %v244 = vunpack.c.l.b16 %v37
  %v245 = vpack.c.b16 %v218, %v209
  %v246 = vpack.c.b16 %v219, %v210
  %v247 = vpack.c.b16 %v220, %v211
  %v248 = vpack.c.b16 %v221, %v212
  %v249 = vpack.c.b16 %v222, %v213
  %v250 = vpack.c.b16 %v223, %v214
  %v251 = vpack.c.b16 %v224, %v215
  %v252 = vpack.c.b16 %v225, %v216
  %v253 = vpack.c.b16 %v226, %v217
  %v254 = vpack.c.b16 %v236, %v227
  %v255 = vpack.c.b16 %v237, %v228
  %v256 = vpack.c.b16 %v238, %v229
  %v257 = vpack.c.b16 %v239, %v230
  %v258 = vpack.c.b16 %v240, %v231
  %v259 = vpack.c.b16 %v241, %v232
  %v260 = vpack.c.b16 %v242, %v233
  %v261 = vpack.c.b16 %v243, %v234
  %v262 = vpack.c.b16 %v244, %v235
  %v425 = vunpack.c.l.b16 %v38
  %v426 = vunpack.c.l.b16 %v39
  %v427 = vunpack.c.l.b16 %v40
  %v428 = vunpack.c.l.b16 %v41
  %v429 = vunpack.c.l.b16 %v42
  %v430 = vunpack.c.l.b16 %v43
  %v431 = vunpack.c.l.b16 %v44
  %v432 = vunpack.c.l.b16 %v45
  %v433 = vunpack.c.l.b16 %v46
  %v434 = vunpack.c.l.b16 %v47
  %v435 = vunpack.c.l.b16 %v48
  %v436 = vunpack.c.l.b16 %v49
  %v437 = vunpack.c.l.b16 %v50
  %v438 = vunpack.c.l.b16 %v51
  %v439 = vunpack.c.l.b16 %v52
  %v440 = vunpack.c.l.b16 %v53
  %v441 = vunpack.c.l.b16 %v54
  %v442 = vunpack.c.l.b16 %v55
  %v443 = vunpack.c.l.b16 %v56
  %v444 = vunpack.c.l.b16 %v57
  %v445 = vunpack.c.l.b16 %v58
  %v446 = vunpack.c.l.b16 %v59
  %v447 = vunpack.c.l.b16 %v60
  %v448 = vunpack.c.l.b16 %v61
  %v449 = vunpack.c.l.b16 %v62
  %v450 = vunpack.c.l.b16 %v63
  %v451 = vunpack.c.l.b16 %v64
  %v452 = vunpack.c.l.b16 %v65
  %v453 = vunpack.c.l.b16 %v66
  %v454 = vunpack.c.l.b16 %v67
  %v455 = vunpack.c.l.b16 %v68
  %v456 = vunpack.c.l.b16 %v69
  %v457 = vunpack.c.l.b16 %v70
  %v458 = vunpack.c.l.b16 %v71
  %v459 = vunpack.c.l.b16 %v72
  %v460 = vunpack.c.l.b16 %v73
  %v461 = vunpack.c.l.b16 %v74
  %v462 = vunpack.c.l.b16 %v75
  %v463 = vunpack.c.l.b16 %v76
  %v464 = vunpack.c.l.b16 %v77
  %v465 = vunpack.c.l.b16 %v78
  %v466 = vunpack.c.l.b16 %v79
  %v467 = vunpack.c.l.b16 %v80
  %v468 = vunpack.c.l.b16 %v81
  %v469 = vunpack.c.l.b16 %v82
  %v470 = vunpack.c.l.b16 %v83
  %v471 = vunpack.c.l.b16 %v84
  %v472 = vunpack.c.l.b16 %v85
  %v473 = vunpack.c.l.b16 %v86
  %v474 = vunpack.c.l.b16 %v87
  %v475 = vunpack.c.l.b16 %v88
  %v476 = vunpack.c.l.b16 %v89
  %v477 = vunpack.c.l.b16 %v90
  %v478 = vunpack.c.l.b16 %v91
  %v479 = vunpack.c.l.b16 %v92
  %v480 = vunpack.c.l.b16 %v93
  %v481 = vunpack.c.l.b16 %v94
  %v482 = vunpack.c.l.b16 %v95
  %v483 = vunpack.c.l.b16 %v96
  %v484 = vunpack.c.l.b16 %v97
  %v485 = vunpack.c.l.b16 %v98
  %v486 = vunpack.c.l.b16 %v99
  %v487 = vunpack.c.l.b16 %v100
  %v488 = vunpack.c.l.b16 %v101
  %v489 = vunpack.c.l.b16 %v102
  %v490 = vunpack.c.l.b16 %v103
  %v491 = vunpack.c.l.b16 %v104
  %v492 = vunpack.c.l.b16 %v105
  %v493 = vunpack.c.l.b16 %v106
  %v494 = vunpack.c.l.b16 %v107
  %v495 = vunpack.c.l.b16 %v108
  %v496 = vunpack.c.l.b16 %v109
  %v497 = vunpack.c.l.b16 %v110
  %v498 = vunpack.c.l.b16 %v111
  %v499 = vunpack.c.l.b16 %v112
  %v500 = vunpack.c.l.b16 %v113
  %v501 = vunpack.c.l.b16 %v114
  %v502 = vunpack.c.l.b16 %v115
  %v503 = vunpack.c.l.b16 %v116
  %v504 = vunpack.c.l.b16 %v117
  %v505 = vunpack.c.l.b16 %v118
  %v506 = vunpack.c.l.b16 %v119
  %v507 = vunpack.c.l.b16 %v120
  %v508 = vunpack.c.l.b16 %v121
  %v509 = vunpack.c.l.b16 %v122
  %v510 = vunpack.c.l.b16 %v123
  %v511 = vunpack.c.l.b16 %v124
  %v512 = vunpack.c.l.b16 %v125
  %v513 = vunpack.c.l.b16 %v126
  %v514 = vunpack.c.l.b16 %v127
  %v515 = vunpack.c.l.b16 %v128
  %v516 = vunpack.c.l.b16 %v129
  %v517 = vunpack.c.l.b16 %v130
  %v518 = vunpack.c.l.b16 %v131
  %v519 = vunpack.c.l.b16 %v132
  %v520 = vunpack.c.l.b16 %v133
  %v521 = vunpack.c.l.b16 %v134
  %v522 = vunpack.c.l.b16 %v135
  %v523 = vunpack.c.l.b16 %v136
  %v524 = vunpack.c.l.b16 %v137
  %v525 = vunpack.c.l.b16 %v138
  %v526 = vunpack.c.l.b16 %v139
  %v527 = vunpack.c.l.b16 %v140
  %v528 = vunpack.c.l.b16 %v141
  %v529 = vunpack.c.l.b16 %v142
  %v530 = vunpack.c.l.b16 %v143
  %v531 = vunpack.c.l.b16 %v144
  %v532 = vunpack.c.l.b16 %v145
  %v533 = vunpack.c.l.b16 %v146
  %v534 = vunpack.c.l.b16 %v147
  %v535 = vunpack.c.l.b16 %v148
  %v536 = vunpack.c.l.b16 %v149
  %v537 = vunpack.c.l.b16 %v150
  %v538 = vunpack.c.l.b16 %v151
  %v539 = vunpack.c.l.b16 %v152
  %v540 = vunpack.c.l.b16 %v153
  %v541 = vunpack.c.l.b16 %v154
  %v542 = vunpack.c.l.b16 %v155
  %v543 = vunpack.c.l.b16 %v156
  %v544 = vunpack.c.l.b16 %v157
  %v545 = vunpack.c.l.b16 %v158
  %v546 = vunpack.c.l.b16 %v159
  %v547 = vunpack.c.l.b16 %v160
  %v548 = vunpack.c.l.b16 %v161
  %v549 = vunpack.c.l.b16 %v162
  %v550 = vunpack.c.l.b16 %v163
  %v551 = vunpack.c.l.b16 %v164
  %v552 = vunpack.c.l.b16 %v165
  %v553 = vunpack.c.l.b16 %v166
  %v554 = vunpack.c.l.b16 %v167
  %v555 = vunpack.c.l.b16 %v168
  %v556 = vunpack.c.l.b16 %v169
  %v557 = vunpack.c.l.b16 %v170
  %v558 = vunpack.c.l.b16 %v171
  %v559 = vunpack.c.l.b16 %v172
  %v560 = vunpack.c.l.b16 %v173
  %v561 = vunpack.c.l.b16 %v174
  %v562 = vunpack.c.l.b16 %v175
  %v563 = vunpack.c.l.b16 %v176
  %v564 = vunpack.c.l.b16 %v177
  %v565 = vunpack.c.l.b16 %v178
  %v566 = vunpack.c.l.b16 %v179
  %v567 = vunpack.c.l.b16 %v180
  %v568 = vunpack.c.l.b16 %v181
  %v569 = vpack.c.b16 %v426, %v425
  %v570 = vpack.c.b16 %v428, %v427
  %v571 = vpack.c.b16 %v430, %v429
  %v572 = vpack.c.b16 %v432, %v431
  %v573 = vpack.c.b16 %v434, %v433
  %v574 = vpack.c.b16 %v436, %v435
  %v575 = vpack.c.b16 %v438, %v437
  %v576 = vpack.c.b16 %v440, %v439
  %v577 = vpack.c.b16 %v442, %v441
  %v578 = vpack.c.b16 %v444, %v443
  %v579 = vpack.c.b16 %v446, %v445
  %v580 = vpack.c.b16 %v448, %v447
  %v581 = vpack.c.b16 %v450, %v449
  %v582 = vpack.c.b16 %v452, %v451
  %v583 = vpack.c.b16 %v454, %v453
  %v584 = vpack.c.b16 %v456, %v455
  %v585 = vpack.c.b16 %v458, %v457
  %v586 = vpack.c.b16 %v460, %v459
  %v587 = vpack.c.b16 %v462, %v461
  %v588 = vpack.c.b16 %v464, %v463
  %v589 = vpack.c.b16 %v466, %v465
  %v590 = vpack.c.b16 %v468, %v467
  %v591 = vpack.c.b16 %v470, %v469
  %v592 = vpack.c.b16 %v472, %v471
  %v593 = vpack.c.b16 %v474, %v473
  %v594 = vpack.c.b16 %v476, %v475
  %v595 = vpack.c.b16 %v478, %v477
  %v596 = vpack.c.b16 %v480, %v479
  %v597 = vpack.c.b16 %v482, %v481
  %v598 = vpack.c.b16 %v484, %v483
  %v599 = vpack.c.b16 %v486, %v485
  %v600 = vpack.c.b16 %v488, %v487
  %v601 = vpack.c.b16 %v490, %v489
  %v602 = vpack.c.b16 %v492, %v491
  %v603 = vpack.c.b16 %v494, %v493
  %v604 = vpack.c.b16 %v496, %v495
  %v605 = vpack.c.b16 %v498, %v497
  %v606 = vpack.c.b16 %v500, %v499
  %v607 = vpack.c.b16 %v502, %v501
  %v608 = vpack.c.b16 %v504, %v503
  %v609 = vpack.c.b16 %v506, %v505
  %v610 = vpack.c.b16 %v508, %v507
  %v611 = vpack.c.b16 %v510, %v509
  %v612 = vpack.c.b16 %v512, %v511
  %v613 = vpack.c.b16 %v514, %v513
  %v614 = vpack.c.b16 %v516, %v515
  %v615 = vpack.c.b16 %v518, %v517
  %v616 = vpack.c.b16 %v520, %v519
  %v617 = vpack.c.b16 %v522, %v521
  %v618 = vpack.c.b16 %v524, %v523
  %v619 = vpack.c.b16 %v526, %v525
  %v620 = vpack.c.b16 %v528, %v527
  %v621 = vpack.c.b16 %v530, %v529
  %v622 = vpack.c.b16 %v532, %v531
  %v623 = vpack.c.b16 %v534, %v533
  %v624 = vpack.c.b16 %v536, %v535
  %v625 = vpack.c.b16 %v538, %v537
  %v626 = vpack.c.b16 %v540, %v539
  %v627 = vpack.c.b16 %v542, %v541
  %v628 = vpack.c.b16 %v544, %v543
  %v629 = vpack.c.b16 %v546, %v545
  %v630 = vpack.c.b16 %v548, %v547
  %v631 = vpack.c.b16 %v550, %v549
  %v632 = vpack.c.b16 %v552, %v551
  %v633 = vpack.c.b16 %v554, %v553
  %v634 = vpack.c.b16 %v556, %v555
  %v635 = vpack.c.b16 %v558, %v557
  %v636 = vpack.c.b16 %v560, %v559
  %v637 = vpack.c.b16 %v562, %v561
  %v638 = vpack.c.b16 %v564, %v563
  %v639 = vpack.c.b16 %v566, %v565
  %v640 = vpack.c.b16 %v568, %v567
  %713 = vmatprep.subr.bf16.mxu0 0
  %714 = vmatpush1.bf16.msra.mxu0 %v576
  %715 = vmatprep.subr.bf16.mxu0 0
  %716 = vmatpush1.bf16.msra.mxu0 %v575
  %717 = vmatprep.subr.bf16.mxu0 0
  %718 = vmatpush1.bf16.msra.mxu0 %v574
  %719 = vmatprep.subr.bf16.mxu0 0
  %720 = vmatpush1.bf16.msra.mxu0 %v573
  %721 = vmatprep.subr.bf16.mxu0 0
  %722 = vmatpush1.bf16.msra.mxu0 %v572
  %723 = vmatprep.subr.bf16.mxu0 0
  %724 = vmatpush1.bf16.msra.mxu0 %v571
  %725 = vmatprep.subr.bf16.mxu0 0
  %726 = vmatpush1.bf16.msra.mxu0 %v570
  %727 = vmatprep.subr.bf16.mxu0 0
  %728 = vmatpush1.bf16.msra.mxu0 %v569
  %729 = vmatprep.subr.bf16.mxu0 0
  %730 = vmatpush2.bf16.msra.mxu0 %v584
  %731 = vmatprep.subr.bf16.mxu0 0
  %732 = vmatpush2.bf16.msra.mxu0 %v583
  %733 = vmatprep.subr.bf16.mxu0 0
  %734 = vmatpush2.bf16.msra.mxu0 %v582
  %735 = vmatprep.subr.bf16.mxu0 0
  %736 = vmatpush2.bf16.msra.mxu0 %v581
  %737 = vmatprep.subr.bf16.mxu0 0
  %738 = vmatpush2.bf16.msra.mxu0 %v580
  %739 = vmatprep.subr.bf16.mxu0 0
  %740 = vmatpush2.bf16.msra.mxu0 %v579
  %741 = vmatprep.subr.bf16.mxu0 0
  %742 = vmatpush2.bf16.msra.mxu0 %v578
  %743 = vmatprep.subr.bf16.mxu0 0
  %744 = vmatpush2.bf16.msra.mxu0 %v577
  %745 = vmatprep.mubr.bf16.mxu0 %v246
  %746 = vmatmul.mubr.bf16.gmra.mxu0 %v245
  %v747 = vpop.f32.mrf.mxu0
  %v748 = vadd.f32 %v187, %v747
  %v749 = vpop.f32.mrf.mxu0
  %v750 = vpop.f32.mrf.mxu0
  %v751 = vadd.f32 %v187, %v750
  %v752 = vpop.f32.mrf.mxu0
  %753 = vmatprep.mubr.bf16.mxu0 %v255
  %754 = vmatmul.mubr.bf16.gmra.mxu0 %v254
  %v755 = vpop.f32.mrf.mxu0
  %v756 = vadd.f32 %v187, %v755
  %v757 = vpop.f32.mrf.mxu0
  %v758 = vpop.f32.mrf.mxu0
  %v759 = vadd.f32 %v187, %v758
  %v760 = vpop.f32.mrf.mxu0
  %761 = vdwg.mxu0
  %762 = vmatprep.subr.bf16.mxu0 0
  %763 = vmatpush1.bf16.msra.mxu0 %v592
  %764 = vmatprep.subr.bf16.mxu0 0
  %765 = vmatpush1.bf16.msra.mxu0 %v591
  %766 = vmatprep.subr.bf16.mxu0 0
  %767 = vmatpush1.bf16.msra.mxu0 %v590
  %768 = vmatprep.subr.bf16.mxu0 0
  %769 = vmatpush1.bf16.msra.mxu0 %v589
  %770 = vmatprep.subr.bf16.mxu0 0
  %771 = vmatpush1.bf16.msra.mxu0 %v588
  %772 = vmatprep.subr.bf16.mxu0 0
  %773 = vmatpush1.bf16.msra.mxu0 %v587
  %774 = vmatprep.subr.bf16.mxu0 0
  %775 = vmatpush1.bf16.msra.mxu0 %v586
  %776 = vmatprep.subr.bf16.mxu0 0
  %777 = vmatpush1.bf16.msra.mxu0 %v585
  %778 = vmatprep.subr.bf16.mxu0 0
  %779 = vmatpush2.bf16.msra.mxu0 %v600
  %780 = vmatprep.subr.bf16.mxu0 0
  %781 = vmatpush2.bf16.msra.mxu0 %v599
  %782 = vmatprep.subr.bf16.mxu0 0
  %783 = vmatpush2.bf16.msra.mxu0 %v598
  %784 = vmatprep.subr.bf16.mxu0 0
  %785 = vmatpush2.bf16.msra.mxu0 %v597
  %786 = vmatprep.subr.bf16.mxu0 0
  %787 = vmatpush2.bf16.msra.mxu0 %v596
  %788 = vmatprep.subr.bf16.mxu0 0
  %789 = vmatpush2.bf16.msra.mxu0 %v595
  %790 = vmatprep.subr.bf16.mxu0 0
  %791 = vmatpush2.bf16.msra.mxu0 %v594
  %792 = vmatprep.subr.bf16.mxu0 0
  %793 = vmatpush2.bf16.msra.mxu0 %v593
  %794 = vmatprep.mubr.bf16.mxu0 %v248
  %795 = vmatmul.mubr.bf16.gmra.mxu0 %v247
  %v796 = vpop.f32.mrf.mxu0
  %v797 = vadd.f32 %v748, %v796
  %v798 = vpop.f32.mrf.mxu0
  %v799 = vpop.f32.mrf.mxu0
  %v800 = vadd.f32 %v751, %v799
  %v801 = vpop.f32.mrf.mxu0
  %802 = vmatprep.mubr.bf16.mxu0 %v257
  %803 = vmatmul.mubr.bf16.gmra.mxu0 %v256
  %v804 = vpop.f32.mrf.mxu0
  %v805 = vadd.f32 %v756, %v804
  %v806 = vpop.f32.mrf.mxu0
  %v807 = vpop.f32.mrf.mxu0
  %v808 = vadd.f32 %v759, %v807
  %v809 = vpop.f32.mrf.mxu0
  %810 = vdwg.mxu0
  %811 = vmatprep.subr.bf16.mxu0 0
  %812 = vmatpush1.bf16.msra.mxu0 %v608
  %813 = vmatprep.subr.bf16.mxu0 0
  %814 = vmatpush1.bf16.msra.mxu0 %v607
  %815 = vmatprep.subr.bf16.mxu0 0
  %816 = vmatpush1.bf16.msra.mxu0 %v606
  %817 = vmatprep.subr.bf16.mxu0 0
  %818 = vmatpush1.bf16.msra.mxu0 %v605
  %819 = vmatprep.subr.bf16.mxu0 0
  %820 = vmatpush1.bf16.msra.mxu0 %v604
  %821 = vmatprep.subr.bf16.mxu0 0
  %822 = vmatpush1.bf16.msra.mxu0 %v603
  %823 = vmatprep.subr.bf16.mxu0 0
  %824 = vmatpush1.bf16.msra.mxu0 %v602
  %825 = vmatprep.subr.bf16.mxu0 0
  %826 = vmatpush1.bf16.msra.mxu0 %v601
  %827 = vmatprep.subr.bf16.mxu0 0
  %828 = vmatpush2.bf16.msra.mxu0 %v616
  %829 = vmatprep.subr.bf16.mxu0 0
  %830 = vmatpush2.bf16.msra.mxu0 %v615
  %831 = vmatprep.subr.bf16.mxu0 0
  %832 = vmatpush2.bf16.msra.mxu0 %v614
  %833 = vmatprep.subr.bf16.mxu0 0
  %834 = vmatpush2.bf16.msra.mxu0 %v613
  %835 = vmatprep.subr.bf16.mxu0 0
  %836 = vmatpush2.bf16.msra.mxu0 %v612
  %837 = vmatprep.subr.bf16.mxu0 0
  %838 = vmatpush2.bf16.msra.mxu0 %v611
  %839 = vmatprep.subr.bf16.mxu0 0
  %840 = vmatpush2.bf16.msra.mxu0 %v610
  %841 = vmatprep.subr.bf16.mxu0 0
  %842 = vmatpush2.bf16.msra.mxu0 %v609
  %843 = vmatprep.mubr.bf16.mxu0 %v250
  %844 = vmatmul.mubr.bf16.gmra.mxu0 %v249
  %v845 = vpop.f32.mrf.mxu0
  %v846 = vadd.f32 %v797, %v845
  %v847 = vpop.f32.mrf.mxu0
  %v848 = vpop.f32.mrf.mxu0
  %v849 = vadd.f32 %v800, %v848
  %v850 = vpop.f32.mrf.mxu0
  %851 = vmatprep.mubr.bf16.mxu0 %v259
  %852 = vmatmul.mubr.bf16.gmra.mxu0 %v258
  %v853 = vpop.f32.mrf.mxu0
  %v854 = vadd.f32 %v805, %v853
  %v855 = vpop.f32.mrf.mxu0
  %v856 = vpop.f32.mrf.mxu0
  %v857 = vadd.f32 %v808, %v856
  %v858 = vpop.f32.mrf.mxu0
  %859 = vdwg.mxu0
  %860 = vmatprep.subr.bf16.mxu0 0
  %861 = vmatpush1.bf16.msra.mxu0 %v624
  %862 = vmatprep.subr.bf16.mxu0 0
  %863 = vmatpush1.bf16.msra.mxu0 %v623
  %864 = vmatprep.subr.bf16.mxu0 0
  %865 = vmatpush1.bf16.msra.mxu0 %v622
  %866 = vmatprep.subr.bf16.mxu0 0
  %867 = vmatpush1.bf16.msra.mxu0 %v621
  %868 = vmatprep.subr.bf16.mxu0 0
  %869 = vmatpush1.bf16.msra.mxu0 %v620
  %870 = vmatprep.subr.bf16.mxu0 0
  %871 = vmatpush1.bf16.msra.mxu0 %v619
  %872 = vmatprep.subr.bf16.mxu0 0
  %873 = vmatpush1.bf16.msra.mxu0 %v618
  %874 = vmatprep.subr.bf16.mxu0 0
  %875 = vmatpush1.bf16.msra.mxu0 %v617
  %876 = vmatprep.subr.bf16.mxu0 0
  %877 = vmatpush2.bf16.msra.mxu0 %v632
  %878 = vmatprep.subr.bf16.mxu0 0
  %879 = vmatpush2.bf16.msra.mxu0 %v631
  %880 = vmatprep.subr.bf16.mxu0 0
  %881 = vmatpush2.bf16.msra.mxu0 %v630
  %882 = vmatprep.subr.bf16.mxu0 0
  %883 = vmatpush2.bf16.msra.mxu0 %v629
  %884 = vmatprep.subr.bf16.mxu0 0
  %885 = vmatpush2.bf16.msra.mxu0 %v628
  %886 = vmatprep.subr.bf16.mxu0 0
  %887 = vmatpush2.bf16.msra.mxu0 %v627
  %888 = vmatprep.subr.bf16.mxu0 0
  %889 = vmatpush2.bf16.msra.mxu0 %v626
  %890 = vmatprep.subr.bf16.mxu0 0
  %891 = vmatpush2.bf16.msra.mxu0 %v625
  %892 = vmatprep.mubr.bf16.mxu0 %v252
  %893 = vmatmul.mubr.bf16.gmra.mxu0 %v251
  %v894 = vpop.f32.mrf.mxu0
  %v895 = vadd.f32 %v846, %v894
  %v896 = vpop.f32.mrf.mxu0
  %v897 = vpop.f32.mrf.mxu0
  %v898 = vadd.f32 %v849, %v897
  %v899 = vpop.f32.mrf.mxu0
  %900 = vmatprep.mubr.bf16.mxu0 %v261
  %901 = vmatmul.mubr.bf16.gmra.mxu0 %v260
  %v902 = vpop.f32.mrf.mxu0
  %v903 = vadd.f32 %v854, %v902
  %v904 = vpop.f32.mrf.mxu0
  %v905 = vpop.f32.mrf.mxu0
  %v906 = vadd.f32 %v857, %v905
  %v907 = vpop.f32.mrf.mxu0
  %908 = vdwg.mxu0
  %909 = vmatprep.subr.bf16.mxu0 0
  %910 = vmatpush1.bf16.msra.mxu0 %v640
  %911 = vmatprep.subr.bf16.mxu0 0
  %912 = vmatpush1.bf16.msra.mxu0 %v639
  %913 = vmatprep.subr.bf16.mxu0 0
  %914 = vmatpush1.bf16.msra.mxu0 %v638
  %915 = vmatprep.subr.bf16.mxu0 0
  %916 = vmatpush1.bf16.msra.mxu0 %v637
  %917 = vmatprep.subr.bf16.mxu0 0
  %918 = vmatpush1.bf16.msra.mxu0 %v636
  %919 = vmatprep.subr.bf16.mxu0 0
  %920 = vmatpush1.bf16.msra.mxu0 %v635
  %921 = vmatprep.subr.bf16.mxu0 0
  %922 = vmatpush1.bf16.msra.mxu0 %v634
  %923 = vmatprep.subr.bf16.mxu0 0
  %924 = vmatpush1.bf16.msra.mxu0 %v633
  %925 = vmatprep.subr.bf16.mxu0 0
  %926 = vmatpush2.bf16.msra.mxu0 0
  %927 = vmatprep.subr.bf16.mxu0 0
  %928 = vmatpush2.bf16.msra.mxu0 0
  %929 = vmatprep.subr.bf16.mxu0 0
  %930 = vmatpush2.bf16.msra.mxu0 0
  %931 = vmatprep.subr.bf16.mxu0 0
  %932 = vmatpush2.bf16.msra.mxu0 0
  %933 = vmatprep.subr.bf16.mxu0 0
  %934 = vmatpush2.bf16.msra.mxu0 0
  %935 = vmatprep.subr.bf16.mxu0 0
  %936 = vmatpush2.bf16.msra.mxu0 0
  %937 = vmatprep.subr.bf16.mxu0 0
  %938 = vmatpush2.bf16.msra.mxu0 0
  %939 = vmatprep.subr.bf16.mxu0 0
  %940 = vmatpush2.bf16.msra.mxu0 0
  %941 = vmatprep.mubr.bf16.mxu0 0
  %942 = vmatmul.mubr.bf16.gmra.mxu0 %v253
  %v943 = vpop.f32.mrf.mxu0
  %v944 = vadd.f32 %v895, %v943
  %v945 = vpop.f32.mrf.mxu0
  %v946 = vpop.f32.mrf.mxu0
  %v947 = vadd.f32 %v898, %v946
  %v948 = vpop.f32.mrf.mxu0
  %949 = vmatprep.mubr.bf16.mxu0 0
  %950 = vmatmul.mubr.bf16.gmra.mxu0 %v262
  %v951 = vpop.f32.mrf.mxu0
  %v952 = vadd.f32 %v903, %v951
  %v953 = vpop.f32.mrf.mxu0
  %v954 = vpop.f32.mrf.mxu0
  %v955 = vadd.f32 %v906, %v954
  %v956 = vpop.f32.mrf.mxu0
  %957 = vdwg.mxu0
  %v958 = vld [vmem:[%s3] sm:$0xf]
  %v959 = vld [vmem:[%s3 + $0x4] sm:$0xf]
  %v960 = vld [vmem:[%s3 + $0x8] sm:$0xf]
  %v961 = vld [vmem:[%s3 + $0xc] sm:$0xf]
  %v962 = vunpack.c.l.bf16 %v958
  %v963 = vunpack.c.l.bf16 %v959
  %v964 = vunpack.c.l.bf16 %v960
  %v965 = vunpack.c.l.bf16 %v961
  %v966 = vadd.f32 %v944, %v962
  %v967 = vadd.f32 %v947, %v963
  %v968 = vadd.f32 %v952, %v964
  %v969 = vadd.f32 %v955, %v965
  %v970 = vmax.f32 %v966, 0.0
  %v971 = vmax.f32 %v967, 0.0
  %v972 = vmax.f32 %v968, 0.0
  %v973 = vmax.f32 %v969, 0.0
  %v974 = vpack.c.bf16 %v971, %v970
  %v975 = vpack.c.bf16 %v973, %v972
  %v978 = vunpack.c.l.b16 %v974
  %v979 = vunpack.c.h.b16 %v974
  %v980 = vunpack.c.l.b16 %v975
  %v981 = vunpack.c.h.b16 %v975
  %v982 = vpack.c.b16 %v978, %v978
  %v983 = vpack.c.b16 %v979, %v979
  %v984 = vpack.c.b16 %v980, %v980
  %v985 = vpack.c.b16 %v981, %v981
  %990 = vst [vmem:[%s4] sm:$0xf] %v982
  %991 = vst [vmem:[%s4 + $0x4] sm:$0xf] %v983
  %992 = vst [vmem:[%s4 + $0x8] sm:$0xf] %v984
  %993 = vst [vmem:[%s4 + $0xc] sm:$0xf] %v985
  // Predicated region
  $region18: #{colorization_net.22} parent=0 // pred_check
    _
  $region19: #{colorization_net.22} parent=0 // pred_check_branch
    %995 = sbr.rel (0) target = $region21
  $region20: #{colorization_net.22} parent=0 // pred_region
    _
  $region21: #{colorization_net.22} parent=0 // pred_fallthru
    _
  // Predicated region
  $region22: #{colorization_net.22} parent=0 // pred_check
    _
  $region23: #{colorization_net.22} parent=0 // pred_check_branch
    %997 = sbr.rel (0) target = $region25
  $region24: #{colorization_net.22} parent=0 // pred_region
    _
  $region25: #{colorization_net.22} parent=0 // pred_fallthru
    _

// kernel: colorization_net.28
$region0: #{colorization_net.28}
  #allocation0 [shape = 'u32[]', space=smem, size = 0x4, offset = 0x4, fixed_abs, tag = 'smem constant byte address 0x4 - core index']
  #allocation1 [shape = 'u32[144,128]{1,0:T(1,128)}', space=vmem, size = 0x12000, scoped, tag = 'internal scratch']
  %s0 = inlined_call_operand.vmem [shape: bf16[512,1152], index: 0, kind: input, shape index: {}]
  %s1 = inlined_call_operand.vmem [shape: bf16[1152,128], index: 1, kind: input, shape index: {}]
  %s2 = inlined_call_operand.vmem [shape: f32[1,128], index: 2, kind: input, shape index: {}]
  %s3 = inlined_call_operand.vmem [shape: bf16[512,128], index: 3, kind: output, shape index: {}]
  %s4 = sld [smem:[#allocation0]]
  $region45: #{colorization_net.28} parent=0
    _
  %s6 = ssub.s32 1, %s4
  %s7 = scalar_select 0, %s6, %s4
  loop: start=0, step=1, limit=4
  $region2: #{colorization_net.28} parent=0 // loop_pre_header
    _
  $region3: #{colorization_net.28} parent=0 // loop_header
    %s9 = sphi 0, %s13
    %p10 = scmp.ge.s32.totalorder %s9, 4
    %s19 = sphi 0, %s21
    %s22 = sphi 0, %s19
    %s23 = sphi 0, %s22
    %s39 = sphi 0, %s23
    %s43 = sphi 0, %s43
    %s45 = sphi 0, %s43
    %s46 = sphi 0, %s45
    %s60 = sphi 0, %s46
    %s64 = sphi 0, %s64
    %s66 = sphi 0, %s64
    %s67 = sphi 0, %s66
    %s81 = sphi 0, %s67
    %s87 = sphi 0, %s89
    %s90 = sphi 0, %s87
    %s91 = sphi 0, %s90
    %s107 = sphi 0, %s91
  $region4: #{colorization_net.28} parent=0 // loop_header_branch
    %12 = sbr.rel (%p10) target = $region8
  $region5: #{colorization_net.28} parent=0 // loop_body
    %s14 = ssub.s32 %s9, 1
    %s15 = ssub.s32 %s9, 2
    %s16 = sadd.s32 %s9, 1
    %s17 = ssub.s32 %s9, %s16
    %p18 = scmp.eq.s32.totalorder %s17, 0
    %s20 = sadd.s32 %s19, 1
    %s21 = scalar_select %p18, %s19, %s20
    %p24 = pneg %p18
    %p25 = scmp.eq.s32.totalorder %s9, 1
    %p26 = por %p24, %p25
    %p27 = scmp.ne.s32.totalorder %s19, %s22
    %p28 = scmp.eq.s32.totalorder %s9, 0
    %p29 = por %p27, %p28
    %p30 = scmp.ne.s32.totalorder %s19, %s22
    %p31 = scmp.eq.s32.totalorder %s14, 1
    %p32 = por %p30, %p31
    %p33 = scmp.ne.s32.totalorder %s22, %s23
    %p34 = scmp.eq.s32.totalorder %s14, 0
    %p35 = por %p33, %p34
    %p36 = scmp.ne.s32.totalorder %s22, %s23
    %p37 = scmp.eq.s32.totalorder %s15, 1
    %p38 = por %p36, %p37
    %p40 = scmp.ne.s32.totalorder %s23, %s39
    %p41 = scmp.eq.s32.totalorder %s15, 0
    %p42 = por %p40, %p41
    %s44 = sadd.s32 %s43, 1
    %p47 = scmp.eq.s32.totalorder %s9, 1
    %p48 = scmp.ne.s32.totalorder %s43, %s45
    %p49 = scmp.eq.s32.totalorder %s9, 0
    %p50 = por %p48, %p49
    %p51 = scmp.ne.s32.totalorder %s43, %s45
    %p52 = scmp.eq.s32.totalorder %s14, 1
    %p53 = por %p51, %p52
    %p54 = scmp.ne.s32.totalorder %s45, %s46
    %p55 = scmp.eq.s32.totalorder %s14, 0
    %p56 = por %p54, %p55
    %p57 = scmp.ne.s32.totalorder %s45, %s46
    %p58 = scmp.eq.s32.totalorder %s15, 1
    %p59 = por %p57, %p58
    %p61 = scmp.ne.s32.totalorder %s46, %s60
    %p62 = scmp.eq.s32.totalorder %s15, 0
    %p63 = por %p61, %p62
    %s65 = sadd.s32 %s64, 1
    %p68 = scmp.eq.s32.totalorder %s9, 1
    %p69 = scmp.ne.s32.totalorder %s64, %s66
    %p70 = scmp.eq.s32.totalorder %s9, 0
    %p71 = por %p69, %p70
    %p72 = scmp.ne.s32.totalorder %s64, %s66
    %p73 = scmp.eq.s32.totalorder %s14, 1
    %p74 = por %p72, %p73
    %p75 = scmp.ne.s32.totalorder %s66, %s67
    %p76 = scmp.eq.s32.totalorder %s14, 0
    %p77 = por %p75, %p76
    %p78 = scmp.ne.s32.totalorder %s66, %s67
    %p79 = scmp.eq.s32.totalorder %s15, 1
    %p80 = por %p78, %p79
    %p82 = scmp.ne.s32.totalorder %s67, %s81
    %p83 = scmp.eq.s32.totalorder %s15, 0
    %p84 = por %p82, %p83
    %s85 = ssub.s32 %s9, %s16
    %p86 = scmp.eq.s32.totalorder %s85, 0
    %s88 = sadd.s32 %s87, 1
    %s89 = scalar_select %p86, %s87, %s88
    %p92 = pneg %p86
    %p93 = scmp.eq.s32.totalorder %s9, 1
    %p94 = por %p92, %p93
    %p95 = scmp.ne.s32.totalorder %s87, %s90
    %p96 = scmp.eq.s32.totalorder %s9, 0
    %p97 = por %p95, %p96
    %p98 = scmp.ne.s32.totalorder %s87, %s90
    %p99 = scmp.eq.s32.totalorder %s14, 1
    %p100 = por %p98, %p99
    %p101 = scmp.ne.s32.totalorder %s90, %s91
    %p102 = scmp.eq.s32.totalorder %s14, 0
    %p103 = por %p101, %p102
    %p104 = scmp.ne.s32.totalorder %s90, %s91
    %p105 = scmp.eq.s32.totalorder %s15, 1
    %p106 = por %p104, %p105
    %p108 = scmp.ne.s32.totalorder %s91, %s107
    %p109 = scmp.eq.s32.totalorder %s15, 0
    %p110 = por %p108, %p109
    %p111 = scmp.le.s32.totalorder 1, %s9
    %p112 = scmp.lt.s32.totalorder %s9, 3
    %p113 = pnand %p111, %p112
    %p114 = pneg %p113
    // Predicated region
    $region9: #{colorization_net.28} parent=5 // pred_check
      _
    $region10: #{colorization_net.28} parent=5 // pred_check_branch
      %116 = sbr.rel (%p113) target = $region12
    $region11: #{colorization_net.28} parent=5 // pred_region
      %s117 = ssub.s32 %s9, 1
      // Predicated region
      $region13: #{colorization_net.28} parent=11 // pred_check
        %p118 = pneg %p56
      $region14: #{colorization_net.28} parent=11 // pred_check_branch
        %120 = sbr.rel (%p118) target = $region16
      $region15: #{colorization_net.28} parent=11 // pred_region
        _
      $region16: #{colorization_net.28} parent=11 // pred_fallthru
        _
      // Predicated region
      $region17: #{colorization_net.28} parent=11 // pred_check
        %p121 = pneg %p77
      $region18: #{colorization_net.28} parent=11 // pred_check_branch
        %123 = sbr.rel (%p121) target = $region20
      $region19: #{colorization_net.28} parent=11 // pred_region
        _
      $region20: #{colorization_net.28} parent=11 // pred_fallthru
        _
    $region12: #{colorization_net.28} parent=5 // pred_fallthru
      _
    %p124 = scmp.lt.s32.totalorder %s9, 2
    // Predicated region
    $region21: #{colorization_net.28} parent=5 // pred_check
      %p125 = pneg %p124
    $region22: #{colorization_net.28} parent=5 // pred_check_branch
      %127 = sbr.rel (%p125) target = $region24
    $region23: #{colorization_net.28} parent=5 // pred_region
      // Predicated region
      $region25: #{colorization_net.28} parent=23 // pred_check
        %p128 = pneg %p29
      $region26: #{colorization_net.28} parent=23 // pred_check_branch
        %130 = sbr.rel (%p128) target = $region28
      $region27: #{colorization_net.28} parent=23 // pred_region
        %s131 = smul.u32 32, %s9
        %p132 = scmp.lt.s32.totalorder %s131, 63
        %s133 = scalar_select %p132, %s131, 63
        %s134 = smul.addr %s133, 9
        %s135 = smul.addr %s134, 4
        %s136 = scalar_lea.vmem %s0, %s135
        %s137 = smul.u32 32, %s9
      $region28: #{colorization_net.28} parent=23 // pred_fallthru
        _
    $region24: #{colorization_net.28} parent=5 // pred_fallthru
      _
    %p138 = scmp.le.s32.totalorder 1, %s9
    %p139 = scmp.lt.s32.totalorder %s9, 3
    %p140 = pnand %p138, %p139
    %p141 = pneg %p140
    // Predicated region
    $region29: #{colorization_net.28} parent=5 // pred_check
      _
    $region30: #{colorization_net.28} parent=5 // pred_check_branch
      %143 = sbr.rel (%p140) target = $region32
    $region31: #{colorization_net.28} parent=5 // pred_region
      %s144 = ssub.s32 %s9, 1
      %s145 = smul.u32 32, %s14
      %p146 = scmp.lt.s32.totalorder %s145, 63
      %s147 = scalar_select %p146, %s145, 63
      %s148 = smul.addr %s147, 9
      %s149 = smul.addr %s148, 4
      %s150 = scalar_lea.vmem %s0, %s149
      %p151 = pneg %p35
      %p152 = pneg %p32
      %p153 = pneg %p56
      %p154 = pneg %p53
      %p155 = pneg %p77
      %p156 = pneg %p74
      %p157 = pneg %p103
      %p158 = pneg %p100
      %s159 = smul.u32 32, %s14
      %p160 = scmp.lt.s32.totalorder %s159, 63
      %s161 = scalar_select %p160, %s159, 63
      %s162 = smul.addr %s161, 4
      %s163 = scalar_lea.vmem %s3, %s162
      %s164 = smul.u32 32, %s14
      %p165 = scmp.lt.s32.totalorder %s164, 63
      %s166 = scalar_select %p165, %s164, 63
      %s167 = smul.addr %s166, 9
      %s168 = smul.addr %s167, 4
      %s169 = scalar_lea.vmem %s0, %s168
      %s170 = smul.u32 32, %s14
      %s171 = smul.u32 32, %s14
      %p172 = scmp.lt.s32.totalorder %s171, 63
      %s173 = scalar_select %p172, %s171, 63
      %s174 = smul.addr %s173, 4
      %s175 = scalar_lea.vmem %s3, %s174
      %s176 = smul.u32 32, %s14
      %v178 = vld [vmem:[%s169] sm:$0xff]
      %v179 = vld [vmem:[%s169 + $0x8] sm:$0xff]
      %v180 = vld [vmem:[%s169 + $0x10] sm:$0xff]
      %v181 = vld [vmem:[%s169 + $0x18] sm:$0xff]
      %v182 = vld [vmem:[%s169 + $0x20] sm:$0xf]
      %v183 = vld [vmem:[%s169 + $0x24] sm:$0xff]
      %v184 = vld [vmem:[%s169 + $0x2c] sm:$0xff]
      %v185 = vld [vmem:[%s169 + $0x34] sm:$0xff]
      %v186 = vld [vmem:[%s169 + $0x3c] sm:$0xff]
      %v187 = vld [vmem:[%s169 + $0x44] sm:$0xf]
      %v188 = vld [vmem:[%s169 + $0x48] sm:$0xff]
      %v189 = vld [vmem:[%s169 + $0x50] sm:$0xff]
      %v190 = vld [vmem:[%s169 + $0x58] sm:$0xff]
      %v191 = vld [vmem:[%s169 + $0x60] sm:$0xff]
      %v192 = vld [vmem:[%s169 + $0x68] sm:$0xf]
      %v193 = vld [vmem:[%s169 + $0x6c] sm:$0xff]
      %v194 = vld [vmem:[%s169 + $0x74] sm:$0xff]
      %v195 = vld [vmem:[%s169 + $0x7c] sm:$0xff]
      %v196 = vld [vmem:[%s169 + $0x84] sm:$0xff]
      %v197 = vld [vmem:[%s169 + $0x8c] sm:$0xf]
      %v198 = vld [vmem:[%s169 + $0x90] sm:$0xff]
      %v199 = vld [vmem:[%s169 + $0x98] sm:$0xff]
      %v200 = vld [vmem:[%s169 + $0xa0] sm:$0xff]
      %v201 = vld [vmem:[%s169 + $0xa8] sm:$0xff]
      %v202 = vld [vmem:[%s169 + $0xb0] sm:$0xf]
      %v203 = vld [vmem:[%s169 + $0xb4] sm:$0xff]
      %v204 = vld [vmem:[%s169 + $0xbc] sm:$0xff]
      %v205 = vld [vmem:[%s169 + $0xc4] sm:$0xff]
      %v206 = vld [vmem:[%s169 + $0xcc] sm:$0xff]
      %v207 = vld [vmem:[%s169 + $0xd4] sm:$0xf]
      %v208 = vld [vmem:[%s169 + $0xd8] sm:$0xff]
      %v209 = vld [vmem:[%s169 + $0xe0] sm:$0xff]
      %v210 = vld [vmem:[%s169 + $0xe8] sm:$0xff]
      %v211 = vld [vmem:[%s169 + $0xf0] sm:$0xff]
      %v212 = vld [vmem:[%s169 + $0xf8] sm:$0xf]
      %v213 = vld [vmem:[%s169 + $0xfc] sm:$0xff]
      %v214 = vld [vmem:[%s169 + $0x104] sm:$0xff]
      %v215 = vld [vmem:[%s169 + $0x10c] sm:$0xff]
      %v216 = vld [vmem:[%s169 + $0x114] sm:$0xff]
      %v217 = vld [vmem:[%s169 + $0x11c] sm:$0xf]
      %v218 = vld [vmem:[%s169 + $0x120] sm:$0xff]
      %v219 = vld [vmem:[%s169 + $0x128] sm:$0xff]
      %v220 = vld [vmem:[%s169 + $0x130] sm:$0xff]
      %v221 = vld [vmem:[%s169 + $0x138] sm:$0xff]
      %v222 = vld [vmem:[%s169 + $0x140] sm:$0xf]
      %v223 = vld [vmem:[%s169 + $0x144] sm:$0xff]
      %v224 = vld [vmem:[%s169 + $0x14c] sm:$0xff]
      %v225 = vld [vmem:[%s169 + $0x154] sm:$0xff]
      %v226 = vld [vmem:[%s169 + $0x15c] sm:$0xff]
      %v227 = vld [vmem:[%s169 + $0x164] sm:$0xf]
      %v228 = vld [vmem:[%s169 + $0x168] sm:$0xff]
      %v229 = vld [vmem:[%s169 + $0x170] sm:$0xff]
      %v230 = vld [vmem:[%s169 + $0x178] sm:$0xff]
      %v231 = vld [vmem:[%s169 + $0x180] sm:$0xff]
      %v232 = vld [vmem:[%s169 + $0x188] sm:$0xf]
      %v233 = vld [vmem:[%s169 + $0x18c] sm:$0xff]
      %v234 = vld [vmem:[%s169 + $0x194] sm:$0xff]
      %v235 = vld [vmem:[%s169 + $0x19c] sm:$0xff]
      %v236 = vld [vmem:[%s169 + $0x1a4] sm:$0xff]
      %v237 = vld [vmem:[%s169 + $0x1ac] sm:$0xf]
      %v238 = vld [vmem:[%s169 + $0x1b0] sm:$0xff]
      %v239 = vld [vmem:[%s169 + $0x1b8] sm:$0xff]
      %v240 = vld [vmem:[%s169 + $0x1c0] sm:$0xff]
      %v241 = vld [vmem:[%s169 + $0x1c8] sm:$0xff]
      %v242 = vld [vmem:[%s169 + $0x1d0] sm:$0xf]
      %v243 = vld [vmem:[%s169 + $0x1d4] sm:$0xff]
      %v244 = vld [vmem:[%s169 + $0x1dc] sm:$0xff]
      %v245 = vld [vmem:[%s169 + $0x1e4] sm:$0xff]
      %v246 = vld [vmem:[%s169 + $0x1ec] sm:$0xff]
      %v247 = vld [vmem:[%s169 + $0x1f4] sm:$0xf]
      %v248 = vld [vmem:[%s169 + $0x1f8] sm:$0xff]
      %v249 = vld [vmem:[%s169 + $0x200] sm:$0xff]
      %v250 = vld [vmem:[%s169 + $0x208] sm:$0xff]
      %v251 = vld [vmem:[%s169 + $0x210] sm:$0xff]
      %v252 = vld [vmem:[%s169 + $0x218] sm:$0xf]
      %v253 = vld [vmem:[%s169 + $0x21c] sm:$0xff]
      %v254 = vld [vmem:[%s169 + $0x224] sm:$0xff]
      %v255 = vld [vmem:[%s169 + $0x22c] sm:$0xff]
      %v256 = vld [vmem:[%s169 + $0x234] sm:$0xff]
      %v257 = vld [vmem:[%s169 + $0x23c] sm:$0xf]
      %v258 = vld [vmem:[%s169 + $0x240] sm:$0xff]
      %v259 = vld [vmem:[%s169 + $0x248] sm:$0xff]
      %v260 = vld [vmem:[%s169 + $0x250] sm:$0xff]
      %v261 = vld [vmem:[%s169 + $0x258] sm:$0xff]
      %v262 = vld [vmem:[%s169 + $0x260] sm:$0xf]
      %v263 = vld [vmem:[%s169 + $0x264] sm:$0xff]
      %v264 = vld [vmem:[%s169 + $0x26c] sm:$0xff]
      %v265 = vld [vmem:[%s169 + $0x274] sm:$0xff]
      %v266 = vld [vmem:[%s169 + $0x27c] sm:$0xff]
      %v267 = vld [vmem:[%s169 + $0x284] sm:$0xf]
      %v268 = vld [vmem:[%s169 + $0x288] sm:$0xff]
      %v269 = vld [vmem:[%s169 + $0x290] sm:$0xff]
      %v270 = vld [vmem:[%s169 + $0x298] sm:$0xff]
      %v271 = vld [vmem:[%s169 + $0x2a0] sm:$0xff]
      %v272 = vld [vmem:[%s169 + $0x2a8] sm:$0xf]
      %v273 = vld [vmem:[%s169 + $0x2ac] sm:$0xff]
      %v274 = vld [vmem:[%s169 + $0x2b4] sm:$0xff]
      %v275 = vld [vmem:[%s169 + $0x2bc] sm:$0xff]
      %v276 = vld [vmem:[%s169 + $0x2c4] sm:$0xff]
      %v277 = vld [vmem:[%s169 + $0x2cc] sm:$0xf]
      %v278 = vld [vmem:[%s169 + $0x2d0] sm:$0xff]
      %v279 = vld [vmem:[%s169 + $0x2d8] sm:$0xff]
      %v280 = vld [vmem:[%s169 + $0x2e0] sm:$0xff]
      %v281 = vld [vmem:[%s169 + $0x2e8] sm:$0xff]
      %v282 = vld [vmem:[%s169 + $0x2f0] sm:$0xf]
      %v283 = vld [vmem:[%s169 + $0x2f4] sm:$0xff]
      %v284 = vld [vmem:[%s169 + $0x2fc] sm:$0xff]
      %v285 = vld [vmem:[%s169 + $0x304] sm:$0xff]
      %v286 = vld [vmem:[%s169 + $0x30c] sm:$0xff]
      %v287 = vld [vmem:[%s169 + $0x314] sm:$0xf]
      %v288 = vld [vmem:[%s169 + $0x318] sm:$0xff]
      %v289 = vld [vmem:[%s169 + $0x320] sm:$0xff]
      %v290 = vld [vmem:[%s169 + $0x328] sm:$0xff]
      %v291 = vld [vmem:[%s169 + $0x330] sm:$0xff]
      %v292 = vld [vmem:[%s169 + $0x338] sm:$0xf]
      %v293 = vld [vmem:[%s169 + $0x33c] sm:$0xff]
      %v294 = vld [vmem:[%s169 + $0x344] sm:$0xff]
      %v295 = vld [vmem:[%s169 + $0x34c] sm:$0xff]
      %v296 = vld [vmem:[%s169 + $0x354] sm:$0xff]
      %v297 = vld [vmem:[%s169 + $0x35c] sm:$0xf]
      %v298 = vld [vmem:[%s169 + $0x360] sm:$0xff]
      %v299 = vld [vmem:[%s169 + $0x368] sm:$0xff]
      %v300 = vld [vmem:[%s169 + $0x370] sm:$0xff]
      %v301 = vld [vmem:[%s169 + $0x378] sm:$0xff]
      %v302 = vld [vmem:[%s169 + $0x380] sm:$0xf]
      %v303 = vld [vmem:[%s169 + $0x384] sm:$0xff]
      %v304 = vld [vmem:[%s169 + $0x38c] sm:$0xff]
      %v305 = vld [vmem:[%s169 + $0x394] sm:$0xff]
      %v306 = vld [vmem:[%s169 + $0x39c] sm:$0xff]
      %v307 = vld [vmem:[%s169 + $0x3a4] sm:$0xf]
      %v308 = vld [vmem:[%s169 + $0x3a8] sm:$0xff]
      %v309 = vld [vmem:[%s169 + $0x3b0] sm:$0xff]
      %v310 = vld [vmem:[%s169 + $0x3b8] sm:$0xff]
      %v311 = vld [vmem:[%s169 + $0x3c0] sm:$0xff]
      %v312 = vld [vmem:[%s169 + $0x3c8] sm:$0xf]
      %v313 = vld [vmem:[%s169 + $0x3cc] sm:$0xff]
      %v314 = vld [vmem:[%s169 + $0x3d4] sm:$0xff]
      %v315 = vld [vmem:[%s169 + $0x3dc] sm:$0xff]
      %v316 = vld [vmem:[%s169 + $0x3e4] sm:$0xff]
      %v317 = vld [vmem:[%s169 + $0x3ec] sm:$0xf]
      %v318 = vld [vmem:[%s169 + $0x3f0] sm:$0xff]
      %v319 = vld [vmem:[%s169 + $0x3f8] sm:$0xff]
      %v320 = vld [vmem:[%s169 + $0x400] sm:$0xff]
      %v321 = vld [vmem:[%s169 + $0x408] sm:$0xff]
      %v322 = vld [vmem:[%s169 + $0x410] sm:$0xf]
      %v323 = vld [vmem:[%s169 + $0x414] sm:$0xff]
      %v324 = vld [vmem:[%s169 + $0x41c] sm:$0xff]
      %v325 = vld [vmem:[%s169 + $0x424] sm:$0xff]
      %v326 = vld [vmem:[%s169 + $0x42c] sm:$0xff]
      %v327 = vld [vmem:[%s169 + $0x434] sm:$0xf]
      %v328 = vld [vmem:[%s169 + $0x438] sm:$0xff]
      %v329 = vld [vmem:[%s169 + $0x440] sm:$0xff]
      %v330 = vld [vmem:[%s169 + $0x448] sm:$0xff]
      %v331 = vld [vmem:[%s169 + $0x450] sm:$0xff]
      %v332 = vld [vmem:[%s169 + $0x458] sm:$0xf]
      %v333 = vld [vmem:[%s169 + $0x45c] sm:$0xff]
      %v334 = vld [vmem:[%s169 + $0x464] sm:$0xff]
      %v335 = vld [vmem:[%s169 + $0x46c] sm:$0xff]
      %v336 = vld [vmem:[%s169 + $0x474] sm:$0xff]
      %v337 = vld [vmem:[%s169 + $0x47c] sm:$0xf]
      %v338 = vld [vmem:[%s1] sm:$0xf]
      %v339 = vld [vmem:[%s1 + $0x4] sm:$0xf]
      %v340 = vld [vmem:[%s1 + $0x8] sm:$0xf]
      %v341 = vld [vmem:[%s1 + $0xc] sm:$0xf]
      %v342 = vld [vmem:[%s1 + $0x10] sm:$0xf]
      %v343 = vld [vmem:[%s1 + $0x14] sm:$0xf]
      %v344 = vld [vmem:[%s1 + $0x18] sm:$0xf]
      %v345 = vld [vmem:[%s1 + $0x1c] sm:$0xf]
      %v346 = vld [vmem:[%s1 + $0x20] sm:$0xf]
      %v347 = vld [vmem:[%s1 + $0x24] sm:$0xf]
      %v348 = vld [vmem:[%s1 + $0x28] sm:$0xf]
      %v349 = vld [vmem:[%s1 + $0x2c] sm:$0xf]
      %v350 = vld [vmem:[%s1 + $0x30] sm:$0xf]
      %v351 = vld [vmem:[%s1 + $0x34] sm:$0xf]
      %v352 = vld [vmem:[%s1 + $0x38] sm:$0xf]
      %v353 = vld [vmem:[%s1 + $0x3c] sm:$0xf]
      %v354 = vld [vmem:[%s1 + $0x40] sm:$0xf]
      %v355 = vld [vmem:[%s1 + $0x44] sm:$0xf]
      %v356 = vld [vmem:[%s1 + $0x48] sm:$0xf]
      %v357 = vld [vmem:[%s1 + $0x4c] sm:$0xf]
      %v358 = vld [vmem:[%s1 + $0x50] sm:$0xf]
      %v359 = vld [vmem:[%s1 + $0x54] sm:$0xf]
      %v360 = vld [vmem:[%s1 + $0x58] sm:$0xf]
      %v361 = vld [vmem:[%s1 + $0x5c] sm:$0xf]
      %v362 = vld [vmem:[%s1 + $0x60] sm:$0xf]
      %v363 = vld [vmem:[%s1 + $0x64] sm:$0xf]
      %v364 = vld [vmem:[%s1 + $0x68] sm:$0xf]
      %v365 = vld [vmem:[%s1 + $0x6c] sm:$0xf]
      %v366 = vld [vmem:[%s1 + $0x70] sm:$0xf]
      %v367 = vld [vmem:[%s1 + $0x74] sm:$0xf]
      %v368 = vld [vmem:[%s1 + $0x78] sm:$0xf]
      %v369 = vld [vmem:[%s1 + $0x7c] sm:$0xf]
      %v370 = vld [vmem:[%s1 + $0x80] sm:$0xf]
      %v371 = vld [vmem:[%s1 + $0x84] sm:$0xf]
      %v372 = vld [vmem:[%s1 + $0x88] sm:$0xf]
      %v373 = vld [vmem:[%s1 + $0x8c] sm:$0xf]
      %v374 = vld [vmem:[%s1 + $0x90] sm:$0xf]
      %v375 = vld [vmem:[%s1 + $0x94] sm:$0xf]
      %v376 = vld [vmem:[%s1 + $0x98] sm:$0xf]
      %v377 = vld [vmem:[%s1 + $0x9c] sm:$0xf]
      %v378 = vld [vmem:[%s1 + $0xa0] sm:$0xf]
      %v379 = vld [vmem:[%s1 + $0xa4] sm:$0xf]
      %v380 = vld [vmem:[%s1 + $0xa8] sm:$0xf]
      %v381 = vld [vmem:[%s1 + $0xac] sm:$0xf]
      %v382 = vld [vmem:[%s1 + $0xb0] sm:$0xf]
      %v383 = vld [vmem:[%s1 + $0xb4] sm:$0xf]
      %v384 = vld [vmem:[%s1 + $0xb8] sm:$0xf]
      %v385 = vld [vmem:[%s1 + $0xbc] sm:$0xf]
      %v386 = vld [vmem:[%s1 + $0xc0] sm:$0xf]
      %v387 = vld [vmem:[%s1 + $0xc4] sm:$0xf]
      %v388 = vld [vmem:[%s1 + $0xc8] sm:$0xf]
      %v389 = vld [vmem:[%s1 + $0xcc] sm:$0xf]
      %v390 = vld [vmem:[%s1 + $0xd0] sm:$0xf]
      %v391 = vld [vmem:[%s1 + $0xd4] sm:$0xf]
      %v392 = vld [vmem:[%s1 + $0xd8] sm:$0xf]
      %v393 = vld [vmem:[%s1 + $0xdc] sm:$0xf]
      %v394 = vld [vmem:[%s1 + $0xe0] sm:$0xf]
      %v395 = vld [vmem:[%s1 + $0xe4] sm:$0xf]
      %v396 = vld [vmem:[%s1 + $0xe8] sm:$0xf]
      %v397 = vld [vmem:[%s1 + $0xec] sm:$0xf]
      %v398 = vld [vmem:[%s1 + $0xf0] sm:$0xf]
      %v399 = vld [vmem:[%s1 + $0xf4] sm:$0xf]
      %v400 = vld [vmem:[%s1 + $0xf8] sm:$0xf]
      %v401 = vld [vmem:[%s1 + $0xfc] sm:$0xf]
      %v402 = vld [vmem:[%s1 + $0x100] sm:$0xf]
      %v403 = vld [vmem:[%s1 + $0x104] sm:$0xf]
      %v404 = vld [vmem:[%s1 + $0x108] sm:$0xf]
      %v405 = vld [vmem:[%s1 + $0x10c] sm:$0xf]
      %v406 = vld [vmem:[%s1 + $0x110] sm:$0xf]
      %v407 = vld [vmem:[%s1 + $0x114] sm:$0xf]
      %v408 = vld [vmem:[%s1 + $0x118] sm:$0xf]
      %v409 = vld [vmem:[%s1 + $0x11c] sm:$0xf]
      %v410 = vld [vmem:[%s1 + $0x120] sm:$0xf]
      %v411 = vld [vmem:[%s1 + $0x124] sm:$0xf]
      %v412 = vld [vmem:[%s1 + $0x128] sm:$0xf]
      %v413 = vld [vmem:[%s1 + $0x12c] sm:$0xf]
      %v414 = vld [vmem:[%s1 + $0x130] sm:$0xf]
      %v415 = vld [vmem:[%s1 + $0x134] sm:$0xf]
      %v416 = vld [vmem:[%s1 + $0x138] sm:$0xf]
      %v417 = vld [vmem:[%s1 + $0x13c] sm:$0xf]
      %v418 = vld [vmem:[%s1 + $0x140] sm:$0xf]
      %v419 = vld [vmem:[%s1 + $0x144] sm:$0xf]
      %v420 = vld [vmem:[%s1 + $0x148] sm:$0xf]
      %v421 = vld [vmem:[%s1 + $0x14c] sm:$0xf]
      %v422 = vld [vmem:[%s1 + $0x150] sm:$0xf]
      %v423 = vld [vmem:[%s1 + $0x154] sm:$0xf]
      %v424 = vld [vmem:[%s1 + $0x158] sm:$0xf]
      %v425 = vld [vmem:[%s1 + $0x15c] sm:$0xf]
      %v426 = vld [vmem:[%s1 + $0x160] sm:$0xf]
      %v427 = vld [vmem:[%s1 + $0x164] sm:$0xf]
      %v428 = vld [vmem:[%s1 + $0x168] sm:$0xf]
      %v429 = vld [vmem:[%s1 + $0x16c] sm:$0xf]
      %v430 = vld [vmem:[%s1 + $0x170] sm:$0xf]
      %v431 = vld [vmem:[%s1 + $0x174] sm:$0xf]
      %v432 = vld [vmem:[%s1 + $0x178] sm:$0xf]
      %v433 = vld [vmem:[%s1 + $0x17c] sm:$0xf]
      %v434 = vld [vmem:[%s1 + $0x180] sm:$0xf]
      %v435 = vld [vmem:[%s1 + $0x184] sm:$0xf]
      %v436 = vld [vmem:[%s1 + $0x188] sm:$0xf]
      %v437 = vld [vmem:[%s1 + $0x18c] sm:$0xf]
      %v438 = vld [vmem:[%s1 + $0x190] sm:$0xf]
      %v439 = vld [vmem:[%s1 + $0x194] sm:$0xf]
      %v440 = vld [vmem:[%s1 + $0x198] sm:$0xf]
      %v441 = vld [vmem:[%s1 + $0x19c] sm:$0xf]
      %v442 = vld [vmem:[%s1 + $0x1a0] sm:$0xf]
      %v443 = vld [vmem:[%s1 + $0x1a4] sm:$0xf]
      %v444 = vld [vmem:[%s1 + $0x1a8] sm:$0xf]
      %v445 = vld [vmem:[%s1 + $0x1ac] sm:$0xf]
      %v446 = vld [vmem:[%s1 + $0x1b0] sm:$0xf]
      %v447 = vld [vmem:[%s1 + $0x1b4] sm:$0xf]
      %v448 = vld [vmem:[%s1 + $0x1b8] sm:$0xf]
      %v449 = vld [vmem:[%s1 + $0x1bc] sm:$0xf]
      %v450 = vld [vmem:[%s1 + $0x1c0] sm:$0xf]
      %v451 = vld [vmem:[%s1 + $0x1c4] sm:$0xf]
      %v452 = vld [vmem:[%s1 + $0x1c8] sm:$0xf]
      %v453 = vld [vmem:[%s1 + $0x1cc] sm:$0xf]
      %v454 = vld [vmem:[%s1 + $0x1d0] sm:$0xf]
      %v455 = vld [vmem:[%s1 + $0x1d4] sm:$0xf]
      %v456 = vld [vmem:[%s1 + $0x1d8] sm:$0xf]
      %v457 = vld [vmem:[%s1 + $0x1dc] sm:$0xf]
      %v458 = vld [vmem:[%s1 + $0x1e0] sm:$0xf]
      %v459 = vld [vmem:[%s1 + $0x1e4] sm:$0xf]
      %v460 = vld [vmem:[%s1 + $0x1e8] sm:$0xf]
      %v461 = vld [vmem:[%s1 + $0x1ec] sm:$0xf]
      %v462 = vld [vmem:[%s1 + $0x1f0] sm:$0xf]
      %v463 = vld [vmem:[%s1 + $0x1f4] sm:$0xf]
      %v464 = vld [vmem:[%s1 + $0x1f8] sm:$0xf]
      %v465 = vld [vmem:[%s1 + $0x1fc] sm:$0xf]
      %v466 = vld [vmem:[%s1 + $0x200] sm:$0xf]
      %v467 = vld [vmem:[%s1 + $0x204] sm:$0xf]
      %v468 = vld [vmem:[%s1 + $0x208] sm:$0xf]
      %v469 = vld [vmem:[%s1 + $0x20c] sm:$0xf]
      %v470 = vld [vmem:[%s1 + $0x210] sm:$0xf]
      %v471 = vld [vmem:[%s1 + $0x214] sm:$0xf]
      %v472 = vld [vmem:[%s1 + $0x218] sm:$0xf]
      %v473 = vld [vmem:[%s1 + $0x21c] sm:$0xf]
      %v474 = vld [vmem:[%s1 + $0x220] sm:$0xf]
      %v475 = vld [vmem:[%s1 + $0x224] sm:$0xf]
      %v476 = vld [vmem:[%s1 + $0x228] sm:$0xf]
      %v477 = vld [vmem:[%s1 + $0x22c] sm:$0xf]
      %v478 = vld [vmem:[%s1 + $0x230] sm:$0xf]
      %v479 = vld [vmem:[%s1 + $0x234] sm:$0xf]
      %v480 = vld [vmem:[%s1 + $0x238] sm:$0xf]
      %v481 = vld [vmem:[%s1 + $0x23c] sm:$0xf]
      %v482 = vld [vmem:[%s2] sm:$0x1]
      %v484 = vlaneseq
      %v485 = vshrl.u32 %v484, 7
      %v486 = vsub.s32 0, %v485
      %v487 = vrot.slane %v482, %v486
      %v649 = vunpack.c.l.b16 %v178
      %v650 = vunpack.c.h.b16 %v178
      %v651 = vunpack.c.l.b16 %v179
      %v652 = vunpack.c.h.b16 %v179
      %v653 = vunpack.c.l.b16 %v180
      %v654 = vunpack.c.h.b16 %v180
      %v655 = vunpack.c.l.b16 %v181
      %v656 = vunpack.c.h.b16 %v181
      %v657 = vunpack.c.l.b16 %v182
      %v658 = vunpack.c.l.b16 %v183
      %v659 = vunpack.c.h.b16 %v183
      %v660 = vunpack.c.l.b16 %v184
      %v661 = vunpack.c.h.b16 %v184
      %v662 = vunpack.c.l.b16 %v185
      %v663 = vunpack.c.h.b16 %v185
      %v664 = vunpack.c.l.b16 %v186
      %v665 = vunpack.c.h.b16 %v186
      %v666 = vunpack.c.l.b16 %v187
      %v667 = vunpack.c.l.b16 %v188
      %v668 = vunpack.c.h.b16 %v188
      %v669 = vunpack.c.l.b16 %v189
      %v670 = vunpack.c.h.b16 %v189
      %v671 = vunpack.c.l.b16 %v190
      %v672 = vunpack.c.h.b16 %v190
      %v673 = vunpack.c.l.b16 %v191
      %v674 = vunpack.c.h.b16 %v191
      %v675 = vunpack.c.l.b16 %v192
      %v676 = vunpack.c.l.b16 %v193
      %v677 = vunpack.c.h.b16 %v193
      %v678 = vunpack.c.l.b16 %v194
      %v679 = vunpack.c.h.b16 %v194
      %v680 = vunpack.c.l.b16 %v195
      %v681 = vunpack.c.h.b16 %v195
      %v682 = vunpack.c.l.b16 %v196
      %v683 = vunpack.c.h.b16 %v196
      %v684 = vunpack.c.l.b16 %v197
      %v685 = vunpack.c.l.b16 %v198
      %v686 = vunpack.c.h.b16 %v198
      %v687 = vunpack.c.l.b16 %v199
      %v688 = vunpack.c.h.b16 %v199
      %v689 = vunpack.c.l.b16 %v200
      %v690 = vunpack.c.h.b16 %v200
      %v691 = vunpack.c.l.b16 %v201
      %v692 = vunpack.c.h.b16 %v201
      %v693 = vunpack.c.l.b16 %v202
      %v694 = vunpack.c.l.b16 %v203
      %v695 = vunpack.c.h.b16 %v203
      %v696 = vunpack.c.l.b16 %v204
      %v697 = vunpack.c.h.b16 %v204
      %v698 = vunpack.c.l.b16 %v205
      %v699 = vunpack.c.h.b16 %v205
      %v700 = vunpack.c.l.b16 %v206
      %v701 = vunpack.c.h.b16 %v206
      %v702 = vunpack.c.l.b16 %v207
      %v703 = vunpack.c.l.b16 %v208
      %v704 = vunpack.c.h.b16 %v208
      %v705 = vunpack.c.l.b16 %v209
      %v706 = vunpack.c.h.b16 %v209
      %v707 = vunpack.c.l.b16 %v210
      %v708 = vunpack.c.h.b16 %v210
      %v709 = vunpack.c.l.b16 %v211
      %v710 = vunpack.c.h.b16 %v211
      %v711 = vunpack.c.l.b16 %v212
      %v712 = vunpack.c.l.b16 %v213
      %v713 = vunpack.c.h.b16 %v213
      %v714 = vunpack.c.l.b16 %v214
      %v715 = vunpack.c.h.b16 %v214
      %v716 = vunpack.c.l.b16 %v215
      %v717 = vunpack.c.h.b16 %v215
      %v718 = vunpack.c.l.b16 %v216
      %v719 = vunpack.c.h.b16 %v216
      %v720 = vunpack.c.l.b16 %v217
      %v721 = vunpack.c.l.b16 %v218
      %v722 = vunpack.c.h.b16 %v218
      %v723 = vunpack.c.l.b16 %v219
      %v724 = vunpack.c.h.b16 %v219
      %v725 = vunpack.c.l.b16 %v220
      %v726 = vunpack.c.h.b16 %v220
      %v727 = vunpack.c.l.b16 %v221
      %v728 = vunpack.c.h.b16 %v221
      %v729 = vunpack.c.l.b16 %v222
      %v730 = vunpack.c.l.b16 %v223
      %v731 = vunpack.c.h.b16 %v223
      %v732 = vunpack.c.l.b16 %v224
      %v733 = vunpack.c.h.b16 %v224
      %v734 = vunpack.c.l.b16 %v225
      %v735 = vunpack.c.h.b16 %v225
      %v736 = vunpack.c.l.b16 %v226
      %v737 = vunpack.c.h.b16 %v226
      %v738 = vunpack.c.l.b16 %v227
      %v739 = vunpack.c.l.b16 %v228
      %v740 = vunpack.c.h.b16 %v228
      %v741 = vunpack.c.l.b16 %v229
      %v742 = vunpack.c.h.b16 %v229
      %v743 = vunpack.c.l.b16 %v230
      %v744 = vunpack.c.h.b16 %v230
      %v745 = vunpack.c.l.b16 %v231
      %v746 = vunpack.c.h.b16 %v231
      %v747 = vunpack.c.l.b16 %v232
      %v748 = vunpack.c.l.b16 %v233
      %v749 = vunpack.c.h.b16 %v233
      %v750 = vunpack.c.l.b16 %v234
      %v751 = vunpack.c.h.b16 %v234
      %v752 = vunpack.c.l.b16 %v235
      %v753 = vunpack.c.h.b16 %v235
      %v754 = vunpack.c.l.b16 %v236
      %v755 = vunpack.c.h.b16 %v236
      %v756 = vunpack.c.l.b16 %v237
      %v757 = vunpack.c.l.b16 %v238
      %v758 = vunpack.c.h.b16 %v238
      %v759 = vunpack.c.l.b16 %v239
      %v760 = vunpack.c.h.b16 %v239
      %v761 = vunpack.c.l.b16 %v240
      %v762 = vunpack.c.h.b16 %v240
      %v763 = vunpack.c.l.b16 %v241
      %v764 = vunpack.c.h.b16 %v241
      %v765 = vunpack.c.l.b16 %v242
      %v766 = vunpack.c.l.b16 %v243
      %v767 = vunpack.c.h.b16 %v243
      %v768 = vunpack.c.l.b16 %v244
      %v769 = vunpack.c.h.b16 %v244
      %v770 = vunpack.c.l.b16 %v245
      %v771 = vunpack.c.h.b16 %v245
      %v772 = vunpack.c.l.b16 %v246
      %v773 = vunpack.c.h.b16 %v246
      %v774 = vunpack.c.l.b16 %v247
      %v775 = vunpack.c.l.b16 %v248
      %v776 = vunpack.c.h.b16 %v248
      %v777 = vunpack.c.l.b16 %v249
      %v778 = vunpack.c.h.b16 %v249
      %v779 = vunpack.c.l.b16 %v250
      %v780 = vunpack.c.h.b16 %v250
      %v781 = vunpack.c.l.b16 %v251
      %v782 = vunpack.c.h.b16 %v251
      %v783 = vunpack.c.l.b16 %v252
      %v784 = vunpack.c.l.b16 %v253
      %v785 = vunpack.c.h.b16 %v253
      %v786 = vunpack.c.l.b16 %v254
      %v787 = vunpack.c.h.b16 %v254
      %v788 = vunpack.c.l.b16 %v255
      %v789 = vunpack.c.h.b16 %v255
      %v790 = vunpack.c.l.b16 %v256
      %v791 = vunpack.c.h.b16 %v256
      %v792 = vunpack.c.l.b16 %v257
      %v793 = vunpack.c.l.b16 %v258
      %v794 = vunpack.c.h.b16 %v258
      %v795 = vunpack.c.l.b16 %v259
      %v796 = vunpack.c.h.b16 %v259
      %v797 = vunpack.c.l.b16 %v260
      %v798 = vunpack.c.h.b16 %v260
      %v799 = vunpack.c.l.b16 %v261
      %v800 = vunpack.c.h.b16 %v261
      %v801 = vunpack.c.l.b16 %v262
      %v802 = vunpack.c.l.b16 %v263
      %v803 = vunpack.c.h.b16 %v263
      %v804 = vunpack.c.l.b16 %v264
      %v805 = vunpack.c.h.b16 %v264
      %v806 = vunpack.c.l.b16 %v265
      %v807 = vunpack.c.h.b16 %v265
      %v808 = vunpack.c.l.b16 %v266
      %v809 = vunpack.c.h.b16 %v266
      %v810 = vunpack.c.l.b16 %v267
      %v811 = vunpack.c.l.b16 %v268
      %v812 = vunpack.c.h.b16 %v268
      %v813 = vunpack.c.l.b16 %v269
      %v814 = vunpack.c.h.b16 %v269
      %v815 = vunpack.c.l.b16 %v270
      %v816 = vunpack.c.h.b16 %v270
      %v817 = vunpack.c.l.b16 %v271
      %v818 = vunpack.c.h.b16 %v271
      %v819 = vunpack.c.l.b16 %v272
      %v820 = vunpack.c.l.b16 %v273
      %v821 = vunpack.c.h.b16 %v273
      %v822 = vunpack.c.l.b16 %v274
      %v823 = vunpack.c.h.b16 %v274
      %v824 = vunpack.c.l.b16 %v275
      %v825 = vunpack.c.h.b16 %v275
      %v826 = vunpack.c.l.b16 %v276
      %v827 = vunpack.c.h.b16 %v276
      %v828 = vunpack.c.l.b16 %v277
      %v829 = vunpack.c.l.b16 %v278
      %v830 = vunpack.c.h.b16 %v278
      %v831 = vunpack.c.l.b16 %v279
      %v832 = vunpack.c.h.b16 %v279
      %v833 = vunpack.c.l.b16 %v280
      %v834 = vunpack.c.h.b16 %v280
      %v835 = vunpack.c.l.b16 %v281
      %v836 = vunpack.c.h.b16 %v281
      %v837 = vunpack.c.l.b16 %v282
      %v838 = vunpack.c.l.b16 %v283
      %v839 = vunpack.c.h.b16 %v283
      %v840 = vunpack.c.l.b16 %v284
      %v841 = vunpack.c.h.b16 %v284
      %v842 = vunpack.c.l.b16 %v285
      %v843 = vunpack.c.h.b16 %v285
      %v844 = vunpack.c.l.b16 %v286
      %v845 = vunpack.c.h.b16 %v286
      %v846 = vunpack.c.l.b16 %v287
      %v847 = vunpack.c.l.b16 %v288
      %v848 = vunpack.c.h.b16 %v288
      %v849 = vunpack.c.l.b16 %v289
      %v850 = vunpack.c.h.b16 %v289
      %v851 = vunpack.c.l.b16 %v290
      %v852 = vunpack.c.h.b16 %v290
      %v853 = vunpack.c.l.b16 %v291
      %v854 = vunpack.c.h.b16 %v291
      %v855 = vunpack.c.l.b16 %v292
      %v856 = vunpack.c.l.b16 %v293
      %v857 = vunpack.c.h.b16 %v293
      %v858 = vunpack.c.l.b16 %v294
      %v859 = vunpack.c.h.b16 %v294
      %v860 = vunpack.c.l.b16 %v295
      %v861 = vunpack.c.h.b16 %v295
      %v862 = vunpack.c.l.b16 %v296
      %v863 = vunpack.c.h.b16 %v296
      %v864 = vunpack.c.l.b16 %v297
      %v865 = vunpack.c.l.b16 %v298
      %v866 = vunpack.c.h.b16 %v298
      %v867 = vunpack.c.l.b16 %v299
      %v868 = vunpack.c.h.b16 %v299
      %v869 = vunpack.c.l.b16 %v300
      %v870 = vunpack.c.h.b16 %v300
      %v871 = vunpack.c.l.b16 %v301
      %v872 = vunpack.c.h.b16 %v301
      %v873 = vunpack.c.l.b16 %v302
      %v874 = vunpack.c.l.b16 %v303
      %v875 = vunpack.c.h.b16 %v303
      %v876 = vunpack.c.l.b16 %v304
      %v877 = vunpack.c.h.b16 %v304
      %v878 = vunpack.c.l.b16 %v305
      %v879 = vunpack.c.h.b16 %v305
      %v880 = vunpack.c.l.b16 %v306
      %v881 = vunpack.c.h.b16 %v306
      %v882 = vunpack.c.l.b16 %v307
      %v883 = vunpack.c.l.b16 %v308
      %v884 = vunpack.c.h.b16 %v308
      %v885 = vunpack.c.l.b16 %v309
      %v886 = vunpack.c.h.b16 %v309
      %v887 = vunpack.c.l.b16 %v310
      %v888 = vunpack.c.h.b16 %v310
      %v889 = vunpack.c.l.b16 %v311
      %v890 = vunpack.c.h.b16 %v311
      %v891 = vunpack.c.l.b16 %v312
      %v892 = vunpack.c.l.b16 %v313
      %v893 = vunpack.c.h.b16 %v313
      %v894 = vunpack.c.l.b16 %v314
      %v895 = vunpack.c.h.b16 %v314
      %v896 = vunpack.c.l.b16 %v315
      %v897 = vunpack.c.h.b16 %v315
      %v898 = vunpack.c.l.b16 %v316
      %v899 = vunpack.c.h.b16 %v316
      %v900 = vunpack.c.l.b16 %v317
      %v901 = vunpack.c.l.b16 %v318
      %v902 = vunpack.c.h.b16 %v318
      %v903 = vunpack.c.l.b16 %v319
      %v904 = vunpack.c.h.b16 %v319
      %v905 = vunpack.c.l.b16 %v320
      %v906 = vunpack.c.h.b16 %v320
      %v907 = vunpack.c.l.b16 %v321
      %v908 = vunpack.c.h.b16 %v321
      %v909 = vunpack.c.l.b16 %v322
      %v910 = vunpack.c.l.b16 %v323
      %v911 = vunpack.c.h.b16 %v323
      %v912 = vunpack.c.l.b16 %v324
      %v913 = vunpack.c.h.b16 %v324
      %v914 = vunpack.c.l.b16 %v325
      %v915 = vunpack.c.h.b16 %v325
      %v916 = vunpack.c.l.b16 %v326
      %v917 = vunpack.c.h.b16 %v326
      %v918 = vunpack.c.l.b16 %v327
      %v919 = vunpack.c.l.b16 %v328
      %v920 = vunpack.c.h.b16 %v328
      %v921 = vunpack.c.l.b16 %v329
      %v922 = vunpack.c.h.b16 %v329
      %v923 = vunpack.c.l.b16 %v330
      %v924 = vunpack.c.h.b16 %v330
      %v925 = vunpack.c.l.b16 %v331
      %v926 = vunpack.c.h.b16 %v331
      %v927 = vunpack.c.l.b16 %v332
      %v928 = vunpack.c.l.b16 %v333
      %v929 = vunpack.c.h.b16 %v333
      %v930 = vunpack.c.l.b16 %v334
      %v931 = vunpack.c.h.b16 %v334
      %v932 = vunpack.c.l.b16 %v335
      %v933 = vunpack.c.h.b16 %v335
      %v934 = vunpack.c.l.b16 %v336
      %v935 = vunpack.c.h.b16 %v336
      %v936 = vunpack.c.l.b16 %v337
      %v937 = vpack.c.b16 %v658, %v649
      %v938 = vpack.c.b16 %v659, %v650
      %v939 = vpack.c.b16 %v660, %v651
      %v940 = vpack.c.b16 %v661, %v652
      %v941 = vpack.c.b16 %v662, %v653
      %v942 = vpack.c.b16 %v663, %v654
      %v943 = vpack.c.b16 %v664, %v655
      %v944 = vpack.c.b16 %v665, %v656
      %v945 = vpack.c.b16 %v666, %v657
      %v946 = vpack.c.b16 %v676, %v667
      %v947 = vpack.c.b16 %v677, %v668
      %v948 = vpack.c.b16 %v678, %v669
      %v949 = vpack.c.b16 %v679, %v670
      %v950 = vpack.c.b16 %v680, %v671
      %v951 = vpack.c.b16 %v681, %v672
      %v952 = vpack.c.b16 %v682, %v673
      %v953 = vpack.c.b16 %v683, %v674
      %v954 = vpack.c.b16 %v684, %v675
      %v955 = vpack.c.b16 %v694, %v685
      %v956 = vpack.c.b16 %v695, %v686
      %v957 = vpack.c.b16 %v696, %v687
      %v958 = vpack.c.b16 %v697, %v688
      %v959 = vpack.c.b16 %v698, %v689
      %v960 = vpack.c.b16 %v699, %v690
      %v961 = vpack.c.b16 %v700, %v691
      %v962 = vpack.c.b16 %v701, %v692
      %v963 = vpack.c.b16 %v702, %v693
      %v964 = vpack.c.b16 %v712, %v703
      %v965 = vpack.c.b16 %v713, %v704
      %v966 = vpack.c.b16 %v714, %v705
      %v967 = vpack.c.b16 %v715, %v706
      %v968 = vpack.c.b16 %v716, %v707
      %v969 = vpack.c.b16 %v717, %v708
      %v970 = vpack.c.b16 %v718, %v709
      %v971 = vpack.c.b16 %v719, %v710
      %v972 = vpack.c.b16 %v720, %v711
      %v973 = vpack.c.b16 %v730, %v721
      %v974 = vpack.c.b16 %v731, %v722
      %v975 = vpack.c.b16 %v732, %v723
      %v976 = vpack.c.b16 %v733, %v724
      %v977 = vpack.c.b16 %v734, %v725
      %v978 = vpack.c.b16 %v735, %v726
      %v979 = vpack.c.b16 %v736, %v727
      %v980 = vpack.c.b16 %v737, %v728
      %v981 = vpack.c.b16 %v738, %v729
      %v982 = vpack.c.b16 %v748, %v739
      %v983 = vpack.c.b16 %v749, %v740
      %v984 = vpack.c.b16 %v750, %v741
      %v985 = vpack.c.b16 %v751, %v742
      %v986 = vpack.c.b16 %v752, %v743
      %v987 = vpack.c.b16 %v753, %v744
      %v988 = vpack.c.b16 %v754, %v745
      %v989 = vpack.c.b16 %v755, %v746
      %v990 = vpack.c.b16 %v756, %v747
      %v991 = vpack.c.b16 %v766, %v757
      %v992 = vpack.c.b16 %v767, %v758
      %v993 = vpack.c.b16 %v768, %v759
      %v994 = vpack.c.b16 %v769, %v760
      %v995 = vpack.c.b16 %v770, %v761
      %v996 = vpack.c.b16 %v771, %v762
      %v997 = vpack.c.b16 %v772, %v763
      %v998 = vpack.c.b16 %v773, %v764
      %v999 = vpack.c.b16 %v774, %v765
      %v1000 = vpack.c.b16 %v784, %v775
      %v1001 = vpack.c.b16 %v785, %v776
      %v1002 = vpack.c.b16 %v786, %v777
      %v1003 = vpack.c.b16 %v787, %v778
      %v1004 = vpack.c.b16 %v788, %v779
      %v1005 = vpack.c.b16 %v789, %v780
      %v1006 = vpack.c.b16 %v790, %v781
      %v1007 = vpack.c.b16 %v791, %v782
      %v1008 = vpack.c.b16 %v792, %v783
      %v1009 = vpack.c.b16 %v802, %v793
      %v1010 = vpack.c.b16 %v803, %v794
      %v1011 = vpack.c.b16 %v804, %v795
      %v1012 = vpack.c.b16 %v805, %v796
      %v1013 = vpack.c.b16 %v806, %v797
      %v1014 = vpack.c.b16 %v807, %v798
      %v1015 = vpack.c.b16 %v808, %v799
      %v1016 = vpack.c.b16 %v809, %v800
      %v1017 = vpack.c.b16 %v810, %v801
      %v1018 = vpack.c.b16 %v820, %v811
      %v1019 = vpack.c.b16 %v821, %v812
      %v1020 = vpack.c.b16 %v822, %v813
      %v1021 = vpack.c.b16 %v823, %v814
      %v1022 = vpack.c.b16 %v824, %v815
      %v1023 = vpack.c.b16 %v825, %v816
      %v1024 = vpack.c.b16 %v826, %v817
      %v1025 = vpack.c.b16 %v827, %v818
      %v1026 = vpack.c.b16 %v828, %v819
      %v1027 = vpack.c.b16 %v838, %v829
      %v1028 = vpack.c.b16 %v839, %v830
      %v1029 = vpack.c.b16 %v840, %v831
      %v1030 = vpack.c.b16 %v841, %v832
      %v1031 = vpack.c.b16 %v842, %v833
      %v1032 = vpack.c.b16 %v843, %v834
      %v1033 = vpack.c.b16 %v844, %v835
      %v1034 = vpack.c.b16 %v845, %v836
      %v1035 = vpack.c.b16 %v846, %v837
      %v1036 = vpack.c.b16 %v856, %v847
      %v1037 = vpack.c.b16 %v857, %v848
      %v1038 = vpack.c.b16 %v858, %v849
      %v1039 = vpack.c.b16 %v859, %v850
      %v1040 = vpack.c.b16 %v860, %v851
      %v1041 = vpack.c.b16 %v861, %v852
      %v1042 = vpack.c.b16 %v862, %v853
      %v1043 = vpack.c.b16 %v863, %v854
      %v1044 = vpack.c.b16 %v864, %v855
      %v1045 = vpack.c.b16 %v874, %v865
      %v1046 = vpack.c.b16 %v875, %v866
      %v1047 = vpack.c.b16 %v876, %v867
      %v1048 = vpack.c.b16 %v877, %v868
      %v1049 = vpack.c.b16 %v878, %v869
      %v1050 = vpack.c.b16 %v879, %v870
      %v1051 = vpack.c.b16 %v880, %v871
      %v1052 = vpack.c.b16 %v881, %v872
      %v1053 = vpack.c.b16 %v882, %v873
      %v1054 = vpack.c.b16 %v892, %v883
      %v1055 = vpack.c.b16 %v893, %v884
      %v1056 = vpack.c.b16 %v894, %v885
      %v1057 = vpack.c.b16 %v895, %v886
      %v1058 = vpack.c.b16 %v896, %v887
      %v1059 = vpack.c.b16 %v897, %v888
      %v1060 = vpack.c.b16 %v898, %v889
      %v1061 = vpack.c.b16 %v899, %v890
      %v1062 = vpack.c.b16 %v900, %v891
      %v1063 = vpack.c.b16 %v910, %v901
      %v1064 = vpack.c.b16 %v911, %v902
      %v1065 = vpack.c.b16 %v912, %v903
      %v1066 = vpack.c.b16 %v913, %v904
      %v1067 = vpack.c.b16 %v914, %v905
      %v1068 = vpack.c.b16 %v915, %v906
      %v1069 = vpack.c.b16 %v916, %v907
      %v1070 = vpack.c.b16 %v917, %v908
      %v1071 = vpack.c.b16 %v918, %v909
      %v1072 = vpack.c.b16 %v928, %v919
      %v1073 = vpack.c.b16 %v929, %v920
      %v1074 = vpack.c.b16 %v930, %v921
      %v1075 = vpack.c.b16 %v931, %v922
      %v1076 = vpack.c.b16 %v932, %v923
      %v1077 = vpack.c.b16 %v933, %v924
      %v1078 = vpack.c.b16 %v934, %v925
      %v1079 = vpack.c.b16 %v935, %v926
      %v1080 = vpack.c.b16 %v936, %v927
      %v1369 = vunpack.c.l.b16 %v338
      %v1370 = vunpack.c.l.b16 %v339
      %v1371 = vunpack.c.l.b16 %v340
      %v1372 = vunpack.c.l.b16 %v341
      %v1373 = vunpack.c.l.b16 %v342
      %v1374 = vunpack.c.l.b16 %v343
      %v1375 = vunpack.c.l.b16 %v344
      %v1376 = vunpack.c.l.b16 %v345
      %v1377 = vunpack.c.l.b16 %v346
      %v1378 = vunpack.c.l.b16 %v347
      %v1379 = vunpack.c.l.b16 %v348
      %v1380 = vunpack.c.l.b16 %v349
      %v1381 = vunpack.c.l.b16 %v350
      %v1382 = vunpack.c.l.b16 %v351
      %v1383 = vunpack.c.l.b16 %v352
      %v1384 = vunpack.c.l.b16 %v353
      %v1385 = vunpack.c.l.b16 %v354
      %v1386 = vunpack.c.l.b16 %v355
      %v1387 = vunpack.c.l.b16 %v356
      %v1388 = vunpack.c.l.b16 %v357
      %v1389 = vunpack.c.l.b16 %v358
      %v1390 = vunpack.c.l.b16 %v359
      %v1391 = vunpack.c.l.b16 %v360
      %v1392 = vunpack.c.l.b16 %v361
      %v1393 = vunpack.c.l.b16 %v362
      %v1394 = vunpack.c.l.b16 %v363
      %v1395 = vunpack.c.l.b16 %v364
      %v1396 = vunpack.c.l.b16 %v365
      %v1397 = vunpack.c.l.b16 %v366
      %v1398 = vunpack.c.l.b16 %v367
      %v1399 = vunpack.c.l.b16 %v368
      %v1400 = vunpack.c.l.b16 %v369
      %v1401 = vunpack.c.l.b16 %v370
      %v1402 = vunpack.c.l.b16 %v371
      %v1403 = vunpack.c.l.b16 %v372
      %v1404 = vunpack.c.l.b16 %v373
      %v1405 = vunpack.c.l.b16 %v374
      %v1406 = vunpack.c.l.b16 %v375
      %v1407 = vunpack.c.l.b16 %v376
      %v1408 = vunpack.c.l.b16 %v377
      %v1409 = vunpack.c.l.b16 %v378
      %v1410 = vunpack.c.l.b16 %v379
      %v1411 = vunpack.c.l.b16 %v380
      %v1412 = vunpack.c.l.b16 %v381
      %v1413 = vunpack.c.l.b16 %v382
      %v1414 = vunpack.c.l.b16 %v383
      %v1415 = vunpack.c.l.b16 %v384
      %v1416 = vunpack.c.l.b16 %v385
      %v1417 = vunpack.c.l.b16 %v386
      %v1418 = vunpack.c.l.b16 %v387
      %v1419 = vunpack.c.l.b16 %v388
      %v1420 = vunpack.c.l.b16 %v389
      %v1421 = vunpack.c.l.b16 %v390
      %v1422 = vunpack.c.l.b16 %v391
      %v1423 = vunpack.c.l.b16 %v392
      %v1424 = vunpack.c.l.b16 %v393
      %v1425 = vunpack.c.l.b16 %v394
      %v1426 = vunpack.c.l.b16 %v395
      %v1427 = vunpack.c.l.b16 %v396
      %v1428 = vunpack.c.l.b16 %v397
      %v1429 = vunpack.c.l.b16 %v398
      %v1430 = vunpack.c.l.b16 %v399
      %v1431 = vunpack.c.l.b16 %v400
      %v1432 = vunpack.c.l.b16 %v401
      %v1433 = vunpack.c.l.b16 %v402
      %v1434 = vunpack.c.l.b16 %v403
      %v1435 = vunpack.c.l.b16 %v404
      %v1436 = vunpack.c.l.b16 %v405
      %v1437 = vunpack.c.l.b16 %v406
      %v1438 = vunpack.c.l.b16 %v407
      %v1439 = vunpack.c.l.b16 %v408
      %v1440 = vunpack.c.l.b16 %v409
      %v1441 = vunpack.c.l.b16 %v410
      %v1442 = vunpack.c.l.b16 %v411
      %v1443 = vunpack.c.l.b16 %v412
      %v1444 = vunpack.c.l.b16 %v413
      %v1445 = vunpack.c.l.b16 %v414
      %v1446 = vunpack.c.l.b16 %v415
      %v1447 = vunpack.c.l.b16 %v416
      %v1448 = vunpack.c.l.b16 %v417
      %v1449 = vunpack.c.l.b16 %v418
      %v1450 = vunpack.c.l.b16 %v419
      %v1451 = vunpack.c.l.b16 %v420
      %v1452 = vunpack.c.l.b16 %v421
      %v1453 = vunpack.c.l.b16 %v422
      %v1454 = vunpack.c.l.b16 %v423
      %v1455 = vunpack.c.l.b16 %v424
      %v1456 = vunpack.c.l.b16 %v425
      %v1457 = vunpack.c.l.b16 %v426
      %v1458 = vunpack.c.l.b16 %v427
      %v1459 = vunpack.c.l.b16 %v428
      %v1460 = vunpack.c.l.b16 %v429
      %v1461 = vunpack.c.l.b16 %v430
      %v1462 = vunpack.c.l.b16 %v431
      %v1463 = vunpack.c.l.b16 %v432
      %v1464 = vunpack.c.l.b16 %v433
      %v1465 = vunpack.c.l.b16 %v434
      %v1466 = vunpack.c.l.b16 %v435
      %v1467 = vunpack.c.l.b16 %v436
      %v1468 = vunpack.c.l.b16 %v437
      %v1469 = vunpack.c.l.b16 %v438
      %v1470 = vunpack.c.l.b16 %v439
      %v1471 = vunpack.c.l.b16 %v440
      %v1472 = vunpack.c.l.b16 %v441
      %v1473 = vunpack.c.l.b16 %v442
      %v1474 = vunpack.c.l.b16 %v443
      %v1475 = vunpack.c.l.b16 %v444
      %v1476 = vunpack.c.l.b16 %v445
      %v1477 = vunpack.c.l.b16 %v446
      %v1478 = vunpack.c.l.b16 %v447
      %v1479 = vunpack.c.l.b16 %v448
      %v1480 = vunpack.c.l.b16 %v449
      %v1481 = vunpack.c.l.b16 %v450
      %v1482 = vunpack.c.l.b16 %v451
      %v1483 = vunpack.c.l.b16 %v452
      %v1484 = vunpack.c.l.b16 %v453
      %v1485 = vunpack.c.l.b16 %v454
      %v1486 = vunpack.c.l.b16 %v455
      %v1487 = vunpack.c.l.b16 %v456
      %v1488 = vunpack.c.l.b16 %v457
      %v1489 = vunpack.c.l.b16 %v458
      %v1490 = vunpack.c.l.b16 %v459
      %v1491 = vunpack.c.l.b16 %v460
      %v1492 = vunpack.c.l.b16 %v461
      %v1493 = vunpack.c.l.b16 %v462
      %v1494 = vunpack.c.l.b16 %v463
      %v1495 = vunpack.c.l.b16 %v464
      %v1496 = vunpack.c.l.b16 %v465
      %v1497 = vunpack.c.l.b16 %v466
      %v1498 = vunpack.c.l.b16 %v467
      %v1499 = vunpack.c.l.b16 %v468
      %v1500 = vunpack.c.l.b16 %v469
      %v1501 = vunpack.c.l.b16 %v470
      %v1502 = vunpack.c.l.b16 %v471
      %v1503 = vunpack.c.l.b16 %v472
      %v1504 = vunpack.c.l.b16 %v473
      %v1505 = vunpack.c.l.b16 %v474
      %v1506 = vunpack.c.l.b16 %v475
      %v1507 = vunpack.c.l.b16 %v476
      %v1508 = vunpack.c.l.b16 %v477
      %v1509 = vunpack.c.l.b16 %v478
      %v1510 = vunpack.c.l.b16 %v479
      %v1511 = vunpack.c.l.b16 %v480
      %v1512 = vunpack.c.l.b16 %v481
      %v1513 = vpack.c.b16 %v1370, %v1369
      %v1514 = vpack.c.b16 %v1372, %v1371
      %v1515 = vpack.c.b16 %v1374, %v1373
      %v1516 = vpack.c.b16 %v1376, %v1375
      %v1517 = vpack.c.b16 %v1378, %v1377
      %v1518 = vpack.c.b16 %v1380, %v1379
      %v1519 = vpack.c.b16 %v1382, %v1381
      %v1520 = vpack.c.b16 %v1384, %v1383
      %v1521 = vpack.c.b16 %v1386, %v1385
      %v1522 = vpack.c.b16 %v1388, %v1387
      %v1523 = vpack.c.b16 %v1390, %v1389
      %v1524 = vpack.c.b16 %v1392, %v1391
      %v1525 = vpack.c.b16 %v1394, %v1393
      %v1526 = vpack.c.b16 %v1396, %v1395
      %v1527 = vpack.c.b16 %v1398, %v1397
      %v1528 = vpack.c.b16 %v1400, %v1399
      %v1529 = vpack.c.b16 %v1402, %v1401
      %v1530 = vpack.c.b16 %v1404, %v1403
      %v1531 = vpack.c.b16 %v1406, %v1405
      %v1532 = vpack.c.b16 %v1408, %v1407
      %v1533 = vpack.c.b16 %v1410, %v1409
      %v1534 = vpack.c.b16 %v1412, %v1411
      %v1535 = vpack.c.b16 %v1414, %v1413
      %v1536 = vpack.c.b16 %v1416, %v1415
      %v1537 = vpack.c.b16 %v1418, %v1417
      %v1538 = vpack.c.b16 %v1420, %v1419
      %v1539 = vpack.c.b16 %v1422, %v1421
      %v1540 = vpack.c.b16 %v1424, %v1423
      %v1541 = vpack.c.b16 %v1426, %v1425
      %v1542 = vpack.c.b16 %v1428, %v1427
      %v1543 = vpack.c.b16 %v1430, %v1429
      %v1544 = vpack.c.b16 %v1432, %v1431
      %v1545 = vpack.c.b16 %v1434, %v1433
      %v1546 = vpack.c.b16 %v1436, %v1435
      %v1547 = vpack.c.b16 %v1438, %v1437
      %v1548 = vpack.c.b16 %v1440, %v1439
      %v1549 = vpack.c.b16 %v1442, %v1441
      %v1550 = vpack.c.b16 %v1444, %v1443
      %v1551 = vpack.c.b16 %v1446, %v1445
      %v1552 = vpack.c.b16 %v1448, %v1447
      %v1553 = vpack.c.b16 %v1450, %v1449
      %v1554 = vpack.c.b16 %v1452, %v1451
      %v1555 = vpack.c.b16 %v1454, %v1453
      %v1556 = vpack.c.b16 %v1456, %v1455
      %v1557 = vpack.c.b16 %v1458, %v1457
      %v1558 = vpack.c.b16 %v1460, %v1459
      %v1559 = vpack.c.b16 %v1462, %v1461
      %v1560 = vpack.c.b16 %v1464, %v1463
      %v1561 = vpack.c.b16 %v1466, %v1465
      %v1562 = vpack.c.b16 %v1468, %v1467
      %v1563 = vpack.c.b16 %v1470, %v1469
      %v1564 = vpack.c.b16 %v1472, %v1471
      %v1565 = vpack.c.b16 %v1474, %v1473
      %v1566 = vpack.c.b16 %v1476, %v1475
      %v1567 = vpack.c.b16 %v1478, %v1477
      %v1568 = vpack.c.b16 %v1480, %v1479
      %v1569 = vpack.c.b16 %v1482, %v1481
      %v1570 = vpack.c.b16 %v1484, %v1483
      %v1571 = vpack.c.b16 %v1486, %v1485
      %v1572 = vpack.c.b16 %v1488, %v1487
      %v1573 = vpack.c.b16 %v1490, %v1489
      %v1574 = vpack.c.b16 %v1492, %v1491
      %v1575 = vpack.c.b16 %v1494, %v1493
      %v1576 = vpack.c.b16 %v1496, %v1495
      %v1577 = vpack.c.b16 %v1498, %v1497
      %v1578 = vpack.c.b16 %v1500, %v1499
      %v1579 = vpack.c.b16 %v1502, %v1501
      %v1580 = vpack.c.b16 %v1504, %v1503
      %v1581 = vpack.c.b16 %v1506, %v1505
      %v1582 = vpack.c.b16 %v1508, %v1507
      %v1583 = vpack.c.b16 %v1510, %v1509
      %v1584 = vpack.c.b16 %v1512, %v1511
      %1657 = vmatprep.subr.bf16.mxu0 0
      %1658 = vmatpush1.bf16.msra.mxu0 %v1520
      %1659 = vmatprep.subr.bf16.mxu0 0
      %1660 = vmatpush1.bf16.msra.mxu0 %v1519
      %1661 = vmatprep.subr.bf16.mxu0 0
      %1662 = vmatpush1.bf16.msra.mxu0 %v1518
      %1663 = vmatprep.subr.bf16.mxu0 0
      %1664 = vmatpush1.bf16.msra.mxu0 %v1517
      %1665 = vmatprep.subr.bf16.mxu0 0
      %1666 = vmatpush1.bf16.msra.mxu0 %v1516
      %1667 = vmatprep.subr.bf16.mxu0 0
      %1668 = vmatpush1.bf16.msra.mxu0 %v1515
      %1669 = vmatprep.subr.bf16.mxu0 0
      %1670 = vmatpush1.bf16.msra.mxu0 %v1514
      %1671 = vmatprep.subr.bf16.mxu0 0
      %1672 = vmatpush1.bf16.msra.mxu0 %v1513
      %1673 = vmatprep.subr.bf16.mxu0 0
      %1674 = vmatpush2.bf16.msra.mxu0 %v1528
      %1675 = vmatprep.subr.bf16.mxu0 0
      %1676 = vmatpush2.bf16.msra.mxu0 %v1527
      %1677 = vmatprep.subr.bf16.mxu0 0
      %1678 = vmatpush2.bf16.msra.mxu0 %v1526
      %1679 = vmatprep.subr.bf16.mxu0 0
      %1680 = vmatpush2.bf16.msra.mxu0 %v1525
      %1681 = vmatprep.subr.bf16.mxu0 0
      %1682 = vmatpush2.bf16.msra.mxu0 %v1524
      %1683 = vmatprep.subr.bf16.mxu0 0
      %1684 = vmatpush2.bf16.msra.mxu0 %v1523
      %1685 = vmatprep.subr.bf16.mxu0 0
      %1686 = vmatpush2.bf16.msra.mxu0 %v1522
      %1687 = vmatprep.subr.bf16.mxu0 0
      %1688 = vmatpush2.bf16.msra.mxu0 %v1521
      %1689 = vmatprep.mubr.bf16.mxu0 %v938
      %1690 = vmatmul.mubr.bf16.gmra.mxu0 %v937
      %v1691 = vpop.f32.mrf.mxu0
      %v1692 = vadd.f32 %v487, %v1691
      %v1693 = vpop.f32.mrf.mxu0
      %v1694 = vpop.f32.mrf.mxu0
      %v1695 = vadd.f32 %v487, %v1694
      %v1696 = vpop.f32.mrf.mxu0
      %1697 = vmatprep.mubr.bf16.mxu0 %v947
      %1698 = vmatmul.mubr.bf16.gmra.mxu0 %v946
      %v1699 = vpop.f32.mrf.mxu0
      %v1700 = vadd.f32 %v487, %v1699
      %v1701 = vpop.f32.mrf.mxu0
      %v1702 = vpop.f32.mrf.mxu0
      %v1703 = vadd.f32 %v487, %v1702
      %v1704 = vpop.f32.mrf.mxu0
      %1705 = vmatprep.mubr.bf16.mxu0 %v956
      %1706 = vmatmul.mubr.bf16.gmra.mxu0 %v955
      %v1707 = vpop.f32.mrf.mxu0
      %v1708 = vadd.f32 %v487, %v1707
      %v1709 = vpop.f32.mrf.mxu0
      %v1710 = vpop.f32.mrf.mxu0
      %v1711 = vadd.f32 %v487, %v1710
      %v1712 = vpop.f32.mrf.mxu0
      %1713 = vmatprep.mubr.bf16.mxu0 %v965
      %1714 = vmatmul.mubr.bf16.gmra.mxu0 %v964
      %v1715 = vpop.f32.mrf.mxu0
      %v1716 = vadd.f32 %v487, %v1715
      %v1717 = vpop.f32.mrf.mxu0
      %v1718 = vpop.f32.mrf.mxu0
      %v1719 = vadd.f32 %v487, %v1718
      %v1720 = vpop.f32.mrf.mxu0
      %1721 = vmatprep.mubr.bf16.mxu0 %v974
      %1722 = vmatmul.mubr.bf16.gmra.mxu0 %v973
      %v1723 = vpop.f32.mrf.mxu0
      %v1724 = vadd.f32 %v487, %v1723
      %v1725 = vpop.f32.mrf.mxu0
      %v1726 = vpop.f32.mrf.mxu0
      %v1727 = vadd.f32 %v487, %v1726
      %v1728 = vpop.f32.mrf.mxu0
      %1729 = vmatprep.mubr.bf16.mxu0 %v983
      %1730 = vmatmul.mubr.bf16.gmra.mxu0 %v982
      %v1731 = vpop.f32.mrf.mxu0
      %v1732 = vadd.f32 %v487, %v1731
      %v1733 = vpop.f32.mrf.mxu0
      %v1734 = vpop.f32.mrf.mxu0
      %v1735 = vadd.f32 %v487, %v1734
      %v1736 = vpop.f32.mrf.mxu0
      %1737 = vmatprep.mubr.bf16.mxu0 %v992
      %1738 = vmatmul.mubr.bf16.gmra.mxu0 %v991
      %v1739 = vpop.f32.mrf.mxu0
      %v1740 = vadd.f32 %v487, %v1739
      %v1741 = vpop.f32.mrf.mxu0
      %v1742 = vpop.f32.mrf.mxu0
      %v1743 = vadd.f32 %v487, %v1742
      %v1744 = vpop.f32.mrf.mxu0
      %1745 = vmatprep.mubr.bf16.mxu0 %v1001
      %1746 = vmatmul.mubr.bf16.gmra.mxu0 %v1000
      %v1747 = vpop.f32.mrf.mxu0
      %v1748 = vadd.f32 %v487, %v1747
      %v1749 = vpop.f32.mrf.mxu0
      %v1750 = vpop.f32.mrf.mxu0
      %v1751 = vadd.f32 %v487, %v1750
      %v1752 = vpop.f32.mrf.mxu0
      %1753 = vmatprep.mubr.bf16.mxu0 %v1010
      %1754 = vmatmul.mubr.bf16.gmra.mxu0 %v1009
      %v1755 = vpop.f32.mrf.mxu0
      %v1756 = vadd.f32 %v487, %v1755
      %v1757 = vpop.f32.mrf.mxu0
      %v1758 = vpop.f32.mrf.mxu0
      %v1759 = vadd.f32 %v487, %v1758
      %v1760 = vpop.f32.mrf.mxu0
      %1761 = vmatprep.mubr.bf16.mxu0 %v1019
      %1762 = vmatmul.mubr.bf16.gmra.mxu0 %v1018
      %v1763 = vpop.f32.mrf.mxu0
      %v1764 = vadd.f32 %v487, %v1763
      %v1765 = vpop.f32.mrf.mxu0
      %v1766 = vpop.f32.mrf.mxu0
      %v1767 = vadd.f32 %v487, %v1766
      %v1768 = vpop.f32.mrf.mxu0
      %1769 = vmatprep.mubr.bf16.mxu0 %v1028
      %1770 = vmatmul.mubr.bf16.gmra.mxu0 %v1027
      %v1771 = vpop.f32.mrf.mxu0
      %v1772 = vadd.f32 %v487, %v1771
      %v1773 = vpop.f32.mrf.mxu0
      %v1774 = vpop.f32.mrf.mxu0
      %v1775 = vadd.f32 %v487, %v1774
      %v1776 = vpop.f32.mrf.mxu0
      %1777 = vmatprep.mubr.bf16.mxu0 %v1037
      %1778 = vmatmul.mubr.bf16.gmra.mxu0 %v1036
      %v1779 = vpop.f32.mrf.mxu0
      %v1780 = vadd.f32 %v487, %v1779
      %v1781 = vpop.f32.mrf.mxu0
      %v1782 = vpop.f32.mrf.mxu0
      %v1783 = vadd.f32 %v487, %v1782
      %v1784 = vpop.f32.mrf.mxu0
      %1785 = vmatprep.mubr.bf16.mxu0 %v1046
      %1786 = vmatmul.mubr.bf16.gmra.mxu0 %v1045
      %v1787 = vpop.f32.mrf.mxu0
      %v1788 = vadd.f32 %v487, %v1787
      %v1789 = vpop.f32.mrf.mxu0
      %v1790 = vpop.f32.mrf.mxu0
      %v1791 = vadd.f32 %v487, %v1790
      %v1792 = vpop.f32.mrf.mxu0
      %1793 = vmatprep.mubr.bf16.mxu0 %v1055
      %1794 = vmatmul.mubr.bf16.gmra.mxu0 %v1054
      %v1795 = vpop.f32.mrf.mxu0
      %v1796 = vadd.f32 %v487, %v1795
      %v1797 = vpop.f32.mrf.mxu0
      %v1798 = vpop.f32.mrf.mxu0
      %v1799 = vadd.f32 %v487, %v1798
      %v1800 = vpop.f32.mrf.mxu0
      %1801 = vmatprep.mubr.bf16.mxu0 %v1064
      %1802 = vmatmul.mubr.bf16.gmra.mxu0 %v1063
      %v1803 = vpop.f32.mrf.mxu0
      %v1804 = vadd.f32 %v487, %v1803
      %v1805 = vpop.f32.mrf.mxu0
      %v1806 = vpop.f32.mrf.mxu0
      %v1807 = vadd.f32 %v487, %v1806
      %v1808 = vpop.f32.mrf.mxu0
      %1809 = vmatprep.mubr.bf16.mxu0 %v1073
      %1810 = vmatmul.mubr.bf16.gmra.mxu0 %v1072
      %v1811 = vpop.f32.mrf.mxu0
      %v1812 = vadd.f32 %v487, %v1811
      %v1813 = vpop.f32.mrf.mxu0
      %v1814 = vpop.f32.mrf.mxu0
      %v1815 = vadd.f32 %v487, %v1814
      %v1816 = vpop.f32.mrf.mxu0
      %1817 = vdwg.mxu0
      %1818 = vmatprep.subr.bf16.mxu0 0
      %1819 = vmatpush1.bf16.msra.mxu0 %v1536
      %1820 = vmatprep.subr.bf16.mxu0 0
      %1821 = vmatpush1.bf16.msra.mxu0 %v1535
      %1822 = vmatprep.subr.bf16.mxu0 0
      %1823 = vmatpush1.bf16.msra.mxu0 %v1534
      %1824 = vmatprep.subr.bf16.mxu0 0
      %1825 = vmatpush1.bf16.msra.mxu0 %v1533
      %1826 = vmatprep.subr.bf16.mxu0 0
      %1827 = vmatpush1.bf16.msra.mxu0 %v1532
      %1828 = vmatprep.subr.bf16.mxu0 0
      %1829 = vmatpush1.bf16.msra.mxu0 %v1531
      %1830 = vmatprep.subr.bf16.mxu0 0
      %1831 = vmatpush1.bf16.msra.mxu0 %v1530
      %1832 = vmatprep.subr.bf16.mxu0 0
      %1833 = vmatpush1.bf16.msra.mxu0 %v1529
      %1834 = vmatprep.subr.bf16.mxu0 0
      %1835 = vmatpush2.bf16.msra.mxu0 %v1544
      %1836 = vmatprep.subr.bf16.mxu0 0
      %1837 = vmatpush2.bf16.msra.mxu0 %v1543
      %1838 = vmatprep.subr.bf16.mxu0 0
      %1839 = vmatpush2.bf16.msra.mxu0 %v1542
      %1840 = vmatprep.subr.bf16.mxu0 0
      %1841 = vmatpush2.bf16.msra.mxu0 %v1541
      %1842 = vmatprep.subr.bf16.mxu0 0
      %1843 = vmatpush2.bf16.msra.mxu0 %v1540
      %1844 = vmatprep.subr.bf16.mxu0 0
      %1845 = vmatpush2.bf16.msra.mxu0 %v1539
      %1846 = vmatprep.subr.bf16.mxu0 0
      %1847 = vmatpush2.bf16.msra.mxu0 %v1538
      %1848 = vmatprep.subr.bf16.mxu0 0
      %1849 = vmatpush2.bf16.msra.mxu0 %v1537
      %1850 = vmatprep.mubr.bf16.mxu0 %v940
      %1851 = vmatmul.mubr.bf16.gmra.mxu0 %v939
      %v1852 = vpop.f32.mrf.mxu0
      %v1853 = vadd.f32 %v1692, %v1852
      %v1854 = vpop.f32.mrf.mxu0
      %v1855 = vpop.f32.mrf.mxu0
      %v1856 = vadd.f32 %v1695, %v1855
      %v1857 = vpop.f32.mrf.mxu0
      %1858 = vmatprep.mubr.bf16.mxu0 %v949
      %1859 = vmatmul.mubr.bf16.gmra.mxu0 %v948
      %v1860 = vpop.f32.mrf.mxu0
      %v1861 = vadd.f32 %v1700, %v1860
      %v1862 = vpop.f32.mrf.mxu0
      %v1863 = vpop.f32.mrf.mxu0
      %v1864 = vadd.f32 %v1703, %v1863
      %v1865 = vpop.f32.mrf.mxu0
      %1866 = vmatprep.mubr.bf16.mxu0 %v958
      %1867 = vmatmul.mubr.bf16.gmra.mxu0 %v957
      %v1868 = vpop.f32.mrf.mxu0
      %v1869 = vadd.f32 %v1708, %v1868
      %v1870 = vpop.f32.mrf.mxu0
      %v1871 = vpop.f32.mrf.mxu0
      %v1872 = vadd.f32 %v1711, %v1871
      %v1873 = vpop.f32.mrf.mxu0
      %1874 = vmatprep.mubr.bf16.mxu0 %v967
      %1875 = vmatmul.mubr.bf16.gmra.mxu0 %v966
      %v1876 = vpop.f32.mrf.mxu0
      %v1877 = vadd.f32 %v1716, %v1876
      %v1878 = vpop.f32.mrf.mxu0
      %v1879 = vpop.f32.mrf.mxu0
      %v1880 = vadd.f32 %v1719, %v1879
      %v1881 = vpop.f32.mrf.mxu0
      %1882 = vmatprep.mubr.bf16.mxu0 %v976
      %1883 = vmatmul.mubr.bf16.gmra.mxu0 %v975
      %v1884 = vpop.f32.mrf.mxu0
      %v1885 = vadd.f32 %v1724, %v1884
      %v1886 = vpop.f32.mrf.mxu0
      %v1887 = vpop.f32.mrf.mxu0
      %v1888 = vadd.f32 %v1727, %v1887
      %v1889 = vpop.f32.mrf.mxu0
      %1890 = vmatprep.mubr.bf16.mxu0 %v985
      %1891 = vmatmul.mubr.bf16.gmra.mxu0 %v984
      %v1892 = vpop.f32.mrf.mxu0
      %v1893 = vadd.f32 %v1732, %v1892
      %v1894 = vpop.f32.mrf.mxu0
      %v1895 = vpop.f32.mrf.mxu0
      %v1896 = vadd.f32 %v1735, %v1895
      %v1897 = vpop.f32.mrf.mxu0
      %1898 = vmatprep.mubr.bf16.mxu0 %v994
      %1899 = vmatmul.mubr.bf16.gmra.mxu0 %v993
      %v1900 = vpop.f32.mrf.mxu0
      %v1901 = vadd.f32 %v1740, %v1900
      %v1902 = vpop.f32.mrf.mxu0
      %v1903 = vpop.f32.mrf.mxu0
      %v1904 = vadd.f32 %v1743, %v1903
      %v1905 = vpop.f32.mrf.mxu0
      %1906 = vmatprep.mubr.bf16.mxu0 %v1003
      %1907 = vmatmul.mubr.bf16.gmra.mxu0 %v1002
      %v1908 = vpop.f32.mrf.mxu0
      %v1909 = vadd.f32 %v1748, %v1908
      %v1910 = vpop.f32.mrf.mxu0
      %v1911 = vpop.f32.mrf.mxu0
      %v1912 = vadd.f32 %v1751, %v1911
      %v1913 = vpop.f32.mrf.mxu0
      %1914 = vmatprep.mubr.bf16.mxu0 %v1012
      %1915 = vmatmul.mubr.bf16.gmra.mxu0 %v1011
      %v1916 = vpop.f32.mrf.mxu0
      %v1917 = vadd.f32 %v1756, %v1916
      %v1918 = vpop.f32.mrf.mxu0
      %v1919 = vpop.f32.mrf.mxu0
      %v1920 = vadd.f32 %v1759, %v1919
      %v1921 = vpop.f32.mrf.mxu0
      %1922 = vmatprep.mubr.bf16.mxu0 %v1021
      %1923 = vmatmul.mubr.bf16.gmra.mxu0 %v1020
      %v1924 = vpop.f32.mrf.mxu0
      %v1925 = vadd.f32 %v1764, %v1924
      %v1926 = vpop.f32.mrf.mxu0
      %v1927 = vpop.f32.mrf.mxu0
      %v1928 = vadd.f32 %v1767, %v1927
      %v1929 = vpop.f32.mrf.mxu0
      %1930 = vmatprep.mubr.bf16.mxu0 %v1030
      %1931 = vmatmul.mubr.bf16.gmra.mxu0 %v1029
      %v1932 = vpop.f32.mrf.mxu0
      %v1933 = vadd.f32 %v1772, %v1932
      %v1934 = vpop.f32.mrf.mxu0
      %v1935 = vpop.f32.mrf.mxu0
      %v1936 = vadd.f32 %v1775, %v1935
      %v1937 = vpop.f32.mrf.mxu0
      %1938 = vmatprep.mubr.bf16.mxu0 %v1039
      %1939 = vmatmul.mubr.bf16.gmra.mxu0 %v1038
      %v1940 = vpop.f32.mrf.mxu0
      %v1941 = vadd.f32 %v1780, %v1940
      %v1942 = vpop.f32.mrf.mxu0
      %v1943 = vpop.f32.mrf.mxu0
      %v1944 = vadd.f32 %v1783, %v1943
      %v1945 = vpop.f32.mrf.mxu0
      %1946 = vmatprep.mubr.bf16.mxu0 %v1048
      %1947 = vmatmul.mubr.bf16.gmra.mxu0 %v1047
      %v1948 = vpop.f32.mrf.mxu0
      %v1949 = vadd.f32 %v1788, %v1948
      %v1950 = vpop.f32.mrf.mxu0
      %v1951 = vpop.f32.mrf.mxu0
      %v1952 = vadd.f32 %v1791, %v1951
      %v1953 = vpop.f32.mrf.mxu0
      %1954 = vmatprep.mubr.bf16.mxu0 %v1057
      %1955 = vmatmul.mubr.bf16.gmra.mxu0 %v1056
      %v1956 = vpop.f32.mrf.mxu0
      %v1957 = vadd.f32 %v1796, %v1956
      %v1958 = vpop.f32.mrf.mxu0
      %v1959 = vpop.f32.mrf.mxu0
      %v1960 = vadd.f32 %v1799, %v1959
      %v1961 = vpop.f32.mrf.mxu0
      %1962 = vmatprep.mubr.bf16.mxu0 %v1066
      %1963 = vmatmul.mubr.bf16.gmra.mxu0 %v1065
      %v1964 = vpop.f32.mrf.mxu0
      %v1965 = vadd.f32 %v1804, %v1964
      %v1966 = vpop.f32.mrf.mxu0
      %v1967 = vpop.f32.mrf.mxu0
      %v1968 = vadd.f32 %v1807, %v1967
      %v1969 = vpop.f32.mrf.mxu0
      %1970 = vmatprep.mubr.bf16.mxu0 %v1075
      %1971 = vmatmul.mubr.bf16.gmra.mxu0 %v1074
      %v1972 = vpop.f32.mrf.mxu0
      %v1973 = vadd.f32 %v1812, %v1972
      %v1974 = vpop.f32.mrf.mxu0
      %v1975 = vpop.f32.mrf.mxu0
      %v1976 = vadd.f32 %v1815, %v1975
      %v1977 = vpop.f32.mrf.mxu0
      %1978 = vdwg.mxu0
      %1979 = vmatprep.subr.bf16.mxu0 0
      %1980 = vmatpush1.bf16.msra.mxu0 %v1552
      %1981 = vmatprep.subr.bf16.mxu0 0
      %1982 = vmatpush1.bf16.msra.mxu0 %v1551
      %1983 = vmatprep.subr.bf16.mxu0 0
      %1984 = vmatpush1.bf16.msra.mxu0 %v1550
      %1985 = vmatprep.subr.bf16.mxu0 0
      %1986 = vmatpush1.bf16.msra.mxu0 %v1549
      %1987 = vmatprep.subr.bf16.mxu0 0
      %1988 = vmatpush1.bf16.msra.mxu0 %v1548
      %1989 = vmatprep.subr.bf16.mxu0 0
      %1990 = vmatpush1.bf16.msra.mxu0 %v1547
      %1991 = vmatprep.subr.bf16.mxu0 0
      %1992 = vmatpush1.bf16.msra.mxu0 %v1546
      %1993 = vmatprep.subr.bf16.mxu0 0
      %1994 = vmatpush1.bf16.msra.mxu0 %v1545
      %1995 = vmatprep.subr.bf16.mxu0 0
      %1996 = vmatpush2.bf16.msra.mxu0 %v1560
      %1997 = vmatprep.subr.bf16.mxu0 0
      %1998 = vmatpush2.bf16.msra.mxu0 %v1559
      %1999 = vmatprep.subr.bf16.mxu0 0
      %2000 = vmatpush2.bf16.msra.mxu0 %v1558
      %2001 = vmatprep.subr.bf16.mxu0 0
      %2002 = vmatpush2.bf16.msra.mxu0 %v1557
      %2003 = vmatprep.subr.bf16.mxu0 0
      %2004 = vmatpush2.bf16.msra.mxu0 %v1556
      %2005 = vmatprep.subr.bf16.mxu0 0
      %2006 = vmatpush2.bf16.msra.mxu0 %v1555
      %2007 = vmatprep.subr.bf16.mxu0 0
      %2008 = vmatpush2.bf16.msra.mxu0 %v1554
      %2009 = vmatprep.subr.bf16.mxu0 0
      %2010 = vmatpush2.bf16.msra.mxu0 %v1553
      %2011 = vmatprep.mubr.bf16.mxu0 %v942
      %2012 = vmatmul.mubr.bf16.gmra.mxu0 %v941
      %v2013 = vpop.f32.mrf.mxu0
      %v2014 = vadd.f32 %v1853, %v2013
      %v2015 = vpop.f32.mrf.mxu0
      %v2016 = vpop.f32.mrf.mxu0
      %v2017 = vadd.f32 %v1856, %v2016
      %v2018 = vpop.f32.mrf.mxu0
      %2019 = vmatprep.mubr.bf16.mxu0 %v951
      %2020 = vmatmul.mubr.bf16.gmra.mxu0 %v950
      %v2021 = vpop.f32.mrf.mxu0
      %v2022 = vadd.f32 %v1861, %v2021
      %v2023 = vpop.f32.mrf.mxu0
      %v2024 = vpop.f32.mrf.mxu0
      %v2025 = vadd.f32 %v1864, %v2024
      %v2026 = vpop.f32.mrf.mxu0
      %2027 = vmatprep.mubr.bf16.mxu0 %v960
      %2028 = vmatmul.mubr.bf16.gmra.mxu0 %v959
      %v2029 = vpop.f32.mrf.mxu0
      %v2030 = vadd.f32 %v1869, %v2029
      %v2031 = vpop.f32.mrf.mxu0
      %v2032 = vpop.f32.mrf.mxu0
      %v2033 = vadd.f32 %v1872, %v2032
      %v2034 = vpop.f32.mrf.mxu0
      %2035 = vmatprep.mubr.bf16.mxu0 %v969
      %2036 = vmatmul.mubr.bf16.gmra.mxu0 %v968
      %v2037 = vpop.f32.mrf.mxu0
      %v2038 = vadd.f32 %v1877, %v2037
      %v2039 = vpop.f32.mrf.mxu0
      %v2040 = vpop.f32.mrf.mxu0
      %v2041 = vadd.f32 %v1880, %v2040
      %v2042 = vpop.f32.mrf.mxu0
      %2043 = vmatprep.mubr.bf16.mxu0 %v978
      %2044 = vmatmul.mubr.bf16.gmra.mxu0 %v977
      %v2045 = vpop.f32.mrf.mxu0
      %v2046 = vadd.f32 %v1885, %v2045
      %v2047 = vpop.f32.mrf.mxu0
      %v2048 = vpop.f32.mrf.mxu0
      %v2049 = vadd.f32 %v1888, %v2048
      %v2050 = vpop.f32.mrf.mxu0
      %2051 = vmatprep.mubr.bf16.mxu0 %v987
      %2052 = vmatmul.mubr.bf16.gmra.mxu0 %v986
      %v2053 = vpop.f32.mrf.mxu0
      %v2054 = vadd.f32 %v1893, %v2053
      %v2055 = vpop.f32.mrf.mxu0
      %v2056 = vpop.f32.mrf.mxu0
      %v2057 = vadd.f32 %v1896, %v2056
      %v2058 = vpop.f32.mrf.mxu0
      %2059 = vmatprep.mubr.bf16.mxu0 %v996
      %2060 = vmatmul.mubr.bf16.gmra.mxu0 %v995
      %v2061 = vpop.f32.mrf.mxu0
      %v2062 = vadd.f32 %v1901, %v2061
      %v2063 = vpop.f32.mrf.mxu0
      %v2064 = vpop.f32.mrf.mxu0
      %v2065 = vadd.f32 %v1904, %v2064
      %v2066 = vpop.f32.mrf.mxu0
      %2067 = vmatprep.mubr.bf16.mxu0 %v1005
      %2068 = vmatmul.mubr.bf16.gmra.mxu0 %v1004
      %v2069 = vpop.f32.mrf.mxu0
      %v2070 = vadd.f32 %v1909, %v2069
      %v2071 = vpop.f32.mrf.mxu0
      %v2072 = vpop.f32.mrf.mxu0
      %v2073 = vadd.f32 %v1912, %v2072
      %v2074 = vpop.f32.mrf.mxu0
      %2075 = vmatprep.mubr.bf16.mxu0 %v1014
      %2076 = vmatmul.mubr.bf16.gmra.mxu0 %v1013
      %v2077 = vpop.f32.mrf.mxu0
      %v2078 = vadd.f32 %v1917, %v2077
      %v2079 = vpop.f32.mrf.mxu0
      %v2080 = vpop.f32.mrf.mxu0
      %v2081 = vadd.f32 %v1920, %v2080
      %v2082 = vpop.f32.mrf.mxu0
      %2083 = vmatprep.mubr.bf16.mxu0 %v1023
      %2084 = vmatmul.mubr.bf16.gmra.mxu0 %v1022
      %v2085 = vpop.f32.mrf.mxu0
      %v2086 = vadd.f32 %v1925, %v2085
      %v2087 = vpop.f32.mrf.mxu0
      %v2088 = vpop.f32.mrf.mxu0
      %v2089 = vadd.f32 %v1928, %v2088
      %v2090 = vpop.f32.mrf.mxu0
      %2091 = vmatprep.mubr.bf16.mxu0 %v1032
      %2092 = vmatmul.mubr.bf16.gmra.mxu0 %v1031
      %v2093 = vpop.f32.mrf.mxu0
      %v2094 = vadd.f32 %v1933, %v2093
      %v2095 = vpop.f32.mrf.mxu0
      %v2096 = vpop.f32.mrf.mxu0
      %v2097 = vadd.f32 %v1936, %v2096
      %v2098 = vpop.f32.mrf.mxu0
      %2099 = vmatprep.mubr.bf16.mxu0 %v1041
      %2100 = vmatmul.mubr.bf16.gmra.mxu0 %v1040
      %v2101 = vpop.f32.mrf.mxu0
      %v2102 = vadd.f32 %v1941, %v2101
      %v2103 = vpop.f32.mrf.mxu0
      %v2104 = vpop.f32.mrf.mxu0
      %v2105 = vadd.f32 %v1944, %v2104
      %v2106 = vpop.f32.mrf.mxu0
      %2107 = vmatprep.mubr.bf16.mxu0 %v1050
      %2108 = vmatmul.mubr.bf16.gmra.mxu0 %v1049
      %v2109 = vpop.f32.mrf.mxu0
      %v2110 = vadd.f32 %v1949, %v2109
      %v2111 = vpop.f32.mrf.mxu0
      %v2112 = vpop.f32.mrf.mxu0
      %v2113 = vadd.f32 %v1952, %v2112
      %v2114 = vpop.f32.mrf.mxu0
      %2115 = vmatprep.mubr.bf16.mxu0 %v1059
      %2116 = vmatmul.mubr.bf16.gmra.mxu0 %v1058
      %v2117 = vpop.f32.mrf.mxu0
      %v2118 = vadd.f32 %v1957, %v2117
      %v2119 = vpop.f32.mrf.mxu0
      %v2120 = vpop.f32.mrf.mxu0
      %v2121 = vadd.f32 %v1960, %v2120
      %v2122 = vpop.f32.mrf.mxu0
      %2123 = vmatprep.mubr.bf16.mxu0 %v1068
      %2124 = vmatmul.mubr.bf16.gmra.mxu0 %v1067
      %v2125 = vpop.f32.mrf.mxu0
      %v2126 = vadd.f32 %v1965, %v2125
      %v2127 = vpop.f32.mrf.mxu0
      %v2128 = vpop.f32.mrf.mxu0
      %v2129 = vadd.f32 %v1968, %v2128
      %v2130 = vpop.f32.mrf.mxu0
      %2131 = vmatprep.mubr.bf16.mxu0 %v1077
      %2132 = vmatmul.mubr.bf16.gmra.mxu0 %v1076
      %v2133 = vpop.f32.mrf.mxu0
      %v2134 = vadd.f32 %v1973, %v2133
      %v2135 = vpop.f32.mrf.mxu0
      %v2136 = vpop.f32.mrf.mxu0
      %v2137 = vadd.f32 %v1976, %v2136
      %v2138 = vpop.f32.mrf.mxu0
      %2139 = vdwg.mxu0
      %2140 = vmatprep.subr.bf16.mxu0 0
      %2141 = vmatpush1.bf16.msra.mxu0 %v1568
      %2142 = vmatprep.subr.bf16.mxu0 0
      %2143 = vmatpush1.bf16.msra.mxu0 %v1567
      %2144 = vmatprep.subr.bf16.mxu0 0
      %2145 = vmatpush1.bf16.msra.mxu0 %v1566
      %2146 = vmatprep.subr.bf16.mxu0 0
      %2147 = vmatpush1.bf16.msra.mxu0 %v1565
      %2148 = vmatprep.subr.bf16.mxu0 0
      %2149 = vmatpush1.bf16.msra.mxu0 %v1564
      %2150 = vmatprep.subr.bf16.mxu0 0
      %2151 = vmatpush1.bf16.msra.mxu0 %v1563
      %2152 = vmatprep.subr.bf16.mxu0 0
      %2153 = vmatpush1.bf16.msra.mxu0 %v1562
      %2154 = vmatprep.subr.bf16.mxu0 0
      %2155 = vmatpush1.bf16.msra.mxu0 %v1561
      %2156 = vmatprep.subr.bf16.mxu0 0
      %2157 = vmatpush2.bf16.msra.mxu0 %v1576
      %2158 = vmatprep.subr.bf16.mxu0 0
      %2159 = vmatpush2.bf16.msra.mxu0 %v1575
      %2160 = vmatprep.subr.bf16.mxu0 0
      %2161 = vmatpush2.bf16.msra.mxu0 %v1574
      %2162 = vmatprep.subr.bf16.mxu0 0
      %2163 = vmatpush2.bf16.msra.mxu0 %v1573
      %2164 = vmatprep.subr.bf16.mxu0 0
      %2165 = vmatpush2.bf16.msra.mxu0 %v1572
      %2166 = vmatprep.subr.bf16.mxu0 0
      %2167 = vmatpush2.bf16.msra.mxu0 %v1571
      %2168 = vmatprep.subr.bf16.mxu0 0
      %2169 = vmatpush2.bf16.msra.mxu0 %v1570
      %2170 = vmatprep.subr.bf16.mxu0 0
      %2171 = vmatpush2.bf16.msra.mxu0 %v1569
      %2172 = vmatprep.mubr.bf16.mxu0 %v944
      %2173 = vmatmul.mubr.bf16.gmra.mxu0 %v943
      %v2174 = vpop.f32.mrf.mxu0
      %v2175 = vadd.f32 %v2014, %v2174
      %v2176 = vpop.f32.mrf.mxu0
      %v2177 = vpop.f32.mrf.mxu0
      %v2178 = vadd.f32 %v2017, %v2177
      %v2179 = vpop.f32.mrf.mxu0
      %2180 = vmatprep.mubr.bf16.mxu0 %v953
      %2181 = vmatmul.mubr.bf16.gmra.mxu0 %v952
      %v2182 = vpop.f32.mrf.mxu0
      %v2183 = vadd.f32 %v2022, %v2182
      %v2184 = vpop.f32.mrf.mxu0
      %v2185 = vpop.f32.mrf.mxu0
      %v2186 = vadd.f32 %v2025, %v2185
      %v2187 = vpop.f32.mrf.mxu0
      %2188 = vmatprep.mubr.bf16.mxu0 %v962
      %2189 = vmatmul.mubr.bf16.gmra.mxu0 %v961
      %v2190 = vpop.f32.mrf.mxu0
      %v2191 = vadd.f32 %v2030, %v2190
      %v2192 = vpop.f32.mrf.mxu0
      %v2193 = vpop.f32.mrf.mxu0
      %v2194 = vadd.f32 %v2033, %v2193
      %v2195 = vpop.f32.mrf.mxu0
      %2196 = vmatprep.mubr.bf16.mxu0 %v971
      %2197 = vmatmul.mubr.bf16.gmra.mxu0 %v970
      %v2198 = vpop.f32.mrf.mxu0
      %v2199 = vadd.f32 %v2038, %v2198
      %v2200 = vpop.f32.mrf.mxu0
      %v2201 = vpop.f32.mrf.mxu0
      %v2202 = vadd.f32 %v2041, %v2201
      %v2203 = vpop.f32.mrf.mxu0
      %2204 = vmatprep.mubr.bf16.mxu0 %v980
      %2205 = vmatmul.mubr.bf16.gmra.mxu0 %v979
      %v2206 = vpop.f32.mrf.mxu0
      %v2207 = vadd.f32 %v2046, %v2206
      %v2208 = vpop.f32.mrf.mxu0
      %v2209 = vpop.f32.mrf.mxu0
      %v2210 = vadd.f32 %v2049, %v2209
      %v2211 = vpop.f32.mrf.mxu0
      %2212 = vmatprep.mubr.bf16.mxu0 %v989
      %2213 = vmatmul.mubr.bf16.gmra.mxu0 %v988
      %v2214 = vpop.f32.mrf.mxu0
      %v2215 = vadd.f32 %v2054, %v2214
      %v2216 = vpop.f32.mrf.mxu0
      %v2217 = vpop.f32.mrf.mxu0
      %v2218 = vadd.f32 %v2057, %v2217
      %v2219 = vpop.f32.mrf.mxu0
      %2220 = vmatprep.mubr.bf16.mxu0 %v998
      %2221 = vmatmul.mubr.bf16.gmra.mxu0 %v997
      %v2222 = vpop.f32.mrf.mxu0
      %v2223 = vadd.f32 %v2062, %v2222
      %v2224 = vpop.f32.mrf.mxu0
      %v2225 = vpop.f32.mrf.mxu0
      %v2226 = vadd.f32 %v2065, %v2225
      %v2227 = vpop.f32.mrf.mxu0
      %2228 = vmatprep.mubr.bf16.mxu0 %v1007
      %2229 = vmatmul.mubr.bf16.gmra.mxu0 %v1006
      %v2230 = vpop.f32.mrf.mxu0
      %v2231 = vadd.f32 %v2070, %v2230
      %v2232 = vpop.f32.mrf.mxu0
      %v2233 = vpop.f32.mrf.mxu0
      %v2234 = vadd.f32 %v2073, %v2233
      %v2235 = vpop.f32.mrf.mxu0
      %2236 = vmatprep.mubr.bf16.mxu0 %v1016
      %2237 = vmatmul.mubr.bf16.gmra.mxu0 %v1015
      %v2238 = vpop.f32.mrf.mxu0
      %v2239 = vadd.f32 %v2078, %v2238
      %v2240 = vpop.f32.mrf.mxu0
      %v2241 = vpop.f32.mrf.mxu0
      %v2242 = vadd.f32 %v2081, %v2241
      %v2243 = vpop.f32.mrf.mxu0
      %2244 = vmatprep.mubr.bf16.mxu0 %v1025
      %2245 = vmatmul.mubr.bf16.gmra.mxu0 %v1024
      %v2246 = vpop.f32.mrf.mxu0
      %v2247 = vadd.f32 %v2086, %v2246
      %v2248 = vpop.f32.mrf.mxu0
      %v2249 = vpop.f32.mrf.mxu0
      %v2250 = vadd.f32 %v2089, %v2249
      %v2251 = vpop.f32.mrf.mxu0
      %2252 = vmatprep.mubr.bf16.mxu0 %v1034
      %2253 = vmatmul.mubr.bf16.gmra.mxu0 %v1033
      %v2254 = vpop.f32.mrf.mxu0
      %v2255 = vadd.f32 %v2094, %v2254
      %v2256 = vpop.f32.mrf.mxu0
      %v2257 = vpop.f32.mrf.mxu0
      %v2258 = vadd.f32 %v2097, %v2257
      %v2259 = vpop.f32.mrf.mxu0
      %2260 = vmatprep.mubr.bf16.mxu0 %v1043
      %2261 = vmatmul.mubr.bf16.gmra.mxu0 %v1042
      %v2262 = vpop.f32.mrf.mxu0
      %v2263 = vadd.f32 %v2102, %v2262
      %v2264 = vpop.f32.mrf.mxu0
      %v2265 = vpop.f32.mrf.mxu0
      %v2266 = vadd.f32 %v2105, %v2265
      %v2267 = vpop.f32.mrf.mxu0
      %2268 = vmatprep.mubr.bf16.mxu0 %v1052
      %2269 = vmatmul.mubr.bf16.gmra.mxu0 %v1051
      %v2270 = vpop.f32.mrf.mxu0
      %v2271 = vadd.f32 %v2110, %v2270
      %v2272 = vpop.f32.mrf.mxu0
      %v2273 = vpop.f32.mrf.mxu0
      %v2274 = vadd.f32 %v2113, %v2273
      %v2275 = vpop.f32.mrf.mxu0
      %2276 = vmatprep.mubr.bf16.mxu0 %v1061
      %2277 = vmatmul.mubr.bf16.gmra.mxu0 %v1060
      %v2278 = vpop.f32.mrf.mxu0
      %v2279 = vadd.f32 %v2118, %v2278
      %v2280 = vpop.f32.mrf.mxu0
      %v2281 = vpop.f32.mrf.mxu0
      %v2282 = vadd.f32 %v2121, %v2281
      %v2283 = vpop.f32.mrf.mxu0
      %2284 = vmatprep.mubr.bf16.mxu0 %v1070
      %2285 = vmatmul.mubr.bf16.gmra.mxu0 %v1069
      %v2286 = vpop.f32.mrf.mxu0
      %v2287 = vadd.f32 %v2126, %v2286
      %v2288 = vpop.f32.mrf.mxu0
      %v2289 = vpop.f32.mrf.mxu0
      %v2290 = vadd.f32 %v2129, %v2289
      %v2291 = vpop.f32.mrf.mxu0
      %2292 = vmatprep.mubr.bf16.mxu0 %v1079
      %2293 = vmatmul.mubr.bf16.gmra.mxu0 %v1078
      %v2294 = vpop.f32.mrf.mxu0
      %v2295 = vadd.f32 %v2134, %v2294
      %v2296 = vpop.f32.mrf.mxu0
      %v2297 = vpop.f32.mrf.mxu0
      %v2298 = vadd.f32 %v2137, %v2297
      %v2299 = vpop.f32.mrf.mxu0
      %2300 = vdwg.mxu0
      %2301 = vmatprep.subr.bf16.mxu0 0
      %2302 = vmatpush1.bf16.msra.mxu0 %v1584
      %2303 = vmatprep.subr.bf16.mxu0 0
      %2304 = vmatpush1.bf16.msra.mxu0 %v1583
      %2305 = vmatprep.subr.bf16.mxu0 0
      %2306 = vmatpush1.bf16.msra.mxu0 %v1582
      %2307 = vmatprep.subr.bf16.mxu0 0
      %2308 = vmatpush1.bf16.msra.mxu0 %v1581
      %2309 = vmatprep.subr.bf16.mxu0 0
      %2310 = vmatpush1.bf16.msra.mxu0 %v1580
      %2311 = vmatprep.subr.bf16.mxu0 0
      %2312 = vmatpush1.bf16.msra.mxu0 %v1579
      %2313 = vmatprep.subr.bf16.mxu0 0
      %2314 = vmatpush1.bf16.msra.mxu0 %v1578
      %2315 = vmatprep.subr.bf16.mxu0 0
      %2316 = vmatpush1.bf16.msra.mxu0 %v1577
      %2317 = vmatprep.subr.bf16.mxu0 0
      %2318 = vmatpush2.bf16.msra.mxu0 0
      %2319 = vmatprep.subr.bf16.mxu0 0
      %2320 = vmatpush2.bf16.msra.mxu0 0
      %2321 = vmatprep.subr.bf16.mxu0 0
      %2322 = vmatpush2.bf16.msra.mxu0 0
      %2323 = vmatprep.subr.bf16.mxu0 0
      %2324 = vmatpush2.bf16.msra.mxu0 0
      %2325 = vmatprep.subr.bf16.mxu0 0
      %2326 = vmatpush2.bf16.msra.mxu0 0
      %2327 = vmatprep.subr.bf16.mxu0 0
      %2328 = vmatpush2.bf16.msra.mxu0 0
      %2329 = vmatprep.subr.bf16.mxu0 0
      %2330 = vmatpush2.bf16.msra.mxu0 0
      %2331 = vmatprep.subr.bf16.mxu0 0
      %2332 = vmatpush2.bf16.msra.mxu0 0
      %2333 = vmatprep.mubr.bf16.mxu0 0
      %2334 = vmatmul.mubr.bf16.gmra.mxu0 %v945
      %v2335 = vpop.f32.mrf.mxu0
      %v2336 = vadd.f32 %v2175, %v2335
      %v2337 = vpop.f32.mrf.mxu0
      %v2338 = vpop.f32.mrf.mxu0
      %v2339 = vadd.f32 %v2178, %v2338
      %v2340 = vpop.f32.mrf.mxu0
      %2341 = vmatprep.mubr.bf16.mxu0 0
      %2342 = vmatmul.mubr.bf16.gmra.mxu0 %v954
      %v2343 = vpop.f32.mrf.mxu0
      %v2344 = vadd.f32 %v2183, %v2343
      %v2345 = vpop.f32.mrf.mxu0
      %v2346 = vpop.f32.mrf.mxu0
      %v2347 = vadd.f32 %v2186, %v2346
      %v2348 = vpop.f32.mrf.mxu0
      %2349 = vmatprep.mubr.bf16.mxu0 0
      %2350 = vmatmul.mubr.bf16.gmra.mxu0 %v963
      %v2351 = vpop.f32.mrf.mxu0
      %v2352 = vadd.f32 %v2191, %v2351
      %v2353 = vpop.f32.mrf.mxu0
      %v2354 = vpop.f32.mrf.mxu0
      %v2355 = vadd.f32 %v2194, %v2354
      %v2356 = vpop.f32.mrf.mxu0
      %2357 = vmatprep.mubr.bf16.mxu0 0
      %2358 = vmatmul.mubr.bf16.gmra.mxu0 %v972
      %v2359 = vpop.f32.mrf.mxu0
      %v2360 = vadd.f32 %v2199, %v2359
      %v2361 = vpop.f32.mrf.mxu0
      %v2362 = vpop.f32.mrf.mxu0
      %v2363 = vadd.f32 %v2202, %v2362
      %v2364 = vpop.f32.mrf.mxu0
      %2365 = vmatprep.mubr.bf16.mxu0 0
      %2366 = vmatmul.mubr.bf16.gmra.mxu0 %v981
      %v2367 = vpop.f32.mrf.mxu0
      %v2368 = vadd.f32 %v2207, %v2367
      %v2369 = vpop.f32.mrf.mxu0
      %v2370 = vpop.f32.mrf.mxu0
      %v2371 = vadd.f32 %v2210, %v2370
      %v2372 = vpop.f32.mrf.mxu0
      %2373 = vmatprep.mubr.bf16.mxu0 0
      %2374 = vmatmul.mubr.bf16.gmra.mxu0 %v990
      %v2375 = vpop.f32.mrf.mxu0
      %v2376 = vadd.f32 %v2215, %v2375
      %v2377 = vpop.f32.mrf.mxu0
      %v2378 = vpop.f32.mrf.mxu0
      %v2379 = vadd.f32 %v2218, %v2378
      %v2380 = vpop.f32.mrf.mxu0
      %2381 = vmatprep.mubr.bf16.mxu0 0
      %2382 = vmatmul.mubr.bf16.gmra.mxu0 %v999
      %v2383 = vpop.f32.mrf.mxu0
      %v2384 = vadd.f32 %v2223, %v2383
      %v2385 = vpop.f32.mrf.mxu0
      %v2386 = vpop.f32.mrf.mxu0
      %v2387 = vadd.f32 %v2226, %v2386
      %v2388 = vpop.f32.mrf.mxu0
      %2389 = vmatprep.mubr.bf16.mxu0 0
      %2390 = vmatmul.mubr.bf16.gmra.mxu0 %v1008
      %v2391 = vpop.f32.mrf.mxu0
      %v2392 = vadd.f32 %v2231, %v2391
      %v2393 = vpop.f32.mrf.mxu0
      %v2394 = vpop.f32.mrf.mxu0
      %v2395 = vadd.f32 %v2234, %v2394
      %v2396 = vpop.f32.mrf.mxu0
      %2397 = vmatprep.mubr.bf16.mxu0 0
      %2398 = vmatmul.mubr.bf16.gmra.mxu0 %v1017
      %v2399 = vpop.f32.mrf.mxu0
      %v2400 = vadd.f32 %v2239, %v2399
      %v2401 = vpop.f32.mrf.mxu0
      %v2402 = vpop.f32.mrf.mxu0
      %v2403 = vadd.f32 %v2242, %v2402
      %v2404 = vpop.f32.mrf.mxu0
      %2405 = vmatprep.mubr.bf16.mxu0 0
      %2406 = vmatmul.mubr.bf16.gmra.mxu0 %v1026
      %v2407 = vpop.f32.mrf.mxu0
      %v2408 = vadd.f32 %v2247, %v2407
      %v2409 = vpop.f32.mrf.mxu0
      %v2410 = vpop.f32.mrf.mxu0
      %v2411 = vadd.f32 %v2250, %v2410
      %v2412 = vpop.f32.mrf.mxu0
      %2413 = vmatprep.mubr.bf16.mxu0 0
      %2414 = vmatmul.mubr.bf16.gmra.mxu0 %v1035
      %v2415 = vpop.f32.mrf.mxu0
      %v2416 = vadd.f32 %v2255, %v2415
      %v2417 = vpop.f32.mrf.mxu0
      %v2418 = vpop.f32.mrf.mxu0
      %v2419 = vadd.f32 %v2258, %v2418
      %v2420 = vpop.f32.mrf.mxu0
      %2421 = vmatprep.mubr.bf16.mxu0 0
      %2422 = vmatmul.mubr.bf16.gmra.mxu0 %v1044
      %v2423 = vpop.f32.mrf.mxu0
      %v2424 = vadd.f32 %v2263, %v2423
      %v2425 = vpop.f32.mrf.mxu0
      %v2426 = vpop.f32.mrf.mxu0
      %v2427 = vadd.f32 %v2266, %v2426
      %v2428 = vpop.f32.mrf.mxu0
      %2429 = vmatprep.mubr.bf16.mxu0 0
      %2430 = vmatmul.mubr.bf16.gmra.mxu0 %v1053
      %v2431 = vpop.f32.mrf.mxu0
      %v2432 = vadd.f32 %v2271, %v2431
      %v2433 = vpop.f32.mrf.mxu0
      %v2434 = vpop.f32.mrf.mxu0
      %v2435 = vadd.f32 %v2274, %v2434
      %v2436 = vpop.f32.mrf.mxu0
      %2437 = vmatprep.mubr.bf16.mxu0 0
      %2438 = vmatmul.mubr.bf16.gmra.mxu0 %v1062
      %v2439 = vpop.f32.mrf.mxu0
      %v2440 = vadd.f32 %v2279, %v2439
      %v2441 = vpop.f32.mrf.mxu0
      %v2442 = vpop.f32.mrf.mxu0
      %v2443 = vadd.f32 %v2282, %v2442
      %v2444 = vpop.f32.mrf.mxu0
      %2445 = vmatprep.mubr.bf16.mxu0 0
      %2446 = vmatmul.mubr.bf16.gmra.mxu0 %v1071
      %v2447 = vpop.f32.mrf.mxu0
      %v2448 = vadd.f32 %v2287, %v2447
      %v2449 = vpop.f32.mrf.mxu0
      %v2450 = vpop.f32.mrf.mxu0
      %v2451 = vadd.f32 %v2290, %v2450
      %v2452 = vpop.f32.mrf.mxu0
      %2453 = vmatprep.mubr.bf16.mxu0 0
      %2454 = vmatmul.mubr.bf16.gmra.mxu0 %v1080
      %v2455 = vpop.f32.mrf.mxu0
      %v2456 = vadd.f32 %v2295, %v2455
      %v2457 = vpop.f32.mrf.mxu0
      %v2458 = vpop.f32.mrf.mxu0
      %v2459 = vadd.f32 %v2298, %v2458
      %v2460 = vpop.f32.mrf.mxu0
      %2461 = vdwg.mxu0
      %v2462 = vmax.f32 %v2336, 0.0
      %v2463 = vmax.f32 %v2339, 0.0
      %v2464 = vmax.f32 %v2344, 0.0
      %v2465 = vmax.f32 %v2347, 0.0
      %v2466 = vmax.f32 %v2352, 0.0
      %v2467 = vmax.f32 %v2355, 0.0
      %v2468 = vmax.f32 %v2360, 0.0
      %v2469 = vmax.f32 %v2363, 0.0
      %v2470 = vmax.f32 %v2368, 0.0
      %v2471 = vmax.f32 %v2371, 0.0
      %v2472 = vmax.f32 %v2376, 0.0
      %v2473 = vmax.f32 %v2379, 0.0
      %v2474 = vmax.f32 %v2384, 0.0
      %v2475 = vmax.f32 %v2387, 0.0
      %v2476 = vmax.f32 %v2392, 0.0
      %v2477 = vmax.f32 %v2395, 0.0
      %v2478 = vmax.f32 %v2400, 0.0
      %v2479 = vmax.f32 %v2403, 0.0
      %v2480 = vmax.f32 %v2408, 0.0
      %v2481 = vmax.f32 %v2411, 0.0
      %v2482 = vmax.f32 %v2416, 0.0
      %v2483 = vmax.f32 %v2419, 0.0
      %v2484 = vmax.f32 %v2424, 0.0
      %v2485 = vmax.f32 %v2427, 0.0
      %v2486 = vmax.f32 %v2432, 0.0
      %v2487 = vmax.f32 %v2435, 0.0
      %v2488 = vmax.f32 %v2440, 0.0
      %v2489 = vmax.f32 %v2443, 0.0
      %v2490 = vmax.f32 %v2448, 0.0
      %v2491 = vmax.f32 %v2451, 0.0
      %v2492 = vmax.f32 %v2456, 0.0
      %v2493 = vmax.f32 %v2459, 0.0
      %v2494 = vpack.c.bf16 %v2463, %v2462
      %v2495 = vpack.c.bf16 %v2465, %v2464
      %v2496 = vpack.c.bf16 %v2467, %v2466
      %v2497 = vpack.c.bf16 %v2469, %v2468
      %v2498 = vpack.c.bf16 %v2471, %v2470
      %v2499 = vpack.c.bf16 %v2473, %v2472
      %v2500 = vpack.c.bf16 %v2475, %v2474
      %v2501 = vpack.c.bf16 %v2477, %v2476
      %v2502 = vpack.c.bf16 %v2479, %v2478
      %v2503 = vpack.c.bf16 %v2481, %v2480
      %v2504 = vpack.c.bf16 %v2483, %v2482
      %v2505 = vpack.c.bf16 %v2485, %v2484
      %v2506 = vpack.c.bf16 %v2487, %v2486
      %v2507 = vpack.c.bf16 %v2489, %v2488
      %v2508 = vpack.c.bf16 %v2491, %v2490
      %v2509 = vpack.c.bf16 %v2493, %v2492
      %v2526 = vunpack.c.l.b16 %v2494
      %v2527 = vunpack.c.h.b16 %v2494
      %v2528 = vunpack.c.l.b16 %v2495
      %v2529 = vunpack.c.h.b16 %v2495
      %v2530 = vunpack.c.l.b16 %v2496
      %v2531 = vunpack.c.h.b16 %v2496
      %v2532 = vunpack.c.l.b16 %v2497
      %v2533 = vunpack.c.h.b16 %v2497
      %v2534 = vunpack.c.l.b16 %v2498
      %v2535 = vunpack.c.h.b16 %v2498
      %v2536 = vunpack.c.l.b16 %v2499
      %v2537 = vunpack.c.h.b16 %v2499
      %v2538 = vunpack.c.l.b16 %v2500
      %v2539 = vunpack.c.h.b16 %v2500
      %v2540 = vunpack.c.l.b16 %v2501
      %v2541 = vunpack.c.h.b16 %v2501
      %v2542 = vunpack.c.l.b16 %v2502
      %v2543 = vunpack.c.h.b16 %v2502
      %v2544 = vunpack.c.l.b16 %v2503
      %v2545 = vunpack.c.h.b16 %v2503
      %v2546 = vunpack.c.l.b16 %v2504
      %v2547 = vunpack.c.h.b16 %v2504
      %v2548 = vunpack.c.l.b16 %v2505
      %v2549 = vunpack.c.h.b16 %v2505
      %v2550 = vunpack.c.l.b16 %v2506
      %v2551 = vunpack.c.h.b16 %v2506
      %v2552 = vunpack.c.l.b16 %v2507
      %v2553 = vunpack.c.h.b16 %v2507
      %v2554 = vunpack.c.l.b16 %v2508
      %v2555 = vunpack.c.h.b16 %v2508
      %v2556 = vunpack.c.l.b16 %v2509
      %v2557 = vunpack.c.h.b16 %v2509
      %v2558 = vpack.c.b16 %v2526, %v2526
      %v2559 = vpack.c.b16 %v2527, %v2527
      %v2560 = vpack.c.b16 %v2528, %v2528
      %v2561 = vpack.c.b16 %v2529, %v2529
      %v2562 = vpack.c.b16 %v2530, %v2530
      %v2563 = vpack.c.b16 %v2531, %v2531
      %v2564 = vpack.c.b16 %v2532, %v2532
      %v2565 = vpack.c.b16 %v2533, %v2533
      %v2566 = vpack.c.b16 %v2534, %v2534
      %v2567 = vpack.c.b16 %v2535, %v2535
      %v2568 = vpack.c.b16 %v2536, %v2536
      %v2569 = vpack.c.b16 %v2537, %v2537
      %v2570 = vpack.c.b16 %v2538, %v2538
      %v2571 = vpack.c.b16 %v2539, %v2539
      %v2572 = vpack.c.b16 %v2540, %v2540
      %v2573 = vpack.c.b16 %v2541, %v2541
      %v2574 = vpack.c.b16 %v2542, %v2542
      %v2575 = vpack.c.b16 %v2543, %v2543
      %v2576 = vpack.c.b16 %v2544, %v2544
      %v2577 = vpack.c.b16 %v2545, %v2545
      %v2578 = vpack.c.b16 %v2546, %v2546
      %v2579 = vpack.c.b16 %v2547, %v2547
      %v2580 = vpack.c.b16 %v2548, %v2548
      %v2581 = vpack.c.b16 %v2549, %v2549
      %v2582 = vpack.c.b16 %v2550, %v2550
      %v2583 = vpack.c.b16 %v2551, %v2551
      %v2584 = vpack.c.b16 %v2552, %v2552
      %v2585 = vpack.c.b16 %v2553, %v2553
      %v2586 = vpack.c.b16 %v2554, %v2554
      %v2587 = vpack.c.b16 %v2555, %v2555
      %v2588 = vpack.c.b16 %v2556, %v2556
      %v2589 = vpack.c.b16 %v2557, %v2557
      %2622 = vst [vmem:[%s175] sm:$0xf] %v2558
      %2623 = vst [vmem:[%s175 + $0x4] sm:$0xf] %v2559
      %2624 = vst [vmem:[%s175 + $0x8] sm:$0xf] %v2560
      %2625 = vst [vmem:[%s175 + $0xc] sm:$0xf] %v2561
      %2626 = vst [vmem:[%s175 + $0x10] sm:$0xf] %v2562
      %2627 = vst [vmem:[%s175 + $0x14] sm:$0xf] %v2563
      %2628 = vst [vmem:[%s175 + $0x18] sm:$0xf] %v2564
      %2629 = vst [vmem:[%s175 + $0x1c] sm:$0xf] %v2565
      %2630 = vst [vmem:[%s175 + $0x20] sm:$0xf] %v2566
      %2631 = vst [vmem:[%s175 + $0x24] sm:$0xf] %v2567
      %2632 = vst [vmem:[%s175 + $0x28] sm:$0xf] %v2568
      %2633 = vst [vmem:[%s175 + $0x2c] sm:$0xf] %v2569
      %2634 = vst [vmem:[%s175 + $0x30] sm:$0xf] %v2570
      %2635 = vst [vmem:[%s175 + $0x34] sm:$0xf] %v2571
      %2636 = vst [vmem:[%s175 + $0x38] sm:$0xf] %v2572
      %2637 = vst [vmem:[%s175 + $0x3c] sm:$0xf] %v2573
      %2638 = vst [vmem:[%s175 + $0x40] sm:$0xf] %v2574
      %2639 = vst [vmem:[%s175 + $0x44] sm:$0xf] %v2575
      %2640 = vst [vmem:[%s175 + $0x48] sm:$0xf] %v2576
      %2641 = vst [vmem:[%s175 + $0x4c] sm:$0xf] %v2577
      %2642 = vst [vmem:[%s175 + $0x50] sm:$0xf] %v2578
      %2643 = vst [vmem:[%s175 + $0x54] sm:$0xf] %v2579
      %2644 = vst [vmem:[%s175 + $0x58] sm:$0xf] %v2580
      %2645 = vst [vmem:[%s175 + $0x5c] sm:$0xf] %v2581
      %2646 = vst [vmem:[%s175 + $0x60] sm:$0xf] %v2582
      %2647 = vst [vmem:[%s175 + $0x64] sm:$0xf] %v2583
      %2648 = vst [vmem:[%s175 + $0x68] sm:$0xf] %v2584
      %2649 = vst [vmem:[%s175 + $0x6c] sm:$0xf] %v2585
      %2650 = vst [vmem:[%s175 + $0x70] sm:$0xf] %v2586
      %2651 = vst [vmem:[%s175 + $0x74] sm:$0xf] %v2587
      %2652 = vst [vmem:[%s175 + $0x78] sm:$0xf] %v2588
      %2653 = vst [vmem:[%s175 + $0x7c] sm:$0xf] %v2589
      %s2654 = smul.u32 32, %s14
      %p2655 = scmp.lt.s32.totalorder %s2654, 63
      %s2656 = scalar_select %p2655, %s2654, 63
      %s2657 = smul.addr %s2656, 4
      %s2658 = scalar_lea.vmem %s3, %s2657
      // Predicated region
      $region33: #{colorization_net.28} parent=31 // pred_check
        %p2659 = pneg %p100
      $region34: #{colorization_net.28} parent=31 // pred_check_branch
        %2661 = sbr.rel (%p2659) target = $region36
      $region35: #{colorization_net.28} parent=31 // pred_region
        %s2662 = smul.u32 32, %s14
      $region36: #{colorization_net.28} parent=31 // pred_fallthru
        _
    $region32: #{colorization_net.28} parent=5 // pred_fallthru
      _
    %p2663 = scmp.le.s32.totalorder 2, %s9
    // Predicated region
    $region37: #{colorization_net.28} parent=5 // pred_check
      %p2664 = pneg %p2663
    $region38: #{colorization_net.28} parent=5 // pred_check_branch
      %2666 = sbr.rel (%p2664) target = $region40
    $region39: #{colorization_net.28} parent=5 // pred_region
      %s2667 = ssub.s32 %s9, 2
      // Predicated region
      $region41: #{colorization_net.28} parent=39 // pred_check
        %p2668 = pneg %p106
      $region42: #{colorization_net.28} parent=39 // pred_check_branch
        %2670 = sbr.rel (%p2668) target = $region44
      $region43: #{colorization_net.28} parent=39 // pred_region
        %s2671 = smul.u32 32, %s15
        %p2672 = scmp.lt.s32.totalorder %s2671, 63
        %s2673 = scalar_select %p2672, %s2671, 63
        %s2674 = smul.addr %s2673, 4
        %s2675 = scalar_lea.vmem %s3, %s2674
      $region44: #{colorization_net.28} parent=39 // pred_fallthru
        _
    $region40: #{colorization_net.28} parent=5 // pred_fallthru
      _
  $region6: #{colorization_net.28} parent=0 // loop_footer
    %s13 = sadd.s32 1, %s9
  $region7: #{colorization_net.28} parent=0 // loop_footer_branch
    %8 = sbr.rel target = $region3
  $region8: #{colorization_net.28} parent=0 // loop_exit
    _

// kernel: colorization_net.29
$region0: #{colorization_net.29}
  #allocation0 [shape = 'u32[]', space=smem, size = 0x4, offset = 0x4, fixed_abs, tag = 'smem constant byte address 0x4 - core index']
  #allocation1 [shape = 'u32[144,128]{1,0:T(1,128)}', space=vmem, size = 0x12000, scoped, tag = 'internal scratch']
  %s0 = inlined_call_operand.vmem [shape: bf16[512,1152], index: 0, kind: input, shape index: {}]
  %s1 = inlined_call_operand.vmem [shape: bf16[1152,128], index: 1, kind: input, shape index: {}]
  %s2 = inlined_call_operand.vmem [shape: f32[1,128], index: 2, kind: input, shape index: {}]
  %s3 = inlined_call_operand.vmem [shape: bf16[512,128], index: 3, kind: output, shape index: {}]
  %s4 = sld [smem:[#allocation0]]
  $region45: #{colorization_net.29} parent=0
    _
  %s6 = ssub.s32 1, %s4
  %s7 = scalar_select 0, %s6, %s4
  loop: start=0, step=1, limit=4
  $region2: #{colorization_net.29} parent=0 // loop_pre_header
    _
  $region3: #{colorization_net.29} parent=0 // loop_header
    %s9 = sphi 0, %s13
    %p10 = scmp.ge.s32.totalorder %s9, 4
    %s19 = sphi 0, %s21
    %s22 = sphi 0, %s19
    %s23 = sphi 0, %s22
    %s39 = sphi 0, %s23
    %s43 = sphi 0, %s43
    %s45 = sphi 0, %s43
    %s46 = sphi 0, %s45
    %s60 = sphi 0, %s46
    %s64 = sphi 0, %s64
    %s66 = sphi 0, %s64
    %s67 = sphi 0, %s66
    %s81 = sphi 0, %s67
    %s87 = sphi 0, %s89
    %s90 = sphi 0, %s87
    %s91 = sphi 0, %s90
    %s107 = sphi 0, %s91
  $region4: #{colorization_net.29} parent=0 // loop_header_branch
    %12 = sbr.rel (%p10) target = $region8
  $region5: #{colorization_net.29} parent=0 // loop_body
    %s14 = ssub.s32 %s9, 1
    %s15 = ssub.s32 %s9, 2
    %s16 = sadd.s32 %s9, 1
    %s17 = ssub.s32 %s9, %s16
    %p18 = scmp.eq.s32.totalorder %s17, 0
    %s20 = sadd.s32 %s19, 1
    %s21 = scalar_select %p18, %s19, %s20
    %p24 = pneg %p18
    %p25 = scmp.eq.s32.totalorder %s9, 1
    %p26 = por %p24, %p25
    %p27 = scmp.ne.s32.totalorder %s19, %s22
    %p28 = scmp.eq.s32.totalorder %s9, 0
    %p29 = por %p27, %p28
    %p30 = scmp.ne.s32.totalorder %s19, %s22
    %p31 = scmp.eq.s32.totalorder %s14, 1
    %p32 = por %p30, %p31
    %p33 = scmp.ne.s32.totalorder %s22, %s23
    %p34 = scmp.eq.s32.totalorder %s14, 0
    %p35 = por %p33, %p34
    %p36 = scmp.ne.s32.totalorder %s22, %s23
    %p37 = scmp.eq.s32.totalorder %s15, 1
    %p38 = por %p36, %p37
    %p40 = scmp.ne.s32.totalorder %s23, %s39
    %p41 = scmp.eq.s32.totalorder %s15, 0
    %p42 = por %p40, %p41
    %s44 = sadd.s32 %s43, 1
    %p47 = scmp.eq.s32.totalorder %s9, 1
    %p48 = scmp.ne.s32.totalorder %s43, %s45
    %p49 = scmp.eq.s32.totalorder %s9, 0
    %p50 = por %p48, %p49
    %p51 = scmp.ne.s32.totalorder %s43, %s45
    %p52 = scmp.eq.s32.totalorder %s14, 1
    %p53 = por %p51, %p52
    %p54 = scmp.ne.s32.totalorder %s45, %s46
    %p55 = scmp.eq.s32.totalorder %s14, 0
    %p56 = por %p54, %p55
    %p57 = scmp.ne.s32.totalorder %s45, %s46
    %p58 = scmp.eq.s32.totalorder %s15, 1
    %p59 = por %p57, %p58
    %p61 = scmp.ne.s32.totalorder %s46, %s60
    %p62 = scmp.eq.s32.totalorder %s15, 0
    %p63 = por %p61, %p62
    %s65 = sadd.s32 %s64, 1
    %p68 = scmp.eq.s32.totalorder %s9, 1
    %p69 = scmp.ne.s32.totalorder %s64, %s66
    %p70 = scmp.eq.s32.totalorder %s9, 0
    %p71 = por %p69, %p70
    %p72 = scmp.ne.s32.totalorder %s64, %s66
    %p73 = scmp.eq.s32.totalorder %s14, 1
    %p74 = por %p72, %p73
    %p75 = scmp.ne.s32.totalorder %s66, %s67
    %p76 = scmp.eq.s32.totalorder %s14, 0
    %p77 = por %p75, %p76
    %p78 = scmp.ne.s32.totalorder %s66, %s67
    %p79 = scmp.eq.s32.totalorder %s15, 1
    %p80 = por %p78, %p79
    %p82 = scmp.ne.s32.totalorder %s67, %s81
    %p83 = scmp.eq.s32.totalorder %s15, 0
    %p84 = por %p82, %p83
    %s85 = ssub.s32 %s9, %s16
    %p86 = scmp.eq.s32.totalorder %s85, 0
    %s88 = sadd.s32 %s87, 1
    %s89 = scalar_select %p86, %s87, %s88
    %p92 = pneg %p86
    %p93 = scmp.eq.s32.totalorder %s9, 1
    %p94 = por %p92, %p93
    %p95 = scmp.ne.s32.totalorder %s87, %s90
    %p96 = scmp.eq.s32.totalorder %s9, 0
    %p97 = por %p95, %p96
    %p98 = scmp.ne.s32.totalorder %s87, %s90
    %p99 = scmp.eq.s32.totalorder %s14, 1
    %p100 = por %p98, %p99
    %p101 = scmp.ne.s32.totalorder %s90, %s91
    %p102 = scmp.eq.s32.totalorder %s14, 0
    %p103 = por %p101, %p102
    %p104 = scmp.ne.s32.totalorder %s90, %s91
    %p105 = scmp.eq.s32.totalorder %s15, 1
    %p106 = por %p104, %p105
    %p108 = scmp.ne.s32.totalorder %s91, %s107
    %p109 = scmp.eq.s32.totalorder %s15, 0
    %p110 = por %p108, %p109
    %p111 = scmp.le.s32.totalorder 1, %s9
    %p112 = scmp.lt.s32.totalorder %s9, 3
    %p113 = pnand %p111, %p112
    %p114 = pneg %p113
    // Predicated region
    $region9: #{colorization_net.29} parent=5 // pred_check
      _
    $region10: #{colorization_net.29} parent=5 // pred_check_branch
      %116 = sbr.rel (%p113) target = $region12
    $region11: #{colorization_net.29} parent=5 // pred_region
      %s117 = ssub.s32 %s9, 1
      // Predicated region
      $region13: #{colorization_net.29} parent=11 // pred_check
        %p118 = pneg %p56
      $region14: #{colorization_net.29} parent=11 // pred_check_branch
        %120 = sbr.rel (%p118) target = $region16
      $region15: #{colorization_net.29} parent=11 // pred_region
        _
      $region16: #{colorization_net.29} parent=11 // pred_fallthru
        _
      // Predicated region
      $region17: #{colorization_net.29} parent=11 // pred_check
        %p121 = pneg %p77
      $region18: #{colorization_net.29} parent=11 // pred_check_branch
        %123 = sbr.rel (%p121) target = $region20
      $region19: #{colorization_net.29} parent=11 // pred_region
        _
      $region20: #{colorization_net.29} parent=11 // pred_fallthru
        _
    $region12: #{colorization_net.29} parent=5 // pred_fallthru
      _
    %p124 = scmp.lt.s32.totalorder %s9, 2
    // Predicated region
    $region21: #{colorization_net.29} parent=5 // pred_check
      %p125 = pneg %p124
    $region22: #{colorization_net.29} parent=5 // pred_check_branch
      %127 = sbr.rel (%p125) target = $region24
    $region23: #{colorization_net.29} parent=5 // pred_region
      // Predicated region
      $region25: #{colorization_net.29} parent=23 // pred_check
        %p128 = pneg %p29
      $region26: #{colorization_net.29} parent=23 // pred_check_branch
        %130 = sbr.rel (%p128) target = $region28
      $region27: #{colorization_net.29} parent=23 // pred_region
        %s131 = smul.u32 32, %s9
        %p132 = scmp.lt.s32.totalorder %s131, 63
        %s133 = scalar_select %p132, %s131, 63
        %s134 = smul.addr %s133, 9
        %s135 = smul.addr %s134, 4
        %s136 = scalar_lea.vmem %s0, %s135
        %s137 = smul.u32 32, %s9
      $region28: #{colorization_net.29} parent=23 // pred_fallthru
        _
    $region24: #{colorization_net.29} parent=5 // pred_fallthru
      _
    %p138 = scmp.le.s32.totalorder 1, %s9
    %p139 = scmp.lt.s32.totalorder %s9, 3
    %p140 = pnand %p138, %p139
    %p141 = pneg %p140
    // Predicated region
    $region29: #{colorization_net.29} parent=5 // pred_check
      _
    $region30: #{colorization_net.29} parent=5 // pred_check_branch
      %143 = sbr.rel (%p140) target = $region32
    $region31: #{colorization_net.29} parent=5 // pred_region
      %s144 = ssub.s32 %s9, 1
      %s145 = smul.u32 32, %s14
      %p146 = scmp.lt.s32.totalorder %s145, 63
      %s147 = scalar_select %p146, %s145, 63
      %s148 = smul.addr %s147, 9
      %s149 = smul.addr %s148, 4
      %s150 = scalar_lea.vmem %s0, %s149
      %p151 = pneg %p35
      %p152 = pneg %p32
      %p153 = pneg %p56
      %p154 = pneg %p53
      %p155 = pneg %p77
      %p156 = pneg %p74
      %p157 = pneg %p103
      %p158 = pneg %p100
      %s159 = smul.u32 32, %s14
      %p160 = scmp.lt.s32.totalorder %s159, 63
      %s161 = scalar_select %p160, %s159, 63
      %s162 = smul.addr %s161, 4
      %s163 = scalar_lea.vmem %s3, %s162
      %s164 = smul.u32 32, %s14
      %p165 = scmp.lt.s32.totalorder %s164, 63
      %s166 = scalar_select %p165, %s164, 63
      %s167 = smul.addr %s166, 9
      %s168 = smul.addr %s167, 4
      %s169 = scalar_lea.vmem %s0, %s168
      %s170 = smul.u32 32, %s14
      %s171 = smul.u32 32, %s14
      %p172 = scmp.lt.s32.totalorder %s171, 63
      %s173 = scalar_select %p172, %s171, 63
      %s174 = smul.addr %s173, 4
      %s175 = scalar_lea.vmem %s3, %s174
      %s176 = smul.u32 32, %s14
      %v178 = vld [vmem:[%s169] sm:$0xff]
      %v179 = vld [vmem:[%s169 + $0x8] sm:$0xff]
      %v180 = vld [vmem:[%s169 + $0x10] sm:$0xff]
      %v181 = vld [vmem:[%s169 + $0x18] sm:$0xff]
      %v182 = vld [vmem:[%s169 + $0x20] sm:$0xf]
      %v183 = vld [vmem:[%s169 + $0x24] sm:$0xff]
      %v184 = vld [vmem:[%s169 + $0x2c] sm:$0xff]
      %v185 = vld [vmem:[%s169 + $0x34] sm:$0xff]
      %v186 = vld [vmem:[%s169 + $0x3c] sm:$0xff]
      %v187 = vld [vmem:[%s169 + $0x44] sm:$0xf]
      %v188 = vld [vmem:[%s169 + $0x48] sm:$0xff]
      %v189 = vld [vmem:[%s169 + $0x50] sm:$0xff]
      %v190 = vld [vmem:[%s169 + $0x58] sm:$0xff]
      %v191 = vld [vmem:[%s169 + $0x60] sm:$0xff]
      %v192 = vld [vmem:[%s169 + $0x68] sm:$0xf]
      %v193 = vld [vmem:[%s169 + $0x6c] sm:$0xff]
      %v194 = vld [vmem:[%s169 + $0x74] sm:$0xff]
      %v195 = vld [vmem:[%s169 + $0x7c] sm:$0xff]
      %v196 = vld [vmem:[%s169 + $0x84] sm:$0xff]
      %v197 = vld [vmem:[%s169 + $0x8c] sm:$0xf]
      %v198 = vld [vmem:[%s169 + $0x90] sm:$0xff]
      %v199 = vld [vmem:[%s169 + $0x98] sm:$0xff]
      %v200 = vld [vmem:[%s169 + $0xa0] sm:$0xff]
      %v201 = vld [vmem:[%s169 + $0xa8] sm:$0xff]
      %v202 = vld [vmem:[%s169 + $0xb0] sm:$0xf]
      %v203 = vld [vmem:[%s169 + $0xb4] sm:$0xff]
      %v204 = vld [vmem:[%s169 + $0xbc] sm:$0xff]
      %v205 = vld [vmem:[%s169 + $0xc4] sm:$0xff]
      %v206 = vld [vmem:[%s169 + $0xcc] sm:$0xff]
      %v207 = vld [vmem:[%s169 + $0xd4] sm:$0xf]
      %v208 = vld [vmem:[%s169 + $0xd8] sm:$0xff]
      %v209 = vld [vmem:[%s169 + $0xe0] sm:$0xff]
      %v210 = vld [vmem:[%s169 + $0xe8] sm:$0xff]
      %v211 = vld [vmem:[%s169 + $0xf0] sm:$0xff]
      %v212 = vld [vmem:[%s169 + $0xf8] sm:$0xf]
      %v213 = vld [vmem:[%s169 + $0xfc] sm:$0xff]
      %v214 = vld [vmem:[%s169 + $0x104] sm:$0xff]
      %v215 = vld [vmem:[%s169 + $0x10c] sm:$0xff]
      %v216 = vld [vmem:[%s169 + $0x114] sm:$0xff]
      %v217 = vld [vmem:[%s169 + $0x11c] sm:$0xf]
      %v218 = vld [vmem:[%s169 + $0x120] sm:$0xff]
      %v219 = vld [vmem:[%s169 + $0x128] sm:$0xff]
      %v220 = vld [vmem:[%s169 + $0x130] sm:$0xff]
      %v221 = vld [vmem:[%s169 + $0x138] sm:$0xff]
      %v222 = vld [vmem:[%s169 + $0x140] sm:$0xf]
      %v223 = vld [vmem:[%s169 + $0x144] sm:$0xff]
      %v224 = vld [vmem:[%s169 + $0x14c] sm:$0xff]
      %v225 = vld [vmem:[%s169 + $0x154] sm:$0xff]
      %v226 = vld [vmem:[%s169 + $0x15c] sm:$0xff]
      %v227 = vld [vmem:[%s169 + $0x164] sm:$0xf]
      %v228 = vld [vmem:[%s169 + $0x168] sm:$0xff]
      %v229 = vld [vmem:[%s169 + $0x170] sm:$0xff]
      %v230 = vld [vmem:[%s169 + $0x178] sm:$0xff]
      %v231 = vld [vmem:[%s169 + $0x180] sm:$0xff]
      %v232 = vld [vmem:[%s169 + $0x188] sm:$0xf]
      %v233 = vld [vmem:[%s169 + $0x18c] sm:$0xff]
      %v234 = vld [vmem:[%s169 + $0x194] sm:$0xff]
      %v235 = vld [vmem:[%s169 + $0x19c] sm:$0xff]
      %v236 = vld [vmem:[%s169 + $0x1a4] sm:$0xff]
      %v237 = vld [vmem:[%s169 + $0x1ac] sm:$0xf]
      %v238 = vld [vmem:[%s169 + $0x1b0] sm:$0xff]
      %v239 = vld [vmem:[%s169 + $0x1b8] sm:$0xff]
      %v240 = vld [vmem:[%s169 + $0x1c0] sm:$0xff]
      %v241 = vld [vmem:[%s169 + $0x1c8] sm:$0xff]
      %v242 = vld [vmem:[%s169 + $0x1d0] sm:$0xf]
      %v243 = vld [vmem:[%s169 + $0x1d4] sm:$0xff]
      %v244 = vld [vmem:[%s169 + $0x1dc] sm:$0xff]
      %v245 = vld [vmem:[%s169 + $0x1e4] sm:$0xff]
      %v246 = vld [vmem:[%s169 + $0x1ec] sm:$0xff]
      %v247 = vld [vmem:[%s169 + $0x1f4] sm:$0xf]
      %v248 = vld [vmem:[%s169 + $0x1f8] sm:$0xff]
      %v249 = vld [vmem:[%s169 + $0x200] sm:$0xff]
      %v250 = vld [vmem:[%s169 + $0x208] sm:$0xff]
      %v251 = vld [vmem:[%s169 + $0x210] sm:$0xff]
      %v252 = vld [vmem:[%s169 + $0x218] sm:$0xf]
      %v253 = vld [vmem:[%s169 + $0x21c] sm:$0xff]
      %v254 = vld [vmem:[%s169 + $0x224] sm:$0xff]
      %v255 = vld [vmem:[%s169 + $0x22c] sm:$0xff]
      %v256 = vld [vmem:[%s169 + $0x234] sm:$0xff]
      %v257 = vld [vmem:[%s169 + $0x23c] sm:$0xf]
      %v258 = vld [vmem:[%s169 + $0x240] sm:$0xff]
      %v259 = vld [vmem:[%s169 + $0x248] sm:$0xff]
      %v260 = vld [vmem:[%s169 + $0x250] sm:$0xff]
      %v261 = vld [vmem:[%s169 + $0x258] sm:$0xff]
      %v262 = vld [vmem:[%s169 + $0x260] sm:$0xf]
      %v263 = vld [vmem:[%s169 + $0x264] sm:$0xff]
      %v264 = vld [vmem:[%s169 + $0x26c] sm:$0xff]
      %v265 = vld [vmem:[%s169 + $0x274] sm:$0xff]
      %v266 = vld [vmem:[%s169 + $0x27c] sm:$0xff]
      %v267 = vld [vmem:[%s169 + $0x284] sm:$0xf]
      %v268 = vld [vmem:[%s169 + $0x288] sm:$0xff]
      %v269 = vld [vmem:[%s169 + $0x290] sm:$0xff]
      %v270 = vld [vmem:[%s169 + $0x298] sm:$0xff]
      %v271 = vld [vmem:[%s169 + $0x2a0] sm:$0xff]
      %v272 = vld [vmem:[%s169 + $0x2a8] sm:$0xf]
      %v273 = vld [vmem:[%s169 + $0x2ac] sm:$0xff]
      %v274 = vld [vmem:[%s169 + $0x2b4] sm:$0xff]
      %v275 = vld [vmem:[%s169 + $0x2bc] sm:$0xff]
      %v276 = vld [vmem:[%s169 + $0x2c4] sm:$0xff]
      %v277 = vld [vmem:[%s169 + $0x2cc] sm:$0xf]
      %v278 = vld [vmem:[%s169 + $0x2d0] sm:$0xff]
      %v279 = vld [vmem:[%s169 + $0x2d8] sm:$0xff]
      %v280 = vld [vmem:[%s169 + $0x2e0] sm:$0xff]
      %v281 = vld [vmem:[%s169 + $0x2e8] sm:$0xff]
      %v282 = vld [vmem:[%s169 + $0x2f0] sm:$0xf]
      %v283 = vld [vmem:[%s169 + $0x2f4] sm:$0xff]
      %v284 = vld [vmem:[%s169 + $0x2fc] sm:$0xff]
      %v285 = vld [vmem:[%s169 + $0x304] sm:$0xff]
      %v286 = vld [vmem:[%s169 + $0x30c] sm:$0xff]
      %v287 = vld [vmem:[%s169 + $0x314] sm:$0xf]
      %v288 = vld [vmem:[%s169 + $0x318] sm:$0xff]
      %v289 = vld [vmem:[%s169 + $0x320] sm:$0xff]
      %v290 = vld [vmem:[%s169 + $0x328] sm:$0xff]
      %v291 = vld [vmem:[%s169 + $0x330] sm:$0xff]
      %v292 = vld [vmem:[%s169 + $0x338] sm:$0xf]
      %v293 = vld [vmem:[%s169 + $0x33c] sm:$0xff]
      %v294 = vld [vmem:[%s169 + $0x344] sm:$0xff]
      %v295 = vld [vmem:[%s169 + $0x34c] sm:$0xff]
      %v296 = vld [vmem:[%s169 + $0x354] sm:$0xff]
      %v297 = vld [vmem:[%s169 + $0x35c] sm:$0xf]
      %v298 = vld [vmem:[%s169 + $0x360] sm:$0xff]
      %v299 = vld [vmem:[%s169 + $0x368] sm:$0xff]
      %v300 = vld [vmem:[%s169 + $0x370] sm:$0xff]
      %v301 = vld [vmem:[%s169 + $0x378] sm:$0xff]
      %v302 = vld [vmem:[%s169 + $0x380] sm:$0xf]
      %v303 = vld [vmem:[%s169 + $0x384] sm:$0xff]
      %v304 = vld [vmem:[%s169 + $0x38c] sm:$0xff]
      %v305 = vld [vmem:[%s169 + $0x394] sm:$0xff]
      %v306 = vld [vmem:[%s169 + $0x39c] sm:$0xff]
      %v307 = vld [vmem:[%s169 + $0x3a4] sm:$0xf]
      %v308 = vld [vmem:[%s169 + $0x3a8] sm:$0xff]
      %v309 = vld [vmem:[%s169 + $0x3b0] sm:$0xff]
      %v310 = vld [vmem:[%s169 + $0x3b8] sm:$0xff]
      %v311 = vld [vmem:[%s169 + $0x3c0] sm:$0xff]
      %v312 = vld [vmem:[%s169 + $0x3c8] sm:$0xf]
      %v313 = vld [vmem:[%s169 + $0x3cc] sm:$0xff]
      %v314 = vld [vmem:[%s169 + $0x3d4] sm:$0xff]
      %v315 = vld [vmem:[%s169 + $0x3dc] sm:$0xff]
      %v316 = vld [vmem:[%s169 + $0x3e4] sm:$0xff]
      %v317 = vld [vmem:[%s169 + $0x3ec] sm:$0xf]
      %v318 = vld [vmem:[%s169 + $0x3f0] sm:$0xff]
      %v319 = vld [vmem:[%s169 + $0x3f8] sm:$0xff]
      %v320 = vld [vmem:[%s169 + $0x400] sm:$0xff]
      %v321 = vld [vmem:[%s169 + $0x408] sm:$0xff]
      %v322 = vld [vmem:[%s169 + $0x410] sm:$0xf]
      %v323 = vld [vmem:[%s169 + $0x414] sm:$0xff]
      %v324 = vld [vmem:[%s169 + $0x41c] sm:$0xff]
      %v325 = vld [vmem:[%s169 + $0x424] sm:$0xff]
      %v326 = vld [vmem:[%s169 + $0x42c] sm:$0xff]
      %v327 = vld [vmem:[%s169 + $0x434] sm:$0xf]
      %v328 = vld [vmem:[%s169 + $0x438] sm:$0xff]
      %v329 = vld [vmem:[%s169 + $0x440] sm:$0xff]
      %v330 = vld [vmem:[%s169 + $0x448] sm:$0xff]
      %v331 = vld [vmem:[%s169 + $0x450] sm:$0xff]
      %v332 = vld [vmem:[%s169 + $0x458] sm:$0xf]
      %v333 = vld [vmem:[%s169 + $0x45c] sm:$0xff]
      %v334 = vld [vmem:[%s169 + $0x464] sm:$0xff]
      %v335 = vld [vmem:[%s169 + $0x46c] sm:$0xff]
      %v336 = vld [vmem:[%s169 + $0x474] sm:$0xff]
      %v337 = vld [vmem:[%s169 + $0x47c] sm:$0xf]
      %v338 = vld [vmem:[%s1] sm:$0xf]
      %v339 = vld [vmem:[%s1 + $0x4] sm:$0xf]
      %v340 = vld [vmem:[%s1 + $0x8] sm:$0xf]
      %v341 = vld [vmem:[%s1 + $0xc] sm:$0xf]
      %v342 = vld [vmem:[%s1 + $0x10] sm:$0xf]
      %v343 = vld [vmem:[%s1 + $0x14] sm:$0xf]
      %v344 = vld [vmem:[%s1 + $0x18] sm:$0xf]
      %v345 = vld [vmem:[%s1 + $0x1c] sm:$0xf]
      %v346 = vld [vmem:[%s1 + $0x20] sm:$0xf]
      %v347 = vld [vmem:[%s1 + $0x24] sm:$0xf]
      %v348 = vld [vmem:[%s1 + $0x28] sm:$0xf]
      %v349 = vld [vmem:[%s1 + $0x2c] sm:$0xf]
      %v350 = vld [vmem:[%s1 + $0x30] sm:$0xf]
      %v351 = vld [vmem:[%s1 + $0x34] sm:$0xf]
      %v352 = vld [vmem:[%s1 + $0x38] sm:$0xf]
      %v353 = vld [vmem:[%s1 + $0x3c] sm:$0xf]
      %v354 = vld [vmem:[%s1 + $0x40] sm:$0xf]
      %v355 = vld [vmem:[%s1 + $0x44] sm:$0xf]
      %v356 = vld [vmem:[%s1 + $0x48] sm:$0xf]
      %v357 = vld [vmem:[%s1 + $0x4c] sm:$0xf]
      %v358 = vld [vmem:[%s1 + $0x50] sm:$0xf]
      %v359 = vld [vmem:[%s1 + $0x54] sm:$0xf]
      %v360 = vld [vmem:[%s1 + $0x58] sm:$0xf]
      %v361 = vld [vmem:[%s1 + $0x5c] sm:$0xf]
      %v362 = vld [vmem:[%s1 + $0x60] sm:$0xf]
      %v363 = vld [vmem:[%s1 + $0x64] sm:$0xf]
      %v364 = vld [vmem:[%s1 + $0x68] sm:$0xf]
      %v365 = vld [vmem:[%s1 + $0x6c] sm:$0xf]
      %v366 = vld [vmem:[%s1 + $0x70] sm:$0xf]
      %v367 = vld [vmem:[%s1 + $0x74] sm:$0xf]
      %v368 = vld [vmem:[%s1 + $0x78] sm:$0xf]
      %v369 = vld [vmem:[%s1 + $0x7c] sm:$0xf]
      %v370 = vld [vmem:[%s1 + $0x80] sm:$0xf]
      %v371 = vld [vmem:[%s1 + $0x84] sm:$0xf]
      %v372 = vld [vmem:[%s1 + $0x88] sm:$0xf]
      %v373 = vld [vmem:[%s1 + $0x8c] sm:$0xf]
      %v374 = vld [vmem:[%s1 + $0x90] sm:$0xf]
      %v375 = vld [vmem:[%s1 + $0x94] sm:$0xf]
      %v376 = vld [vmem:[%s1 + $0x98] sm:$0xf]
      %v377 = vld [vmem:[%s1 + $0x9c] sm:$0xf]
      %v378 = vld [vmem:[%s1 + $0xa0] sm:$0xf]
      %v379 = vld [vmem:[%s1 + $0xa4] sm:$0xf]
      %v380 = vld [vmem:[%s1 + $0xa8] sm:$0xf]
      %v381 = vld [vmem:[%s1 + $0xac] sm:$0xf]
      %v382 = vld [vmem:[%s1 + $0xb0] sm:$0xf]
      %v383 = vld [vmem:[%s1 + $0xb4] sm:$0xf]
      %v384 = vld [vmem:[%s1 + $0xb8] sm:$0xf]
      %v385 = vld [vmem:[%s1 + $0xbc] sm:$0xf]
      %v386 = vld [vmem:[%s1 + $0xc0] sm:$0xf]
      %v387 = vld [vmem:[%s1 + $0xc4] sm:$0xf]
      %v388 = vld [vmem:[%s1 + $0xc8] sm:$0xf]
      %v389 = vld [vmem:[%s1 + $0xcc] sm:$0xf]
      %v390 = vld [vmem:[%s1 + $0xd0] sm:$0xf]
      %v391 = vld [vmem:[%s1 + $0xd4] sm:$0xf]
      %v392 = vld [vmem:[%s1 + $0xd8] sm:$0xf]
      %v393 = vld [vmem:[%s1 + $0xdc] sm:$0xf]
      %v394 = vld [vmem:[%s1 + $0xe0] sm:$0xf]
      %v395 = vld [vmem:[%s1 + $0xe4] sm:$0xf]
      %v396 = vld [vmem:[%s1 + $0xe8] sm:$0xf]
      %v397 = vld [vmem:[%s1 + $0xec] sm:$0xf]
      %v398 = vld [vmem:[%s1 + $0xf0] sm:$0xf]
      %v399 = vld [vmem:[%s1 + $0xf4] sm:$0xf]
      %v400 = vld [vmem:[%s1 + $0xf8] sm:$0xf]
      %v401 = vld [vmem:[%s1 + $0xfc] sm:$0xf]
      %v402 = vld [vmem:[%s1 + $0x100] sm:$0xf]
      %v403 = vld [vmem:[%s1 + $0x104] sm:$0xf]
      %v404 = vld [vmem:[%s1 + $0x108] sm:$0xf]
      %v405 = vld [vmem:[%s1 + $0x10c] sm:$0xf]
      %v406 = vld [vmem:[%s1 + $0x110] sm:$0xf]
      %v407 = vld [vmem:[%s1 + $0x114] sm:$0xf]
      %v408 = vld [vmem:[%s1 + $0x118] sm:$0xf]
      %v409 = vld [vmem:[%s1 + $0x11c] sm:$0xf]
      %v410 = vld [vmem:[%s1 + $0x120] sm:$0xf]
      %v411 = vld [vmem:[%s1 + $0x124] sm:$0xf]
      %v412 = vld [vmem:[%s1 + $0x128] sm:$0xf]
      %v413 = vld [vmem:[%s1 + $0x12c] sm:$0xf]
      %v414 = vld [vmem:[%s1 + $0x130] sm:$0xf]
      %v415 = vld [vmem:[%s1 + $0x134] sm:$0xf]
      %v416 = vld [vmem:[%s1 + $0x138] sm:$0xf]
      %v417 = vld [vmem:[%s1 + $0x13c] sm:$0xf]
      %v418 = vld [vmem:[%s1 + $0x140] sm:$0xf]
      %v419 = vld [vmem:[%s1 + $0x144] sm:$0xf]
      %v420 = vld [vmem:[%s1 + $0x148] sm:$0xf]
      %v421 = vld [vmem:[%s1 + $0x14c] sm:$0xf]
      %v422 = vld [vmem:[%s1 + $0x150] sm:$0xf]
      %v423 = vld [vmem:[%s1 + $0x154] sm:$0xf]
      %v424 = vld [vmem:[%s1 + $0x158] sm:$0xf]
      %v425 = vld [vmem:[%s1 + $0x15c] sm:$0xf]
      %v426 = vld [vmem:[%s1 + $0x160] sm:$0xf]
      %v427 = vld [vmem:[%s1 + $0x164] sm:$0xf]
      %v428 = vld [vmem:[%s1 + $0x168] sm:$0xf]
      %v429 = vld [vmem:[%s1 + $0x16c] sm:$0xf]
      %v430 = vld [vmem:[%s1 + $0x170] sm:$0xf]
      %v431 = vld [vmem:[%s1 + $0x174] sm:$0xf]
      %v432 = vld [vmem:[%s1 + $0x178] sm:$0xf]
      %v433 = vld [vmem:[%s1 + $0x17c] sm:$0xf]
      %v434 = vld [vmem:[%s1 + $0x180] sm:$0xf]
      %v435 = vld [vmem:[%s1 + $0x184] sm:$0xf]
      %v436 = vld [vmem:[%s1 + $0x188] sm:$0xf]
      %v437 = vld [vmem:[%s1 + $0x18c] sm:$0xf]
      %v438 = vld [vmem:[%s1 + $0x190] sm:$0xf]
      %v439 = vld [vmem:[%s1 + $0x194] sm:$0xf]
      %v440 = vld [vmem:[%s1 + $0x198] sm:$0xf]
      %v441 = vld [vmem:[%s1 + $0x19c] sm:$0xf]
      %v442 = vld [vmem:[%s1 + $0x1a0] sm:$0xf]
      %v443 = vld [vmem:[%s1 + $0x1a4] sm:$0xf]
      %v444 = vld [vmem:[%s1 + $0x1a8] sm:$0xf]
      %v445 = vld [vmem:[%s1 + $0x1ac] sm:$0xf]
      %v446 = vld [vmem:[%s1 + $0x1b0] sm:$0xf]
      %v447 = vld [vmem:[%s1 + $0x1b4] sm:$0xf]
      %v448 = vld [vmem:[%s1 + $0x1b8] sm:$0xf]
      %v449 = vld [vmem:[%s1 + $0x1bc] sm:$0xf]
      %v450 = vld [vmem:[%s1 + $0x1c0] sm:$0xf]
      %v451 = vld [vmem:[%s1 + $0x1c4] sm:$0xf]
      %v452 = vld [vmem:[%s1 + $0x1c8] sm:$0xf]
      %v453 = vld [vmem:[%s1 + $0x1cc] sm:$0xf]
      %v454 = vld [vmem:[%s1 + $0x1d0] sm:$0xf]
      %v455 = vld [vmem:[%s1 + $0x1d4] sm:$0xf]
      %v456 = vld [vmem:[%s1 + $0x1d8] sm:$0xf]
      %v457 = vld [vmem:[%s1 + $0x1dc] sm:$0xf]
      %v458 = vld [vmem:[%s1 + $0x1e0] sm:$0xf]
      %v459 = vld [vmem:[%s1 + $0x1e4] sm:$0xf]
      %v460 = vld [vmem:[%s1 + $0x1e8] sm:$0xf]
      %v461 = vld [vmem:[%s1 + $0x1ec] sm:$0xf]
      %v462 = vld [vmem:[%s1 + $0x1f0] sm:$0xf]
      %v463 = vld [vmem:[%s1 + $0x1f4] sm:$0xf]
      %v464 = vld [vmem:[%s1 + $0x1f8] sm:$0xf]
      %v465 = vld [vmem:[%s1 + $0x1fc] sm:$0xf]
      %v466 = vld [vmem:[%s1 + $0x200] sm:$0xf]
      %v467 = vld [vmem:[%s1 + $0x204] sm:$0xf]
      %v468 = vld [vmem:[%s1 + $0x208] sm:$0xf]
      %v469 = vld [vmem:[%s1 + $0x20c] sm:$0xf]
      %v470 = vld [vmem:[%s1 + $0x210] sm:$0xf]
      %v471 = vld [vmem:[%s1 + $0x214] sm:$0xf]
      %v472 = vld [vmem:[%s1 + $0x218] sm:$0xf]
      %v473 = vld [vmem:[%s1 + $0x21c] sm:$0xf]
      %v474 = vld [vmem:[%s1 + $0x220] sm:$0xf]
      %v475 = vld [vmem:[%s1 + $0x224] sm:$0xf]
      %v476 = vld [vmem:[%s1 + $0x228] sm:$0xf]
      %v477 = vld [vmem:[%s1 + $0x22c] sm:$0xf]
      %v478 = vld [vmem:[%s1 + $0x230] sm:$0xf]
      %v479 = vld [vmem:[%s1 + $0x234] sm:$0xf]
      %v480 = vld [vmem:[%s1 + $0x238] sm:$0xf]
      %v481 = vld [vmem:[%s1 + $0x23c] sm:$0xf]
      %v482 = vld [vmem:[%s2] sm:$0x1]
      %v484 = vlaneseq
      %v485 = vshrl.u32 %v484, 7
      %v486 = vsub.s32 0, %v485
      %v487 = vrot.slane %v482, %v486
      %v649 = vunpack.c.l.b16 %v178
      %v650 = vunpack.c.h.b16 %v178
      %v651 = vunpack.c.l.b16 %v179
      %v652 = vunpack.c.h.b16 %v179
      %v653 = vunpack.c.l.b16 %v180
      %v654 = vunpack.c.h.b16 %v180
      %v655 = vunpack.c.l.b16 %v181
      %v656 = vunpack.c.h.b16 %v181
      %v657 = vunpack.c.l.b16 %v182
      %v658 = vunpack.c.l.b16 %v183
      %v659 = vunpack.c.h.b16 %v183
      %v660 = vunpack.c.l.b16 %v184
      %v661 = vunpack.c.h.b16 %v184
      %v662 = vunpack.c.l.b16 %v185
      %v663 = vunpack.c.h.b16 %v185
      %v664 = vunpack.c.l.b16 %v186
      %v665 = vunpack.c.h.b16 %v186
      %v666 = vunpack.c.l.b16 %v187
      %v667 = vunpack.c.l.b16 %v188
      %v668 = vunpack.c.h.b16 %v188
      %v669 = vunpack.c.l.b16 %v189
      %v670 = vunpack.c.h.b16 %v189
      %v671 = vunpack.c.l.b16 %v190
      %v672 = vunpack.c.h.b16 %v190
      %v673 = vunpack.c.l.b16 %v191
      %v674 = vunpack.c.h.b16 %v191
      %v675 = vunpack.c.l.b16 %v192
      %v676 = vunpack.c.l.b16 %v193
      %v677 = vunpack.c.h.b16 %v193
      %v678 = vunpack.c.l.b16 %v194
      %v679 = vunpack.c.h.b16 %v194
      %v680 = vunpack.c.l.b16 %v195
      %v681 = vunpack.c.h.b16 %v195
      %v682 = vunpack.c.l.b16 %v196
      %v683 = vunpack.c.h.b16 %v196
      %v684 = vunpack.c.l.b16 %v197
      %v685 = vunpack.c.l.b16 %v198
      %v686 = vunpack.c.h.b16 %v198
      %v687 = vunpack.c.l.b16 %v199
      %v688 = vunpack.c.h.b16 %v199
      %v689 = vunpack.c.l.b16 %v200
      %v690 = vunpack.c.h.b16 %v200
      %v691 = vunpack.c.l.b16 %v201
      %v692 = vunpack.c.h.b16 %v201
      %v693 = vunpack.c.l.b16 %v202
      %v694 = vunpack.c.l.b16 %v203
      %v695 = vunpack.c.h.b16 %v203
      %v696 = vunpack.c.l.b16 %v204
      %v697 = vunpack.c.h.b16 %v204
      %v698 = vunpack.c.l.b16 %v205
      %v699 = vunpack.c.h.b16 %v205
      %v700 = vunpack.c.l.b16 %v206
      %v701 = vunpack.c.h.b16 %v206
      %v702 = vunpack.c.l.b16 %v207
      %v703 = vunpack.c.l.b16 %v208
      %v704 = vunpack.c.h.b16 %v208
      %v705 = vunpack.c.l.b16 %v209
      %v706 = vunpack.c.h.b16 %v209
      %v707 = vunpack.c.l.b16 %v210
      %v708 = vunpack.c.h.b16 %v210
      %v709 = vunpack.c.l.b16 %v211
      %v710 = vunpack.c.h.b16 %v211
      %v711 = vunpack.c.l.b16 %v212
      %v712 = vunpack.c.l.b16 %v213
      %v713 = vunpack.c.h.b16 %v213
      %v714 = vunpack.c.l.b16 %v214
      %v715 = vunpack.c.h.b16 %v214
      %v716 = vunpack.c.l.b16 %v215
      %v717 = vunpack.c.h.b16 %v215
      %v718 = vunpack.c.l.b16 %v216
      %v719 = vunpack.c.h.b16 %v216
      %v720 = vunpack.c.l.b16 %v217
      %v721 = vunpack.c.l.b16 %v218
      %v722 = vunpack.c.h.b16 %v218
      %v723 = vunpack.c.l.b16 %v219
      %v724 = vunpack.c.h.b16 %v219
      %v725 = vunpack.c.l.b16 %v220
      %v726 = vunpack.c.h.b16 %v220
      %v727 = vunpack.c.l.b16 %v221
      %v728 = vunpack.c.h.b16 %v221
      %v729 = vunpack.c.l.b16 %v222
      %v730 = vunpack.c.l.b16 %v223
      %v731 = vunpack.c.h.b16 %v223
      %v732 = vunpack.c.l.b16 %v224
      %v733 = vunpack.c.h.b16 %v224
      %v734 = vunpack.c.l.b16 %v225
      %v735 = vunpack.c.h.b16 %v225
      %v736 = vunpack.c.l.b16 %v226
      %v737 = vunpack.c.h.b16 %v226
      %v738 = vunpack.c.l.b16 %v227
      %v739 = vunpack.c.l.b16 %v228
      %v740 = vunpack.c.h.b16 %v228
      %v741 = vunpack.c.l.b16 %v229
      %v742 = vunpack.c.h.b16 %v229
      %v743 = vunpack.c.l.b16 %v230
      %v744 = vunpack.c.h.b16 %v230
      %v745 = vunpack.c.l.b16 %v231
      %v746 = vunpack.c.h.b16 %v231
      %v747 = vunpack.c.l.b16 %v232
      %v748 = vunpack.c.l.b16 %v233
      %v749 = vunpack.c.h.b16 %v233
      %v750 = vunpack.c.l.b16 %v234
      %v751 = vunpack.c.h.b16 %v234
      %v752 = vunpack.c.l.b16 %v235
      %v753 = vunpack.c.h.b16 %v235
      %v754 = vunpack.c.l.b16 %v236
      %v755 = vunpack.c.h.b16 %v236
      %v756 = vunpack.c.l.b16 %v237
      %v757 = vunpack.c.l.b16 %v238
      %v758 = vunpack.c.h.b16 %v238
      %v759 = vunpack.c.l.b16 %v239
      %v760 = vunpack.c.h.b16 %v239
      %v761 = vunpack.c.l.b16 %v240
      %v762 = vunpack.c.h.b16 %v240
      %v763 = vunpack.c.l.b16 %v241
      %v764 = vunpack.c.h.b16 %v241
      %v765 = vunpack.c.l.b16 %v242
      %v766 = vunpack.c.l.b16 %v243
      %v767 = vunpack.c.h.b16 %v243
      %v768 = vunpack.c.l.b16 %v244
      %v769 = vunpack.c.h.b16 %v244
      %v770 = vunpack.c.l.b16 %v245
      %v771 = vunpack.c.h.b16 %v245
      %v772 = vunpack.c.l.b16 %v246
      %v773 = vunpack.c.h.b16 %v246
      %v774 = vunpack.c.l.b16 %v247
      %v775 = vunpack.c.l.b16 %v248
      %v776 = vunpack.c.h.b16 %v248
      %v777 = vunpack.c.l.b16 %v249
      %v778 = vunpack.c.h.b16 %v249
      %v779 = vunpack.c.l.b16 %v250
      %v780 = vunpack.c.h.b16 %v250
      %v781 = vunpack.c.l.b16 %v251
      %v782 = vunpack.c.h.b16 %v251
      %v783 = vunpack.c.l.b16 %v252
      %v784 = vunpack.c.l.b16 %v253
      %v785 = vunpack.c.h.b16 %v253
      %v786 = vunpack.c.l.b16 %v254
      %v787 = vunpack.c.h.b16 %v254
      %v788 = vunpack.c.l.b16 %v255
      %v789 = vunpack.c.h.b16 %v255
      %v790 = vunpack.c.l.b16 %v256
      %v791 = vunpack.c.h.b16 %v256
      %v792 = vunpack.c.l.b16 %v257
      %v793 = vunpack.c.l.b16 %v258
      %v794 = vunpack.c.h.b16 %v258
      %v795 = vunpack.c.l.b16 %v259
      %v796 = vunpack.c.h.b16 %v259
      %v797 = vunpack.c.l.b16 %v260
      %v798 = vunpack.c.h.b16 %v260
      %v799 = vunpack.c.l.b16 %v261
      %v800 = vunpack.c.h.b16 %v261
      %v801 = vunpack.c.l.b16 %v262
      %v802 = vunpack.c.l.b16 %v263
      %v803 = vunpack.c.h.b16 %v263
      %v804 = vunpack.c.l.b16 %v264
      %v805 = vunpack.c.h.b16 %v264
      %v806 = vunpack.c.l.b16 %v265
      %v807 = vunpack.c.h.b16 %v265
      %v808 = vunpack.c.l.b16 %v266
      %v809 = vunpack.c.h.b16 %v266
      %v810 = vunpack.c.l.b16 %v267
      %v811 = vunpack.c.l.b16 %v268
      %v812 = vunpack.c.h.b16 %v268
      %v813 = vunpack.c.l.b16 %v269
      %v814 = vunpack.c.h.b16 %v269
      %v815 = vunpack.c.l.b16 %v270
      %v816 = vunpack.c.h.b16 %v270
      %v817 = vunpack.c.l.b16 %v271
      %v818 = vunpack.c.h.b16 %v271
      %v819 = vunpack.c.l.b16 %v272
      %v820 = vunpack.c.l.b16 %v273
      %v821 = vunpack.c.h.b16 %v273
      %v822 = vunpack.c.l.b16 %v274
      %v823 = vunpack.c.h.b16 %v274
      %v824 = vunpack.c.l.b16 %v275
      %v825 = vunpack.c.h.b16 %v275
      %v826 = vunpack.c.l.b16 %v276
      %v827 = vunpack.c.h.b16 %v276
      %v828 = vunpack.c.l.b16 %v277
      %v829 = vunpack.c.l.b16 %v278
      %v830 = vunpack.c.h.b16 %v278
      %v831 = vunpack.c.l.b16 %v279
      %v832 = vunpack.c.h.b16 %v279
      %v833 = vunpack.c.l.b16 %v280
      %v834 = vunpack.c.h.b16 %v280
      %v835 = vunpack.c.l.b16 %v281
      %v836 = vunpack.c.h.b16 %v281
      %v837 = vunpack.c.l.b16 %v282
      %v838 = vunpack.c.l.b16 %v283
      %v839 = vunpack.c.h.b16 %v283
      %v840 = vunpack.c.l.b16 %v284
      %v841 = vunpack.c.h.b16 %v284
      %v842 = vunpack.c.l.b16 %v285
      %v843 = vunpack.c.h.b16 %v285
      %v844 = vunpack.c.l.b16 %v286
      %v845 = vunpack.c.h.b16 %v286
      %v846 = vunpack.c.l.b16 %v287
      %v847 = vunpack.c.l.b16 %v288
      %v848 = vunpack.c.h.b16 %v288
      %v849 = vunpack.c.l.b16 %v289
      %v850 = vunpack.c.h.b16 %v289
      %v851 = vunpack.c.l.b16 %v290
      %v852 = vunpack.c.h.b16 %v290
      %v853 = vunpack.c.l.b16 %v291
      %v854 = vunpack.c.h.b16 %v291
      %v855 = vunpack.c.l.b16 %v292
      %v856 = vunpack.c.l.b16 %v293
      %v857 = vunpack.c.h.b16 %v293
      %v858 = vunpack.c.l.b16 %v294
      %v859 = vunpack.c.h.b16 %v294
      %v860 = vunpack.c.l.b16 %v295
      %v861 = vunpack.c.h.b16 %v295
      %v862 = vunpack.c.l.b16 %v296
      %v863 = vunpack.c.h.b16 %v296
      %v864 = vunpack.c.l.b16 %v297
      %v865 = vunpack.c.l.b16 %v298
      %v866 = vunpack.c.h.b16 %v298
      %v867 = vunpack.c.l.b16 %v299
      %v868 = vunpack.c.h.b16 %v299
      %v869 = vunpack.c.l.b16 %v300
      %v870 = vunpack.c.h.b16 %v300
      %v871 = vunpack.c.l.b16 %v301
      %v872 = vunpack.c.h.b16 %v301
      %v873 = vunpack.c.l.b16 %v302
      %v874 = vunpack.c.l.b16 %v303
      %v875 = vunpack.c.h.b16 %v303
      %v876 = vunpack.c.l.b16 %v304
      %v877 = vunpack.c.h.b16 %v304
      %v878 = vunpack.c.l.b16 %v305
      %v879 = vunpack.c.h.b16 %v305
      %v880 = vunpack.c.l.b16 %v306
      %v881 = vunpack.c.h.b16 %v306
      %v882 = vunpack.c.l.b16 %v307
      %v883 = vunpack.c.l.b16 %v308
      %v884 = vunpack.c.h.b16 %v308
      %v885 = vunpack.c.l.b16 %v309
      %v886 = vunpack.c.h.b16 %v309
      %v887 = vunpack.c.l.b16 %v310
      %v888 = vunpack.c.h.b16 %v310
      %v889 = vunpack.c.l.b16 %v311
      %v890 = vunpack.c.h.b16 %v311
      %v891 = vunpack.c.l.b16 %v312
      %v892 = vunpack.c.l.b16 %v313
      %v893 = vunpack.c.h.b16 %v313
      %v894 = vunpack.c.l.b16 %v314
      %v895 = vunpack.c.h.b16 %v314
      %v896 = vunpack.c.l.b16 %v315
      %v897 = vunpack.c.h.b16 %v315
      %v898 = vunpack.c.l.b16 %v316
      %v899 = vunpack.c.h.b16 %v316
      %v900 = vunpack.c.l.b16 %v317
      %v901 = vunpack.c.l.b16 %v318
      %v902 = vunpack.c.h.b16 %v318
      %v903 = vunpack.c.l.b16 %v319
      %v904 = vunpack.c.h.b16 %v319
      %v905 = vunpack.c.l.b16 %v320
      %v906 = vunpack.c.h.b16 %v320
      %v907 = vunpack.c.l.b16 %v321
      %v908 = vunpack.c.h.b16 %v321
      %v909 = vunpack.c.l.b16 %v322
      %v910 = vunpack.c.l.b16 %v323
      %v911 = vunpack.c.h.b16 %v323
      %v912 = vunpack.c.l.b16 %v324
      %v913 = vunpack.c.h.b16 %v324
      %v914 = vunpack.c.l.b16 %v325
      %v915 = vunpack.c.h.b16 %v325
      %v916 = vunpack.c.l.b16 %v326
      %v917 = vunpack.c.h.b16 %v326
      %v918 = vunpack.c.l.b16 %v327
      %v919 = vunpack.c.l.b16 %v328
      %v920 = vunpack.c.h.b16 %v328
      %v921 = vunpack.c.l.b16 %v329
      %v922 = vunpack.c.h.b16 %v329
      %v923 = vunpack.c.l.b16 %v330
      %v924 = vunpack.c.h.b16 %v330
      %v925 = vunpack.c.l.b16 %v331
      %v926 = vunpack.c.h.b16 %v331
      %v927 = vunpack.c.l.b16 %v332
      %v928 = vunpack.c.l.b16 %v333
      %v929 = vunpack.c.h.b16 %v333
      %v930 = vunpack.c.l.b16 %v334
      %v931 = vunpack.c.h.b16 %v334
      %v932 = vunpack.c.l.b16 %v335
      %v933 = vunpack.c.h.b16 %v335
      %v934 = vunpack.c.l.b16 %v336
      %v935 = vunpack.c.h.b16 %v336
      %v936 = vunpack.c.l.b16 %v337
      %v937 = vpack.c.b16 %v658, %v649
      %v938 = vpack.c.b16 %v659, %v650
      %v939 = vpack.c.b16 %v660, %v651
      %v940 = vpack.c.b16 %v661, %v652
      %v941 = vpack.c.b16 %v662, %v653
      %v942 = vpack.c.b16 %v663, %v654
      %v943 = vpack.c.b16 %v664, %v655
      %v944 = vpack.c.b16 %v665, %v656
      %v945 = vpack.c.b16 %v666, %v657
      %v946 = vpack.c.b16 %v676, %v667
      %v947 = vpack.c.b16 %v677, %v668
      %v948 = vpack.c.b16 %v678, %v669
      %v949 = vpack.c.b16 %v679, %v670
      %v950 = vpack.c.b16 %v680, %v671
      %v951 = vpack.c.b16 %v681, %v672
      %v952 = vpack.c.b16 %v682, %v673
      %v953 = vpack.c.b16 %v683, %v674
      %v954 = vpack.c.b16 %v684, %v675
      %v955 = vpack.c.b16 %v694, %v685
      %v956 = vpack.c.b16 %v695, %v686
      %v957 = vpack.c.b16 %v696, %v687
      %v958 = vpack.c.b16 %v697, %v688
      %v959 = vpack.c.b16 %v698, %v689
      %v960 = vpack.c.b16 %v699, %v690
      %v961 = vpack.c.b16 %v700, %v691
      %v962 = vpack.c.b16 %v701, %v692
      %v963 = vpack.c.b16 %v702, %v693
      %v964 = vpack.c.b16 %v712, %v703
      %v965 = vpack.c.b16 %v713, %v704
      %v966 = vpack.c.b16 %v714, %v705
      %v967 = vpack.c.b16 %v715, %v706
      %v968 = vpack.c.b16 %v716, %v707
      %v969 = vpack.c.b16 %v717, %v708
      %v970 = vpack.c.b16 %v718, %v709
      %v971 = vpack.c.b16 %v719, %v710
      %v972 = vpack.c.b16 %v720, %v711
      %v973 = vpack.c.b16 %v730, %v721
      %v974 = vpack.c.b16 %v731, %v722
      %v975 = vpack.c.b16 %v732, %v723
      %v976 = vpack.c.b16 %v733, %v724
      %v977 = vpack.c.b16 %v734, %v725
      %v978 = vpack.c.b16 %v735, %v726
      %v979 = vpack.c.b16 %v736, %v727
      %v980 = vpack.c.b16 %v737, %v728
      %v981 = vpack.c.b16 %v738, %v729
      %v982 = vpack.c.b16 %v748, %v739
      %v983 = vpack.c.b16 %v749, %v740
      %v984 = vpack.c.b16 %v750, %v741
      %v985 = vpack.c.b16 %v751, %v742
      %v986 = vpack.c.b16 %v752, %v743
      %v987 = vpack.c.b16 %v753, %v744
      %v988 = vpack.c.b16 %v754, %v745
      %v989 = vpack.c.b16 %v755, %v746
      %v990 = vpack.c.b16 %v756, %v747
      %v991 = vpack.c.b16 %v766, %v757
      %v992 = vpack.c.b16 %v767, %v758
      %v993 = vpack.c.b16 %v768, %v759
      %v994 = vpack.c.b16 %v769, %v760
      %v995 = vpack.c.b16 %v770, %v761
      %v996 = vpack.c.b16 %v771, %v762
      %v997 = vpack.c.b16 %v772, %v763
      %v998 = vpack.c.b16 %v773, %v764
      %v999 = vpack.c.b16 %v774, %v765
      %v1000 = vpack.c.b16 %v784, %v775
      %v1001 = vpack.c.b16 %v785, %v776
      %v1002 = vpack.c.b16 %v786, %v777
      %v1003 = vpack.c.b16 %v787, %v778
      %v1004 = vpack.c.b16 %v788, %v779
      %v1005 = vpack.c.b16 %v789, %v780
      %v1006 = vpack.c.b16 %v790, %v781
      %v1007 = vpack.c.b16 %v791, %v782
      %v1008 = vpack.c.b16 %v792, %v783
      %v1009 = vpack.c.b16 %v802, %v793
      %v1010 = vpack.c.b16 %v803, %v794
      %v1011 = vpack.c.b16 %v804, %v795
      %v1012 = vpack.c.b16 %v805, %v796
      %v1013 = vpack.c.b16 %v806, %v797
      %v1014 = vpack.c.b16 %v807, %v798
      %v1015 = vpack.c.b16 %v808, %v799
      %v1016 = vpack.c.b16 %v809, %v800
      %v1017 = vpack.c.b16 %v810, %v801
      %v1018 = vpack.c.b16 %v820, %v811
      %v1019 = vpack.c.b16 %v821, %v812
      %v1020 = vpack.c.b16 %v822, %v813
      %v1021 = vpack.c.b16 %v823, %v814
      %v1022 = vpack.c.b16 %v824, %v815
      %v1023 = vpack.c.b16 %v825, %v816
      %v1024 = vpack.c.b16 %v826, %v817
      %v1025 = vpack.c.b16 %v827, %v818
      %v1026 = vpack.c.b16 %v828, %v819
      %v1027 = vpack.c.b16 %v838, %v829
      %v1028 = vpack.c.b16 %v839, %v830
      %v1029 = vpack.c.b16 %v840, %v831
      %v1030 = vpack.c.b16 %v841, %v832
      %v1031 = vpack.c.b16 %v842, %v833
      %v1032 = vpack.c.b16 %v843, %v834
      %v1033 = vpack.c.b16 %v844, %v835
      %v1034 = vpack.c.b16 %v845, %v836
      %v1035 = vpack.c.b16 %v846, %v837
      %v1036 = vpack.c.b16 %v856, %v847
      %v1037 = vpack.c.b16 %v857, %v848
      %v1038 = vpack.c.b16 %v858, %v849
      %v1039 = vpack.c.b16 %v859, %v850
      %v1040 = vpack.c.b16 %v860, %v851
      %v1041 = vpack.c.b16 %v861, %v852
      %v1042 = vpack.c.b16 %v862, %v853
      %v1043 = vpack.c.b16 %v863, %v854
      %v1044 = vpack.c.b16 %v864, %v855
      %v1045 = vpack.c.b16 %v874, %v865
      %v1046 = vpack.c.b16 %v875, %v866
      %v1047 = vpack.c.b16 %v876, %v867
      %v1048 = vpack.c.b16 %v877, %v868
      %v1049 = vpack.c.b16 %v878, %v869
      %v1050 = vpack.c.b16 %v879, %v870
      %v1051 = vpack.c.b16 %v880, %v871
      %v1052 = vpack.c.b16 %v881, %v872
      %v1053 = vpack.c.b16 %v882, %v873
      %v1054 = vpack.c.b16 %v892, %v883
      %v1055 = vpack.c.b16 %v893, %v884
      %v1056 = vpack.c.b16 %v894, %v885
      %v1057 = vpack.c.b16 %v895, %v886
      %v1058 = vpack.c.b16 %v896, %v887
      %v1059 = vpack.c.b16 %v897, %v888
      %v1060 = vpack.c.b16 %v898, %v889
      %v1061 = vpack.c.b16 %v899, %v890
      %v1062 = vpack.c.b16 %v900, %v891
      %v1063 = vpack.c.b16 %v910, %v901
      %v1064 = vpack.c.b16 %v911, %v902
      %v1065 = vpack.c.b16 %v912, %v903
      %v1066 = vpack.c.b16 %v913, %v904
      %v1067 = vpack.c.b16 %v914, %v905
      %v1068 = vpack.c.b16 %v915, %v906
      %v1069 = vpack.c.b16 %v916, %v907
      %v1070 = vpack.c.b16 %v917, %v908
      %v1071 = vpack.c.b16 %v918, %v909
      %v1072 = vpack.c.b16 %v928, %v919
      %v1073 = vpack.c.b16 %v929, %v920
      %v1074 = vpack.c.b16 %v930, %v921
      %v1075 = vpack.c.b16 %v931, %v922
      %v1076 = vpack.c.b16 %v932, %v923
      %v1077 = vpack.c.b16 %v933, %v924
      %v1078 = vpack.c.b16 %v934, %v925
      %v1079 = vpack.c.b16 %v935, %v926
      %v1080 = vpack.c.b16 %v936, %v927
      %v1369 = vunpack.c.l.b16 %v338
      %v1370 = vunpack.c.l.b16 %v339
      %v1371 = vunpack.c.l.b16 %v340
      %v1372 = vunpack.c.l.b16 %v341
      %v1373 = vunpack.c.l.b16 %v342
      %v1374 = vunpack.c.l.b16 %v343
      %v1375 = vunpack.c.l.b16 %v344
      %v1376 = vunpack.c.l.b16 %v345
      %v1377 = vunpack.c.l.b16 %v346
      %v1378 = vunpack.c.l.b16 %v347
      %v1379 = vunpack.c.l.b16 %v348
      %v1380 = vunpack.c.l.b16 %v349
      %v1381 = vunpack.c.l.b16 %v350
      %v1382 = vunpack.c.l.b16 %v351
      %v1383 = vunpack.c.l.b16 %v352
      %v1384 = vunpack.c.l.b16 %v353
      %v1385 = vunpack.c.l.b16 %v354
      %v1386 = vunpack.c.l.b16 %v355
      %v1387 = vunpack.c.l.b16 %v356
      %v1388 = vunpack.c.l.b16 %v357
      %v1389 = vunpack.c.l.b16 %v358
      %v1390 = vunpack.c.l.b16 %v359
      %v1391 = vunpack.c.l.b16 %v360
      %v1392 = vunpack.c.l.b16 %v361
      %v1393 = vunpack.c.l.b16 %v362
      %v1394 = vunpack.c.l.b16 %v363
      %v1395 = vunpack.c.l.b16 %v364
      %v1396 = vunpack.c.l.b16 %v365
      %v1397 = vunpack.c.l.b16 %v366
      %v1398 = vunpack.c.l.b16 %v367
      %v1399 = vunpack.c.l.b16 %v368
      %v1400 = vunpack.c.l.b16 %v369
      %v1401 = vunpack.c.l.b16 %v370
      %v1402 = vunpack.c.l.b16 %v371
      %v1403 = vunpack.c.l.b16 %v372
      %v1404 = vunpack.c.l.b16 %v373
      %v1405 = vunpack.c.l.b16 %v374
      %v1406 = vunpack.c.l.b16 %v375
      %v1407 = vunpack.c.l.b16 %v376
      %v1408 = vunpack.c.l.b16 %v377
      %v1409 = vunpack.c.l.b16 %v378
      %v1410 = vunpack.c.l.b16 %v379
      %v1411 = vunpack.c.l.b16 %v380
      %v1412 = vunpack.c.l.b16 %v381
      %v1413 = vunpack.c.l.b16 %v382
      %v1414 = vunpack.c.l.b16 %v383
      %v1415 = vunpack.c.l.b16 %v384
      %v1416 = vunpack.c.l.b16 %v385
      %v1417 = vunpack.c.l.b16 %v386
      %v1418 = vunpack.c.l.b16 %v387
      %v1419 = vunpack.c.l.b16 %v388
      %v1420 = vunpack.c.l.b16 %v389
      %v1421 = vunpack.c.l.b16 %v390
      %v1422 = vunpack.c.l.b16 %v391
      %v1423 = vunpack.c.l.b16 %v392
      %v1424 = vunpack.c.l.b16 %v393
      %v1425 = vunpack.c.l.b16 %v394
      %v1426 = vunpack.c.l.b16 %v395
      %v1427 = vunpack.c.l.b16 %v396
      %v1428 = vunpack.c.l.b16 %v397
      %v1429 = vunpack.c.l.b16 %v398
      %v1430 = vunpack.c.l.b16 %v399
      %v1431 = vunpack.c.l.b16 %v400
      %v1432 = vunpack.c.l.b16 %v401
      %v1433 = vunpack.c.l.b16 %v402
      %v1434 = vunpack.c.l.b16 %v403
      %v1435 = vunpack.c.l.b16 %v404
      %v1436 = vunpack.c.l.b16 %v405
      %v1437 = vunpack.c.l.b16 %v406
      %v1438 = vunpack.c.l.b16 %v407
      %v1439 = vunpack.c.l.b16 %v408
      %v1440 = vunpack.c.l.b16 %v409
      %v1441 = vunpack.c.l.b16 %v410
      %v1442 = vunpack.c.l.b16 %v411
      %v1443 = vunpack.c.l.b16 %v412
      %v1444 = vunpack.c.l.b16 %v413
      %v1445 = vunpack.c.l.b16 %v414
      %v1446 = vunpack.c.l.b16 %v415
      %v1447 = vunpack.c.l.b16 %v416
      %v1448 = vunpack.c.l.b16 %v417
      %v1449 = vunpack.c.l.b16 %v418
      %v1450 = vunpack.c.l.b16 %v419
      %v1451 = vunpack.c.l.b16 %v420
      %v1452 = vunpack.c.l.b16 %v421
      %v1453 = vunpack.c.l.b16 %v422
      %v1454 = vunpack.c.l.b16 %v423
      %v1455 = vunpack.c.l.b16 %v424
      %v1456 = vunpack.c.l.b16 %v425
      %v1457 = vunpack.c.l.b16 %v426
      %v1458 = vunpack.c.l.b16 %v427
      %v1459 = vunpack.c.l.b16 %v428
      %v1460 = vunpack.c.l.b16 %v429
      %v1461 = vunpack.c.l.b16 %v430
      %v1462 = vunpack.c.l.b16 %v431
      %v1463 = vunpack.c.l.b16 %v432
      %v1464 = vunpack.c.l.b16 %v433
      %v1465 = vunpack.c.l.b16 %v434
      %v1466 = vunpack.c.l.b16 %v435
      %v1467 = vunpack.c.l.b16 %v436
      %v1468 = vunpack.c.l.b16 %v437
      %v1469 = vunpack.c.l.b16 %v438
      %v1470 = vunpack.c.l.b16 %v439
      %v1471 = vunpack.c.l.b16 %v440
      %v1472 = vunpack.c.l.b16 %v441
      %v1473 = vunpack.c.l.b16 %v442
      %v1474 = vunpack.c.l.b16 %v443
      %v1475 = vunpack.c.l.b16 %v444
      %v1476 = vunpack.c.l.b16 %v445
      %v1477 = vunpack.c.l.b16 %v446
      %v1478 = vunpack.c.l.b16 %v447
      %v1479 = vunpack.c.l.b16 %v448
      %v1480 = vunpack.c.l.b16 %v449
      %v1481 = vunpack.c.l.b16 %v450
      %v1482 = vunpack.c.l.b16 %v451
      %v1483 = vunpack.c.l.b16 %v452
      %v1484 = vunpack.c.l.b16 %v453
      %v1485 = vunpack.c.l.b16 %v454
      %v1486 = vunpack.c.l.b16 %v455
      %v1487 = vunpack.c.l.b16 %v456
      %v1488 = vunpack.c.l.b16 %v457
      %v1489 = vunpack.c.l.b16 %v458
      %v1490 = vunpack.c.l.b16 %v459
      %v1491 = vunpack.c.l.b16 %v460
      %v1492 = vunpack.c.l.b16 %v461
      %v1493 = vunpack.c.l.b16 %v462
      %v1494 = vunpack.c.l.b16 %v463
      %v1495 = vunpack.c.l.b16 %v464
      %v1496 = vunpack.c.l.b16 %v465
      %v1497 = vunpack.c.l.b16 %v466
      %v1498 = vunpack.c.l.b16 %v467
      %v1499 = vunpack.c.l.b16 %v468
      %v1500 = vunpack.c.l.b16 %v469
      %v1501 = vunpack.c.l.b16 %v470
      %v1502 = vunpack.c.l.b16 %v471
      %v1503 = vunpack.c.l.b16 %v472
      %v1504 = vunpack.c.l.b16 %v473
      %v1505 = vunpack.c.l.b16 %v474
      %v1506 = vunpack.c.l.b16 %v475
      %v1507 = vunpack.c.l.b16 %v476
      %v1508 = vunpack.c.l.b16 %v477
      %v1509 = vunpack.c.l.b16 %v478
      %v1510 = vunpack.c.l.b16 %v479
      %v1511 = vunpack.c.l.b16 %v480
      %v1512 = vunpack.c.l.b16 %v481
      %v1513 = vpack.c.b16 %v1370, %v1369
      %v1514 = vpack.c.b16 %v1372, %v1371
      %v1515 = vpack.c.b16 %v1374, %v1373
      %v1516 = vpack.c.b16 %v1376, %v1375
      %v1517 = vpack.c.b16 %v1378, %v1377
      %v1518 = vpack.c.b16 %v1380, %v1379
      %v1519 = vpack.c.b16 %v1382, %v1381
      %v1520 = vpack.c.b16 %v1384, %v1383
      %v1521 = vpack.c.b16 %v1386, %v1385
      %v1522 = vpack.c.b16 %v1388, %v1387
      %v1523 = vpack.c.b16 %v1390, %v1389
      %v1524 = vpack.c.b16 %v1392, %v1391
      %v1525 = vpack.c.b16 %v1394, %v1393
      %v1526 = vpack.c.b16 %v1396, %v1395
      %v1527 = vpack.c.b16 %v1398, %v1397
      %v1528 = vpack.c.b16 %v1400, %v1399
      %v1529 = vpack.c.b16 %v1402, %v1401
      %v1530 = vpack.c.b16 %v1404, %v1403
      %v1531 = vpack.c.b16 %v1406, %v1405
      %v1532 = vpack.c.b16 %v1408, %v1407
      %v1533 = vpack.c.b16 %v1410, %v1409
      %v1534 = vpack.c.b16 %v1412, %v1411
      %v1535 = vpack.c.b16 %v1414, %v1413
      %v1536 = vpack.c.b16 %v1416, %v1415
      %v1537 = vpack.c.b16 %v1418, %v1417
      %v1538 = vpack.c.b16 %v1420, %v1419
      %v1539 = vpack.c.b16 %v1422, %v1421
      %v1540 = vpack.c.b16 %v1424, %v1423
      %v1541 = vpack.c.b16 %v1426, %v1425
      %v1542 = vpack.c.b16 %v1428, %v1427
      %v1543 = vpack.c.b16 %v1430, %v1429
      %v1544 = vpack.c.b16 %v1432, %v1431
      %v1545 = vpack.c.b16 %v1434, %v1433
      %v1546 = vpack.c.b16 %v1436, %v1435
      %v1547 = vpack.c.b16 %v1438, %v1437
      %v1548 = vpack.c.b16 %v1440, %v1439
      %v1549 = vpack.c.b16 %v1442, %v1441
      %v1550 = vpack.c.b16 %v1444, %v1443
      %v1551 = vpack.c.b16 %v1446, %v1445
      %v1552 = vpack.c.b16 %v1448, %v1447
      %v1553 = vpack.c.b16 %v1450, %v1449
      %v1554 = vpack.c.b16 %v1452, %v1451
      %v1555 = vpack.c.b16 %v1454, %v1453
      %v1556 = vpack.c.b16 %v1456, %v1455
      %v1557 = vpack.c.b16 %v1458, %v1457
      %v1558 = vpack.c.b16 %v1460, %v1459
      %v1559 = vpack.c.b16 %v1462, %v1461
      %v1560 = vpack.c.b16 %v1464, %v1463
      %v1561 = vpack.c.b16 %v1466, %v1465
      %v1562 = vpack.c.b16 %v1468, %v1467
      %v1563 = vpack.c.b16 %v1470, %v1469
      %v1564 = vpack.c.b16 %v1472, %v1471
      %v1565 = vpack.c.b16 %v1474, %v1473
      %v1566 = vpack.c.b16 %v1476, %v1475
      %v1567 = vpack.c.b16 %v1478, %v1477
      %v1568 = vpack.c.b16 %v1480, %v1479
      %v1569 = vpack.c.b16 %v1482, %v1481
      %v1570 = vpack.c.b16 %v1484, %v1483
      %v1571 = vpack.c.b16 %v1486, %v1485
      %v1572 = vpack.c.b16 %v1488, %v1487
      %v1573 = vpack.c.b16 %v1490, %v1489
      %v1574 = vpack.c.b16 %v1492, %v1491
      %v1575 = vpack.c.b16 %v1494, %v1493
      %v1576 = vpack.c.b16 %v1496, %v1495
      %v1577 = vpack.c.b16 %v1498, %v1497
      %v1578 = vpack.c.b16 %v1500, %v1499
      %v1579 = vpack.c.b16 %v1502, %v1501
      %v1580 = vpack.c.b16 %v1504, %v1503
      %v1581 = vpack.c.b16 %v1506, %v1505
      %v1582 = vpack.c.b16 %v1508, %v1507
      %v1583 = vpack.c.b16 %v1510, %v1509
      %v1584 = vpack.c.b16 %v1512, %v1511
      %1657 = vmatprep.subr.bf16.mxu0 0
      %1658 = vmatpush1.bf16.msra.mxu0 %v1520
      %1659 = vmatprep.subr.bf16.mxu0 0
      %1660 = vmatpush1.bf16.msra.mxu0 %v1519
      %1661 = vmatprep.subr.bf16.mxu0 0
      %1662 = vmatpush1.bf16.msra.mxu0 %v1518
      %1663 = vmatprep.subr.bf16.mxu0 0
      %1664 = vmatpush1.bf16.msra.mxu0 %v1517
      %1665 = vmatprep.subr.bf16.mxu0 0
      %1666 = vmatpush1.bf16.msra.mxu0 %v1516
      %1667 = vmatprep.subr.bf16.mxu0 0
      %1668 = vmatpush1.bf16.msra.mxu0 %v1515
      %1669 = vmatprep.subr.bf16.mxu0 0
      %1670 = vmatpush1.bf16.msra.mxu0 %v1514
      %1671 = vmatprep.subr.bf16.mxu0 0
      %1672 = vmatpush1.bf16.msra.mxu0 %v1513
      %1673 = vmatprep.subr.bf16.mxu0 0
      %1674 = vmatpush2.bf16.msra.mxu0 %v1528
      %1675 = vmatprep.subr.bf16.mxu0 0
      %1676 = vmatpush2.bf16.msra.mxu0 %v1527
      %1677 = vmatprep.subr.bf16.mxu0 0
      %1678 = vmatpush2.bf16.msra.mxu0 %v1526
      %1679 = vmatprep.subr.bf16.mxu0 0
      %1680 = vmatpush2.bf16.msra.mxu0 %v1525
      %1681 = vmatprep.subr.bf16.mxu0 0
      %1682 = vmatpush2.bf16.msra.mxu0 %v1524
      %1683 = vmatprep.subr.bf16.mxu0 0
      %1684 = vmatpush2.bf16.msra.mxu0 %v1523
      %1685 = vmatprep.subr.bf16.mxu0 0
      %1686 = vmatpush2.bf16.msra.mxu0 %v1522
      %1687 = vmatprep.subr.bf16.mxu0 0
      %1688 = vmatpush2.bf16.msra.mxu0 %v1521
      %1689 = vmatprep.mubr.bf16.mxu0 %v938
      %1690 = vmatmul.mubr.bf16.gmra.mxu0 %v937
      %v1691 = vpop.f32.mrf.mxu0
      %v1692 = vadd.f32 %v487, %v1691
      %v1693 = vpop.f32.mrf.mxu0
      %v1694 = vpop.f32.mrf.mxu0
      %v1695 = vadd.f32 %v487, %v1694
      %v1696 = vpop.f32.mrf.mxu0
      %1697 = vmatprep.mubr.bf16.mxu0 %v947
      %1698 = vmatmul.mubr.bf16.gmra.mxu0 %v946
      %v1699 = vpop.f32.mrf.mxu0
      %v1700 = vadd.f32 %v487, %v1699
      %v1701 = vpop.f32.mrf.mxu0
      %v1702 = vpop.f32.mrf.mxu0
      %v1703 = vadd.f32 %v487, %v1702
      %v1704 = vpop.f32.mrf.mxu0
      %1705 = vmatprep.mubr.bf16.mxu0 %v956
      %1706 = vmatmul.mubr.bf16.gmra.mxu0 %v955
      %v1707 = vpop.f32.mrf.mxu0
      %v1708 = vadd.f32 %v487, %v1707
      %v1709 = vpop.f32.mrf.mxu0
      %v1710 = vpop.f32.mrf.mxu0
      %v1711 = vadd.f32 %v487, %v1710
      %v1712 = vpop.f32.mrf.mxu0
      %1713 = vmatprep.mubr.bf16.mxu0 %v965
      %1714 = vmatmul.mubr.bf16.gmra.mxu0 %v964
      %v1715 = vpop.f32.mrf.mxu0
      %v1716 = vadd.f32 %v487, %v1715
      %v1717 = vpop.f32.mrf.mxu0
      %v1718 = vpop.f32.mrf.mxu0
      %v1719 = vadd.f32 %v487, %v1718
      %v1720 = vpop.f32.mrf.mxu0
      %1721 = vmatprep.mubr.bf16.mxu0 %v974
      %1722 = vmatmul.mubr.bf16.gmra.mxu0 %v973
      %v1723 = vpop.f32.mrf.mxu0
      %v1724 = vadd.f32 %v487, %v1723
      %v1725 = vpop.f32.mrf.mxu0
      %v1726 = vpop.f32.mrf.mxu0
      %v1727 = vadd.f32 %v487, %v1726
      %v1728 = vpop.f32.mrf.mxu0
      %1729 = vmatprep.mubr.bf16.mxu0 %v983
      %1730 = vmatmul.mubr.bf16.gmra.mxu0 %v982
      %v1731 = vpop.f32.mrf.mxu0
      %v1732 = vadd.f32 %v487, %v1731
      %v1733 = vpop.f32.mrf.mxu0
      %v1734 = vpop.f32.mrf.mxu0
      %v1735 = vadd.f32 %v487, %v1734
      %v1736 = vpop.f32.mrf.mxu0
      %1737 = vmatprep.mubr.bf16.mxu0 %v992
      %1738 = vmatmul.mubr.bf16.gmra.mxu0 %v991
      %v1739 = vpop.f32.mrf.mxu0
      %v1740 = vadd.f32 %v487, %v1739
      %v1741 = vpop.f32.mrf.mxu0
      %v1742 = vpop.f32.mrf.mxu0
      %v1743 = vadd.f32 %v487, %v1742
      %v1744 = vpop.f32.mrf.mxu0
      %1745 = vmatprep.mubr.bf16.mxu0 %v1001
      %1746 = vmatmul.mubr.bf16.gmra.mxu0 %v1000
      %v1747 = vpop.f32.mrf.mxu0
      %v1748 = vadd.f32 %v487, %v1747
      %v1749 = vpop.f32.mrf.mxu0
      %v1750 = vpop.f32.mrf.mxu0
      %v1751 = vadd.f32 %v487, %v1750
      %v1752 = vpop.f32.mrf.mxu0
      %1753 = vmatprep.mubr.bf16.mxu0 %v1010
      %1754 = vmatmul.mubr.bf16.gmra.mxu0 %v1009
      %v1755 = vpop.f32.mrf.mxu0
      %v1756 = vadd.f32 %v487, %v1755
      %v1757 = vpop.f32.mrf.mxu0
      %v1758 = vpop.f32.mrf.mxu0
      %v1759 = vadd.f32 %v487, %v1758
      %v1760 = vpop.f32.mrf.mxu0
      %1761 = vmatprep.mubr.bf16.mxu0 %v1019
      %1762 = vmatmul.mubr.bf16.gmra.mxu0 %v1018
      %v1763 = vpop.f32.mrf.mxu0
      %v1764 = vadd.f32 %v487, %v1763
      %v1765 = vpop.f32.mrf.mxu0
      %v1766 = vpop.f32.mrf.mxu0
      %v1767 = vadd.f32 %v487, %v1766
      %v1768 = vpop.f32.mrf.mxu0
      %1769 = vmatprep.mubr.bf16.mxu0 %v1028
      %1770 = vmatmul.mubr.bf16.gmra.mxu0 %v1027
      %v1771 = vpop.f32.mrf.mxu0
      %v1772 = vadd.f32 %v487, %v1771
      %v1773 = vpop.f32.mrf.mxu0
      %v1774 = vpop.f32.mrf.mxu0
      %v1775 = vadd.f32 %v487, %v1774
      %v1776 = vpop.f32.mrf.mxu0
      %1777 = vmatprep.mubr.bf16.mxu0 %v1037
      %1778 = vmatmul.mubr.bf16.gmra.mxu0 %v1036
      %v1779 = vpop.f32.mrf.mxu0
      %v1780 = vadd.f32 %v487, %v1779
      %v1781 = vpop.f32.mrf.mxu0
      %v1782 = vpop.f32.mrf.mxu0
      %v1783 = vadd.f32 %v487, %v1782
      %v1784 = vpop.f32.mrf.mxu0
      %1785 = vmatprep.mubr.bf16.mxu0 %v1046
      %1786 = vmatmul.mubr.bf16.gmra.mxu0 %v1045
      %v1787 = vpop.f32.mrf.mxu0
      %v1788 = vadd.f32 %v487, %v1787
      %v1789 = vpop.f32.mrf.mxu0
      %v1790 = vpop.f32.mrf.mxu0
      %v1791 = vadd.f32 %v487, %v1790
      %v1792 = vpop.f32.mrf.mxu0
      %1793 = vmatprep.mubr.bf16.mxu0 %v1055
      %1794 = vmatmul.mubr.bf16.gmra.mxu0 %v1054
      %v1795 = vpop.f32.mrf.mxu0
      %v1796 = vadd.f32 %v487, %v1795
      %v1797 = vpop.f32.mrf.mxu0
      %v1798 = vpop.f32.mrf.mxu0
      %v1799 = vadd.f32 %v487, %v1798
      %v1800 = vpop.f32.mrf.mxu0
      %1801 = vmatprep.mubr.bf16.mxu0 %v1064
      %1802 = vmatmul.mubr.bf16.gmra.mxu0 %v1063
      %v1803 = vpop.f32.mrf.mxu0
      %v1804 = vadd.f32 %v487, %v1803
      %v1805 = vpop.f32.mrf.mxu0
      %v1806 = vpop.f32.mrf.mxu0
      %v1807 = vadd.f32 %v487, %v1806
      %v1808 = vpop.f32.mrf.mxu0
      %1809 = vmatprep.mubr.bf16.mxu0 %v1073
      %1810 = vmatmul.mubr.bf16.gmra.mxu0 %v1072
      %v1811 = vpop.f32.mrf.mxu0
      %v1812 = vadd.f32 %v487, %v1811
      %v1813 = vpop.f32.mrf.mxu0
      %v1814 = vpop.f32.mrf.mxu0
      %v1815 = vadd.f32 %v487, %v1814
      %v1816 = vpop.f32.mrf.mxu0
      %1817 = vdwg.mxu0
      %1818 = vmatprep.subr.bf16.mxu0 0
      %1819 = vmatpush1.bf16.msra.mxu0 %v1536
      %1820 = vmatprep.subr.bf16.mxu0 0
      %1821 = vmatpush1.bf16.msra.mxu0 %v1535
      %1822 = vmatprep.subr.bf16.mxu0 0
      %1823 = vmatpush1.bf16.msra.mxu0 %v1534
      %1824 = vmatprep.subr.bf16.mxu0 0
      %1825 = vmatpush1.bf16.msra.mxu0 %v1533
      %1826 = vmatprep.subr.bf16.mxu0 0
      %1827 = vmatpush1.bf16.msra.mxu0 %v1532
      %1828 = vmatprep.subr.bf16.mxu0 0
      %1829 = vmatpush1.bf16.msra.mxu0 %v1531
      %1830 = vmatprep.subr.bf16.mxu0 0
      %1831 = vmatpush1.bf16.msra.mxu0 %v1530
      %1832 = vmatprep.subr.bf16.mxu0 0
      %1833 = vmatpush1.bf16.msra.mxu0 %v1529
      %1834 = vmatprep.subr.bf16.mxu0 0
      %1835 = vmatpush2.bf16.msra.mxu0 %v1544
      %1836 = vmatprep.subr.bf16.mxu0 0
      %1837 = vmatpush2.bf16.msra.mxu0 %v1543
      %1838 = vmatprep.subr.bf16.mxu0 0
      %1839 = vmatpush2.bf16.msra.mxu0 %v1542
      %1840 = vmatprep.subr.bf16.mxu0 0
      %1841 = vmatpush2.bf16.msra.mxu0 %v1541
      %1842 = vmatprep.subr.bf16.mxu0 0
      %1843 = vmatpush2.bf16.msra.mxu0 %v1540
      %1844 = vmatprep.subr.bf16.mxu0 0
      %1845 = vmatpush2.bf16.msra.mxu0 %v1539
      %1846 = vmatprep.subr.bf16.mxu0 0
      %1847 = vmatpush2.bf16.msra.mxu0 %v1538
      %1848 = vmatprep.subr.bf16.mxu0 0
      %1849 = vmatpush2.bf16.msra.mxu0 %v1537
      %1850 = vmatprep.mubr.bf16.mxu0 %v940
      %1851 = vmatmul.mubr.bf16.gmra.mxu0 %v939
      %v1852 = vpop.f32.mrf.mxu0
      %v1853 = vadd.f32 %v1692, %v1852
      %v1854 = vpop.f32.mrf.mxu0
      %v1855 = vpop.f32.mrf.mxu0
      %v1856 = vadd.f32 %v1695, %v1855
      %v1857 = vpop.f32.mrf.mxu0
      %1858 = vmatprep.mubr.bf16.mxu0 %v949
      %1859 = vmatmul.mubr.bf16.gmra.mxu0 %v948
      %v1860 = vpop.f32.mrf.mxu0
      %v1861 = vadd.f32 %v1700, %v1860
      %v1862 = vpop.f32.mrf.mxu0
      %v1863 = vpop.f32.mrf.mxu0
      %v1864 = vadd.f32 %v1703, %v1863
      %v1865 = vpop.f32.mrf.mxu0
      %1866 = vmatprep.mubr.bf16.mxu0 %v958
      %1867 = vmatmul.mubr.bf16.gmra.mxu0 %v957
      %v1868 = vpop.f32.mrf.mxu0
      %v1869 = vadd.f32 %v1708, %v1868
      %v1870 = vpop.f32.mrf.mxu0
      %v1871 = vpop.f32.mrf.mxu0
      %v1872 = vadd.f32 %v1711, %v1871
      %v1873 = vpop.f32.mrf.mxu0
      %1874 = vmatprep.mubr.bf16.mxu0 %v967
      %1875 = vmatmul.mubr.bf16.gmra.mxu0 %v966
      %v1876 = vpop.f32.mrf.mxu0
      %v1877 = vadd.f32 %v1716, %v1876
      %v1878 = vpop.f32.mrf.mxu0
      %v1879 = vpop.f32.mrf.mxu0
      %v1880 = vadd.f32 %v1719, %v1879
      %v1881 = vpop.f32.mrf.mxu0
      %1882 = vmatprep.mubr.bf16.mxu0 %v976
      %1883 = vmatmul.mubr.bf16.gmra.mxu0 %v975
      %v1884 = vpop.f32.mrf.mxu0
      %v1885 = vadd.f32 %v1724, %v1884
      %v1886 = vpop.f32.mrf.mxu0
      %v1887 = vpop.f32.mrf.mxu0
      %v1888 = vadd.f32 %v1727, %v1887
      %v1889 = vpop.f32.mrf.mxu0
      %1890 = vmatprep.mubr.bf16.mxu0 %v985
      %1891 = vmatmul.mubr.bf16.gmra.mxu0 %v984
      %v1892 = vpop.f32.mrf.mxu0
      %v1893 = vadd.f32 %v1732, %v1892
      %v1894 = vpop.f32.mrf.mxu0
      %v1895 = vpop.f32.mrf.mxu0
      %v1896 = vadd.f32 %v1735, %v1895
      %v1897 = vpop.f32.mrf.mxu0
      %1898 = vmatprep.mubr.bf16.mxu0 %v994
      %1899 = vmatmul.mubr.bf16.gmra.mxu0 %v993
      %v1900 = vpop.f32.mrf.mxu0
      %v1901 = vadd.f32 %v1740, %v1900
      %v1902 = vpop.f32.mrf.mxu0
      %v1903 = vpop.f32.mrf.mxu0
      %v1904 = vadd.f32 %v1743, %v1903
      %v1905 = vpop.f32.mrf.mxu0
      %1906 = vmatprep.mubr.bf16.mxu0 %v1003
      %1907 = vmatmul.mubr.bf16.gmra.mxu0 %v1002
      %v1908 = vpop.f32.mrf.mxu0
      %v1909 = vadd.f32 %v1748, %v1908
      %v1910 = vpop.f32.mrf.mxu0
      %v1911 = vpop.f32.mrf.mxu0
      %v1912 = vadd.f32 %v1751, %v1911
      %v1913 = vpop.f32.mrf.mxu0
      %1914 = vmatprep.mubr.bf16.mxu0 %v1012
      %1915 = vmatmul.mubr.bf16.gmra.mxu0 %v1011
      %v1916 = vpop.f32.mrf.mxu0
      %v1917 = vadd.f32 %v1756, %v1916
      %v1918 = vpop.f32.mrf.mxu0
      %v1919 = vpop.f32.mrf.mxu0
      %v1920 = vadd.f32 %v1759, %v1919
      %v1921 = vpop.f32.mrf.mxu0
      %1922 = vmatprep.mubr.bf16.mxu0 %v1021
      %1923 = vmatmul.mubr.bf16.gmra.mxu0 %v1020
      %v1924 = vpop.f32.mrf.mxu0
      %v1925 = vadd.f32 %v1764, %v1924
      %v1926 = vpop.f32.mrf.mxu0
      %v1927 = vpop.f32.mrf.mxu0
      %v1928 = vadd.f32 %v1767, %v1927
      %v1929 = vpop.f32.mrf.mxu0
      %1930 = vmatprep.mubr.bf16.mxu0 %v1030
      %1931 = vmatmul.mubr.bf16.gmra.mxu0 %v1029
      %v1932 = vpop.f32.mrf.mxu0
      %v1933 = vadd.f32 %v1772, %v1932
      %v1934 = vpop.f32.mrf.mxu0
      %v1935 = vpop.f32.mrf.mxu0
      %v1936 = vadd.f32 %v1775, %v1935
      %v1937 = vpop.f32.mrf.mxu0
      %1938 = vmatprep.mubr.bf16.mxu0 %v1039
      %1939 = vmatmul.mubr.bf16.gmra.mxu0 %v1038
      %v1940 = vpop.f32.mrf.mxu0
      %v1941 = vadd.f32 %v1780, %v1940
      %v1942 = vpop.f32.mrf.mxu0
      %v1943 = vpop.f32.mrf.mxu0
      %v1944 = vadd.f32 %v1783, %v1943
      %v1945 = vpop.f32.mrf.mxu0
      %1946 = vmatprep.mubr.bf16.mxu0 %v1048
      %1947 = vmatmul.mubr.bf16.gmra.mxu0 %v1047
      %v1948 = vpop.f32.mrf.mxu0
      %v1949 = vadd.f32 %v1788, %v1948
      %v1950 = vpop.f32.mrf.mxu0
      %v1951 = vpop.f32.mrf.mxu0
      %v1952 = vadd.f32 %v1791, %v1951
      %v1953 = vpop.f32.mrf.mxu0
      %1954 = vmatprep.mubr.bf16.mxu0 %v1057
      %1955 = vmatmul.mubr.bf16.gmra.mxu0 %v1056
      %v1956 = vpop.f32.mrf.mxu0
      %v1957 = vadd.f32 %v1796, %v1956
      %v1958 = vpop.f32.mrf.mxu0
      %v1959 = vpop.f32.mrf.mxu0
      %v1960 = vadd.f32 %v1799, %v1959
      %v1961 = vpop.f32.mrf.mxu0
      %1962 = vmatprep.mubr.bf16.mxu0 %v1066
      %1963 = vmatmul.mubr.bf16.gmra.mxu0 %v1065
      %v1964 = vpop.f32.mrf.mxu0
      %v1965 = vadd.f32 %v1804, %v1964
      %v1966 = vpop.f32.mrf.mxu0
      %v1967 = vpop.f32.mrf.mxu0
      %v1968 = vadd.f32 %v1807, %v1967
      %v1969 = vpop.f32.mrf.mxu0
      %1970 = vmatprep.mubr.bf16.mxu0 %v1075
      %1971 = vmatmul.mubr.bf16.gmra.mxu0 %v1074
      %v1972 = vpop.f32.mrf.mxu0
      %v1973 = vadd.f32 %v1812, %v1972
      %v1974 = vpop.f32.mrf.mxu0
      %v1975 = vpop.f32.mrf.mxu0
      %v1976 = vadd.f32 %v1815, %v1975
      %v1977 = vpop.f32.mrf.mxu0
      %1978 = vdwg.mxu0
      %1979 = vmatprep.subr.bf16.mxu0 0
      %1980 = vmatpush1.bf16.msra.mxu0 %v1552
      %1981 = vmatprep.subr.bf16.mxu0 0
      %1982 = vmatpush1.bf16.msra.mxu0 %v1551
      %1983 = vmatprep.subr.bf16.mxu0 0
      %1984 = vmatpush1.bf16.msra.mxu0 %v1550
      %1985 = vmatprep.subr.bf16.mxu0 0
      %1986 = vmatpush1.bf16.msra.mxu0 %v1549
      %1987 = vmatprep.subr.bf16.mxu0 0
      %1988 = vmatpush1.bf16.msra.mxu0 %v1548
      %1989 = vmatprep.subr.bf16.mxu0 0
      %1990 = vmatpush1.bf16.msra.mxu0 %v1547
      %1991 = vmatprep.subr.bf16.mxu0 0
      %1992 = vmatpush1.bf16.msra.mxu0 %v1546
      %1993 = vmatprep.subr.bf16.mxu0 0
      %1994 = vmatpush1.bf16.msra.mxu0 %v1545
      %1995 = vmatprep.subr.bf16.mxu0 0
      %1996 = vmatpush2.bf16.msra.mxu0 %v1560
      %1997 = vmatprep.subr.bf16.mxu0 0
      %1998 = vmatpush2.bf16.msra.mxu0 %v1559
      %1999 = vmatprep.subr.bf16.mxu0 0
      %2000 = vmatpush2.bf16.msra.mxu0 %v1558
      %2001 = vmatprep.subr.bf16.mxu0 0
      %2002 = vmatpush2.bf16.msra.mxu0 %v1557
      %2003 = vmatprep.subr.bf16.mxu0 0
      %2004 = vmatpush2.bf16.msra.mxu0 %v1556
      %2005 = vmatprep.subr.bf16.mxu0 0
      %2006 = vmatpush2.bf16.msra.mxu0 %v1555
      %2007 = vmatprep.subr.bf16.mxu0 0
      %2008 = vmatpush2.bf16.msra.mxu0 %v1554
      %2009 = vmatprep.subr.bf16.mxu0 0
      %2010 = vmatpush2.bf16.msra.mxu0 %v1553
      %2011 = vmatprep.mubr.bf16.mxu0 %v942
      %2012 = vmatmul.mubr.bf16.gmra.mxu0 %v941
      %v2013 = vpop.f32.mrf.mxu0
      %v2014 = vadd.f32 %v1853, %v2013
      %v2015 = vpop.f32.mrf.mxu0
      %v2016 = vpop.f32.mrf.mxu0
      %v2017 = vadd.f32 %v1856, %v2016
      %v2018 = vpop.f32.mrf.mxu0
      %2019 = vmatprep.mubr.bf16.mxu0 %v951
      %2020 = vmatmul.mubr.bf16.gmra.mxu0 %v950
      %v2021 = vpop.f32.mrf.mxu0
      %v2022 = vadd.f32 %v1861, %v2021
      %v2023 = vpop.f32.mrf.mxu0
      %v2024 = vpop.f32.mrf.mxu0
      %v2025 = vadd.f32 %v1864, %v2024
      %v2026 = vpop.f32.mrf.mxu0
      %2027 = vmatprep.mubr.bf16.mxu0 %v960
      %2028 = vmatmul.mubr.bf16.gmra.mxu0 %v959
      %v2029 = vpop.f32.mrf.mxu0
      %v2030 = vadd.f32 %v1869, %v2029
      %v2031 = vpop.f32.mrf.mxu0
      %v2032 = vpop.f32.mrf.mxu0
      %v2033 = vadd.f32 %v1872, %v2032
      %v2034 = vpop.f32.mrf.mxu0
      %2035 = vmatprep.mubr.bf16.mxu0 %v969
      %2036 = vmatmul.mubr.bf16.gmra.mxu0 %v968
      %v2037 = vpop.f32.mrf.mxu0
      %v2038 = vadd.f32 %v1877, %v2037
      %v2039 = vpop.f32.mrf.mxu0
      %v2040 = vpop.f32.mrf.mxu0
      %v2041 = vadd.f32 %v1880, %v2040
      %v2042 = vpop.f32.mrf.mxu0
      %2043 = vmatprep.mubr.bf16.mxu0 %v978
      %2044 = vmatmul.mubr.bf16.gmra.mxu0 %v977
      %v2045 = vpop.f32.mrf.mxu0
      %v2046 = vadd.f32 %v1885, %v2045
      %v2047 = vpop.f32.mrf.mxu0
      %v2048 = vpop.f32.mrf.mxu0
      %v2049 = vadd.f32 %v1888, %v2048
      %v2050 = vpop.f32.mrf.mxu0
      %2051 = vmatprep.mubr.bf16.mxu0 %v987
      %2052 = vmatmul.mubr.bf16.gmra.mxu0 %v986
      %v2053 = vpop.f32.mrf.mxu0
      %v2054 = vadd.f32 %v1893, %v2053
      %v2055 = vpop.f32.mrf.mxu0
      %v2056 = vpop.f32.mrf.mxu0
      %v2057 = vadd.f32 %v1896, %v2056
      %v2058 = vpop.f32.mrf.mxu0
      %2059 = vmatprep.mubr.bf16.mxu0 %v996
      %2060 = vmatmul.mubr.bf16.gmra.mxu0 %v995
      %v2061 = vpop.f32.mrf.mxu0
      %v2062 = vadd.f32 %v1901, %v2061
      %v2063 = vpop.f32.mrf.mxu0
      %v2064 = vpop.f32.mrf.mxu0
      %v2065 = vadd.f32 %v1904, %v2064
      %v2066 = vpop.f32.mrf.mxu0
      %2067 = vmatprep.mubr.bf16.mxu0 %v1005
      %2068 = vmatmul.mubr.bf16.gmra.mxu0 %v1004
      %v2069 = vpop.f32.mrf.mxu0
      %v2070 = vadd.f32 %v1909, %v2069
      %v2071 = vpop.f32.mrf.mxu0
      %v2072 = vpop.f32.mrf.mxu0
      %v2073 = vadd.f32 %v1912, %v2072
      %v2074 = vpop.f32.mrf.mxu0
      %2075 = vmatprep.mubr.bf16.mxu0 %v1014
      %2076 = vmatmul.mubr.bf16.gmra.mxu0 %v1013
      %v2077 = vpop.f32.mrf.mxu0
      %v2078 = vadd.f32 %v1917, %v2077
      %v2079 = vpop.f32.mrf.mxu0
      %v2080 = vpop.f32.mrf.mxu0
      %v2081 = vadd.f32 %v1920, %v2080
      %v2082 = vpop.f32.mrf.mxu0
      %2083 = vmatprep.mubr.bf16.mxu0 %v1023
      %2084 = vmatmul.mubr.bf16.gmra.mxu0 %v1022
      %v2085 = vpop.f32.mrf.mxu0
      %v2086 = vadd.f32 %v1925, %v2085
      %v2087 = vpop.f32.mrf.mxu0
      %v2088 = vpop.f32.mrf.mxu0
      %v2089 = vadd.f32 %v1928, %v2088
      %v2090 = vpop.f32.mrf.mxu0
      %2091 = vmatprep.mubr.bf16.mxu0 %v1032
      %2092 = vmatmul.mubr.bf16.gmra.mxu0 %v1031
      %v2093 = vpop.f32.mrf.mxu0
      %v2094 = vadd.f32 %v1933, %v2093
      %v2095 = vpop.f32.mrf.mxu0
      %v2096 = vpop.f32.mrf.mxu0
      %v2097 = vadd.f32 %v1936, %v2096
      %v2098 = vpop.f32.mrf.mxu0
      %2099 = vmatprep.mubr.bf16.mxu0 %v1041
      %2100 = vmatmul.mubr.bf16.gmra.mxu0 %v1040
      %v2101 = vpop.f32.mrf.mxu0
      %v2102 = vadd.f32 %v1941, %v2101
      %v2103 = vpop.f32.mrf.mxu0
      %v2104 = vpop.f32.mrf.mxu0
      %v2105 = vadd.f32 %v1944, %v2104
      %v2106 = vpop.f32.mrf.mxu0
      %2107 = vmatprep.mubr.bf16.mxu0 %v1050
      %2108 = vmatmul.mubr.bf16.gmra.mxu0 %v1049
      %v2109 = vpop.f32.mrf.mxu0
      %v2110 = vadd.f32 %v1949, %v2109
      %v2111 = vpop.f32.mrf.mxu0
      %v2112 = vpop.f32.mrf.mxu0
      %v2113 = vadd.f32 %v1952, %v2112
      %v2114 = vpop.f32.mrf.mxu0
      %2115 = vmatprep.mubr.bf16.mxu0 %v1059
      %2116 = vmatmul.mubr.bf16.gmra.mxu0 %v1058
      %v2117 = vpop.f32.mrf.mxu0
      %v2118 = vadd.f32 %v1957, %v2117
      %v2119 = vpop.f32.mrf.mxu0
      %v2120 = vpop.f32.mrf.mxu0
      %v2121 = vadd.f32 %v1960, %v2120
      %v2122 = vpop.f32.mrf.mxu0
      %2123 = vmatprep.mubr.bf16.mxu0 %v1068
      %2124 = vmatmul.mubr.bf16.gmra.mxu0 %v1067
      %v2125 = vpop.f32.mrf.mxu0
      %v2126 = vadd.f32 %v1965, %v2125
      %v2127 = vpop.f32.mrf.mxu0
      %v2128 = vpop.f32.mrf.mxu0
      %v2129 = vadd.f32 %v1968, %v2128
      %v2130 = vpop.f32.mrf.mxu0
      %2131 = vmatprep.mubr.bf16.mxu0 %v1077
      %2132 = vmatmul.mubr.bf16.gmra.mxu0 %v1076
      %v2133 = vpop.f32.mrf.mxu0
      %v2134 = vadd.f32 %v1973, %v2133
      %v2135 = vpop.f32.mrf.mxu0
      %v2136 = vpop.f32.mrf.mxu0
      %v2137 = vadd.f32 %v1976, %v2136
      %v2138 = vpop.f32.mrf.mxu0
      %2139 = vdwg.mxu0
      %2140 = vmatprep.subr.bf16.mxu0 0
      %2141 = vmatpush1.bf16.msra.mxu0 %v1568
      %2142 = vmatprep.subr.bf16.mxu0 0
      %2143 = vmatpush1.bf16.msra.mxu0 %v1567
      %2144 = vmatprep.subr.bf16.mxu0 0
      %2145 = vmatpush1.bf16.msra.mxu0 %v1566
      %2146 = vmatprep.subr.bf16.mxu0 0
      %2147 = vmatpush1.bf16.msra.mxu0 %v1565
      %2148 = vmatprep.subr.bf16.mxu0 0
      %2149 = vmatpush1.bf16.msra.mxu0 %v1564
      %2150 = vmatprep.subr.bf16.mxu0 0
      %2151 = vmatpush1.bf16.msra.mxu0 %v1563
      %2152 = vmatprep.subr.bf16.mxu0 0
      %2153 = vmatpush1.bf16.msra.mxu0 %v1562
      %2154 = vmatprep.subr.bf16.mxu0 0
      %2155 = vmatpush1.bf16.msra.mxu0 %v1561
      %2156 = vmatprep.subr.bf16.mxu0 0
      %2157 = vmatpush2.bf16.msra.mxu0 %v1576
      %2158 = vmatprep.subr.bf16.mxu0 0
      %2159 = vmatpush2.bf16.msra.mxu0 %v1575
      %2160 = vmatprep.subr.bf16.mxu0 0
      %2161 = vmatpush2.bf16.msra.mxu0 %v1574
      %2162 = vmatprep.subr.bf16.mxu0 0
      %2163 = vmatpush2.bf16.msra.mxu0 %v1573
      %2164 = vmatprep.subr.bf16.mxu0 0
      %2165 = vmatpush2.bf16.msra.mxu0 %v1572
      %2166 = vmatprep.subr.bf16.mxu0 0
      %2167 = vmatpush2.bf16.msra.mxu0 %v1571
      %2168 = vmatprep.subr.bf16.mxu0 0
      %2169 = vmatpush2.bf16.msra.mxu0 %v1570
      %2170 = vmatprep.subr.bf16.mxu0 0
      %2171 = vmatpush2.bf16.msra.mxu0 %v1569
      %2172 = vmatprep.mubr.bf16.mxu0 %v944
      %2173 = vmatmul.mubr.bf16.gmra.mxu0 %v943
      %v2174 = vpop.f32.mrf.mxu0
      %v2175 = vadd.f32 %v2014, %v2174
      %v2176 = vpop.f32.mrf.mxu0
      %v2177 = vpop.f32.mrf.mxu0
      %v2178 = vadd.f32 %v2017, %v2177
      %v2179 = vpop.f32.mrf.mxu0
      %2180 = vmatprep.mubr.bf16.mxu0 %v953
      %2181 = vmatmul.mubr.bf16.gmra.mxu0 %v952
      %v2182 = vpop.f32.mrf.mxu0
      %v2183 = vadd.f32 %v2022, %v2182
      %v2184 = vpop.f32.mrf.mxu0
      %v2185 = vpop.f32.mrf.mxu0
      %v2186 = vadd.f32 %v2025, %v2185
      %v2187 = vpop.f32.mrf.mxu0
      %2188 = vmatprep.mubr.bf16.mxu0 %v962
      %2189 = vmatmul.mubr.bf16.gmra.mxu0 %v961
      %v2190 = vpop.f32.mrf.mxu0
      %v2191 = vadd.f32 %v2030, %v2190
      %v2192 = vpop.f32.mrf.mxu0
      %v2193 = vpop.f32.mrf.mxu0
      %v2194 = vadd.f32 %v2033, %v2193
      %v2195 = vpop.f32.mrf.mxu0
      %2196 = vmatprep.mubr.bf16.mxu0 %v971
      %2197 = vmatmul.mubr.bf16.gmra.mxu0 %v970
      %v2198 = vpop.f32.mrf.mxu0
      %v2199 = vadd.f32 %v2038, %v2198
      %v2200 = vpop.f32.mrf.mxu0
      %v2201 = vpop.f32.mrf.mxu0
      %v2202 = vadd.f32 %v2041, %v2201
      %v2203 = vpop.f32.mrf.mxu0
      %2204 = vmatprep.mubr.bf16.mxu0 %v980
      %2205 = vmatmul.mubr.bf16.gmra.mxu0 %v979
      %v2206 = vpop.f32.mrf.mxu0
      %v2207 = vadd.f32 %v2046, %v2206
      %v2208 = vpop.f32.mrf.mxu0
      %v2209 = vpop.f32.mrf.mxu0
      %v2210 = vadd.f32 %v2049, %v2209
      %v2211 = vpop.f32.mrf.mxu0
      %2212 = vmatprep.mubr.bf16.mxu0 %v989
      %2213 = vmatmul.mubr.bf16.gmra.mxu0 %v988
      %v2214 = vpop.f32.mrf.mxu0
      %v2215 = vadd.f32 %v2054, %v2214
      %v2216 = vpop.f32.mrf.mxu0
      %v2217 = vpop.f32.mrf.mxu0
      %v2218 = vadd.f32 %v2057, %v2217
      %v2219 = vpop.f32.mrf.mxu0
      %2220 = vmatprep.mubr.bf16.mxu0 %v998
      %2221 = vmatmul.mubr.bf16.gmra.mxu0 %v997
      %v2222 = vpop.f32.mrf.mxu0
      %v2223 = vadd.f32 %v2062, %v2222
      %v2224 = vpop.f32.mrf.mxu0
      %v2225 = vpop.f32.mrf.mxu0
      %v2226 = vadd.f32 %v2065, %v2225
      %v2227 = vpop.f32.mrf.mxu0
      %2228 = vmatprep.mubr.bf16.mxu0 %v1007
      %2229 = vmatmul.mubr.bf16.gmra.mxu0 %v1006
      %v2230 = vpop.f32.mrf.mxu0
      %v2231 = vadd.f32 %v2070, %v2230
      %v2232 = vpop.f32.mrf.mxu0
      %v2233 = vpop.f32.mrf.mxu0
      %v2234 = vadd.f32 %v2073, %v2233
      %v2235 = vpop.f32.mrf.mxu0
      %2236 = vmatprep.mubr.bf16.mxu0 %v1016
      %2237 = vmatmul.mubr.bf16.gmra.mxu0 %v1015
      %v2238 = vpop.f32.mrf.mxu0
      %v2239 = vadd.f32 %v2078, %v2238
      %v2240 = vpop.f32.mrf.mxu0
      %v2241 = vpop.f32.mrf.mxu0
      %v2242 = vadd.f32 %v2081, %v2241
      %v2243 = vpop.f32.mrf.mxu0
      %2244 = vmatprep.mubr.bf16.mxu0 %v1025
      %2245 = vmatmul.mubr.bf16.gmra.mxu0 %v1024
      %v2246 = vpop.f32.mrf.mxu0
      %v2247 = vadd.f32 %v2086, %v2246
      %v2248 = vpop.f32.mrf.mxu0
      %v2249 = vpop.f32.mrf.mxu0
      %v2250 = vadd.f32 %v2089, %v2249
      %v2251 = vpop.f32.mrf.mxu0
      %2252 = vmatprep.mubr.bf16.mxu0 %v1034
      %2253 = vmatmul.mubr.bf16.gmra.mxu0 %v1033
      %v2254 = vpop.f32.mrf.mxu0
      %v2255 = vadd.f32 %v2094, %v2254
      %v2256 = vpop.f32.mrf.mxu0
      %v2257 = vpop.f32.mrf.mxu0
      %v2258 = vadd.f32 %v2097, %v2257
      %v2259 = vpop.f32.mrf.mxu0
      %2260 = vmatprep.mubr.bf16.mxu0 %v1043
      %2261 = vmatmul.mubr.bf16.gmra.mxu0 %v1042
      %v2262 = vpop.f32.mrf.mxu0
      %v2263 = vadd.f32 %v2102, %v2262
      %v2264 = vpop.f32.mrf.mxu0
      %v2265 = vpop.f32.mrf.mxu0
      %v2266 = vadd.f32 %v2105, %v2265
      %v2267 = vpop.f32.mrf.mxu0
      %2268 = vmatprep.mubr.bf16.mxu0 %v1052
      %2269 = vmatmul.mubr.bf16.gmra.mxu0 %v1051
      %v2270 = vpop.f32.mrf.mxu0
      %v2271 = vadd.f32 %v2110, %v2270
      %v2272 = vpop.f32.mrf.mxu0
      %v2273 = vpop.f32.mrf.mxu0
      %v2274 = vadd.f32 %v2113, %v2273
      %v2275 = vpop.f32.mrf.mxu0
      %2276 = vmatprep.mubr.bf16.mxu0 %v1061
      %2277 = vmatmul.mubr.bf16.gmra.mxu0 %v1060
      %v2278 = vpop.f32.mrf.mxu0
      %v2279 = vadd.f32 %v2118, %v2278
      %v2280 = vpop.f32.mrf.mxu0
      %v2281 = vpop.f32.mrf.mxu0
      %v2282 = vadd.f32 %v2121, %v2281
      %v2283 = vpop.f32.mrf.mxu0
      %2284 = vmatprep.mubr.bf16.mxu0 %v1070
      %2285 = vmatmul.mubr.bf16.gmra.mxu0 %v1069
      %v2286 = vpop.f32.mrf.mxu0
      %v2287 = vadd.f32 %v2126, %v2286
      %v2288 = vpop.f32.mrf.mxu0
      %v2289 = vpop.f32.mrf.mxu0
      %v2290 = vadd.f32 %v2129, %v2289
      %v2291 = vpop.f32.mrf.mxu0
      %2292 = vmatprep.mubr.bf16.mxu0 %v1079
      %2293 = vmatmul.mubr.bf16.gmra.mxu0 %v1078
      %v2294 = vpop.f32.mrf.mxu0
      %v2295 = vadd.f32 %v2134, %v2294
      %v2296 = vpop.f32.mrf.mxu0
      %v2297 = vpop.f32.mrf.mxu0
      %v2298 = vadd.f32 %v2137, %v2297
      %v2299 = vpop.f32.mrf.mxu0
      %2300 = vdwg.mxu0
      %2301 = vmatprep.subr.bf16.mxu0 0
      %2302 = vmatpush1.bf16.msra.mxu0 %v1584
      %2303 = vmatprep.subr.bf16.mxu0 0
      %2304 = vmatpush1.bf16.msra.mxu0 %v1583
      %2305 = vmatprep.subr.bf16.mxu0 0
      %2306 = vmatpush1.bf16.msra.mxu0 %v1582
      %2307 = vmatprep.subr.bf16.mxu0 0
      %2308 = vmatpush1.bf16.msra.mxu0 %v1581
      %2309 = vmatprep.subr.bf16.mxu0 0
      %2310 = vmatpush1.bf16.msra.mxu0 %v1580
      %2311 = vmatprep.subr.bf16.mxu0 0
      %2312 = vmatpush1.bf16.msra.mxu0 %v1579
      %2313 = vmatprep.subr.bf16.mxu0 0
      %2314 = vmatpush1.bf16.msra.mxu0 %v1578
      %2315 = vmatprep.subr.bf16.mxu0 0
      %2316 = vmatpush1.bf16.msra.mxu0 %v1577
      %2317 = vmatprep.subr.bf16.mxu0 0
      %2318 = vmatpush2.bf16.msra.mxu0 0
      %2319 = vmatprep.subr.bf16.mxu0 0
      %2320 = vmatpush2.bf16.msra.mxu0 0
      %2321 = vmatprep.subr.bf16.mxu0 0
      %2322 = vmatpush2.bf16.msra.mxu0 0
      %2323 = vmatprep.subr.bf16.mxu0 0
      %2324 = vmatpush2.bf16.msra.mxu0 0
      %2325 = vmatprep.subr.bf16.mxu0 0
      %2326 = vmatpush2.bf16.msra.mxu0 0
      %2327 = vmatprep.subr.bf16.mxu0 0
      %2328 = vmatpush2.bf16.msra.mxu0 0
      %2329 = vmatprep.subr.bf16.mxu0 0
      %2330 = vmatpush2.bf16.msra.mxu0 0
      %2331 = vmatprep.subr.bf16.mxu0 0
      %2332 = vmatpush2.bf16.msra.mxu0 0
      %2333 = vmatprep.mubr.bf16.mxu0 0
      %2334 = vmatmul.mubr.bf16.gmra.mxu0 %v945
      %v2335 = vpop.f32.mrf.mxu0
      %v2336 = vadd.f32 %v2175, %v2335
      %v2337 = vpop.f32.mrf.mxu0
      %v2338 = vpop.f32.mrf.mxu0
      %v2339 = vadd.f32 %v2178, %v2338
      %v2340 = vpop.f32.mrf.mxu0
      %2341 = vmatprep.mubr.bf16.mxu0 0
      %2342 = vmatmul.mubr.bf16.gmra.mxu0 %v954
      %v2343 = vpop.f32.mrf.mxu0
      %v2344 = vadd.f32 %v2183, %v2343
      %v2345 = vpop.f32.mrf.mxu0
      %v2346 = vpop.f32.mrf.mxu0
      %v2347 = vadd.f32 %v2186, %v2346
      %v2348 = vpop.f32.mrf.mxu0
      %2349 = vmatprep.mubr.bf16.mxu0 0
      %2350 = vmatmul.mubr.bf16.gmra.mxu0 %v963
      %v2351 = vpop.f32.mrf.mxu0
      %v2352 = vadd.f32 %v2191, %v2351
      %v2353 = vpop.f32.mrf.mxu0
      %v2354 = vpop.f32.mrf.mxu0
      %v2355 = vadd.f32 %v2194, %v2354
      %v2356 = vpop.f32.mrf.mxu0
      %2357 = vmatprep.mubr.bf16.mxu0 0
      %2358 = vmatmul.mubr.bf16.gmra.mxu0 %v972
      %v2359 = vpop.f32.mrf.mxu0
      %v2360 = vadd.f32 %v2199, %v2359
      %v2361 = vpop.f32.mrf.mxu0
      %v2362 = vpop.f32.mrf.mxu0
      %v2363 = vadd.f32 %v2202, %v2362
      %v2364 = vpop.f32.mrf.mxu0
      %2365 = vmatprep.mubr.bf16.mxu0 0
      %2366 = vmatmul.mubr.bf16.gmra.mxu0 %v981
      %v2367 = vpop.f32.mrf.mxu0
      %v2368 = vadd.f32 %v2207, %v2367
      %v2369 = vpop.f32.mrf.mxu0
      %v2370 = vpop.f32.mrf.mxu0
      %v2371 = vadd.f32 %v2210, %v2370
      %v2372 = vpop.f32.mrf.mxu0
      %2373 = vmatprep.mubr.bf16.mxu0 0
      %2374 = vmatmul.mubr.bf16.gmra.mxu0 %v990
      %v2375 = vpop.f32.mrf.mxu0
      %v2376 = vadd.f32 %v2215, %v2375
      %v2377 = vpop.f32.mrf.mxu0
      %v2378 = vpop.f32.mrf.mxu0
      %v2379 = vadd.f32 %v2218, %v2378
      %v2380 = vpop.f32.mrf.mxu0
      %2381 = vmatprep.mubr.bf16.mxu0 0
      %2382 = vmatmul.mubr.bf16.gmra.mxu0 %v999
      %v2383 = vpop.f32.mrf.mxu0
      %v2384 = vadd.f32 %v2223, %v2383
      %v2385 = vpop.f32.mrf.mxu0
      %v2386 = vpop.f32.mrf.mxu0
      %v2387 = vadd.f32 %v2226, %v2386
      %v2388 = vpop.f32.mrf.mxu0
      %2389 = vmatprep.mubr.bf16.mxu0 0
      %2390 = vmatmul.mubr.bf16.gmra.mxu0 %v1008
      %v2391 = vpop.f32.mrf.mxu0
      %v2392 = vadd.f32 %v2231, %v2391
      %v2393 = vpop.f32.mrf.mxu0
      %v2394 = vpop.f32.mrf.mxu0
      %v2395 = vadd.f32 %v2234, %v2394
      %v2396 = vpop.f32.mrf.mxu0
      %2397 = vmatprep.mubr.bf16.mxu0 0
      %2398 = vmatmul.mubr.bf16.gmra.mxu0 %v1017
      %v2399 = vpop.f32.mrf.mxu0
      %v2400 = vadd.f32 %v2239, %v2399
      %v2401 = vpop.f32.mrf.mxu0
      %v2402 = vpop.f32.mrf.mxu0
      %v2403 = vadd.f32 %v2242, %v2402
      %v2404 = vpop.f32.mrf.mxu0
      %2405 = vmatprep.mubr.bf16.mxu0 0
      %2406 = vmatmul.mubr.bf16.gmra.mxu0 %v1026
      %v2407 = vpop.f32.mrf.mxu0
      %v2408 = vadd.f32 %v2247, %v2407
      %v2409 = vpop.f32.mrf.mxu0
      %v2410 = vpop.f32.mrf.mxu0
      %v2411 = vadd.f32 %v2250, %v2410
      %v2412 = vpop.f32.mrf.mxu0
      %2413 = vmatprep.mubr.bf16.mxu0 0
      %2414 = vmatmul.mubr.bf16.gmra.mxu0 %v1035
      %v2415 = vpop.f32.mrf.mxu0
      %v2416 = vadd.f32 %v2255, %v2415
      %v2417 = vpop.f32.mrf.mxu0
      %v2418 = vpop.f32.mrf.mxu0
      %v2419 = vadd.f32 %v2258, %v2418
      %v2420 = vpop.f32.mrf.mxu0
      %2421 = vmatprep.mubr.bf16.mxu0 0
      %2422 = vmatmul.mubr.bf16.gmra.mxu0 %v1044
      %v2423 = vpop.f32.mrf.mxu0
      %v2424 = vadd.f32 %v2263, %v2423
      %v2425 = vpop.f32.mrf.mxu0
      %v2426 = vpop.f32.mrf.mxu0
      %v2427 = vadd.f32 %v2266, %v2426
      %v2428 = vpop.f32.mrf.mxu0
      %2429 = vmatprep.mubr.bf16.mxu0 0
      %2430 = vmatmul.mubr.bf16.gmra.mxu0 %v1053
      %v2431 = vpop.f32.mrf.mxu0
      %v2432 = vadd.f32 %v2271, %v2431
      %v2433 = vpop.f32.mrf.mxu0
      %v2434 = vpop.f32.mrf.mxu0
      %v2435 = vadd.f32 %v2274, %v2434
      %v2436 = vpop.f32.mrf.mxu0
      %2437 = vmatprep.mubr.bf16.mxu0 0
      %2438 = vmatmul.mubr.bf16.gmra.mxu0 %v1062
      %v2439 = vpop.f32.mrf.mxu0
      %v2440 = vadd.f32 %v2279, %v2439
      %v2441 = vpop.f32.mrf.mxu0
      %v2442 = vpop.f32.mrf.mxu0
      %v2443 = vadd.f32 %v2282, %v2442
      %v2444 = vpop.f32.mrf.mxu0
      %2445 = vmatprep.mubr.bf16.mxu0 0
      %2446 = vmatmul.mubr.bf16.gmra.mxu0 %v1071
      %v2447 = vpop.f32.mrf.mxu0
      %v2448 = vadd.f32 %v2287, %v2447
      %v2449 = vpop.f32.mrf.mxu0
      %v2450 = vpop.f32.mrf.mxu0
      %v2451 = vadd.f32 %v2290, %v2450
      %v2452 = vpop.f32.mrf.mxu0
      %2453 = vmatprep.mubr.bf16.mxu0 0
      %2454 = vmatmul.mubr.bf16.gmra.mxu0 %v1080
      %v2455 = vpop.f32.mrf.mxu0
      %v2456 = vadd.f32 %v2295, %v2455
      %v2457 = vpop.f32.mrf.mxu0
      %v2458 = vpop.f32.mrf.mxu0
      %v2459 = vadd.f32 %v2298, %v2458
      %v2460 = vpop.f32.mrf.mxu0
      %2461 = vdwg.mxu0
      %v2462 = vpack.c.bf16 %v2339, %v2336
      %v2463 = vpack.c.bf16 %v2347, %v2344
      %v2464 = vpack.c.bf16 %v2355, %v2352
      %v2465 = vpack.c.bf16 %v2363, %v2360
      %v2466 = vpack.c.bf16 %v2371, %v2368
      %v2467 = vpack.c.bf16 %v2379, %v2376
      %v2468 = vpack.c.bf16 %v2387, %v2384
      %v2469 = vpack.c.bf16 %v2395, %v2392
      %v2470 = vpack.c.bf16 %v2403, %v2400
      %v2471 = vpack.c.bf16 %v2411, %v2408
      %v2472 = vpack.c.bf16 %v2419, %v2416
      %v2473 = vpack.c.bf16 %v2427, %v2424
      %v2474 = vpack.c.bf16 %v2435, %v2432
      %v2475 = vpack.c.bf16 %v2443, %v2440
      %v2476 = vpack.c.bf16 %v2451, %v2448
      %v2477 = vpack.c.bf16 %v2459, %v2456
      %v2494 = vunpack.c.l.b16 %v2462
      %v2495 = vunpack.c.h.b16 %v2462
      %v2496 = vunpack.c.l.b16 %v2463
      %v2497 = vunpack.c.h.b16 %v2463
      %v2498 = vunpack.c.l.b16 %v2464
      %v2499 = vunpack.c.h.b16 %v2464
      %v2500 = vunpack.c.l.b16 %v2465
      %v2501 = vunpack.c.h.b16 %v2465
      %v2502 = vunpack.c.l.b16 %v2466
      %v2503 = vunpack.c.h.b16 %v2466
      %v2504 = vunpack.c.l.b16 %v2467
      %v2505 = vunpack.c.h.b16 %v2467
      %v2506 = vunpack.c.l.b16 %v2468
      %v2507 = vunpack.c.h.b16 %v2468
      %v2508 = vunpack.c.l.b16 %v2469
      %v2509 = vunpack.c.h.b16 %v2469
      %v2510 = vunpack.c.l.b16 %v2470
      %v2511 = vunpack.c.h.b16 %v2470
      %v2512 = vunpack.c.l.b16 %v2471
      %v2513 = vunpack.c.h.b16 %v2471
      %v2514 = vunpack.c.l.b16 %v2472
      %v2515 = vunpack.c.h.b16 %v2472
      %v2516 = vunpack.c.l.b16 %v2473
      %v2517 = vunpack.c.h.b16 %v2473
      %v2518 = vunpack.c.l.b16 %v2474
      %v2519 = vunpack.c.h.b16 %v2474
      %v2520 = vunpack.c.l.b16 %v2475
      %v2521 = vunpack.c.h.b16 %v2475
      %v2522 = vunpack.c.l.b16 %v2476
      %v2523 = vunpack.c.h.b16 %v2476
      %v2524 = vunpack.c.l.b16 %v2477
      %v2525 = vunpack.c.h.b16 %v2477
      %v2526 = vpack.c.b16 %v2494, %v2494
      %v2527 = vpack.c.b16 %v2495, %v2495
      %v2528 = vpack.c.b16 %v2496, %v2496
      %v2529 = vpack.c.b16 %v2497, %v2497
      %v2530 = vpack.c.b16 %v2498, %v2498
      %v2531 = vpack.c.b16 %v2499, %v2499
      %v2532 = vpack.c.b16 %v2500, %v2500
      %v2533 = vpack.c.b16 %v2501, %v2501
      %v2534 = vpack.c.b16 %v2502, %v2502
      %v2535 = vpack.c.b16 %v2503, %v2503
      %v2536 = vpack.c.b16 %v2504, %v2504
      %v2537 = vpack.c.b16 %v2505, %v2505
      %v2538 = vpack.c.b16 %v2506, %v2506
      %v2539 = vpack.c.b16 %v2507, %v2507
      %v2540 = vpack.c.b16 %v2508, %v2508
      %v2541 = vpack.c.b16 %v2509, %v2509
      %v2542 = vpack.c.b16 %v2510, %v2510
      %v2543 = vpack.c.b16 %v2511, %v2511
      %v2544 = vpack.c.b16 %v2512, %v2512
      %v2545 = vpack.c.b16 %v2513, %v2513
      %v2546 = vpack.c.b16 %v2514, %v2514
      %v2547 = vpack.c.b16 %v2515, %v2515
      %v2548 = vpack.c.b16 %v2516, %v2516
      %v2549 = vpack.c.b16 %v2517, %v2517
      %v2550 = vpack.c.b16 %v2518, %v2518
      %v2551 = vpack.c.b16 %v2519, %v2519
      %v2552 = vpack.c.b16 %v2520, %v2520
      %v2553 = vpack.c.b16 %v2521, %v2521
      %v2554 = vpack.c.b16 %v2522, %v2522
      %v2555 = vpack.c.b16 %v2523, %v2523
      %v2556 = vpack.c.b16 %v2524, %v2524
      %v2557 = vpack.c.b16 %v2525, %v2525
      %2590 = vst [vmem:[%s175] sm:$0xf] %v2526
      %2591 = vst [vmem:[%s175 + $0x4] sm:$0xf] %v2527
      %2592 = vst [vmem:[%s175 + $0x8] sm:$0xf] %v2528
      %2593 = vst [vmem:[%s175 + $0xc] sm:$0xf] %v2529
      %2594 = vst [vmem:[%s175 + $0x10] sm:$0xf] %v2530
      %2595 = vst [vmem:[%s175 + $0x14] sm:$0xf] %v2531
      %2596 = vst [vmem:[%s175 + $0x18] sm:$0xf] %v2532
      %2597 = vst [vmem:[%s175 + $0x1c] sm:$0xf] %v2533
      %2598 = vst [vmem:[%s175 + $0x20] sm:$0xf] %v2534
      %2599 = vst [vmem:[%s175 + $0x24] sm:$0xf] %v2535
      %2600 = vst [vmem:[%s175 + $0x28] sm:$0xf] %v2536
      %2601 = vst [vmem:[%s175 + $0x2c] sm:$0xf] %v2537
      %2602 = vst [vmem:[%s175 + $0x30] sm:$0xf] %v2538
      %2603 = vst [vmem:[%s175 + $0x34] sm:$0xf] %v2539
      %2604 = vst [vmem:[%s175 + $0x38] sm:$0xf] %v2540
      %2605 = vst [vmem:[%s175 + $0x3c] sm:$0xf] %v2541
      %2606 = vst [vmem:[%s175 + $0x40] sm:$0xf] %v2542
      %2607 = vst [vmem:[%s175 + $0x44] sm:$0xf] %v2543
      %2608 = vst [vmem:[%s175 + $0x48] sm:$0xf] %v2544
      %2609 = vst [vmem:[%s175 + $0x4c] sm:$0xf] %v2545
      %2610 = vst [vmem:[%s175 + $0x50] sm:$0xf] %v2546
      %2611 = vst [vmem:[%s175 + $0x54] sm:$0xf] %v2547
      %2612 = vst [vmem:[%s175 + $0x58] sm:$0xf] %v2548
      %2613 = vst [vmem:[%s175 + $0x5c] sm:$0xf] %v2549
      %2614 = vst [vmem:[%s175 + $0x60] sm:$0xf] %v2550
      %2615 = vst [vmem:[%s175 + $0x64] sm:$0xf] %v2551
      %2616 = vst [vmem:[%s175 + $0x68] sm:$0xf] %v2552
      %2617 = vst [vmem:[%s175 + $0x6c] sm:$0xf] %v2553
      %2618 = vst [vmem:[%s175 + $0x70] sm:$0xf] %v2554
      %2619 = vst [vmem:[%s175 + $0x74] sm:$0xf] %v2555
      %2620 = vst [vmem:[%s175 + $0x78] sm:$0xf] %v2556
      %2621 = vst [vmem:[%s175 + $0x7c] sm:$0xf] %v2557
      %s2622 = smul.u32 32, %s14
      %p2623 = scmp.lt.s32.totalorder %s2622, 63
      %s2624 = scalar_select %p2623, %s2622, 63
      %s2625 = smul.addr %s2624, 4
      %s2626 = scalar_lea.vmem %s3, %s2625
      // Predicated region
      $region33: #{colorization_net.29} parent=31 // pred_check
        %p2627 = pneg %p100
      $region34: #{colorization_net.29} parent=31 // pred_check_branch
        %2629 = sbr.rel (%p2627) target = $region36
      $region35: #{colorization_net.29} parent=31 // pred_region
        %s2630 = smul.u32 32, %s14
      $region36: #{colorization_net.29} parent=31 // pred_fallthru
        _
    $region32: #{colorization_net.29} parent=5 // pred_fallthru
      _
    %p2631 = scmp.le.s32.totalorder 2, %s9
    // Predicated region
    $region37: #{colorization_net.29} parent=5 // pred_check
      %p2632 = pneg %p2631
    $region38: #{colorization_net.29} parent=5 // pred_check_branch
      %2634 = sbr.rel (%p2632) target = $region40
    $region39: #{colorization_net.29} parent=5 // pred_region
      %s2635 = ssub.s32 %s9, 2
      // Predicated region
      $region41: #{colorization_net.29} parent=39 // pred_check
        %p2636 = pneg %p106
      $region42: #{colorization_net.29} parent=39 // pred_check_branch
        %2638 = sbr.rel (%p2636) target = $region44
      $region43: #{colorization_net.29} parent=39 // pred_region
        %s2639 = smul.u32 32, %s15
        %p2640 = scmp.lt.s32.totalorder %s2639, 63
        %s2641 = scalar_select %p2640, %s2639, 63
        %s2642 = smul.addr %s2641, 4
        %s2643 = scalar_lea.vmem %s3, %s2642
      $region44: #{colorization_net.29} parent=39 // pred_fallthru
        _
    $region40: #{colorization_net.29} parent=5 // pred_fallthru
      _
  $region6: #{colorization_net.29} parent=0 // loop_footer
    %s13 = sadd.s32 1, %s9
  $region7: #{colorization_net.29} parent=0 // loop_footer_branch
    %8 = sbr.rel target = $region3
  $region8: #{colorization_net.29} parent=0 // loop_exit
    _

</llo_original>
